<compile_context>
chip_gen: v7x
topology: tpu7x:2x2x1
jax: 0.10.0
libtpu: 0.0.40
codegen_flags: <defaults>
</compile_context>

<pallas_src>
import numpy as np

import jax
import jax.numpy as jnp
from jax.experimental import pallas as pl
from jax.experimental.pallas import tpu as pltpu

EPS = 1e-5
NEG_SLOPE = 0.2
KSIZE = 4
STRIDE = 2


def _rup(x, m):
    return (x + m - 1) // m * m


# ---------------------------------------------------------------------------
# Wrapper-side im2col for layer 1 only (raw input is tiny; Cin * K * K = 16).
# Per-row element order is (C, KH, KW), matching w.reshape(Cout, -1).
# ---------------------------------------------------------------------------
def _im2col(x, ksize, stride):
    n, c, h, w = x.shape
    oh = (h - ksize) // stride + 1
    ow = (w - ksize) // stride + 1
    cols = []
    for i in range(ksize):
        for j in range(ksize):
            cols.append(x[:, :, i:i + stride * oh:stride, j:j + stride * ow:stride])
    p = jnp.stack(cols, axis=0).reshape(ksize, ksize, n, c, oh, ow)
    p = jnp.transpose(p, (2, 4, 5, 3, 0, 1))  # (N, OH, OW, C, KH, KW)
    return p.reshape(n * oh * ow, c * ksize * ksize), oh, ow


# ---------------------------------------------------------------------------
# The single fused kernel.
# ---------------------------------------------------------------------------
def _make_fused_kernel(m1, m2, kk):
    inv_m1 = 1.0 / float(m1)   # real (unpadded) row counts for BN statistics
    inv_m2 = 1.0 / float(m2)

    def kernel(p1_ref, w1_ref, ga1_ref, be1_ref,
               sel2_ref, w2_ref, ga2_ref, be2_ref,
               w3r_ref, selb_ref, b3_ref, o_ref):
        # ---- layer 1: conv (patches @ W) + BN(batch stats) + LeakyReLU -----
        # (conv bias dropped: BN mean subtraction cancels it exactly)
        y1 = jnp.dot(p1_ref[...], w1_ref[...], preferred_element_type=jnp.float32)
        s1 = jnp.sum(y1, axis=0, keepdims=True)
        q1 = jnp.sum(y1 * y1, axis=0, keepdims=True)
        mean1 = s1 * inv_m1
        var1 = jnp.maximum(q1 * inv_m1 - mean1 * mean1, 0.0)
        h1 = (y1 - mean1) * jax.lax.rsqrt(var1 + EPS) * ga1_ref[...] + be1_ref[...]
        h1 = jnp.where(h1 >= 0, h1, NEG_SLOPE * h1)            # (M1P, C1)

        # ---- layer 2: in-kernel im2col via MXU selection matmuls + BN + LReLU
        acc2 = None
        for t in range(kk):                                     # static unroll (16 taps)
            rows_t = jnp.dot(sel2_ref[t].astype(jnp.float32), h1,
                             preferred_element_type=jnp.float32)     # (M2P, C1)
            term = jnp.dot(rows_t, w2_ref[t],
                           preferred_element_type=jnp.float32)       # (M2P, C2)
            acc2 = term if acc2 is None else acc2 + term
        s2 = jnp.sum(acc2, axis=0, keepdims=True)
        q2 = jnp.sum(acc2 * acc2, axis=0, keepdims=True)
        mean2 = s2 * inv_m2
        var2 = jnp.maximum(q2 * inv_m2 - mean2 * mean2, 0.0)
        h2 = (acc2 - mean2) * jax.lax.rsqrt(var2 + EPS) * ga2_ref[...] + be2_ref[...]
        h2 = jnp.where(h2 >= 0, h2, NEG_SLOPE * h2)             # (M2P, C2)

        # ---- layer 3: Cout=1, 1x1 spatial. Tap weights are pre-folded onto
        #      the (n, oh2, ow2) row grid -> elementwise mul, lane-reduce,
        #      batch-select matmul, add bias.
        z = jnp.sum(h2 * w3r_ref[...], axis=1, keepdims=True)   # (M2P, 1)
        y3 = jnp.dot(selb_ref[...], z,
                     preferred_element_type=jnp.float32) + b3_ref[...]  # (NP, 1)
        # lane-dense store: a single full (NP, 128) vreg tile (col 0 is the
        # answer; wrapper slices [:N, :1]).
        o_ref[...] = jnp.broadcast_to(y3, o_ref.shape)

    return kernel


# ---------------------------------------------------------------------------
# Forward pass (matches nn.Sequential(conv+BN+LReLU, conv+BN+LReLU, conv) +
# .view(N, -1); BatchNorm in training mode, i.e. batch statistics).
# ---------------------------------------------------------------------------
def discriminator_forward(x, params):
    n, cin, hh, ww = x.shape
    k, s = KSIZE, STRIDE
    oh1, ow1 = (hh - k) // s + 1, (ww - k) // s + 1
    oh2, ow2 = (oh1 - k) // s + 1, (ow1 - k) // s + 1
    oh3, ow3 = (oh2 - k) // s + 1, (ow2 - k) // s + 1

    w1, w2, w3 = params["w1"], params["w2"], params["w3"]
    c1, c2, c3 = w1.shape[0], w2.shape[0], w3.shape[0]
    assert c3 == 1 and oh3 == 1 and ow3 == 1, (
        "fused kernel assumes the final conv output is (N, 1, 1, 1), as for "
        "the MNIST-style 28x28 input of this module")

    m1, m2 = n * oh1 * ow1, n * oh2 * ow2
    m1p, m2p, n_pad = _rup(m1, 8), _rup(m2, 8), _rup(n, 8)
    kk = k * k

    # layer-1 patches (tiny: Cin*K*K columns); pad rows with zeros so the
    # in-kernel single-pass BN stats over the real M1 rows stay exact.
    p1, _, _ = _im2col(x, k, s)                               # (m1, cin*k*k)
    p1 = jnp.pad(p1, ((0, m1p - m1), (0, 0)))
    w1m = w1.reshape(c1, -1).T                                # (cin*k*k, c1)

    # per-tap layer-2 weights: W2[t] = w2[:, :, i, j].T, t = i*K + j
    w2t = jnp.transpose(w2, (2, 3, 1, 0)).reshape(kk, c1, c2)

    # selection ("in-kernel im2col") matrices — pure compile-time constants.
    sel2 = np.zeros((kk, m2p, m1p), np.float32)
    for nn in range(n):
        for a in range(oh2):
            for b in range(ow2):
                r2 = nn * oh2 * ow2 + a * ow2 + b
                for i in range(k):
                    for j in range(k):
                        r1 = nn * oh1 * ow1 + (s * a + i) * ow1 + (s * b + j)
                        sel2[i * k + j, r2, r1] = 1.0
    sel2 = jnp.asarray(sel2, dtype=jnp.bfloat16)              # 0/1 exact in bf16

    selb = np.zeros((n_pad, m2p), np.float32)                 # batch/tap membership
    for nn in range(n):
        for i in range(k):
            for j in range(k):
                selb[nn, nn * oh2 * ow2 + i * ow2 + j] = 1.0
    selb = jnp.asarray(selb, dtype=jnp.float32)

    # layer-3 weights folded onto the (n, oh2, ow2) row grid.
    w3sp = jnp.transpose(w3[0], (1, 2, 0))                    # (k, k, c2)
    w3sp = jnp.pad(w3sp, ((0, oh2 - k), (0, ow2 - k), (0, 0)))
    w3rows = jnp.tile(w3sp.reshape(oh2 * ow2, c2), (n, 1))
    w3rows = jnp.pad(w3rows, ((0, m2p - m2), (0, 0)))         # (m2p, c2)

    ga1 = params["g1"].reshape(1, c1)
    be1 = params["be1"].reshape(1, c1)
    ga2 = params["g2"].reshape(1, c2)
    be2 = params["be2"].reshape(1, c2)
    b3 = params["b3"].reshape(1, 1)
    # NOTE: params["b1"], params["b2"] are intentionally unused — BN cancels them.

    kernel = _make_fused_kernel(m1, m2, kk)
    vmem_specs = [pl.BlockSpec(memory_space=pltpu.MemorySpace.VMEM)
                  for _ in range(11)]
    out = pl.pallas_call(
        kernel,
        out_shape=jax.ShapeDtypeStruct((n_pad, 128), jnp.float32),
        in_specs=vmem_specs,
        out_specs=pl.BlockSpec(memory_space=pltpu.MemorySpace.VMEM),
        compiler_params=pltpu.CompilerParams(vmem_limit_bytes=32 * 1024 * 1024),
    )(p1, w1m, ga1, be1, sel2, w2t, ga2, be2, w3rows, selb, b3)

    # disc_pred.view(len(x), -1) == (N, 1) here.
    return out[:n, :1]


# ---------------------------------------------------------------------------
# Pure-JAX reference (for the sanity check; includes the conv biases).
# ---------------------------------------------------------------------------
def _ref_forward(x, p):
    def conv(x, w, b):
        y = jax.lax.conv_general_dilated(
            x, w, window_strides=(2, 2), padding="VALID",
            dimension_numbers=("NCHW", "OIHW", "NCHW"))
        return y + b.reshape(1, -1, 1, 1)

    def bn_lrelu(y, g, be):
        mean = jnp.mean(y, axis=(0, 2, 3), keepdims=True)
        var = jnp.mean((y - mean) ** 2, axis=(0, 2, 3), keepdims=True)
        yn = (y - mean) / jnp.sqrt(var + EPS) * g.reshape(1, -1, 1, 1) \
             + be.reshape(1, -1, 1, 1)
        return jnp.where(yn >= 0, yn, NEG_SLOPE * yn)

    h = bn_lrelu(conv(x, p["w1"], p["b1"]), p["g1"], p["be1"])
    h = bn_lrelu(conv(h, p["w2"], p["b2"]), p["g2"], p["be2"])
    h = conv(h, p["w3"], p["b3"])
    return h.reshape(h.shape[0], -1)


# ---------------------------------------------------------------------------
def make_params(key, im_chan=1, hidden_dim=16):
    ks = jax.random.split(key, 8)
    def w(k, cout, cin):
        return (0.05 * jax.random.normal(k, (cout, cin, 4, 4))).astype(jnp.float32)
    def v(k, c):
        return (0.1 * jax.random.normal(k, (c,))).astype(jnp.float32)
    return {
        "w1": w(ks[0], hidden_dim, im_chan), "b1": v(ks[1], hidden_dim),
        "g1": jnp.ones((hidden_dim,), jnp.float32) + v(ks[2], hidden_dim),
        "be1": v(ks[3], hidden_dim),
        "w2": w(ks[4], hidden_dim * 2, hidden_dim), "b2": v(ks[5], hidden_dim * 2),
        "g2": jnp.ones((hidden_dim * 2,), jnp.float32) + v(ks[6], hidden_dim * 2),
        "be2": v(ks[7], hidden_dim * 2),
        "w3": w(jax.random.fold_in(key, 100), 1, hidden_dim * 2),
        "b3": v(jax.random.fold_in(key, 101), 1),
    }


if __name__ == "__main__":
    key = jax.random.PRNGKey(0)
    kx, kp = jax.random.split(key)
    # MNIST-like input: batch=2, im_chan=1, 28x28 -> output (2, 1)
    x = jax.random.normal(kx, (2, 1, 28, 28), dtype=jnp.float32)
    params = make_params(kp)

    fwd = jax.jit(discriminator_forward)
    out = jax.block_until_ready(fwd(x, params))

    ref = jax.block_until_ready(_ref_forward(x, params))
    assert out.shape == (2, 1), out.shape
    assert jnp.allclose(out, ref, rtol=1e-3, atol=1e-3), (out, ref)
    print("KERNEL_OK")
</pallas_src>

<mosaic_0001>
module attributes {stable_mosaic.version = 11 : i64} {
  func.func @kernel(%arg0: memref<344x16xf32, #tpu.memory_space<vmem>>, %arg1: memref<16x16xf32, #tpu.memory_space<vmem>>, %arg2: memref<1x16xf32, #tpu.memory_space<vmem>>, %arg3: memref<1x16xf32, #tpu.memory_space<vmem>>, %arg4: memref<16x56x344xbf16, #tpu.memory_space<vmem>>, %arg5: memref<16x16x32xf32, #tpu.memory_space<vmem>>, %arg6: memref<1x32xf32, #tpu.memory_space<vmem>>, %arg7: memref<1x32xf32, #tpu.memory_space<vmem>>, %arg8: memref<56x32xf32, #tpu.memory_space<vmem>>, %arg9: memref<8x56xf32, #tpu.memory_space<vmem>>, %arg10: memref<1x1xf32, #tpu.memory_space<vmem>>, %arg11: memref<8x128xf32, #tpu.memory_space<vmem>>) attributes {dimension_semantics = [], scalar_prefetch = 0 : i64, scratch_operands = 0 : i64, tpu.core_type = #tpu.core_type<tc>} {
    %c0 = arith.constant 0 : index
    %c0_0 = arith.constant 0 : index
    %0 = vector.load %arg0[%c0, %c0_0] : memref<344x16xf32, #tpu.memory_space<vmem>>, vector<344x16xf32>
    %c0_1 = arith.constant 0 : index
    %c0_2 = arith.constant 0 : index
    %1 = vector.load %arg1[%c0_1, %c0_2] : memref<16x16xf32, #tpu.memory_space<vmem>>, vector<16x16xf32>
    %cst = arith.constant dense<0.000000e+00> : vector<344x16xf32>
    %2 = tpu.matmul %0, %1, %cst {dimension_numbers = #tpu.dot_dimension_numbers<[1], [0], [0], [1], [0, 0, 1, 1], [], []>} : vector<344x16xf32>, vector<16x16xf32>, vector<344x16xf32> -> vector<344x16xf32>
    %cst_3 = arith.constant dense<0.000000e+00> : vector<16xf32>
    %3 = vector.multi_reduction <add>, %2, %cst_3 [0] : vector<344x16xf32> to vector<16xf32>
    %4 = vector.shape_cast %3 : vector<16xf32> to vector<1x16xf32>
    %5 = arith.mulf %2, %2 : vector<344x16xf32>
    %cst_4 = arith.constant dense<0.000000e+00> : vector<16xf32>
    %6 = vector.multi_reduction <add>, %5, %cst_4 [0] : vector<344x16xf32> to vector<16xf32>
    %7 = vector.shape_cast %6 : vector<16xf32> to vector<1x16xf32>
    %cst_5 = arith.constant 2.958580e-03 : f32
    %8 = vector.broadcast %cst_5 : f32 to vector<1x16xf32>
    %9 = arith.mulf %4, %8 : vector<1x16xf32>
    %cst_6 = arith.constant 2.958580e-03 : f32
    %10 = vector.broadcast %cst_6 : f32 to vector<1x16xf32>
    %11 = arith.mulf %7, %10 : vector<1x16xf32>
    %12 = arith.mulf %9, %9 : vector<1x16xf32>
    %13 = arith.subf %11, %12 : vector<1x16xf32>
    %cst_7 = arith.constant 0.000000e+00 : f32
    %14 = vector.broadcast %cst_7 : f32 to vector<1x16xf32>
    %15 = arith.maximumf %13, %14 : vector<1x16xf32>
    %16 = vector.broadcast %9 : vector<1x16xf32> to vector<344x16xf32>
    %17 = arith.subf %2, %16 : vector<344x16xf32>
    %cst_8 = arith.constant 9.99999974E-6 : f32
    %18 = vector.broadcast %cst_8 : f32 to vector<1x16xf32>
    %19 = arith.addf %15, %18 : vector<1x16xf32>
    %20 = math.rsqrt %19 : vector<1x16xf32>
    %21 = vector.broadcast %20 : vector<1x16xf32> to vector<344x16xf32>
    %22 = arith.mulf %17, %21 : vector<344x16xf32>
    %c0_9 = arith.constant 0 : index
    %c0_10 = arith.constant 0 : index
    %23 = vector.load %arg2[%c0_9, %c0_10] : memref<1x16xf32, #tpu.memory_space<vmem>>, vector<1x16xf32>
    %24 = vector.broadcast %23 : vector<1x16xf32> to vector<344x16xf32>
    %25 = arith.mulf %22, %24 : vector<344x16xf32>
    %c0_11 = arith.constant 0 : index
    %c0_12 = arith.constant 0 : index
    %26 = vector.load %arg3[%c0_11, %c0_12] : memref<1x16xf32, #tpu.memory_space<vmem>>, vector<1x16xf32>
    %27 = vector.broadcast %26 : vector<1x16xf32> to vector<344x16xf32>
    %28 = arith.addf %25, %27 : vector<344x16xf32>
    %cst_13 = arith.constant 0.000000e+00 : f32
    %29 = vector.broadcast %cst_13 : f32 to vector<344x16xf32>
    %30 = arith.cmpf oge, %28, %29 : vector<344x16xf32>
    %cst_14 = arith.constant 2.000000e-01 : f32
    %31 = vector.broadcast %cst_14 : f32 to vector<344x16xf32>
    %32 = arith.mulf %31, %28 : vector<344x16xf32>
    %33 = arith.select %30, %28, %32 : vector<344x16xi1>, vector<344x16xf32>
    %c0_15 = arith.constant 0 : index
    %c0_16 = arith.constant 0 : index
    %c0_17 = arith.constant 0 : index
    %34 = vector.load %arg4[%c0_15, %c0_16, %c0_17] : memref<16x56x344xbf16, #tpu.memory_space<vmem>>, vector<1x56x344xbf16>
    %35 = vector.shape_cast %34 : vector<1x56x344xbf16> to vector<56x344xbf16>
    %36 = arith.extf %35 : vector<56x344xbf16> to vector<56x344xf32>
    %cst_18 = arith.constant dense<0.000000e+00> : vector<56x16xf32>
    %37 = tpu.matmul %36, %33, %cst_18 {dimension_numbers = #tpu.dot_dimension_numbers<[1], [0], [0], [1], [0, 0, 1, 1], [], []>} : vector<56x344xf32>, vector<344x16xf32>, vector<56x16xf32> -> vector<56x16xf32>
    %c0_19 = arith.constant 0 : index
    %c0_20 = arith.constant 0 : index
    %c0_21 = arith.constant 0 : index
    %38 = vector.load %arg5[%c0_19, %c0_20, %c0_21] : memref<16x16x32xf32, #tpu.memory_space<vmem>>, vector<1x16x32xf32>
    %39 = vector.shape_cast %38 : vector<1x16x32xf32> to vector<16x32xf32>
    %cst_22 = arith.constant dense<0.000000e+00> : vector<56x32xf32>
    %40 = tpu.matmul %37, %39, %cst_22 {dimension_numbers = #tpu.dot_dimension_numbers<[1], [0], [0], [1], [0, 0, 1, 1], [], []>} : vector<56x16xf32>, vector<16x32xf32>, vector<56x32xf32> -> vector<56x32xf32>
    %c1 = arith.constant 1 : index
    %c0_23 = arith.constant 0 : index
    %c0_24 = arith.constant 0 : index
    %41 = vector.load %arg4[%c1, %c0_23, %c0_24] : memref<16x56x344xbf16, #tpu.memory_space<vmem>>, vector<1x56x344xbf16>
    %42 = vector.shape_cast %41 : vector<1x56x344xbf16> to vector<56x344xbf16>
    %43 = arith.extf %42 : vector<56x344xbf16> to vector<56x344xf32>
    %cst_25 = arith.constant dense<0.000000e+00> : vector<56x16xf32>
    %44 = tpu.matmul %43, %33, %cst_25 {dimension_numbers = #tpu.dot_dimension_numbers<[1], [0], [0], [1], [0, 0, 1, 1], [], []>} : vector<56x344xf32>, vector<344x16xf32>, vector<56x16xf32> -> vector<56x16xf32>
    %c1_26 = arith.constant 1 : index
    %c0_27 = arith.constant 0 : index
    %c0_28 = arith.constant 0 : index
    %45 = vector.load %arg5[%c1_26, %c0_27, %c0_28] : memref<16x16x32xf32, #tpu.memory_space<vmem>>, vector<1x16x32xf32>
    %46 = vector.shape_cast %45 : vector<1x16x32xf32> to vector<16x32xf32>
    %cst_29 = arith.constant dense<0.000000e+00> : vector<56x32xf32>
    %47 = tpu.matmul %44, %46, %cst_29 {dimension_numbers = #tpu.dot_dimension_numbers<[1], [0], [0], [1], [0, 0, 1, 1], [], []>} : vector<56x16xf32>, vector<16x32xf32>, vector<56x32xf32> -> vector<56x32xf32>
    %48 = arith.addf %40, %47 : vector<56x32xf32>
    %c2 = arith.constant 2 : index
    %c0_30 = arith.constant 0 : index
    %c0_31 = arith.constant 0 : index
    %49 = vector.load %arg4[%c2, %c0_30, %c0_31] : memref<16x56x344xbf16, #tpu.memory_space<vmem>>, vector<1x56x344xbf16>
    %50 = vector.shape_cast %49 : vector<1x56x344xbf16> to vector<56x344xbf16>
    %51 = arith.extf %50 : vector<56x344xbf16> to vector<56x344xf32>
    %cst_32 = arith.constant dense<0.000000e+00> : vector<56x16xf32>
    %52 = tpu.matmul %51, %33, %cst_32 {dimension_numbers = #tpu.dot_dimension_numbers<[1], [0], [0], [1], [0, 0, 1, 1], [], []>} : vector<56x344xf32>, vector<344x16xf32>, vector<56x16xf32> -> vector<56x16xf32>
    %c2_33 = arith.constant 2 : index
    %c0_34 = arith.constant 0 : index
    %c0_35 = arith.constant 0 : index
    %53 = vector.load %arg5[%c2_33, %c0_34, %c0_35] : memref<16x16x32xf32, #tpu.memory_space<vmem>>, vector<1x16x32xf32>
    %54 = vector.shape_cast %53 : vector<1x16x32xf32> to vector<16x32xf32>
    %cst_36 = arith.constant dense<0.000000e+00> : vector<56x32xf32>
    %55 = tpu.matmul %52, %54, %cst_36 {dimension_numbers = #tpu.dot_dimension_numbers<[1], [0], [0], [1], [0, 0, 1, 1], [], []>} : vector<56x16xf32>, vector<16x32xf32>, vector<56x32xf32> -> vector<56x32xf32>
    %56 = arith.addf %48, %55 : vector<56x32xf32>
    %c3 = arith.constant 3 : index
    %c0_37 = arith.constant 0 : index
    %c0_38 = arith.constant 0 : index
    %57 = vector.load %arg4[%c3, %c0_37, %c0_38] : memref<16x56x344xbf16, #tpu.memory_space<vmem>>, vector<1x56x344xbf16>
    %58 = vector.shape_cast %57 : vector<1x56x344xbf16> to vector<56x344xbf16>
    %59 = arith.extf %58 : vector<56x344xbf16> to vector<56x344xf32>
    %cst_39 = arith.constant dense<0.000000e+00> : vector<56x16xf32>
    %60 = tpu.matmul %59, %33, %cst_39 {dimension_numbers = #tpu.dot_dimension_numbers<[1], [0], [0], [1], [0, 0, 1, 1], [], []>} : vector<56x344xf32>, vector<344x16xf32>, vector<56x16xf32> -> vector<56x16xf32>
    %c3_40 = arith.constant 3 : index
    %c0_41 = arith.constant 0 : index
    %c0_42 = arith.constant 0 : index
    %61 = vector.load %arg5[%c3_40, %c0_41, %c0_42] : memref<16x16x32xf32, #tpu.memory_space<vmem>>, vector<1x16x32xf32>
    %62 = vector.shape_cast %61 : vector<1x16x32xf32> to vector<16x32xf32>
    %cst_43 = arith.constant dense<0.000000e+00> : vector<56x32xf32>
    %63 = tpu.matmul %60, %62, %cst_43 {dimension_numbers = #tpu.dot_dimension_numbers<[1], [0], [0], [1], [0, 0, 1, 1], [], []>} : vector<56x16xf32>, vector<16x32xf32>, vector<56x32xf32> -> vector<56x32xf32>
    %64 = arith.addf %56, %63 : vector<56x32xf32>
    %c4 = arith.constant 4 : index
    %c0_44 = arith.constant 0 : index
    %c0_45 = arith.constant 0 : index
    %65 = vector.load %arg4[%c4, %c0_44, %c0_45] : memref<16x56x344xbf16, #tpu.memory_space<vmem>>, vector<1x56x344xbf16>
    %66 = vector.shape_cast %65 : vector<1x56x344xbf16> to vector<56x344xbf16>
    %67 = arith.extf %66 : vector<56x344xbf16> to vector<56x344xf32>
    %cst_46 = arith.constant dense<0.000000e+00> : vector<56x16xf32>
    %68 = tpu.matmul %67, %33, %cst_46 {dimension_numbers = #tpu.dot_dimension_numbers<[1], [0], [0], [1], [0, 0, 1, 1], [], []>} : vector<56x344xf32>, vector<344x16xf32>, vector<56x16xf32> -> vector<56x16xf32>
    %c4_47 = arith.constant 4 : index
    %c0_48 = arith.constant 0 : index
    %c0_49 = arith.constant 0 : index
    %69 = vector.load %arg5[%c4_47, %c0_48, %c0_49] : memref<16x16x32xf32, #tpu.memory_space<vmem>>, vector<1x16x32xf32>
    %70 = vector.shape_cast %69 : vector<1x16x32xf32> to vector<16x32xf32>
    %cst_50 = arith.constant dense<0.000000e+00> : vector<56x32xf32>
    %71 = tpu.matmul %68, %70, %cst_50 {dimension_numbers = #tpu.dot_dimension_numbers<[1], [0], [0], [1], [0, 0, 1, 1], [], []>} : vector<56x16xf32>, vector<16x32xf32>, vector<56x32xf32> -> vector<56x32xf32>
    %72 = arith.addf %64, %71 : vector<56x32xf32>
    %c5 = arith.constant 5 : index
    %c0_51 = arith.constant 0 : index
    %c0_52 = arith.constant 0 : index
    %73 = vector.load %arg4[%c5, %c0_51, %c0_52] : memref<16x56x344xbf16, #tpu.memory_space<vmem>>, vector<1x56x344xbf16>
    %74 = vector.shape_cast %73 : vector<1x56x344xbf16> to vector<56x344xbf16>
    %75 = arith.extf %74 : vector<56x344xbf16> to vector<56x344xf32>
    %cst_53 = arith.constant dense<0.000000e+00> : vector<56x16xf32>
    %76 = tpu.matmul %75, %33, %cst_53 {dimension_numbers = #tpu.dot_dimension_numbers<[1], [0], [0], [1], [0, 0, 1, 1], [], []>} : vector<56x344xf32>, vector<344x16xf32>, vector<56x16xf32> -> vector<56x16xf32>
    %c5_54 = arith.constant 5 : index
    %c0_55 = arith.constant 0 : index
    %c0_56 = arith.constant 0 : index
    %77 = vector.load %arg5[%c5_54, %c0_55, %c0_56] : memref<16x16x32xf32, #tpu.memory_space<vmem>>, vector<1x16x32xf32>
    %78 = vector.shape_cast %77 : vector<1x16x32xf32> to vector<16x32xf32>
    %cst_57 = arith.constant dense<0.000000e+00> : vector<56x32xf32>
    %79 = tpu.matmul %76, %78, %cst_57 {dimension_numbers = #tpu.dot_dimension_numbers<[1], [0], [0], [1], [0, 0, 1, 1], [], []>} : vector<56x16xf32>, vector<16x32xf32>, vector<56x32xf32> -> vector<56x32xf32>
    %80 = arith.addf %72, %79 : vector<56x32xf32>
    %c6 = arith.constant 6 : index
    %c0_58 = arith.constant 0 : index
    %c0_59 = arith.constant 0 : index
    %81 = vector.load %arg4[%c6, %c0_58, %c0_59] : memref<16x56x344xbf16, #tpu.memory_space<vmem>>, vector<1x56x344xbf16>
    %82 = vector.shape_cast %81 : vector<1x56x344xbf16> to vector<56x344xbf16>
    %83 = arith.extf %82 : vector<56x344xbf16> to vector<56x344xf32>
    %cst_60 = arith.constant dense<0.000000e+00> : vector<56x16xf32>
    %84 = tpu.matmul %83, %33, %cst_60 {dimension_numbers = #tpu.dot_dimension_numbers<[1], [0], [0], [1], [0, 0, 1, 1], [], []>} : vector<56x344xf32>, vector<344x16xf32>, vector<56x16xf32> -> vector<56x16xf32>
    %c6_61 = arith.constant 6 : index
    %c0_62 = arith.constant 0 : index
    %c0_63 = arith.constant 0 : index
    %85 = vector.load %arg5[%c6_61, %c0_62, %c0_63] : memref<16x16x32xf32, #tpu.memory_space<vmem>>, vector<1x16x32xf32>
    %86 = vector.shape_cast %85 : vector<1x16x32xf32> to vector<16x32xf32>
    %cst_64 = arith.constant dense<0.000000e+00> : vector<56x32xf32>
    %87 = tpu.matmul %84, %86, %cst_64 {dimension_numbers = #tpu.dot_dimension_numbers<[1], [0], [0], [1], [0, 0, 1, 1], [], []>} : vector<56x16xf32>, vector<16x32xf32>, vector<56x32xf32> -> vector<56x32xf32>
    %88 = arith.addf %80, %87 : vector<56x32xf32>
    %c7 = arith.constant 7 : index
    %c0_65 = arith.constant 0 : index
    %c0_66 = arith.constant 0 : index
    %89 = vector.load %arg4[%c7, %c0_65, %c0_66] : memref<16x56x344xbf16, #tpu.memory_space<vmem>>, vector<1x56x344xbf16>
    %90 = vector.shape_cast %89 : vector<1x56x344xbf16> to vector<56x344xbf16>
    %91 = arith.extf %90 : vector<56x344xbf16> to vector<56x344xf32>
    %cst_67 = arith.constant dense<0.000000e+00> : vector<56x16xf32>
    %92 = tpu.matmul %91, %33, %cst_67 {dimension_numbers = #tpu.dot_dimension_numbers<[1], [0], [0], [1], [0, 0, 1, 1], [], []>} : vector<56x344xf32>, vector<344x16xf32>, vector<56x16xf32> -> vector<56x16xf32>
    %c7_68 = arith.constant 7 : index
    %c0_69 = arith.constant 0 : index
    %c0_70 = arith.constant 0 : index
    %93 = vector.load %arg5[%c7_68, %c0_69, %c0_70] : memref<16x16x32xf32, #tpu.memory_space<vmem>>, vector<1x16x32xf32>
    %94 = vector.shape_cast %93 : vector<1x16x32xf32> to vector<16x32xf32>
    %cst_71 = arith.constant dense<0.000000e+00> : vector<56x32xf32>
    %95 = tpu.matmul %92, %94, %cst_71 {dimension_numbers = #tpu.dot_dimension_numbers<[1], [0], [0], [1], [0, 0, 1, 1], [], []>} : vector<56x16xf32>, vector<16x32xf32>, vector<56x32xf32> -> vector<56x32xf32>
    %96 = arith.addf %88, %95 : vector<56x32xf32>
    %c8 = arith.constant 8 : index
    %c0_72 = arith.constant 0 : index
    %c0_73 = arith.constant 0 : index
    %97 = vector.load %arg4[%c8, %c0_72, %c0_73] : memref<16x56x344xbf16, #tpu.memory_space<vmem>>, vector<1x56x344xbf16>
    %98 = vector.shape_cast %97 : vector<1x56x344xbf16> to vector<56x344xbf16>
    %99 = arith.extf %98 : vector<56x344xbf16> to vector<56x344xf32>
    %cst_74 = arith.constant dense<0.000000e+00> : vector<56x16xf32>
    %100 = tpu.matmul %99, %33, %cst_74 {dimension_numbers = #tpu.dot_dimension_numbers<[1], [0], [0], [1], [0, 0, 1, 1], [], []>} : vector<56x344xf32>, vector<344x16xf32>, vector<56x16xf32> -> vector<56x16xf32>
    %c8_75 = arith.constant 8 : index
    %c0_76 = arith.constant 0 : index
    %c0_77 = arith.constant 0 : index
    %101 = vector.load %arg5[%c8_75, %c0_76, %c0_77] : memref<16x16x32xf32, #tpu.memory_space<vmem>>, vector<1x16x32xf32>
    %102 = vector.shape_cast %101 : vector<1x16x32xf32> to vector<16x32xf32>
    %cst_78 = arith.constant dense<0.000000e+00> : vector<56x32xf32>
    %103 = tpu.matmul %100, %102, %cst_78 {dimension_numbers = #tpu.dot_dimension_numbers<[1], [0], [0], [1], [0, 0, 1, 1], [], []>} : vector<56x16xf32>, vector<16x32xf32>, vector<56x32xf32> -> vector<56x32xf32>
    %104 = arith.addf %96, %103 : vector<56x32xf32>
    %c9 = arith.constant 9 : index
    %c0_79 = arith.constant 0 : index
    %c0_80 = arith.constant 0 : index
    %105 = vector.load %arg4[%c9, %c0_79, %c0_80] : memref<16x56x344xbf16, #tpu.memory_space<vmem>>, vector<1x56x344xbf16>
    %106 = vector.shape_cast %105 : vector<1x56x344xbf16> to vector<56x344xbf16>
    %107 = arith.extf %106 : vector<56x344xbf16> to vector<56x344xf32>
    %cst_81 = arith.constant dense<0.000000e+00> : vector<56x16xf32>
    %108 = tpu.matmul %107, %33, %cst_81 {dimension_numbers = #tpu.dot_dimension_numbers<[1], [0], [0], [1], [0, 0, 1, 1], [], []>} : vector<56x344xf32>, vector<344x16xf32>, vector<56x16xf32> -> vector<56x16xf32>
    %c9_82 = arith.constant 9 : index
    %c0_83 = arith.constant 0 : index
    %c0_84 = arith.constant 0 : index
    %109 = vector.load %arg5[%c9_82, %c0_83, %c0_84] : memref<16x16x32xf32, #tpu.memory_space<vmem>>, vector<1x16x32xf32>
    %110 = vector.shape_cast %109 : vector<1x16x32xf32> to vector<16x32xf32>
    %cst_85 = arith.constant dense<0.000000e+00> : vector<56x32xf32>
    %111 = tpu.matmul %108, %110, %cst_85 {dimension_numbers = #tpu.dot_dimension_numbers<[1], [0], [0], [1], [0, 0, 1, 1], [], []>} : vector<56x16xf32>, vector<16x32xf32>, vector<56x32xf32> -> vector<56x32xf32>
    %112 = arith.addf %104, %111 : vector<56x32xf32>
    %c10 = arith.constant 10 : index
    %c0_86 = arith.constant 0 : index
    %c0_87 = arith.constant 0 : index
    %113 = vector.load %arg4[%c10, %c0_86, %c0_87] : memref<16x56x344xbf16, #tpu.memory_space<vmem>>, vector<1x56x344xbf16>
    %114 = vector.shape_cast %113 : vector<1x56x344xbf16> to vector<56x344xbf16>
    %115 = arith.extf %114 : vector<56x344xbf16> to vector<56x344xf32>
    %cst_88 = arith.constant dense<0.000000e+00> : vector<56x16xf32>
    %116 = tpu.matmul %115, %33, %cst_88 {dimension_numbers = #tpu.dot_dimension_numbers<[1], [0], [0], [1], [0, 0, 1, 1], [], []>} : vector<56x344xf32>, vector<344x16xf32>, vector<56x16xf32> -> vector<56x16xf32>
    %c10_89 = arith.constant 10 : index
    %c0_90 = arith.constant 0 : index
    %c0_91 = arith.constant 0 : index
    %117 = vector.load %arg5[%c10_89, %c0_90, %c0_91] : memref<16x16x32xf32, #tpu.memory_space<vmem>>, vector<1x16x32xf32>
    %118 = vector.shape_cast %117 : vector<1x16x32xf32> to vector<16x32xf32>
    %cst_92 = arith.constant dense<0.000000e+00> : vector<56x32xf32>
    %119 = tpu.matmul %116, %118, %cst_92 {dimension_numbers = #tpu.dot_dimension_numbers<[1], [0], [0], [1], [0, 0, 1, 1], [], []>} : vector<56x16xf32>, vector<16x32xf32>, vector<56x32xf32> -> vector<56x32xf32>
    %120 = arith.addf %112, %119 : vector<56x32xf32>
    %c11 = arith.constant 11 : index
    %c0_93 = arith.constant 0 : index
    %c0_94 = arith.constant 0 : index
    %121 = vector.load %arg4[%c11, %c0_93, %c0_94] : memref<16x56x344xbf16, #tpu.memory_space<vmem>>, vector<1x56x344xbf16>
    %122 = vector.shape_cast %121 : vector<1x56x344xbf16> to vector<56x344xbf16>
    %123 = arith.extf %122 : vector<56x344xbf16> to vector<56x344xf32>
    %cst_95 = arith.constant dense<0.000000e+00> : vector<56x16xf32>
    %124 = tpu.matmul %123, %33, %cst_95 {dimension_numbers = #tpu.dot_dimension_numbers<[1], [0], [0], [1], [0, 0, 1, 1], [], []>} : vector<56x344xf32>, vector<344x16xf32>, vector<56x16xf32> -> vector<56x16xf32>
    %c11_96 = arith.constant 11 : index
    %c0_97 = arith.constant 0 : index
    %c0_98 = arith.constant 0 : index
    %125 = vector.load %arg5[%c11_96, %c0_97, %c0_98] : memref<16x16x32xf32, #tpu.memory_space<vmem>>, vector<1x16x32xf32>
    %126 = vector.shape_cast %125 : vector<1x16x32xf32> to vector<16x32xf32>
    %cst_99 = arith.constant dense<0.000000e+00> : vector<56x32xf32>
    %127 = tpu.matmul %124, %126, %cst_99 {dimension_numbers = #tpu.dot_dimension_numbers<[1], [0], [0], [1], [0, 0, 1, 1], [], []>} : vector<56x16xf32>, vector<16x32xf32>, vector<56x32xf32> -> vector<56x32xf32>
    %128 = arith.addf %120, %127 : vector<56x32xf32>
    %c12 = arith.constant 12 : index
    %c0_100 = arith.constant 0 : index
    %c0_101 = arith.constant 0 : index
    %129 = vector.load %arg4[%c12, %c0_100, %c0_101] : memref<16x56x344xbf16, #tpu.memory_space<vmem>>, vector<1x56x344xbf16>
    %130 = vector.shape_cast %129 : vector<1x56x344xbf16> to vector<56x344xbf16>
    %131 = arith.extf %130 : vector<56x344xbf16> to vector<56x344xf32>
    %cst_102 = arith.constant dense<0.000000e+00> : vector<56x16xf32>
    %132 = tpu.matmul %131, %33, %cst_102 {dimension_numbers = #tpu.dot_dimension_numbers<[1], [0], [0], [1], [0, 0, 1, 1], [], []>} : vector<56x344xf32>, vector<344x16xf32>, vector<56x16xf32> -> vector<56x16xf32>
    %c12_103 = arith.constant 12 : index
    %c0_104 = arith.constant 0 : index
    %c0_105 = arith.constant 0 : index
    %133 = vector.load %arg5[%c12_103, %c0_104, %c0_105] : memref<16x16x32xf32, #tpu.memory_space<vmem>>, vector<1x16x32xf32>
    %134 = vector.shape_cast %133 : vector<1x16x32xf32> to vector<16x32xf32>
    %cst_106 = arith.constant dense<0.000000e+00> : vector<56x32xf32>
    %135 = tpu.matmul %132, %134, %cst_106 {dimension_numbers = #tpu.dot_dimension_numbers<[1], [0], [0], [1], [0, 0, 1, 1], [], []>} : vector<56x16xf32>, vector<16x32xf32>, vector<56x32xf32> -> vector<56x32xf32>
    %136 = arith.addf %128, %135 : vector<56x32xf32>
    %c13 = arith.constant 13 : index
    %c0_107 = arith.constant 0 : index
    %c0_108 = arith.constant 0 : index
    %137 = vector.load %arg4[%c13, %c0_107, %c0_108] : memref<16x56x344xbf16, #tpu.memory_space<vmem>>, vector<1x56x344xbf16>
    %138 = vector.shape_cast %137 : vector<1x56x344xbf16> to vector<56x344xbf16>
    %139 = arith.extf %138 : vector<56x344xbf16> to vector<56x344xf32>
    %cst_109 = arith.constant dense<0.000000e+00> : vector<56x16xf32>
    %140 = tpu.matmul %139, %33, %cst_109 {dimension_numbers = #tpu.dot_dimension_numbers<[1], [0], [0], [1], [0, 0, 1, 1], [], []>} : vector<56x344xf32>, vector<344x16xf32>, vector<56x16xf32> -> vector<56x16xf32>
    %c13_110 = arith.constant 13 : index
    %c0_111 = arith.constant 0 : index
    %c0_112 = arith.constant 0 : index
    %141 = vector.load %arg5[%c13_110, %c0_111, %c0_112] : memref<16x16x32xf32, #tpu.memory_space<vmem>>, vector<1x16x32xf32>
    %142 = vector.shape_cast %141 : vector<1x16x32xf32> to vector<16x32xf32>
    %cst_113 = arith.constant dense<0.000000e+00> : vector<56x32xf32>
    %143 = tpu.matmul %140, %142, %cst_113 {dimension_numbers = #tpu.dot_dimension_numbers<[1], [0], [0], [1], [0, 0, 1, 1], [], []>} : vector<56x16xf32>, vector<16x32xf32>, vector<56x32xf32> -> vector<56x32xf32>
    %144 = arith.addf %136, %143 : vector<56x32xf32>
    %c14 = arith.constant 14 : index
    %c0_114 = arith.constant 0 : index
    %c0_115 = arith.constant 0 : index
    %145 = vector.load %arg4[%c14, %c0_114, %c0_115] : memref<16x56x344xbf16, #tpu.memory_space<vmem>>, vector<1x56x344xbf16>
    %146 = vector.shape_cast %145 : vector<1x56x344xbf16> to vector<56x344xbf16>
    %147 = arith.extf %146 : vector<56x344xbf16> to vector<56x344xf32>
    %cst_116 = arith.constant dense<0.000000e+00> : vector<56x16xf32>
    %148 = tpu.matmul %147, %33, %cst_116 {dimension_numbers = #tpu.dot_dimension_numbers<[1], [0], [0], [1], [0, 0, 1, 1], [], []>} : vector<56x344xf32>, vector<344x16xf32>, vector<56x16xf32> -> vector<56x16xf32>
    %c14_117 = arith.constant 14 : index
    %c0_118 = arith.constant 0 : index
    %c0_119 = arith.constant 0 : index
    %149 = vector.load %arg5[%c14_117, %c0_118, %c0_119] : memref<16x16x32xf32, #tpu.memory_space<vmem>>, vector<1x16x32xf32>
    %150 = vector.shape_cast %149 : vector<1x16x32xf32> to vector<16x32xf32>
    %cst_120 = arith.constant dense<0.000000e+00> : vector<56x32xf32>
    %151 = tpu.matmul %148, %150, %cst_120 {dimension_numbers = #tpu.dot_dimension_numbers<[1], [0], [0], [1], [0, 0, 1, 1], [], []>} : vector<56x16xf32>, vector<16x32xf32>, vector<56x32xf32> -> vector<56x32xf32>
    %152 = arith.addf %144, %151 : vector<56x32xf32>
    %c15 = arith.constant 15 : index
    %c0_121 = arith.constant 0 : index
    %c0_122 = arith.constant 0 : index
    %153 = vector.load %arg4[%c15, %c0_121, %c0_122] : memref<16x56x344xbf16, #tpu.memory_space<vmem>>, vector<1x56x344xbf16>
    %154 = vector.shape_cast %153 : vector<1x56x344xbf16> to vector<56x344xbf16>
    %155 = arith.extf %154 : vector<56x344xbf16> to vector<56x344xf32>
    %cst_123 = arith.constant dense<0.000000e+00> : vector<56x16xf32>
    %156 = tpu.matmul %155, %33, %cst_123 {dimension_numbers = #tpu.dot_dimension_numbers<[1], [0], [0], [1], [0, 0, 1, 1], [], []>} : vector<56x344xf32>, vector<344x16xf32>, vector<56x16xf32> -> vector<56x16xf32>
    %c15_124 = arith.constant 15 : index
    %c0_125 = arith.constant 0 : index
    %c0_126 = arith.constant 0 : index
    %157 = vector.load %arg5[%c15_124, %c0_125, %c0_126] : memref<16x16x32xf32, #tpu.memory_space<vmem>>, vector<1x16x32xf32>
    %158 = vector.shape_cast %157 : vector<1x16x32xf32> to vector<16x32xf32>
    %cst_127 = arith.constant dense<0.000000e+00> : vector<56x32xf32>
    %159 = tpu.matmul %156, %158, %cst_127 {dimension_numbers = #tpu.dot_dimension_numbers<[1], [0], [0], [1], [0, 0, 1, 1], [], []>} : vector<56x16xf32>, vector<16x32xf32>, vector<56x32xf32> -> vector<56x32xf32>
    %160 = arith.addf %152, %159 : vector<56x32xf32>
    %cst_128 = arith.constant dense<0.000000e+00> : vector<32xf32>
    %161 = vector.multi_reduction <add>, %160, %cst_128 [0] : vector<56x32xf32> to vector<32xf32>
    %162 = vector.shape_cast %161 : vector<32xf32> to vector<1x32xf32>
    %163 = arith.mulf %160, %160 : vector<56x32xf32>
    %cst_129 = arith.constant dense<0.000000e+00> : vector<32xf32>
    %164 = vector.multi_reduction <add>, %163, %cst_129 [0] : vector<56x32xf32> to vector<32xf32>
    %165 = vector.shape_cast %164 : vector<32xf32> to vector<1x32xf32>
    %cst_130 = arith.constant 2.000000e-02 : f32
    %166 = vector.broadcast %cst_130 : f32 to vector<1x32xf32>
    %167 = arith.mulf %162, %166 : vector<1x32xf32>
    %cst_131 = arith.constant 2.000000e-02 : f32
    %168 = vector.broadcast %cst_131 : f32 to vector<1x32xf32>
    %169 = arith.mulf %165, %168 : vector<1x32xf32>
    %170 = arith.mulf %167, %167 : vector<1x32xf32>
    %171 = arith.subf %169, %170 : vector<1x32xf32>
    %cst_132 = arith.constant 0.000000e+00 : f32
    %172 = vector.broadcast %cst_132 : f32 to vector<1x32xf32>
    %173 = arith.maximumf %171, %172 : vector<1x32xf32>
    %174 = vector.broadcast %167 : vector<1x32xf32> to vector<56x32xf32>
    %175 = arith.subf %160, %174 : vector<56x32xf32>
    %cst_133 = arith.constant 9.99999974E-6 : f32
    %176 = vector.broadcast %cst_133 : f32 to vector<1x32xf32>
    %177 = arith.addf %173, %176 : vector<1x32xf32>
    %178 = math.rsqrt %177 : vector<1x32xf32>
    %179 = vector.broadcast %178 : vector<1x32xf32> to vector<56x32xf32>
    %180 = arith.mulf %175, %179 : vector<56x32xf32>
    %c0_134 = arith.constant 0 : index
    %c0_135 = arith.constant 0 : index
    %181 = vector.load %arg6[%c0_134, %c0_135] : memref<1x32xf32, #tpu.memory_space<vmem>>, vector<1x32xf32>
    %182 = vector.broadcast %181 : vector<1x32xf32> to vector<56x32xf32>
    %183 = arith.mulf %180, %182 : vector<56x32xf32>
    %c0_136 = arith.constant 0 : index
    %c0_137 = arith.constant 0 : index
    %184 = vector.load %arg7[%c0_136, %c0_137] : memref<1x32xf32, #tpu.memory_space<vmem>>, vector<1x32xf32>
    %185 = vector.broadcast %184 : vector<1x32xf32> to vector<56x32xf32>
    %186 = arith.addf %183, %185 : vector<56x32xf32>
    %cst_138 = arith.constant 0.000000e+00 : f32
    %187 = vector.broadcast %cst_138 : f32 to vector<56x32xf32>
    %188 = arith.cmpf oge, %186, %187 : vector<56x32xf32>
    %cst_139 = arith.constant 2.000000e-01 : f32
    %189 = vector.broadcast %cst_139 : f32 to vector<56x32xf32>
    %190 = arith.mulf %189, %186 : vector<56x32xf32>
    %191 = arith.select %188, %186, %190 : vector<56x32xi1>, vector<56x32xf32>
    %c0_140 = arith.constant 0 : index
    %c0_141 = arith.constant 0 : index
    %192 = vector.load %arg8[%c0_140, %c0_141] : memref<56x32xf32, #tpu.memory_space<vmem>>, vector<56x32xf32>
    %193 = arith.mulf %191, %192 : vector<56x32xf32>
    %cst_142 = arith.constant dense<0.000000e+00> : vector<56xf32>
    %194 = vector.multi_reduction <add>, %193, %cst_142 [1] : vector<56x32xf32> to vector<56xf32>
    %195 = vector.shape_cast %194 : vector<56xf32> to vector<56x1xf32>
    %c0_143 = arith.constant 0 : index
    %c0_144 = arith.constant 0 : index
    %196 = vector.load %arg9[%c0_143, %c0_144] : memref<8x56xf32, #tpu.memory_space<vmem>>, vector<8x56xf32>
    %cst_145 = arith.constant dense<0.000000e+00> : vector<8x1xf32>
    %197 = tpu.matmul %196, %195, %cst_145 {dimension_numbers = #tpu.dot_dimension_numbers<[1], [0], [0], [1], [0, 0, 1, 1], [], []>} : vector<8x56xf32>, vector<56x1xf32>, vector<8x1xf32> -> vector<8x1xf32>
    %c0_146 = arith.constant 0 : index
    %c0_147 = arith.constant 0 : index
    %198 = vector.load %arg10[%c0_146, %c0_147] : memref<1x1xf32, #tpu.memory_space<vmem>>, vector<1x1xf32>
    %199 = vector.broadcast %198 : vector<1x1xf32> to vector<8x1xf32>
    %200 = arith.addf %197, %199 : vector<8x1xf32>
    %201 = vector.shape_cast %200 : vector<8x1xf32> to vector<8x1xf32>
    %202 = vector.broadcast %201 : vector<8x1xf32> to vector<8x128xf32>
    %c0_148 = arith.constant 0 : index
    %c0_149 = arith.constant 0 : index
    %203 = vector.load %arg11[%c0_148, %c0_149] : memref<8x128xf32, #tpu.memory_space<vmem>>, vector<8x128xf32>
    tpu.vector_store %arg11[%c0_148, %c0_149], %202 {strides = array<i32>} : memref<8x128xf32, #tpu.memory_space<vmem>>, vector<8x128xf32>,
    return
  }
}

</mosaic_0001>

<llo_original>
// kernel: tile.7
$region0: #{tile.7}
  %s0 = inlined_call_operand.vmem [shape: f32[2,25,32], index: 0, kind: input, shape index: {}]
  %s1 = inlined_call_operand.vmem [shape: f32[50,32], index: 1, kind: output, shape index: {}]
  $region1: #{tile.7} parent=0
    #allocation0 [shape = 'u8[131072]{0}', space=vmem, size = 0x20000, scoped, tag = 'scoped mem for input reshape']
    %s3 = sshllo.u32 0, 2
    %s4 = smul.addr 2, 31
    %s5 = scalar_lea.vmem %s0, %s4
    %v6 = vld [vmem:[%s5] sm:%s3]
    %s7 = scalar_lea.vmem [#allocation0], 248
    %8 = vst [vmem:[%s7] sm:%s3] %v6
    %s9 = smul.addr 2, 30
    %s10 = scalar_lea.vmem %s0, %s9
    %v11 = vld [vmem:[%s10] sm:%s3]
    %s12 = scalar_lea.vmem [#allocation0], 240
    %13 = vst [vmem:[%s12] sm:%s3] %v11
    %s14 = smul.addr 2, 29
    %s15 = scalar_lea.vmem %s0, %s14
    %v16 = vld [vmem:[%s15] sm:%s3]
    %s17 = scalar_lea.vmem [#allocation0], 232
    %18 = vst [vmem:[%s17] sm:%s3] %v16
    %s19 = smul.addr 2, 28
    %s20 = scalar_lea.vmem %s0, %s19
    %v21 = vld [vmem:[%s20] sm:%s3]
    %s22 = scalar_lea.vmem [#allocation0], 224
    %23 = vst [vmem:[%s22] sm:%s3] %v21
    %s24 = smul.addr 2, 27
    %s25 = scalar_lea.vmem %s0, %s24
    %v26 = vld [vmem:[%s25] sm:%s3]
    %s27 = scalar_lea.vmem [#allocation0], 216
    %28 = vst [vmem:[%s27] sm:%s3] %v26
    %s29 = smul.addr 2, 26
    %s30 = scalar_lea.vmem %s0, %s29
    %v31 = vld [vmem:[%s30] sm:%s3]
    %s32 = scalar_lea.vmem [#allocation0], 208
    %33 = vst [vmem:[%s32] sm:%s3] %v31
    %s34 = smul.addr 2, 25
    %s35 = scalar_lea.vmem %s0, %s34
    %v36 = vld [vmem:[%s35] sm:%s3]
    %s37 = scalar_lea.vmem [#allocation0], 200
    %38 = vst [vmem:[%s37] sm:%s3] %v36
    %s39 = smul.addr 2, 24
    %s40 = scalar_lea.vmem %s0, %s39
    %v41 = vld [vmem:[%s40] sm:%s3]
    %s42 = scalar_lea.vmem [#allocation0], 192
    %43 = vst [vmem:[%s42] sm:%s3] %v41
    %s44 = smul.addr 2, 23
    %s45 = scalar_lea.vmem %s0, %s44
    %v46 = vld [vmem:[%s45] sm:%s3]
    %s47 = scalar_lea.vmem [#allocation0], 184
    %48 = vst [vmem:[%s47] sm:%s3] %v46
    %s49 = smul.addr 2, 22
    %s50 = scalar_lea.vmem %s0, %s49
    %v51 = vld [vmem:[%s50] sm:%s3]
    %s52 = scalar_lea.vmem [#allocation0], 176
    %53 = vst [vmem:[%s52] sm:%s3] %v51
    %s54 = smul.addr 2, 21
    %s55 = scalar_lea.vmem %s0, %s54
    %v56 = vld [vmem:[%s55] sm:%s3]
    %s57 = scalar_lea.vmem [#allocation0], 168
    %58 = vst [vmem:[%s57] sm:%s3] %v56
    %s59 = smul.addr 2, 20
    %s60 = scalar_lea.vmem %s0, %s59
    %v61 = vld [vmem:[%s60] sm:%s3]
    %s62 = scalar_lea.vmem [#allocation0], 160
    %63 = vst [vmem:[%s62] sm:%s3] %v61
    %s64 = smul.addr 2, 19
    %s65 = scalar_lea.vmem %s0, %s64
    %v66 = vld [vmem:[%s65] sm:%s3]
    %s67 = scalar_lea.vmem [#allocation0], 152
    %68 = vst [vmem:[%s67] sm:%s3] %v66
    %s69 = smul.addr 2, 18
    %s70 = scalar_lea.vmem %s0, %s69
    %v71 = vld [vmem:[%s70] sm:%s3]
    %s72 = scalar_lea.vmem [#allocation0], 144
    %73 = vst [vmem:[%s72] sm:%s3] %v71
    %s74 = smul.addr 2, 17
    %s75 = scalar_lea.vmem %s0, %s74
    %v76 = vld [vmem:[%s75] sm:%s3]
    %s77 = scalar_lea.vmem [#allocation0], 136
    %78 = vst [vmem:[%s77] sm:%s3] %v76
    %s79 = smul.addr 2, 16
    %s80 = scalar_lea.vmem %s0, %s79
    %v81 = vld [vmem:[%s80] sm:%s3]
    %s82 = scalar_lea.vmem [#allocation0], 128
    %83 = vst [vmem:[%s82] sm:%s3] %v81
    %s84 = smul.addr 2, 15
    %s85 = scalar_lea.vmem %s0, %s84
    %v86 = vld [vmem:[%s85] sm:%s3]
    %s87 = scalar_lea.vmem [#allocation0], 120
    %88 = vst [vmem:[%s87] sm:%s3] %v86
    %s89 = smul.addr 2, 14
    %s90 = scalar_lea.vmem %s0, %s89
    %v91 = vld [vmem:[%s90] sm:%s3]
    %s92 = scalar_lea.vmem [#allocation0], 112
    %93 = vst [vmem:[%s92] sm:%s3] %v91
    %s94 = smul.addr 2, 13
    %s95 = scalar_lea.vmem %s0, %s94
    %v96 = vld [vmem:[%s95] sm:%s3]
    %s97 = scalar_lea.vmem [#allocation0], 104
    %98 = vst [vmem:[%s97] sm:%s3] %v96
    %s99 = smul.addr 2, 12
    %s100 = scalar_lea.vmem %s0, %s99
    %v101 = vld [vmem:[%s100] sm:%s3]
    %s102 = scalar_lea.vmem [#allocation0], 96
    %103 = vst [vmem:[%s102] sm:%s3] %v101
    %s104 = smul.addr 2, 11
    %s105 = scalar_lea.vmem %s0, %s104
    %v106 = vld [vmem:[%s105] sm:%s3]
    %s107 = scalar_lea.vmem [#allocation0], 88
    %108 = vst [vmem:[%s107] sm:%s3] %v106
    %s109 = smul.addr 2, 10
    %s110 = scalar_lea.vmem %s0, %s109
    %v111 = vld [vmem:[%s110] sm:%s3]
    %s112 = scalar_lea.vmem [#allocation0], 80
    %113 = vst [vmem:[%s112] sm:%s3] %v111
    %s114 = smul.addr 2, 9
    %s115 = scalar_lea.vmem %s0, %s114
    %v116 = vld [vmem:[%s115] sm:%s3]
    %s117 = scalar_lea.vmem [#allocation0], 72
    %118 = vst [vmem:[%s117] sm:%s3] %v116
    %s119 = smul.addr 2, 8
    %s120 = scalar_lea.vmem %s0, %s119
    %v121 = vld [vmem:[%s120] sm:%s3]
    %s122 = scalar_lea.vmem [#allocation0], 64
    %123 = vst [vmem:[%s122] sm:%s3] %v121
    %s124 = smul.addr 2, 7
    %s125 = scalar_lea.vmem %s0, %s124
    %v126 = vld [vmem:[%s125] sm:%s3]
    %s127 = scalar_lea.vmem [#allocation0], 56
    %128 = vst [vmem:[%s127] sm:%s3] %v126
    %s129 = smul.addr 2, 6
    %s130 = scalar_lea.vmem %s0, %s129
    %v131 = vld [vmem:[%s130] sm:%s3]
    %s132 = scalar_lea.vmem [#allocation0], 48
    %133 = vst [vmem:[%s132] sm:%s3] %v131
    %s134 = smul.addr 2, 5
    %s135 = scalar_lea.vmem %s0, %s134
    %v136 = vld [vmem:[%s135] sm:%s3]
    %s137 = scalar_lea.vmem [#allocation0], 40
    %138 = vst [vmem:[%s137] sm:%s3] %v136
    %s139 = smul.addr 2, 4
    %s140 = scalar_lea.vmem %s0, %s139
    %v141 = vld [vmem:[%s140] sm:%s3]
    %s142 = scalar_lea.vmem [#allocation0], 32
    %143 = vst [vmem:[%s142] sm:%s3] %v141
    %s144 = smul.addr 2, 3
    %s145 = scalar_lea.vmem %s0, %s144
    %v146 = vld [vmem:[%s145] sm:%s3]
    %s147 = scalar_lea.vmem [#allocation0], 24
    %148 = vst [vmem:[%s147] sm:%s3] %v146
    %s149 = smul.addr 2, 2
    %s150 = scalar_lea.vmem %s0, %s149
    %v151 = vld [vmem:[%s150] sm:%s3]
    %s152 = scalar_lea.vmem [#allocation0], 16
    %153 = vst [vmem:[%s152] sm:%s3] %v151
    %s154 = scalar_lea.vmem %s0, 2
    %v155 = vld [vmem:[%s154] sm:%s3]
    %s156 = scalar_lea.vmem [#allocation0], 8
    %157 = vst [vmem:[%s156] sm:%s3] %v155
    %v158 = vld [vmem:[%s0] sm:%s3]
    %159 = vst [vmem:[#allocation0] sm:%s3] %v158
    %v160 = vld [vmem:[#allocation0] ss:$8 sm:$0xf]
    %v161 = vld [vmem:[#allocation0] ss:$8 sm:$0xf0]
    %vm162 = vcmask 1047556
    %v163 = vsel %vm162, %v161, %v160
    %vm164 = vcmask 203776
    %165 = vst.msk [vmem:[%s1] sm:$0xff] %vm164, %v163
    %s166 = scalar_lea.vmem [#allocation0], 64
    %v167 = vld [vmem:[%s166] ss:$8 sm:$0xf]
    %s168 = scalar_lea.vmem [#allocation0], 64
    %v169 = vld [vmem:[%s168] ss:$8 sm:$0xf0]
    %vm170 = vcmask 1047556
    %v171 = vsel %vm170, %v169, %v167
    %vm172 = vcmask 203776
    %s173 = scalar_lea.vmem %s1, 8
    %174 = vst.msk [vmem:[%s173] sm:$0xff] %vm172, %v171
    %s175 = scalar_lea.vmem [#allocation0], 128
    %v176 = vld [vmem:[%s175] ss:$8 sm:$0xf]
    %s177 = scalar_lea.vmem [#allocation0], 128
    %v178 = vld [vmem:[%s177] ss:$8 sm:$0xf0]
    %vm179 = vcmask 1047556
    %v180 = vsel %vm179, %v178, %v176
    %vm181 = vcmask 203776
    %s182 = scalar_lea.vmem %s1, 16
    %183 = vst.msk [vmem:[%s182] sm:$0xff] %vm181, %v180
    %s184 = scalar_lea.vmem [#allocation0], 192
    %v185 = vld [vmem:[%s184] ss:$8 sm:$0xf]
    %s186 = scalar_lea.vmem [#allocation0], 192
    %v187 = vld [vmem:[%s186] ss:$8 sm:$0xf0]
    %vm188 = vcmask 1047556
    %v189 = vsel %vm188, %v187, %v185
    %vm190 = vcmask 203776
    %s191 = scalar_lea.vmem %s1, 24
    %192 = vst.msk [vmem:[%s191] sm:$0xff] %vm190, %v189
    %s193 = scalar_lea.vmem [#allocation0], 1
    %v194 = vld [vmem:[%s193] ss:$8 sm:$0xf]
    %s195 = scalar_lea.vmem [#allocation0], 1
    %v196 = vld [vmem:[%s195] ss:$8 sm:$0xf0]
    %vm197 = vcmask 1047556
    %v198 = vsel %vm197, %v196, %v194
    %199 = vrot.lane.b32.xlu0 %v198, 25
    %v200 = vpop.permute.xlu0 %199
    %vm201 = vcmask 408776
    %202 = vst.msk [vmem:[%s1] sm:$0xff] %vm201, %v200
    %s203 = scalar_lea.vmem [#allocation0], 65
    %v204 = vld [vmem:[%s203] ss:$8 sm:$0xf]
    %s205 = scalar_lea.vmem [#allocation0], 65
    %v206 = vld [vmem:[%s205] ss:$8 sm:$0xf0]
    %vm207 = vcmask 1047556
    %v208 = vsel %vm207, %v206, %v204
    %209 = vrot.lane.b32.xlu0 %v208, 25
    %v210 = vpop.permute.xlu0 %209
    %vm211 = vcmask 408776
    %s212 = scalar_lea.vmem %s1, 8
    %213 = vst.msk [vmem:[%s212] sm:$0xff] %vm211, %v210
    %s214 = scalar_lea.vmem [#allocation0], 129
    %v215 = vld [vmem:[%s214] ss:$8 sm:$0xf]
    %s216 = scalar_lea.vmem [#allocation0], 129
    %v217 = vld [vmem:[%s216] ss:$8 sm:$0xf0]
    %vm218 = vcmask 1047556
    %v219 = vsel %vm218, %v217, %v215
    %220 = vrot.lane.b32.xlu0 %v219, 25
    %v221 = vpop.permute.xlu0 %220
    %vm222 = vcmask 408776
    %s223 = scalar_lea.vmem %s1, 16
    %224 = vst.msk [vmem:[%s223] sm:$0xff] %vm222, %v221
    %s225 = scalar_lea.vmem [#allocation0], 193
    %v226 = vld [vmem:[%s225] ss:$8 sm:$0xf]
    %s227 = scalar_lea.vmem [#allocation0], 193
    %v228 = vld [vmem:[%s227] ss:$8 sm:$0xf0]
    %vm229 = vcmask 1047556
    %v230 = vsel %vm229, %v228, %v226
    %231 = vrot.lane.b32.xlu0 %v230, 25
    %v232 = vpop.permute.xlu0 %231
    %vm233 = vcmask 408776
    %s234 = scalar_lea.vmem %s1, 24
    %235 = vst.msk [vmem:[%s234] sm:$0xff] %vm233, %v232

// kernel: discriminator_forward.1
$region0: #{discriminator_forward.1}
  #allocation0 [shape = 'u32[]', space=smem, size = 0x4, offset = 0x4, fixed_abs, tag = 'smem constant byte address 0x4 - core index']
  #allocation1 [shape = 'u32[144,128]{1,0:T(1,128)}', space=vmem, size = 0x12000, scoped, tag = 'internal scratch']
  #allocation2 [shape = 'f32[1,1]{1,0:T(1,128)S(1)}', space=vmem, size = 0x200, scoped, tag = 'scoped memory for discriminator_forward.1']
  %s0 = inlined_call_operand.vmem [shape: f32[344,16], index: 0, kind: input, shape index: {}]
  %s1 = inlined_call_operand.vmem [shape: f32[16,16], index: 1, kind: input, shape index: {}]
  %s2 = inlined_call_operand.vmem [shape: f32[1,16], index: 2, kind: input, shape index: {}]
  %s3 = inlined_call_operand.vmem [shape: f32[1,16], index: 3, kind: input, shape index: {}]
  %s4 = inlined_call_operand.vmem [shape: bf16[16,56,344], index: 4, kind: input, shape index: {}]
  %s5 = inlined_call_operand.vmem [shape: f32[16,16,32], index: 5, kind: input, shape index: {}]
  %s6 = inlined_call_operand.vmem [shape: f32[1,32], index: 6, kind: input, shape index: {}]
  %s7 = inlined_call_operand.vmem [shape: f32[1,32], index: 7, kind: input, shape index: {}]
  %s8 = inlined_call_operand.vmem [shape: f32[56,32], index: 8, kind: input, shape index: {}]
  %s9 = inlined_call_operand.vmem [shape: f32[8,56], index: 9, kind: input, shape index: {}]
  %s10 = inlined_call_operand.<no memory space> [shape: f32[1,1], index: 10, kind: input, shape index: {}]
  %s11 = inlined_call_operand.vmem [shape: f32[8,128], index: 11, kind: output, shape index: {}]
  %s12 = sld [smem:[#allocation0]]
  $region54: #{discriminator_forward.1} parent=0
    _
  %s14 = ssub.s32 1, %s12
  %s15 = scalar_select 0, %s14, %s12
  %v16 = vstv %s10
  %17 = vst [vmem:[#allocation2] sm:$0x1] %v16
  // Predicated region
  $region2: #{discriminator_forward.1} parent=0 // pred_check
    _
  $region3: #{discriminator_forward.1} parent=0 // pred_check_branch
    %19 = sbr.rel (0) target = $region5
  $region4: #{discriminator_forward.1} parent=0 // pred_region
    _
  $region5: #{discriminator_forward.1} parent=0 // pred_fallthru
    _
  // Predicated region
  $region6: #{discriminator_forward.1} parent=0 // pred_check
    _
  $region7: #{discriminator_forward.1} parent=0 // pred_check_branch
    %21 = sbr.rel (0) target = $region9
  $region8: #{discriminator_forward.1} parent=0 // pred_region
    _
  $region9: #{discriminator_forward.1} parent=0 // pred_fallthru
    _
  // Predicated region
  $region10: #{discriminator_forward.1} parent=0 // pred_check
    _
  $region11: #{discriminator_forward.1} parent=0 // pred_check_branch
    %23 = sbr.rel (0) target = $region13
  $region12: #{discriminator_forward.1} parent=0 // pred_region
    _
  $region13: #{discriminator_forward.1} parent=0 // pred_fallthru
    _
  // Predicated region
  $region14: #{discriminator_forward.1} parent=0 // pred_check
    _
  $region15: #{discriminator_forward.1} parent=0 // pred_check_branch
    %25 = sbr.rel (0) target = $region17
  $region16: #{discriminator_forward.1} parent=0 // pred_region
    _
  $region17: #{discriminator_forward.1} parent=0 // pred_fallthru
    _
  // Predicated region
  $region18: #{discriminator_forward.1} parent=0 // pred_check
    _
  $region19: #{discriminator_forward.1} parent=0 // pred_check_branch
    %27 = sbr.rel (0) target = $region21
  $region20: #{discriminator_forward.1} parent=0 // pred_region
    _
  $region21: #{discriminator_forward.1} parent=0 // pred_fallthru
    _
  // Predicated region
  $region22: #{discriminator_forward.1} parent=0 // pred_check
    _
  $region23: #{discriminator_forward.1} parent=0 // pred_check_branch
    %29 = sbr.rel (0) target = $region25
  $region24: #{discriminator_forward.1} parent=0 // pred_region
    _
  $region25: #{discriminator_forward.1} parent=0 // pred_fallthru
    _
  // Predicated region
  $region26: #{discriminator_forward.1} parent=0 // pred_check
    _
  $region27: #{discriminator_forward.1} parent=0 // pred_check_branch
    %31 = sbr.rel (0) target = $region29
  $region28: #{discriminator_forward.1} parent=0 // pred_region
    _
  $region29: #{discriminator_forward.1} parent=0 // pred_fallthru
    _
  // Predicated region
  $region30: #{discriminator_forward.1} parent=0 // pred_check
    _
  $region31: #{discriminator_forward.1} parent=0 // pred_check_branch
    %33 = sbr.rel (0) target = $region33
  $region32: #{discriminator_forward.1} parent=0 // pred_region
    _
  $region33: #{discriminator_forward.1} parent=0 // pred_fallthru
    _
  // Predicated region
  $region34: #{discriminator_forward.1} parent=0 // pred_check
    _
  $region35: #{discriminator_forward.1} parent=0 // pred_check_branch
    %35 = sbr.rel (0) target = $region37
  $region36: #{discriminator_forward.1} parent=0 // pred_region
    _
  $region37: #{discriminator_forward.1} parent=0 // pred_fallthru
    _
  // Predicated region
  $region38: #{discriminator_forward.1} parent=0 // pred_check
    _
  $region39: #{discriminator_forward.1} parent=0 // pred_check_branch
    %37 = sbr.rel (0) target = $region41
  $region40: #{discriminator_forward.1} parent=0 // pred_region
    _
  $region41: #{discriminator_forward.1} parent=0 // pred_fallthru
    _
  // Predicated region
  $region42: #{discriminator_forward.1} parent=0 // pred_check
    _
  $region43: #{discriminator_forward.1} parent=0 // pred_check_branch
    %39 = sbr.rel (0) target = $region45
  $region44: #{discriminator_forward.1} parent=0 // pred_region
    _
  $region45: #{discriminator_forward.1} parent=0 // pred_fallthru
    _
  %v40 = vld [vmem:[%s0] sm:$0xff]
  %v41 = vld [vmem:[%s0 + $0x8] sm:$0xff]
  %v42 = vld [vmem:[%s0 + $0x10] sm:$0xff]
  %v43 = vld [vmem:[%s0 + $0x18] sm:$0xff]
  %v44 = vld [vmem:[%s0 + $0x20] sm:$0xff]
  %v45 = vld [vmem:[%s0 + $0x28] sm:$0xff]
  %v46 = vld [vmem:[%s0 + $0x30] sm:$0xff]
  %v47 = vld [vmem:[%s0 + $0x38] sm:$0xff]
  %v48 = vld [vmem:[%s0 + $0x40] sm:$0xff]
  %v49 = vld [vmem:[%s0 + $0x48] sm:$0xff]
  %v50 = vld [vmem:[%s0 + $0x50] sm:$0xff]
  %v51 = vld [vmem:[%s0 + $0x58] sm:$0xff]
  %v52 = vld [vmem:[%s0 + $0x60] sm:$0xff]
  %v53 = vld [vmem:[%s0 + $0x68] sm:$0xff]
  %v54 = vld [vmem:[%s0 + $0x70] sm:$0xff]
  %v55 = vld [vmem:[%s0 + $0x78] sm:$0xff]
  %v56 = vld [vmem:[%s0 + $0x80] sm:$0xff]
  %v57 = vld [vmem:[%s0 + $0x88] sm:$0xff]
  %v58 = vld [vmem:[%s0 + $0x90] sm:$0xff]
  %v59 = vld [vmem:[%s0 + $0x98] sm:$0xff]
  %v60 = vld [vmem:[%s0 + $0xa0] sm:$0xff]
  %v61 = vld [vmem:[%s0 + $0xa8] sm:$0xff]
  %v62 = vld [vmem:[%s0 + $0xb0] sm:$0xff]
  %v63 = vld [vmem:[%s0 + $0xb8] sm:$0xff]
  %v64 = vld [vmem:[%s0 + $0xc0] sm:$0xff]
  %v65 = vld [vmem:[%s0 + $0xc8] sm:$0xff]
  %v66 = vld [vmem:[%s0 + $0xd0] sm:$0xff]
  %v67 = vld [vmem:[%s0 + $0xd8] sm:$0xff]
  %v68 = vld [vmem:[%s0 + $0xe0] sm:$0xff]
  %v69 = vld [vmem:[%s0 + $0xe8] sm:$0xff]
  %v70 = vld [vmem:[%s0 + $0xf0] sm:$0xff]
  %v71 = vld [vmem:[%s0 + $0xf8] sm:$0xff]
  %v72 = vld [vmem:[%s0 + $0x100] sm:$0xff]
  %v73 = vld [vmem:[%s0 + $0x108] sm:$0xff]
  %v74 = vld [vmem:[%s0 + $0x110] sm:$0xff]
  %v75 = vld [vmem:[%s0 + $0x118] sm:$0xff]
  %v76 = vld [vmem:[%s0 + $0x120] sm:$0xff]
  %v77 = vld [vmem:[%s0 + $0x128] sm:$0xff]
  %v78 = vld [vmem:[%s0 + $0x130] sm:$0xff]
  %v79 = vld [vmem:[%s0 + $0x138] sm:$0xff]
  %v80 = vld [vmem:[%s0 + $0x140] sm:$0xff]
  %v81 = vld [vmem:[%s0 + $0x148] sm:$0xff]
  %v82 = vld [vmem:[%s0 + $0x150] sm:$0xff]
  %v83 = vld [vmem:[%s1] sm:$0xff]
  %v84 = vld [vmem:[%s1 + $0x8] sm:$0xff]
  %vm85 = vcmask 130048
  %v87 = vsel %vm85, %v40, 0
  %v90 = vsel %vm85, %v41, 0
  %v93 = vsel %vm85, %v42, 0
  %v96 = vsel %vm85, %v43, 0
  %v99 = vsel %vm85, %v44, 0
  %v102 = vsel %vm85, %v45, 0
  %v105 = vsel %vm85, %v46, 0
  %v108 = vsel %vm85, %v47, 0
  %v111 = vsel %vm85, %v48, 0
  %v114 = vsel %vm85, %v49, 0
  %v117 = vsel %vm85, %v50, 0
  %v120 = vsel %vm85, %v51, 0
  %v123 = vsel %vm85, %v52, 0
  %v126 = vsel %vm85, %v53, 0
  %v129 = vsel %vm85, %v54, 0
  %v132 = vsel %vm85, %v55, 0
  %v135 = vsel %vm85, %v56, 0
  %v138 = vsel %vm85, %v57, 0
  %v141 = vsel %vm85, %v58, 0
  %v144 = vsel %vm85, %v59, 0
  %v147 = vsel %vm85, %v60, 0
  %v150 = vsel %vm85, %v61, 0
  %v153 = vsel %vm85, %v62, 0
  %v156 = vsel %vm85, %v63, 0
  %v159 = vsel %vm85, %v64, 0
  %v162 = vsel %vm85, %v65, 0
  %v165 = vsel %vm85, %v66, 0
  %v168 = vsel %vm85, %v67, 0
  %v171 = vsel %vm85, %v68, 0
  %v174 = vsel %vm85, %v69, 0
  %v177 = vsel %vm85, %v70, 0
  %v180 = vsel %vm85, %v71, 0
  %v183 = vsel %vm85, %v72, 0
  %v186 = vsel %vm85, %v73, 0
  %v189 = vsel %vm85, %v74, 0
  %v192 = vsel %vm85, %v75, 0
  %v195 = vsel %vm85, %v76, 0
  %v198 = vsel %vm85, %v77, 0
  %v201 = vsel %vm85, %v78, 0
  %v204 = vsel %vm85, %v79, 0
  %v207 = vsel %vm85, %v80, 0
  %v210 = vsel %vm85, %v81, 0
  %v213 = vsel %vm85, %v82, 0
  %215 = vmatprep.subr.mxu0 0.0
  %216 = vmatpush1.msra.mxu0 %v83
  %217 = vmatprep.subr.mxu0 0.0
  %218 = vmatpush1.msra.mxu0 %v84
  %219 = vmatprep.subr.mxu0 0.0
  %220 = vmatpush1.msra.mxu0 0.0
  %221 = vmatprep.subr.mxu0 0.0
  %222 = vmatpush1.msra.mxu0 0.0
  %223 = vmatprep.subr.mxu0 0.0
  %224 = vmatpush1.msra.mxu0 0.0
  %225 = vmatprep.subr.mxu0 0.0
  %226 = vmatpush1.msra.mxu0 0.0
  %227 = vmatprep.subr.mxu0 0.0
  %228 = vmatpush1.msra.mxu0 0.0
  %229 = vmatprep.subr.mxu0 0.0
  %230 = vmatpush1.msra.mxu0 0.0
  %231 = vmatprep.subr.mxu0 0.0
  %232 = vmatpush1.msra.mxu0 0.0
  %233 = vmatprep.subr.mxu0 0.0
  %234 = vmatpush1.msra.mxu0 0.0
  %235 = vmatprep.subr.mxu0 0.0
  %236 = vmatpush1.msra.mxu0 0.0
  %237 = vmatprep.subr.mxu0 0.0
  %238 = vmatpush1.msra.mxu0 0.0
  %239 = vmatprep.subr.mxu0 0.0
  %240 = vmatpush1.msra.mxu0 0.0
  %241 = vmatprep.subr.mxu0 0.0
  %242 = vmatpush1.msra.mxu0 0.0
  %243 = vmatprep.subr.mxu0 0.0
  %244 = vmatpush1.msra.mxu0 0.0
  %245 = vmatprep.subr.mxu0 0.0
  %246 = vmatpush1.msra.mxu0 0.0
  %247 = vmatprep.subr.mxu0 0.0
  %248 = vmatpush1.msra.mxu0 0.0
  %249 = vmatprep.subr.mxu0 0.0
  %250 = vmatpush1.msra.mxu0 0.0
  %251 = vmatprep.subr.mxu0 0.0
  %252 = vmatpush1.msra.mxu0 0.0
  %253 = vmatprep.subr.mxu0 0.0
  %254 = vmatpush1.msra.mxu0 0.0
  %255 = vmatprep.subr.mxu0 0.0
  %256 = vmatpush1.msra.mxu0 0.0
  %257 = vmatprep.subr.mxu0 0.0
  %258 = vmatpush1.msra.mxu0 0.0
  %259 = vmatprep.subr.mxu0 0.0
  %260 = vmatpush1.msra.mxu0 0.0
  %261 = vmatprep.subr.mxu0 0.0
  %262 = vmatpush1.msra.mxu0 0.0
  %263 = vmatprep.subr.mxu0 0.0
  %264 = vmatpush1.msra.mxu0 0.0
  %265 = vmatprep.subr.mxu0 0.0
  %266 = vmatpush1.msra.mxu0 0.0
  %267 = vmatprep.subr.mxu0 0.0
  %268 = vmatpush1.msra.mxu0 0.0
  %269 = vmatprep.subr.mxu0 0.0
  %270 = vmatpush1.msra.mxu0 0.0
  %271 = vmatprep.subr.mxu0 0.0
  %272 = vmatpush1.msra.mxu0 0.0
  %273 = vmatprep.subr.mxu0 0.0
  %274 = vmatpush1.msra.mxu0 0.0
  %275 = vmatprep.subr.mxu0 0.0
  %276 = vmatpush1.msra.mxu0 0.0
  %277 = vmatprep.subr.mxu0 0.0
  %278 = vmatpush1.msra.mxu0 0.0
  %279 = vmatprep.mubr.f32.mxu0 0.0
  %280 = vmatmul.mubr.f32.gmra.mrb[0].mxu0 %v87
  %v281 = vpop.f32.mrb[0].mxu0
  %v282 = vadd.f32 0.0, %v281
  %v283 = vpop.f32.mrb[0].mxu0
  %284 = vmatprep.mubr.f32.mxu0 0.0
  %285 = vmatmul.mubr.f32.gmra.mrb[0].mxu0 %v90
  %v286 = vpop.f32.mrb[0].mxu0
  %v287 = vadd.f32 0.0, %v286
  %v288 = vpop.f32.mrb[0].mxu0
  %289 = vmatprep.mubr.f32.mxu0 0.0
  %290 = vmatmul.mubr.f32.gmra.mrb[0].mxu0 %v93
  %v291 = vpop.f32.mrb[0].mxu0
  %v292 = vadd.f32 0.0, %v291
  %v293 = vpop.f32.mrb[0].mxu0
  %294 = vmatprep.mubr.f32.mxu0 0.0
  %295 = vmatmul.mubr.f32.gmra.mrb[0].mxu0 %v96
  %v296 = vpop.f32.mrb[0].mxu0
  %v297 = vadd.f32 0.0, %v296
  %v298 = vpop.f32.mrb[0].mxu0
  %299 = vmatprep.mubr.f32.mxu0 0.0
  %300 = vmatmul.mubr.f32.gmra.mrb[0].mxu0 %v99
  %v301 = vpop.f32.mrb[0].mxu0
  %v302 = vadd.f32 0.0, %v301
  %v303 = vpop.f32.mrb[0].mxu0
  %304 = vmatprep.mubr.f32.mxu0 0.0
  %305 = vmatmul.mubr.f32.gmra.mrb[0].mxu0 %v102
  %v306 = vpop.f32.mrb[0].mxu0
  %v307 = vadd.f32 0.0, %v306
  %v308 = vpop.f32.mrb[0].mxu0
  %309 = vmatprep.mubr.f32.mxu0 0.0
  %310 = vmatmul.mubr.f32.gmra.mrb[0].mxu0 %v105
  %v311 = vpop.f32.mrb[0].mxu0
  %v312 = vadd.f32 0.0, %v311
  %v313 = vpop.f32.mrb[0].mxu0
  %314 = vmatprep.mubr.f32.mxu0 0.0
  %315 = vmatmul.mubr.f32.gmra.mrb[0].mxu0 %v108
  %v316 = vpop.f32.mrb[0].mxu0
  %v317 = vadd.f32 0.0, %v316
  %v318 = vpop.f32.mrb[0].mxu0
  %319 = vmatprep.mubr.f32.mxu0 0.0
  %320 = vmatmul.mubr.f32.gmra.mrb[0].mxu0 %v111
  %v321 = vpop.f32.mrb[0].mxu0
  %v322 = vadd.f32 0.0, %v321
  %v323 = vpop.f32.mrb[0].mxu0
  %324 = vmatprep.mubr.f32.mxu0 0.0
  %325 = vmatmul.mubr.f32.gmra.mrb[0].mxu0 %v114
  %v326 = vpop.f32.mrb[0].mxu0
  %v327 = vadd.f32 0.0, %v326
  %v328 = vpop.f32.mrb[0].mxu0
  %329 = vmatprep.mubr.f32.mxu0 0.0
  %330 = vmatmul.mubr.f32.gmra.mrb[0].mxu0 %v117
  %v331 = vpop.f32.mrb[0].mxu0
  %v332 = vadd.f32 0.0, %v331
  %v333 = vpop.f32.mrb[0].mxu0
  %334 = vmatprep.mubr.f32.mxu0 0.0
  %335 = vmatmul.mubr.f32.gmra.mrb[0].mxu0 %v120
  %v336 = vpop.f32.mrb[0].mxu0
  %v337 = vadd.f32 0.0, %v336
  %v338 = vpop.f32.mrb[0].mxu0
  %339 = vmatprep.mubr.f32.mxu0 0.0
  %340 = vmatmul.mubr.f32.gmra.mrb[0].mxu0 %v123
  %v341 = vpop.f32.mrb[0].mxu0
  %v342 = vadd.f32 0.0, %v341
  %v343 = vpop.f32.mrb[0].mxu0
  %344 = vmatprep.mubr.f32.mxu0 0.0
  %345 = vmatmul.mubr.f32.gmra.mrb[0].mxu0 %v126
  %v346 = vpop.f32.mrb[0].mxu0
  %v347 = vadd.f32 0.0, %v346
  %v348 = vpop.f32.mrb[0].mxu0
  %349 = vmatprep.mubr.f32.mxu0 0.0
  %350 = vmatmul.mubr.f32.gmra.mrb[0].mxu0 %v129
  %v351 = vpop.f32.mrb[0].mxu0
  %v352 = vadd.f32 0.0, %v351
  %v353 = vpop.f32.mrb[0].mxu0
  %354 = vmatprep.mubr.f32.mxu0 0.0
  %355 = vmatmul.mubr.f32.gmra.mrb[0].mxu0 %v132
  %v356 = vpop.f32.mrb[0].mxu0
  %v357 = vadd.f32 0.0, %v356
  %v358 = vpop.f32.mrb[0].mxu0
  %359 = vmatprep.mubr.f32.mxu0 0.0
  %360 = vmatmul.mubr.f32.gmra.mrb[0].mxu0 %v135
  %v361 = vpop.f32.mrb[0].mxu0
  %v362 = vadd.f32 0.0, %v361
  %v363 = vpop.f32.mrb[0].mxu0
  %364 = vmatprep.mubr.f32.mxu0 0.0
  %365 = vmatmul.mubr.f32.gmra.mrb[0].mxu0 %v138
  %v366 = vpop.f32.mrb[0].mxu0
  %v367 = vadd.f32 0.0, %v366
  %v368 = vpop.f32.mrb[0].mxu0
  %369 = vmatprep.mubr.f32.mxu0 0.0
  %370 = vmatmul.mubr.f32.gmra.mrb[0].mxu0 %v141
  %v371 = vpop.f32.mrb[0].mxu0
  %v372 = vadd.f32 0.0, %v371
  %v373 = vpop.f32.mrb[0].mxu0
  %374 = vmatprep.mubr.f32.mxu0 0.0
  %375 = vmatmul.mubr.f32.gmra.mrb[0].mxu0 %v144
  %v376 = vpop.f32.mrb[0].mxu0
  %v377 = vadd.f32 0.0, %v376
  %v378 = vpop.f32.mrb[0].mxu0
  %379 = vmatprep.mubr.f32.mxu0 0.0
  %380 = vmatmul.mubr.f32.gmra.mrb[0].mxu0 %v147
  %v381 = vpop.f32.mrb[0].mxu0
  %v382 = vadd.f32 0.0, %v381
  %v383 = vpop.f32.mrb[0].mxu0
  %384 = vmatprep.mubr.f32.mxu0 0.0
  %385 = vmatmul.mubr.f32.gmra.mrb[0].mxu0 %v150
  %v386 = vpop.f32.mrb[0].mxu0
  %v387 = vadd.f32 0.0, %v386
  %v388 = vpop.f32.mrb[0].mxu0
  %389 = vmatprep.mubr.f32.mxu0 0.0
  %390 = vmatmul.mubr.f32.gmra.mrb[0].mxu0 %v153
  %v391 = vpop.f32.mrb[0].mxu0
  %v392 = vadd.f32 0.0, %v391
  %v393 = vpop.f32.mrb[0].mxu0
  %394 = vmatprep.mubr.f32.mxu0 0.0
  %395 = vmatmul.mubr.f32.gmra.mrb[0].mxu0 %v156
  %v396 = vpop.f32.mrb[0].mxu0
  %v397 = vadd.f32 0.0, %v396
  %v398 = vpop.f32.mrb[0].mxu0
  %399 = vmatprep.mubr.f32.mxu0 0.0
  %400 = vmatmul.mubr.f32.gmra.mrb[0].mxu0 %v159
  %v401 = vpop.f32.mrb[0].mxu0
  %v402 = vadd.f32 0.0, %v401
  %v403 = vpop.f32.mrb[0].mxu0
  %404 = vmatprep.mubr.f32.mxu0 0.0
  %405 = vmatmul.mubr.f32.gmra.mrb[0].mxu0 %v162
  %v406 = vpop.f32.mrb[0].mxu0
  %v407 = vadd.f32 0.0, %v406
  %v408 = vpop.f32.mrb[0].mxu0
  %409 = vmatprep.mubr.f32.mxu0 0.0
  %410 = vmatmul.mubr.f32.gmra.mrb[0].mxu0 %v165
  %v411 = vpop.f32.mrb[0].mxu0
  %v412 = vadd.f32 0.0, %v411
  %v413 = vpop.f32.mrb[0].mxu0
  %414 = vmatprep.mubr.f32.mxu0 0.0
  %415 = vmatmul.mubr.f32.gmra.mrb[0].mxu0 %v168
  %v416 = vpop.f32.mrb[0].mxu0
  %v417 = vadd.f32 0.0, %v416
  %v418 = vpop.f32.mrb[0].mxu0
  %419 = vmatprep.mubr.f32.mxu0 0.0
  %420 = vmatmul.mubr.f32.gmra.mrb[0].mxu0 %v171
  %v421 = vpop.f32.mrb[0].mxu0
  %v422 = vadd.f32 0.0, %v421
  %v423 = vpop.f32.mrb[0].mxu0
  %424 = vmatprep.mubr.f32.mxu0 0.0
  %425 = vmatmul.mubr.f32.gmra.mrb[0].mxu0 %v174
  %v426 = vpop.f32.mrb[0].mxu0
  %v427 = vadd.f32 0.0, %v426
  %v428 = vpop.f32.mrb[0].mxu0
  %429 = vmatprep.mubr.f32.mxu0 0.0
  %430 = vmatmul.mubr.f32.gmra.mrb[0].mxu0 %v177
  %v431 = vpop.f32.mrb[0].mxu0
  %v432 = vadd.f32 0.0, %v431
  %v433 = vpop.f32.mrb[0].mxu0
  %434 = vmatprep.mubr.f32.mxu0 0.0
  %435 = vmatmul.mubr.f32.gmra.mrb[0].mxu0 %v180
  %v436 = vpop.f32.mrb[0].mxu0
  %v437 = vadd.f32 0.0, %v436
  %v438 = vpop.f32.mrb[0].mxu0
  %439 = vmatprep.mubr.f32.mxu0 0.0
  %440 = vmatmul.mubr.f32.gmra.mrb[0].mxu0 %v183
  %v441 = vpop.f32.mrb[0].mxu0
  %v442 = vadd.f32 0.0, %v441
  %v443 = vpop.f32.mrb[0].mxu0
  %444 = vmatprep.mubr.f32.mxu0 0.0
  %445 = vmatmul.mubr.f32.gmra.mrb[0].mxu0 %v186
  %v446 = vpop.f32.mrb[0].mxu0
  %v447 = vadd.f32 0.0, %v446
  %v448 = vpop.f32.mrb[0].mxu0
  %449 = vmatprep.mubr.f32.mxu0 0.0
  %450 = vmatmul.mubr.f32.gmra.mrb[0].mxu0 %v189
  %v451 = vpop.f32.mrb[0].mxu0
  %v452 = vadd.f32 0.0, %v451
  %v453 = vpop.f32.mrb[0].mxu0
  %454 = vmatprep.mubr.f32.mxu0 0.0
  %455 = vmatmul.mubr.f32.gmra.mrb[0].mxu0 %v192
  %v456 = vpop.f32.mrb[0].mxu0
  %v457 = vadd.f32 0.0, %v456
  %v458 = vpop.f32.mrb[0].mxu0
  %459 = vmatprep.mubr.f32.mxu0 0.0
  %460 = vmatmul.mubr.f32.gmra.mrb[0].mxu0 %v195
  %v461 = vpop.f32.mrb[0].mxu0
  %v462 = vadd.f32 0.0, %v461
  %v463 = vpop.f32.mrb[0].mxu0
  %464 = vmatprep.mubr.f32.mxu0 0.0
  %465 = vmatmul.mubr.f32.gmra.mrb[0].mxu0 %v198
  %v466 = vpop.f32.mrb[0].mxu0
  %v467 = vadd.f32 0.0, %v466
  %v468 = vpop.f32.mrb[0].mxu0
  %469 = vmatprep.mubr.f32.mxu0 0.0
  %470 = vmatmul.mubr.f32.gmra.mrb[0].mxu0 %v201
  %v471 = vpop.f32.mrb[0].mxu0
  %v472 = vadd.f32 0.0, %v471
  %v473 = vpop.f32.mrb[0].mxu0
  %474 = vmatprep.mubr.f32.mxu0 0.0
  %475 = vmatmul.mubr.f32.gmra.mrb[0].mxu0 %v204
  %v476 = vpop.f32.mrb[0].mxu0
  %v477 = vadd.f32 0.0, %v476
  %v478 = vpop.f32.mrb[0].mxu0
  %479 = vmatprep.mubr.f32.mxu0 0.0
  %480 = vmatmul.mubr.f32.gmra.mrb[0].mxu0 %v207
  %v481 = vpop.f32.mrb[0].mxu0
  %v482 = vadd.f32 0.0, %v481
  %v483 = vpop.f32.mrb[0].mxu0
  %484 = vmatprep.mubr.f32.mxu0 0.0
  %485 = vmatmul.mubr.f32.gmra.mrb[0].mxu0 %v210
  %v486 = vpop.f32.mrb[0].mxu0
  %v487 = vadd.f32 0.0, %v486
  %v488 = vpop.f32.mrb[0].mxu0
  %489 = vmatprep.mubr.f32.mxu0 0.0
  %490 = vmatmul.mubr.f32.gmra.mrb[0].mxu0 %v213
  %v491 = vpop.f32.mrb[0].mxu0
  %v492 = vadd.f32 0.0, %v491
  %v493 = vpop.f32.mrb[0].mxu0
  %494 = vdwg.mxu0
  %v495 = vsel %vm85, %v282, 0.0
  %v496 = vsel %vm85, %v287, 0.0
  %v497 = vadd.f32 %v495, %v496
  %v498 = vsel %vm85, %v292, 0.0
  %v499 = vadd.f32 %v497, %v498
  %v500 = vsel %vm85, %v297, 0.0
  %v501 = vadd.f32 %v499, %v500
  %v502 = vsel %vm85, %v302, 0.0
  %v503 = vadd.f32 %v501, %v502
  %v504 = vsel %vm85, %v307, 0.0
  %v505 = vadd.f32 %v503, %v504
  %v506 = vsel %vm85, %v312, 0.0
  %v507 = vadd.f32 %v505, %v506
  %v508 = vsel %vm85, %v317, 0.0
  %v509 = vadd.f32 %v507, %v508
  %v510 = vsel %vm85, %v322, 0.0
  %v511 = vadd.f32 %v509, %v510
  %v512 = vsel %vm85, %v327, 0.0
  %v513 = vadd.f32 %v511, %v512
  %v514 = vsel %vm85, %v332, 0.0
  %v515 = vadd.f32 %v513, %v514
  %v516 = vsel %vm85, %v337, 0.0
  %v517 = vadd.f32 %v515, %v516
  %v518 = vsel %vm85, %v342, 0.0
  %v519 = vadd.f32 %v517, %v518
  %v520 = vsel %vm85, %v347, 0.0
  %v521 = vadd.f32 %v519, %v520
  %v522 = vsel %vm85, %v352, 0.0
  %v523 = vadd.f32 %v521, %v522
  %v524 = vsel %vm85, %v357, 0.0
  %v525 = vadd.f32 %v523, %v524
  %v526 = vsel %vm85, %v362, 0.0
  %v527 = vadd.f32 %v525, %v526
  %v528 = vsel %vm85, %v367, 0.0
  %v529 = vadd.f32 %v527, %v528
  %v530 = vsel %vm85, %v372, 0.0
  %v531 = vadd.f32 %v529, %v530
  %v532 = vsel %vm85, %v377, 0.0
  %v533 = vadd.f32 %v531, %v532
  %v534 = vsel %vm85, %v382, 0.0
  %v535 = vadd.f32 %v533, %v534
  %v536 = vsel %vm85, %v387, 0.0
  %v537 = vadd.f32 %v535, %v536
  %v538 = vsel %vm85, %v392, 0.0
  %v539 = vadd.f32 %v537, %v538
  %v540 = vsel %vm85, %v397, 0.0
  %v541 = vadd.f32 %v539, %v540
  %v542 = vsel %vm85, %v402, 0.0
  %v543 = vadd.f32 %v541, %v542
  %v544 = vsel %vm85, %v407, 0.0
  %v545 = vadd.f32 %v543, %v544
  %v546 = vsel %vm85, %v412, 0.0
  %v547 = vadd.f32 %v545, %v546
  %v548 = vsel %vm85, %v417, 0.0
  %v549 = vadd.f32 %v547, %v548
  %v550 = vsel %vm85, %v422, 0.0
  %v551 = vadd.f32 %v549, %v550
  %v552 = vsel %vm85, %v427, 0.0
  %v553 = vadd.f32 %v551, %v552
  %v554 = vsel %vm85, %v432, 0.0
  %v555 = vadd.f32 %v553, %v554
  %v556 = vsel %vm85, %v437, 0.0
  %v557 = vadd.f32 %v555, %v556
  %v558 = vsel %vm85, %v442, 0.0
  %v559 = vadd.f32 %v557, %v558
  %v560 = vsel %vm85, %v447, 0.0
  %v561 = vadd.f32 %v559, %v560
  %v562 = vsel %vm85, %v452, 0.0
  %v563 = vadd.f32 %v561, %v562
  %v564 = vsel %vm85, %v457, 0.0
  %v565 = vadd.f32 %v563, %v564
  %v566 = vsel %vm85, %v462, 0.0
  %v567 = vadd.f32 %v565, %v566
  %v568 = vsel %vm85, %v467, 0.0
  %v569 = vadd.f32 %v567, %v568
  %v570 = vsel %vm85, %v472, 0.0
  %v571 = vadd.f32 %v569, %v570
  %v572 = vsel %vm85, %v477, 0.0
  %v573 = vadd.f32 %v571, %v572
  %v574 = vsel %vm85, %v482, 0.0
  %v575 = vadd.f32 %v573, %v574
  %v576 = vsel %vm85, %v487, 0.0
  %v577 = vadd.f32 %v575, %v576
  %v578 = vsel %vm85, %v492, 0.0
  %v579 = vadd.f32 %v577, %v578
  %v580 = vrot.slane %v579, 4
  %v581 = vadd.f32 %v579, %v580
  %v582 = vrot.slane %v581, 2
  %v583 = vadd.f32 %v581, %v582
  %v584 = vrot.slane %v583, 1
  %v585 = vadd.f32 %v583, %v584
  %v586 = vmul.f32 %v282, %v282
  %v587 = vmul.f32 %v287, %v287
  %v588 = vmul.f32 %v292, %v292
  %v589 = vmul.f32 %v297, %v297
  %v590 = vmul.f32 %v302, %v302
  %v591 = vmul.f32 %v307, %v307
  %v592 = vmul.f32 %v312, %v312
  %v593 = vmul.f32 %v317, %v317
  %v594 = vmul.f32 %v322, %v322
  %v595 = vmul.f32 %v327, %v327
  %v596 = vmul.f32 %v332, %v332
  %v597 = vmul.f32 %v337, %v337
  %v598 = vmul.f32 %v342, %v342
  %v599 = vmul.f32 %v347, %v347
  %v600 = vmul.f32 %v352, %v352
  %v601 = vmul.f32 %v357, %v357
  %v602 = vmul.f32 %v362, %v362
  %v603 = vmul.f32 %v367, %v367
  %v604 = vmul.f32 %v372, %v372
  %v605 = vmul.f32 %v377, %v377
  %v606 = vmul.f32 %v382, %v382
  %v607 = vmul.f32 %v387, %v387
  %v608 = vmul.f32 %v392, %v392
  %v609 = vmul.f32 %v397, %v397
  %v610 = vmul.f32 %v402, %v402
  %v611 = vmul.f32 %v407, %v407
  %v612 = vmul.f32 %v412, %v412
  %v613 = vmul.f32 %v417, %v417
  %v614 = vmul.f32 %v422, %v422
  %v615 = vmul.f32 %v427, %v427
  %v616 = vmul.f32 %v432, %v432
  %v617 = vmul.f32 %v437, %v437
  %v618 = vmul.f32 %v442, %v442
  %v619 = vmul.f32 %v447, %v447
  %v620 = vmul.f32 %v452, %v452
  %v621 = vmul.f32 %v457, %v457
  %v622 = vmul.f32 %v462, %v462
  %v623 = vmul.f32 %v467, %v467
  %v624 = vmul.f32 %v472, %v472
  %v625 = vmul.f32 %v477, %v477
  %v626 = vmul.f32 %v482, %v482
  %v627 = vmul.f32 %v487, %v487
  %v628 = vmul.f32 %v492, %v492
  %v629 = vsel %vm85, %v586, 0.0
  %v630 = vsel %vm85, %v587, 0.0
  %v631 = vadd.f32 %v629, %v630
  %v632 = vsel %vm85, %v588, 0.0
  %v633 = vadd.f32 %v631, %v632
  %v634 = vsel %vm85, %v589, 0.0
  %v635 = vadd.f32 %v633, %v634
  %v636 = vsel %vm85, %v590, 0.0
  %v637 = vadd.f32 %v635, %v636
  %v638 = vsel %vm85, %v591, 0.0
  %v639 = vadd.f32 %v637, %v638
  %v640 = vsel %vm85, %v592, 0.0
  %v641 = vadd.f32 %v639, %v640
  %v642 = vsel %vm85, %v593, 0.0
  %v643 = vadd.f32 %v641, %v642
  %v644 = vsel %vm85, %v594, 0.0
  %v645 = vadd.f32 %v643, %v644
  %v646 = vsel %vm85, %v595, 0.0
  %v647 = vadd.f32 %v645, %v646
  %v648 = vsel %vm85, %v596, 0.0
  %v649 = vadd.f32 %v647, %v648
  %v650 = vsel %vm85, %v597, 0.0
  %v651 = vadd.f32 %v649, %v650
  %v652 = vsel %vm85, %v598, 0.0
  %v653 = vadd.f32 %v651, %v652
  %v654 = vsel %vm85, %v599, 0.0
  %v655 = vadd.f32 %v653, %v654
  %v656 = vsel %vm85, %v600, 0.0
  %v657 = vadd.f32 %v655, %v656
  %v658 = vsel %vm85, %v601, 0.0
  %v659 = vadd.f32 %v657, %v658
  %v660 = vsel %vm85, %v602, 0.0
  %v661 = vadd.f32 %v659, %v660
  %v662 = vsel %vm85, %v603, 0.0
  %v663 = vadd.f32 %v661, %v662
  %v664 = vsel %vm85, %v604, 0.0
  %v665 = vadd.f32 %v663, %v664
  %v666 = vsel %vm85, %v605, 0.0
  %v667 = vadd.f32 %v665, %v666
  %v668 = vsel %vm85, %v606, 0.0
  %v669 = vadd.f32 %v667, %v668
  %v670 = vsel %vm85, %v607, 0.0
  %v671 = vadd.f32 %v669, %v670
  %v672 = vsel %vm85, %v608, 0.0
  %v673 = vadd.f32 %v671, %v672
  %v674 = vsel %vm85, %v609, 0.0
  %v675 = vadd.f32 %v673, %v674
  %v676 = vsel %vm85, %v610, 0.0
  %v677 = vadd.f32 %v675, %v676
  %v678 = vsel %vm85, %v611, 0.0
  %v679 = vadd.f32 %v677, %v678
  %v680 = vsel %vm85, %v612, 0.0
  %v681 = vadd.f32 %v679, %v680
  %v682 = vsel %vm85, %v613, 0.0
  %v683 = vadd.f32 %v681, %v682
  %v684 = vsel %vm85, %v614, 0.0
  %v685 = vadd.f32 %v683, %v684
  %v686 = vsel %vm85, %v615, 0.0
  %v687 = vadd.f32 %v685, %v686
  %v688 = vsel %vm85, %v616, 0.0
  %v689 = vadd.f32 %v687, %v688
  %v690 = vsel %vm85, %v617, 0.0
  %v691 = vadd.f32 %v689, %v690
  %v692 = vsel %vm85, %v618, 0.0
  %v693 = vadd.f32 %v691, %v692
  %v694 = vsel %vm85, %v619, 0.0
  %v695 = vadd.f32 %v693, %v694
  %v696 = vsel %vm85, %v620, 0.0
  %v697 = vadd.f32 %v695, %v696
  %v698 = vsel %vm85, %v621, 0.0
  %v699 = vadd.f32 %v697, %v698
  %v700 = vsel %vm85, %v622, 0.0
  %v701 = vadd.f32 %v699, %v700
  %v702 = vsel %vm85, %v623, 0.0
  %v703 = vadd.f32 %v701, %v702
  %v704 = vsel %vm85, %v624, 0.0
  %v705 = vadd.f32 %v703, %v704
  %v706 = vsel %vm85, %v625, 0.0
  %v707 = vadd.f32 %v705, %v706
  %v708 = vsel %vm85, %v626, 0.0
  %v709 = vadd.f32 %v707, %v708
  %v710 = vsel %vm85, %v627, 0.0
  %v711 = vadd.f32 %v709, %v710
  %v712 = vsel %vm85, %v628, 0.0
  %v713 = vadd.f32 %v711, %v712
  %v714 = vrot.slane %v713, 4
  %v715 = vadd.f32 %v713, %v714
  %v716 = vrot.slane %v715, 2
  %v717 = vadd.f32 %v715, %v716
  %v718 = vrot.slane %v717, 1
  %v719 = vadd.f32 %v717, %v718
  %v720 = vmul.f32 %v585, 0.00295858
  %v721 = vmul.f32 %v719, 0.00295858
  %v722 = vmul.f32 %v720, %v720
  %v723 = vsub.f32 %v721, %v722
  %v724 = vmax.f32 %v723, 0.0
  %v725 = vsub.f32 %v282, %v720
  %v726 = vsub.f32 %v287, %v720
  %v727 = vsub.f32 %v292, %v720
  %v728 = vsub.f32 %v297, %v720
  %v729 = vsub.f32 %v302, %v720
  %v730 = vsub.f32 %v307, %v720
  %v731 = vsub.f32 %v312, %v720
  %v732 = vsub.f32 %v317, %v720
  %v733 = vsub.f32 %v322, %v720
  %v734 = vsub.f32 %v327, %v720
  %v735 = vsub.f32 %v332, %v720
  %v736 = vsub.f32 %v337, %v720
  %v737 = vsub.f32 %v342, %v720
  %v738 = vsub.f32 %v347, %v720
  %v739 = vsub.f32 %v352, %v720
  %v740 = vsub.f32 %v357, %v720
  %v741 = vsub.f32 %v362, %v720
  %v742 = vsub.f32 %v367, %v720
  %v743 = vsub.f32 %v372, %v720
  %v744 = vsub.f32 %v377, %v720
  %v745 = vsub.f32 %v382, %v720
  %v746 = vsub.f32 %v387, %v720
  %v747 = vsub.f32 %v392, %v720
  %v748 = vsub.f32 %v397, %v720
  %v749 = vsub.f32 %v402, %v720
  %v750 = vsub.f32 %v407, %v720
  %v751 = vsub.f32 %v412, %v720
  %v752 = vsub.f32 %v417, %v720
  %v753 = vsub.f32 %v422, %v720
  %v754 = vsub.f32 %v427, %v720
  %v755 = vsub.f32 %v432, %v720
  %v756 = vsub.f32 %v437, %v720
  %v757 = vsub.f32 %v442, %v720
  %v758 = vsub.f32 %v447, %v720
  %v759 = vsub.f32 %v452, %v720
  %v760 = vsub.f32 %v457, %v720
  %v761 = vsub.f32 %v462, %v720
  %v762 = vsub.f32 %v467, %v720
  %v763 = vsub.f32 %v472, %v720
  %v764 = vsub.f32 %v477, %v720
  %v765 = vsub.f32 %v482, %v720
  %v766 = vsub.f32 %v487, %v720
  %v767 = vsub.f32 %v492, %v720
  %v768 = vadd.f32 %v724, 1e-05
  %v769 = vrsqrt.pop %v768
  %v770 = vmul.f32 %v725, %v769
  %v771 = vmul.f32 %v726, %v769
  %v772 = vmul.f32 %v727, %v769
  %v773 = vmul.f32 %v728, %v769
  %v774 = vmul.f32 %v729, %v769
  %v775 = vmul.f32 %v730, %v769
  %v776 = vmul.f32 %v731, %v769
  %v777 = vmul.f32 %v732, %v769
  %v778 = vmul.f32 %v733, %v769
  %v779 = vmul.f32 %v734, %v769
  %v780 = vmul.f32 %v735, %v769
  %v781 = vmul.f32 %v736, %v769
  %v782 = vmul.f32 %v737, %v769
  %v783 = vmul.f32 %v738, %v769
  %v784 = vmul.f32 %v739, %v769
  %v785 = vmul.f32 %v740, %v769
  %v786 = vmul.f32 %v741, %v769
  %v787 = vmul.f32 %v742, %v769
  %v788 = vmul.f32 %v743, %v769
  %v789 = vmul.f32 %v744, %v769
  %v790 = vmul.f32 %v745, %v769
  %v791 = vmul.f32 %v746, %v769
  %v792 = vmul.f32 %v747, %v769
  %v793 = vmul.f32 %v748, %v769
  %v794 = vmul.f32 %v749, %v769
  %v795 = vmul.f32 %v750, %v769
  %v796 = vmul.f32 %v751, %v769
  %v797 = vmul.f32 %v752, %v769
  %v798 = vmul.f32 %v753, %v769
  %v799 = vmul.f32 %v754, %v769
  %v800 = vmul.f32 %v755, %v769
  %v801 = vmul.f32 %v756, %v769
  %v802 = vmul.f32 %v757, %v769
  %v803 = vmul.f32 %v758, %v769
  %v804 = vmul.f32 %v759, %v769
  %v805 = vmul.f32 %v760, %v769
  %v806 = vmul.f32 %v761, %v769
  %v807 = vmul.f32 %v762, %v769
  %v808 = vmul.f32 %v763, %v769
  %v809 = vmul.f32 %v764, %v769
  %v810 = vmul.f32 %v765, %v769
  %v811 = vmul.f32 %v766, %v769
  %v812 = vmul.f32 %v767, %v769
  %v813 = vld [vmem:[%s2] sm:$0x1]
  %v815 = vlaneseq
  %v816 = vshrl.u32 %v815, 7
  %v817 = vsub.s32 0, %v816
  %v818 = vrot.slane %v813, %v817
  %v820 = vmul.f32 %v770, %v818
  %v821 = vmul.f32 %v771, %v818
  %v822 = vmul.f32 %v772, %v818
  %v823 = vmul.f32 %v773, %v818
  %v824 = vmul.f32 %v774, %v818
  %v825 = vmul.f32 %v775, %v818
  %v826 = vmul.f32 %v776, %v818
  %v827 = vmul.f32 %v777, %v818
  %v828 = vmul.f32 %v778, %v818
  %v829 = vmul.f32 %v779, %v818
  %v830 = vmul.f32 %v780, %v818
  %v831 = vmul.f32 %v781, %v818
  %v832 = vmul.f32 %v782, %v818
  %v833 = vmul.f32 %v783, %v818
  %v834 = vmul.f32 %v784, %v818
  %v835 = vmul.f32 %v785, %v818
  %v836 = vmul.f32 %v786, %v818
  %v837 = vmul.f32 %v787, %v818
  %v838 = vmul.f32 %v788, %v818
  %v839 = vmul.f32 %v789, %v818
  %v840 = vmul.f32 %v790, %v818
  %v841 = vmul.f32 %v791, %v818
  %v842 = vmul.f32 %v792, %v818
  %v843 = vmul.f32 %v793, %v818
  %v844 = vmul.f32 %v794, %v818
  %v845 = vmul.f32 %v795, %v818
  %v846 = vmul.f32 %v796, %v818
  %v847 = vmul.f32 %v797, %v818
  %v848 = vmul.f32 %v798, %v818
  %v849 = vmul.f32 %v799, %v818
  %v850 = vmul.f32 %v800, %v818
  %v851 = vmul.f32 %v801, %v818
  %v852 = vmul.f32 %v802, %v818
  %v853 = vmul.f32 %v803, %v818
  %v854 = vmul.f32 %v804, %v818
  %v855 = vmul.f32 %v805, %v818
  %v856 = vmul.f32 %v806, %v818
  %v857 = vmul.f32 %v807, %v818
  %v858 = vmul.f32 %v808, %v818
  %v859 = vmul.f32 %v809, %v818
  %v860 = vmul.f32 %v810, %v818
  %v861 = vmul.f32 %v811, %v818
  %v862 = vmul.f32 %v812, %v818
  %v863 = vld [vmem:[%s3] sm:$0x1]
  %v865 = vlaneseq
  %v866 = vshrl.u32 %v865, 7
  %v867 = vsub.s32 0, %v866
  %v868 = vrot.slane %v863, %v867
  %v870 = vadd.f32 %v820, %v868
  %v871 = vadd.f32 %v821, %v868
  %v872 = vadd.f32 %v822, %v868
  %v873 = vadd.f32 %v823, %v868
  %v874 = vadd.f32 %v824, %v868
  %v875 = vadd.f32 %v825, %v868
  %v876 = vadd.f32 %v826, %v868
  %v877 = vadd.f32 %v827, %v868
  %v878 = vadd.f32 %v828, %v868
  %v879 = vadd.f32 %v829, %v868
  %v880 = vadd.f32 %v830, %v868
  %v881 = vadd.f32 %v831, %v868
  %v882 = vadd.f32 %v832, %v868
  %v883 = vadd.f32 %v833, %v868
  %v884 = vadd.f32 %v834, %v868
  %v885 = vadd.f32 %v835, %v868
  %v886 = vadd.f32 %v836, %v868
  %v887 = vadd.f32 %v837, %v868
  %v888 = vadd.f32 %v838, %v868
  %v889 = vadd.f32 %v839, %v868
  %v890 = vadd.f32 %v840, %v868
  %v891 = vadd.f32 %v841, %v868
  %v892 = vadd.f32 %v842, %v868
  %v893 = vadd.f32 %v843, %v868
  %v894 = vadd.f32 %v844, %v868
  %v895 = vadd.f32 %v845, %v868
  %v896 = vadd.f32 %v846, %v868
  %v897 = vadd.f32 %v847, %v868
  %v898 = vadd.f32 %v848, %v868
  %v899 = vadd.f32 %v849, %v868
  %v900 = vadd.f32 %v850, %v868
  %v901 = vadd.f32 %v851, %v868
  %v902 = vadd.f32 %v852, %v868
  %v903 = vadd.f32 %v853, %v868
  %v904 = vadd.f32 %v854, %v868
  %v905 = vadd.f32 %v855, %v868
  %v906 = vadd.f32 %v856, %v868
  %v907 = vadd.f32 %v857, %v868
  %v908 = vadd.f32 %v858, %v868
  %v909 = vadd.f32 %v859, %v868
  %v910 = vadd.f32 %v860, %v868
  %v911 = vadd.f32 %v861, %v868
  %v912 = vadd.f32 %v862, %v868
  %vm913 = vcmp.ge.f32.partialorder %v870, 0.0
  %vm914 = vcmp.ge.f32.partialorder %v871, 0.0
  %vm915 = vcmp.ge.f32.partialorder %v872, 0.0
  %vm916 = vcmp.ge.f32.partialorder %v873, 0.0
  %vm917 = vcmp.ge.f32.partialorder %v874, 0.0
  %vm918 = vcmp.ge.f32.partialorder %v875, 0.0
  %vm919 = vcmp.ge.f32.partialorder %v876, 0.0
  %vm920 = vcmp.ge.f32.partialorder %v877, 0.0
  %vm921 = vcmp.ge.f32.partialorder %v878, 0.0
  %vm922 = vcmp.ge.f32.partialorder %v879, 0.0
  %vm923 = vcmp.ge.f32.partialorder %v880, 0.0
  %vm924 = vcmp.ge.f32.partialorder %v881, 0.0
  %vm925 = vcmp.ge.f32.partialorder %v882, 0.0
  %vm926 = vcmp.ge.f32.partialorder %v883, 0.0
  %vm927 = vcmp.ge.f32.partialorder %v884, 0.0
  %vm928 = vcmp.ge.f32.partialorder %v885, 0.0
  %vm929 = vcmp.ge.f32.partialorder %v886, 0.0
  %vm930 = vcmp.ge.f32.partialorder %v887, 0.0
  %vm931 = vcmp.ge.f32.partialorder %v888, 0.0
  %vm932 = vcmp.ge.f32.partialorder %v889, 0.0
  %vm933 = vcmp.ge.f32.partialorder %v890, 0.0
  %vm934 = vcmp.ge.f32.partialorder %v891, 0.0
  %vm935 = vcmp.ge.f32.partialorder %v892, 0.0
  %vm936 = vcmp.ge.f32.partialorder %v893, 0.0
  %vm937 = vcmp.ge.f32.partialorder %v894, 0.0
  %vm938 = vcmp.ge.f32.partialorder %v895, 0.0
  %vm939 = vcmp.ge.f32.partialorder %v896, 0.0
  %vm940 = vcmp.ge.f32.partialorder %v897, 0.0
  %vm941 = vcmp.ge.f32.partialorder %v898, 0.0
  %vm942 = vcmp.ge.f32.partialorder %v899, 0.0
  %vm943 = vcmp.ge.f32.partialorder %v900, 0.0
  %vm944 = vcmp.ge.f32.partialorder %v901, 0.0
  %vm945 = vcmp.ge.f32.partialorder %v902, 0.0
  %vm946 = vcmp.ge.f32.partialorder %v903, 0.0
  %vm947 = vcmp.ge.f32.partialorder %v904, 0.0
  %vm948 = vcmp.ge.f32.partialorder %v905, 0.0
  %vm949 = vcmp.ge.f32.partialorder %v906, 0.0
  %vm950 = vcmp.ge.f32.partialorder %v907, 0.0
  %vm951 = vcmp.ge.f32.partialorder %v908, 0.0
  %vm952 = vcmp.ge.f32.partialorder %v909, 0.0
  %vm953 = vcmp.ge.f32.partialorder %v910, 0.0
  %vm954 = vcmp.ge.f32.partialorder %v911, 0.0
  %vm955 = vcmp.ge.f32.partialorder %v912, 0.0
  %v956 = vmul.f32 %v870, 0.2
  %v957 = vmul.f32 %v871, 0.2
  %v958 = vmul.f32 %v872, 0.2
  %v959 = vmul.f32 %v873, 0.2
  %v960 = vmul.f32 %v874, 0.2
  %v961 = vmul.f32 %v875, 0.2
  %v962 = vmul.f32 %v876, 0.2
  %v963 = vmul.f32 %v877, 0.2
  %v964 = vmul.f32 %v878, 0.2
  %v965 = vmul.f32 %v879, 0.2
  %v966 = vmul.f32 %v880, 0.2
  %v967 = vmul.f32 %v881, 0.2
  %v968 = vmul.f32 %v882, 0.2
  %v969 = vmul.f32 %v883, 0.2
  %v970 = vmul.f32 %v884, 0.2
  %v971 = vmul.f32 %v885, 0.2
  %v972 = vmul.f32 %v886, 0.2
  %v973 = vmul.f32 %v887, 0.2
  %v974 = vmul.f32 %v888, 0.2
  %v975 = vmul.f32 %v889, 0.2
  %v976 = vmul.f32 %v890, 0.2
  %v977 = vmul.f32 %v891, 0.2
  %v978 = vmul.f32 %v892, 0.2
  %v979 = vmul.f32 %v893, 0.2
  %v980 = vmul.f32 %v894, 0.2
  %v981 = vmul.f32 %v895, 0.2
  %v982 = vmul.f32 %v896, 0.2
  %v983 = vmul.f32 %v897, 0.2
  %v984 = vmul.f32 %v898, 0.2
  %v985 = vmul.f32 %v899, 0.2
  %v986 = vmul.f32 %v900, 0.2
  %v987 = vmul.f32 %v901, 0.2
  %v988 = vmul.f32 %v902, 0.2
  %v989 = vmul.f32 %v903, 0.2
  %v990 = vmul.f32 %v904, 0.2
  %v991 = vmul.f32 %v905, 0.2
  %v992 = vmul.f32 %v906, 0.2
  %v993 = vmul.f32 %v907, 0.2
  %v994 = vmul.f32 %v908, 0.2
  %v995 = vmul.f32 %v909, 0.2
  %v996 = vmul.f32 %v910, 0.2
  %v997 = vmul.f32 %v911, 0.2
  %v998 = vmul.f32 %v912, 0.2
  %v999 = vsel %vm913, %v870, %v956
  %v1000 = vsel %vm914, %v871, %v957
  %v1001 = vsel %vm915, %v872, %v958
  %v1002 = vsel %vm916, %v873, %v959
  %v1003 = vsel %vm917, %v874, %v960
  %v1004 = vsel %vm918, %v875, %v961
  %v1005 = vsel %vm919, %v876, %v962
  %v1006 = vsel %vm920, %v877, %v963
  %v1007 = vsel %vm921, %v878, %v964
  %v1008 = vsel %vm922, %v879, %v965
  %v1009 = vsel %vm923, %v880, %v966
  %v1010 = vsel %vm924, %v881, %v967
  %v1011 = vsel %vm925, %v882, %v968
  %v1012 = vsel %vm926, %v883, %v969
  %v1013 = vsel %vm927, %v884, %v970
  %v1014 = vsel %vm928, %v885, %v971
  %v1015 = vsel %vm929, %v886, %v972
  %v1016 = vsel %vm930, %v887, %v973
  %v1017 = vsel %vm931, %v888, %v974
  %v1018 = vsel %vm932, %v889, %v975
  %v1019 = vsel %vm933, %v890, %v976
  %v1020 = vsel %vm934, %v891, %v977
  %v1021 = vsel %vm935, %v892, %v978
  %v1022 = vsel %vm936, %v893, %v979
  %v1023 = vsel %vm937, %v894, %v980
  %v1024 = vsel %vm938, %v895, %v981
  %v1025 = vsel %vm939, %v896, %v982
  %v1026 = vsel %vm940, %v897, %v983
  %v1027 = vsel %vm941, %v898, %v984
  %v1028 = vsel %vm942, %v899, %v985
  %v1029 = vsel %vm943, %v900, %v986
  %v1030 = vsel %vm944, %v901, %v987
  %v1031 = vsel %vm945, %v902, %v988
  %v1032 = vsel %vm946, %v903, %v989
  %v1033 = vsel %vm947, %v904, %v990
  %v1034 = vsel %vm948, %v905, %v991
  %v1035 = vsel %vm949, %v906, %v992
  %v1036 = vsel %vm950, %v907, %v993
  %v1037 = vsel %vm951, %v908, %v994
  %v1038 = vsel %vm952, %v909, %v995
  %v1039 = vsel %vm953, %v910, %v996
  %v1040 = vsel %vm954, %v911, %v997
  %v1041 = vsel %vm955, %v912, %v998
  %v1042 = vld [vmem:[%s4] sm:$0xff]
  %v1043 = vld [vmem:[%s4 + $0x8] sm:$0xf]
  %v1044 = vld [vmem:[%s4 + $0xc] sm:$0xff]
  %v1045 = vld [vmem:[%s4 + $0x14] sm:$0xf]
  %v1046 = vld [vmem:[%s4 + $0x18] sm:$0xff]
  %v1047 = vld [vmem:[%s4 + $0x20] sm:$0xf]
  %v1048 = vld [vmem:[%s4 + $0x24] sm:$0xff]
  %v1049 = vld [vmem:[%s4 + $0x2c] sm:$0xf]
  %v1050 = vld [vmem:[%s4 + $0x30] sm:$0xff]
  %v1051 = vld [vmem:[%s4 + $0x38] sm:$0xf]
  %v1052 = vld [vmem:[%s4 + $0x3c] sm:$0xff]
  %v1053 = vld [vmem:[%s4 + $0x44] sm:$0xf]
  %v1054 = vld [vmem:[%s4 + $0x48] sm:$0xff]
  %v1055 = vld [vmem:[%s4 + $0x50] sm:$0xf]
  %v1056 = vunpack.c.l.bf16 %v1042
  %v1057 = vunpack.c.h.bf16 %v1042
  %v1058 = vunpack.c.l.bf16 %v1043
  %v1059 = vunpack.c.l.bf16 %v1044
  %v1060 = vunpack.c.h.bf16 %v1044
  %v1061 = vunpack.c.l.bf16 %v1045
  %v1062 = vunpack.c.l.bf16 %v1046
  %v1063 = vunpack.c.h.bf16 %v1046
  %v1064 = vunpack.c.l.bf16 %v1047
  %v1065 = vunpack.c.l.bf16 %v1048
  %v1066 = vunpack.c.h.bf16 %v1048
  %v1067 = vunpack.c.l.bf16 %v1049
  %v1068 = vunpack.c.l.bf16 %v1050
  %v1069 = vunpack.c.h.bf16 %v1050
  %v1070 = vunpack.c.l.bf16 %v1051
  %v1071 = vunpack.c.l.bf16 %v1052
  %v1072 = vunpack.c.h.bf16 %v1052
  %v1073 = vunpack.c.l.bf16 %v1053
  %v1074 = vunpack.c.l.bf16 %v1054
  %v1075 = vunpack.c.h.bf16 %v1054
  %v1076 = vunpack.c.l.bf16 %v1055
  %vm1077 = vcmask 719872
  %v1079 = vsel %vm1077, %v1058, 0
  %v1082 = vsel %vm1077, %v1061, 0
  %v1085 = vsel %vm1077, %v1064, 0
  %v1088 = vsel %vm1077, %v1067, 0
  %v1091 = vsel %vm1077, %v1070, 0
  %v1094 = vsel %vm1077, %v1073, 0
  %v1097 = vsel %vm1077, %v1076, 0
  %1099 = vmatprep.subr.mxu0 0.0
  %1100 = vmatpush1.msra.mxu0 %v999
  %1101 = vmatprep.subr.mxu0 0.0
  %1102 = vmatpush1.msra.mxu0 %v1000
  %1103 = vmatprep.subr.mxu0 0.0
  %1104 = vmatpush1.msra.mxu0 %v1001
  %1105 = vmatprep.subr.mxu0 0.0
  %1106 = vmatpush1.msra.mxu0 %v1002
  %1107 = vmatprep.subr.mxu0 0.0
  %1108 = vmatpush1.msra.mxu0 %v1003
  %1109 = vmatprep.subr.mxu0 0.0
  %1110 = vmatpush1.msra.mxu0 %v1004
  %1111 = vmatprep.subr.mxu0 0.0
  %1112 = vmatpush1.msra.mxu0 %v1005
  %1113 = vmatprep.subr.mxu0 0.0
  %1114 = vmatpush1.msra.mxu0 %v1006
  %1115 = vmatprep.subr.mxu0 0.0
  %1116 = vmatpush1.msra.mxu0 %v1007
  %1117 = vmatprep.subr.mxu0 0.0
  %1118 = vmatpush1.msra.mxu0 %v1008
  %1119 = vmatprep.subr.mxu0 0.0
  %1120 = vmatpush1.msra.mxu0 %v1009
  %1121 = vmatprep.subr.mxu0 0.0
  %1122 = vmatpush1.msra.mxu0 %v1010
  %1123 = vmatprep.subr.mxu0 0.0
  %1124 = vmatpush1.msra.mxu0 %v1011
  %1125 = vmatprep.subr.mxu0 0.0
  %1126 = vmatpush1.msra.mxu0 %v1012
  %1127 = vmatprep.subr.mxu0 0.0
  %1128 = vmatpush1.msra.mxu0 %v1013
  %1129 = vmatprep.subr.mxu0 0.0
  %1130 = vmatpush1.msra.mxu0 %v1014
  %1131 = vmatprep.subr.mxu0 0.0
  %1132 = vmatpush1.msra.mxu0 %v1015
  %1133 = vmatprep.subr.mxu0 0.0
  %1134 = vmatpush1.msra.mxu0 %v1016
  %1135 = vmatprep.subr.mxu0 0.0
  %1136 = vmatpush1.msra.mxu0 %v1017
  %1137 = vmatprep.subr.mxu0 0.0
  %1138 = vmatpush1.msra.mxu0 %v1018
  %1139 = vmatprep.subr.mxu0 0.0
  %1140 = vmatpush1.msra.mxu0 %v1019
  %1141 = vmatprep.subr.mxu0 0.0
  %1142 = vmatpush1.msra.mxu0 %v1020
  %1143 = vmatprep.subr.mxu0 0.0
  %1144 = vmatpush1.msra.mxu0 %v1021
  %1145 = vmatprep.subr.mxu0 0.0
  %1146 = vmatpush1.msra.mxu0 %v1022
  %1147 = vmatprep.subr.mxu0 0.0
  %1148 = vmatpush1.msra.mxu0 %v1023
  %1149 = vmatprep.subr.mxu0 0.0
  %1150 = vmatpush1.msra.mxu0 %v1024
  %1151 = vmatprep.subr.mxu0 0.0
  %1152 = vmatpush1.msra.mxu0 %v1025
  %1153 = vmatprep.subr.mxu0 0.0
  %1154 = vmatpush1.msra.mxu0 %v1026
  %1155 = vmatprep.subr.mxu0 0.0
  %1156 = vmatpush1.msra.mxu0 %v1027
  %1157 = vmatprep.subr.mxu0 0.0
  %1158 = vmatpush1.msra.mxu0 %v1028
  %1159 = vmatprep.subr.mxu0 0.0
  %1160 = vmatpush1.msra.mxu0 %v1029
  %1161 = vmatprep.subr.mxu0 0.0
  %1162 = vmatpush1.msra.mxu0 %v1030
  %1163 = vmatprep.mubr.f32.mxu0 %v1057
  %1164 = vmatmul.mubr.f32.gmra.mrb[0].mxu0 %v1056
  %v1165 = vpop.f32.mrb[0].mxu0
  %v1166 = vadd.f32 0.0, %v1165
  %v1167 = vpop.f32.mrb[0].mxu0
  %1168 = vmatprep.mubr.f32.mxu0 %v1060
  %1169 = vmatmul.mubr.f32.gmra.mrb[0].mxu0 %v1059
  %v1170 = vpop.f32.mrb[0].mxu0
  %v1171 = vadd.f32 0.0, %v1170
  %v1172 = vpop.f32.mrb[0].mxu0
  %1173 = vmatprep.mubr.f32.mxu0 %v1063
  %1174 = vmatmul.mubr.f32.gmra.mrb[0].mxu0 %v1062
  %v1175 = vpop.f32.mrb[0].mxu0
  %v1176 = vadd.f32 0.0, %v1175
  %v1177 = vpop.f32.mrb[0].mxu0
  %1178 = vmatprep.mubr.f32.mxu0 %v1066
  %1179 = vmatmul.mubr.f32.gmra.mrb[0].mxu0 %v1065
  %v1180 = vpop.f32.mrb[0].mxu0
  %v1181 = vadd.f32 0.0, %v1180
  %v1182 = vpop.f32.mrb[0].mxu0
  %1183 = vmatprep.mubr.f32.mxu0 %v1069
  %1184 = vmatmul.mubr.f32.gmra.mrb[0].mxu0 %v1068
  %v1185 = vpop.f32.mrb[0].mxu0
  %v1186 = vadd.f32 0.0, %v1185
  %v1187 = vpop.f32.mrb[0].mxu0
  %1188 = vmatprep.mubr.f32.mxu0 %v1072
  %1189 = vmatmul.mubr.f32.gmra.mrb[0].mxu0 %v1071
  %v1190 = vpop.f32.mrb[0].mxu0
  %v1191 = vadd.f32 0.0, %v1190
  %v1192 = vpop.f32.mrb[0].mxu0
  %1193 = vmatprep.mubr.f32.mxu0 %v1075
  %1194 = vmatmul.mubr.f32.gmra.mrb[0].mxu0 %v1074
  %v1195 = vpop.f32.mrb[0].mxu0
  %v1196 = vadd.f32 0.0, %v1195
  %v1197 = vpop.f32.mrb[0].mxu0
  %1198 = vdwg.mxu0
  %1199 = vmatprep.subr.mxu0 0.0
  %1200 = vmatpush1.msra.mxu0 %v1031
  %1201 = vmatprep.subr.mxu0 0.0
  %1202 = vmatpush1.msra.mxu0 %v1032
  %1203 = vmatprep.subr.mxu0 0.0
  %1204 = vmatpush1.msra.mxu0 %v1033
  %1205 = vmatprep.subr.mxu0 0.0
  %1206 = vmatpush1.msra.mxu0 %v1034
  %1207 = vmatprep.subr.mxu0 0.0
  %1208 = vmatpush1.msra.mxu0 %v1035
  %1209 = vmatprep.subr.mxu0 0.0
  %1210 = vmatpush1.msra.mxu0 %v1036
  %1211 = vmatprep.subr.mxu0 0.0
  %1212 = vmatpush1.msra.mxu0 %v1037
  %1213 = vmatprep.subr.mxu0 0.0
  %1214 = vmatpush1.msra.mxu0 %v1038
  %1215 = vmatprep.subr.mxu0 0.0
  %1216 = vmatpush1.msra.mxu0 %v1039
  %1217 = vmatprep.subr.mxu0 0.0
  %1218 = vmatpush1.msra.mxu0 %v1040
  %1219 = vmatprep.subr.mxu0 0.0
  %1220 = vmatpush1.msra.mxu0 %v1041
  %1221 = vmatprep.subr.mxu0 0.0
  %1222 = vmatpush1.msra.mxu0 0.0
  %1223 = vmatprep.subr.mxu0 0.0
  %1224 = vmatpush1.msra.mxu0 0.0
  %1225 = vmatprep.subr.mxu0 0.0
  %1226 = vmatpush1.msra.mxu0 0.0
  %1227 = vmatprep.subr.mxu0 0.0
  %1228 = vmatpush1.msra.mxu0 0.0
  %1229 = vmatprep.subr.mxu0 0.0
  %1230 = vmatpush1.msra.mxu0 0.0
  %1231 = vmatprep.subr.mxu0 0.0
  %1232 = vmatpush1.msra.mxu0 0.0
  %1233 = vmatprep.subr.mxu0 0.0
  %1234 = vmatpush1.msra.mxu0 0.0
  %1235 = vmatprep.subr.mxu0 0.0
  %1236 = vmatpush1.msra.mxu0 0.0
  %1237 = vmatprep.subr.mxu0 0.0
  %1238 = vmatpush1.msra.mxu0 0.0
  %1239 = vmatprep.subr.mxu0 0.0
  %1240 = vmatpush1.msra.mxu0 0.0
  %1241 = vmatprep.subr.mxu0 0.0
  %1242 = vmatpush1.msra.mxu0 0.0
  %1243 = vmatprep.subr.mxu0 0.0
  %1244 = vmatpush1.msra.mxu0 0.0
  %1245 = vmatprep.subr.mxu0 0.0
  %1246 = vmatpush1.msra.mxu0 0.0
  %1247 = vmatprep.subr.mxu0 0.0
  %1248 = vmatpush1.msra.mxu0 0.0
  %1249 = vmatprep.subr.mxu0 0.0
  %1250 = vmatpush1.msra.mxu0 0.0
  %1251 = vmatprep.subr.mxu0 0.0
  %1252 = vmatpush1.msra.mxu0 0.0
  %1253 = vmatprep.subr.mxu0 0.0
  %1254 = vmatpush1.msra.mxu0 0.0
  %1255 = vmatprep.subr.mxu0 0.0
  %1256 = vmatpush1.msra.mxu0 0.0
  %1257 = vmatprep.subr.mxu0 0.0
  %1258 = vmatpush1.msra.mxu0 0.0
  %1259 = vmatprep.subr.mxu0 0.0
  %1260 = vmatpush1.msra.mxu0 0.0
  %1261 = vmatprep.subr.mxu0 0.0
  %1262 = vmatpush1.msra.mxu0 0.0
  %1263 = vmatprep.mubr.f32.mxu0 0.0
  %1264 = vmatmul.mubr.f32.gmra.mrb[0].mxu0 %v1079
  %v1265 = vpop.f32.mrb[0].mxu0
  %v1266 = vadd.f32 %v1166, %v1265
  %v1267 = vpop.f32.mrb[0].mxu0
  %1268 = vmatprep.mubr.f32.mxu0 0.0
  %1269 = vmatmul.mubr.f32.gmra.mrb[0].mxu0 %v1082
  %v1270 = vpop.f32.mrb[0].mxu0
  %v1271 = vadd.f32 %v1171, %v1270
  %v1272 = vpop.f32.mrb[0].mxu0
  %1273 = vmatprep.mubr.f32.mxu0 0.0
  %1274 = vmatmul.mubr.f32.gmra.mrb[0].mxu0 %v1085
  %v1275 = vpop.f32.mrb[0].mxu0
  %v1276 = vadd.f32 %v1176, %v1275
  %v1277 = vpop.f32.mrb[0].mxu0
  %1278 = vmatprep.mubr.f32.mxu0 0.0
  %1279 = vmatmul.mubr.f32.gmra.mrb[0].mxu0 %v1088
  %v1280 = vpop.f32.mrb[0].mxu0
  %v1281 = vadd.f32 %v1181, %v1280
  %v1282 = vpop.f32.mrb[0].mxu0
  %1283 = vmatprep.mubr.f32.mxu0 0.0
  %1284 = vmatmul.mubr.f32.gmra.mrb[0].mxu0 %v1091
  %v1285 = vpop.f32.mrb[0].mxu0
  %v1286 = vadd.f32 %v1186, %v1285
  %v1287 = vpop.f32.mrb[0].mxu0
  %1288 = vmatprep.mubr.f32.mxu0 0.0
  %1289 = vmatmul.mubr.f32.gmra.mrb[0].mxu0 %v1094
  %v1290 = vpop.f32.mrb[0].mxu0
  %v1291 = vadd.f32 %v1191, %v1290
  %v1292 = vpop.f32.mrb[0].mxu0
  %1293 = vmatprep.mubr.f32.mxu0 0.0
  %1294 = vmatmul.mubr.f32.gmra.mrb[0].mxu0 %v1097
  %v1295 = vpop.f32.mrb[0].mxu0
  %v1296 = vadd.f32 %v1196, %v1295
  %v1297 = vpop.f32.mrb[0].mxu0
  %1298 = vdwg.mxu0
  %v1299 = vld [vmem:[%s5] sm:$0xff]
  %v1300 = vld [vmem:[%s5 + $0x8] sm:$0xff]
  %s1301 = scalar_lea.vmem %s4, 84
  %v1302 = vld [vmem:[%s1301] sm:$0xff]
  %v1303 = vld [vmem:[%s1301 + $0x8] sm:$0xf]
  %v1304 = vld [vmem:[%s1301 + $0xc] sm:$0xff]
  %v1305 = vld [vmem:[%s1301 + $0x14] sm:$0xf]
  %v1306 = vld [vmem:[%s1301 + $0x18] sm:$0xff]
  %v1307 = vld [vmem:[%s1301 + $0x20] sm:$0xf]
  %v1308 = vld [vmem:[%s1301 + $0x24] sm:$0xff]
  %v1309 = vld [vmem:[%s1301 + $0x2c] sm:$0xf]
  %v1310 = vld [vmem:[%s1301 + $0x30] sm:$0xff]
  %v1311 = vld [vmem:[%s1301 + $0x38] sm:$0xf]
  %v1312 = vld [vmem:[%s1301 + $0x3c] sm:$0xff]
  %v1313 = vld [vmem:[%s1301 + $0x44] sm:$0xf]
  %v1314 = vld [vmem:[%s1301 + $0x48] sm:$0xff]
  %v1315 = vld [vmem:[%s1301 + $0x50] sm:$0xf]
  %v1316 = vunpack.c.l.bf16 %v1302
  %v1317 = vunpack.c.h.bf16 %v1302
  %v1318 = vunpack.c.l.bf16 %v1303
  %v1319 = vunpack.c.l.bf16 %v1304
  %v1320 = vunpack.c.h.bf16 %v1304
  %v1321 = vunpack.c.l.bf16 %v1305
  %v1322 = vunpack.c.l.bf16 %v1306
  %v1323 = vunpack.c.h.bf16 %v1306
  %v1324 = vunpack.c.l.bf16 %v1307
  %v1325 = vunpack.c.l.bf16 %v1308
  %v1326 = vunpack.c.h.bf16 %v1308
  %v1327 = vunpack.c.l.bf16 %v1309
  %v1328 = vunpack.c.l.bf16 %v1310
  %v1329 = vunpack.c.h.bf16 %v1310
  %v1330 = vunpack.c.l.bf16 %v1311
  %v1331 = vunpack.c.l.bf16 %v1312
  %v1332 = vunpack.c.h.bf16 %v1312
  %v1333 = vunpack.c.l.bf16 %v1313
  %v1334 = vunpack.c.l.bf16 %v1314
  %v1335 = vunpack.c.h.bf16 %v1314
  %v1336 = vunpack.c.l.bf16 %v1315
  %v1338 = vsel %vm1077, %v1318, 0
  %v1341 = vsel %vm1077, %v1321, 0
  %v1344 = vsel %vm1077, %v1324, 0
  %v1347 = vsel %vm1077, %v1327, 0
  %v1350 = vsel %vm1077, %v1330, 0
  %v1353 = vsel %vm1077, %v1333, 0
  %v1356 = vsel %vm1077, %v1336, 0
  %1358 = vmatprep.subr.mxu0 0.0
  %1359 = vmatpush1.msra.mxu0 %v999
  %1360 = vmatprep.subr.mxu0 0.0
  %1361 = vmatpush1.msra.mxu0 %v1000
  %1362 = vmatprep.subr.mxu0 0.0
  %1363 = vmatpush1.msra.mxu0 %v1001
  %1364 = vmatprep.subr.mxu0 0.0
  %1365 = vmatpush1.msra.mxu0 %v1002
  %1366 = vmatprep.subr.mxu0 0.0
  %1367 = vmatpush1.msra.mxu0 %v1003
  %1368 = vmatprep.subr.mxu0 0.0
  %1369 = vmatpush1.msra.mxu0 %v1004
  %1370 = vmatprep.subr.mxu0 0.0
  %1371 = vmatpush1.msra.mxu0 %v1005
  %1372 = vmatprep.subr.mxu0 0.0
  %1373 = vmatpush1.msra.mxu0 %v1006
  %1374 = vmatprep.subr.mxu0 0.0
  %1375 = vmatpush1.msra.mxu0 %v1007
  %1376 = vmatprep.subr.mxu0 0.0
  %1377 = vmatpush1.msra.mxu0 %v1008
  %1378 = vmatprep.subr.mxu0 0.0
  %1379 = vmatpush1.msra.mxu0 %v1009
  %1380 = vmatprep.subr.mxu0 0.0
  %1381 = vmatpush1.msra.mxu0 %v1010
  %1382 = vmatprep.subr.mxu0 0.0
  %1383 = vmatpush1.msra.mxu0 %v1011
  %1384 = vmatprep.subr.mxu0 0.0
  %1385 = vmatpush1.msra.mxu0 %v1012
  %1386 = vmatprep.subr.mxu0 0.0
  %1387 = vmatpush1.msra.mxu0 %v1013
  %1388 = vmatprep.subr.mxu0 0.0
  %1389 = vmatpush1.msra.mxu0 %v1014
  %1390 = vmatprep.subr.mxu0 0.0
  %1391 = vmatpush1.msra.mxu0 %v1015
  %1392 = vmatprep.subr.mxu0 0.0
  %1393 = vmatpush1.msra.mxu0 %v1016
  %1394 = vmatprep.subr.mxu0 0.0
  %1395 = vmatpush1.msra.mxu0 %v1017
  %1396 = vmatprep.subr.mxu0 0.0
  %1397 = vmatpush1.msra.mxu0 %v1018
  %1398 = vmatprep.subr.mxu0 0.0
  %1399 = vmatpush1.msra.mxu0 %v1019
  %1400 = vmatprep.subr.mxu0 0.0
  %1401 = vmatpush1.msra.mxu0 %v1020
  %1402 = vmatprep.subr.mxu0 0.0
  %1403 = vmatpush1.msra.mxu0 %v1021
  %1404 = vmatprep.subr.mxu0 0.0
  %1405 = vmatpush1.msra.mxu0 %v1022
  %1406 = vmatprep.subr.mxu0 0.0
  %1407 = vmatpush1.msra.mxu0 %v1023
  %1408 = vmatprep.subr.mxu0 0.0
  %1409 = vmatpush1.msra.mxu0 %v1024
  %1410 = vmatprep.subr.mxu0 0.0
  %1411 = vmatpush1.msra.mxu0 %v1025
  %1412 = vmatprep.subr.mxu0 0.0
  %1413 = vmatpush1.msra.mxu0 %v1026
  %1414 = vmatprep.subr.mxu0 0.0
  %1415 = vmatpush1.msra.mxu0 %v1027
  %1416 = vmatprep.subr.mxu0 0.0
  %1417 = vmatpush1.msra.mxu0 %v1028
  %1418 = vmatprep.subr.mxu0 0.0
  %1419 = vmatpush1.msra.mxu0 %v1029
  %1420 = vmatprep.subr.mxu0 0.0
  %1421 = vmatpush1.msra.mxu0 %v1030
  %1422 = vmatprep.mubr.f32.mxu0 %v1317
  %1423 = vmatmul.mubr.f32.gmra.mrb[0].mxu0 %v1316
  %v1424 = vpop.f32.mrb[0].mxu0
  %v1425 = vadd.f32 0.0, %v1424
  %v1426 = vpop.f32.mrb[0].mxu0
  %1427 = vmatprep.mubr.f32.mxu0 %v1320
  %1428 = vmatmul.mubr.f32.gmra.mrb[0].mxu0 %v1319
  %v1429 = vpop.f32.mrb[0].mxu0
  %v1430 = vadd.f32 0.0, %v1429
  %v1431 = vpop.f32.mrb[0].mxu0
  %1432 = vmatprep.mubr.f32.mxu0 %v1323
  %1433 = vmatmul.mubr.f32.gmra.mrb[0].mxu0 %v1322
  %v1434 = vpop.f32.mrb[0].mxu0
  %v1435 = vadd.f32 0.0, %v1434
  %v1436 = vpop.f32.mrb[0].mxu0
  %1437 = vmatprep.mubr.f32.mxu0 %v1326
  %1438 = vmatmul.mubr.f32.gmra.mrb[0].mxu0 %v1325
  %v1439 = vpop.f32.mrb[0].mxu0
  %v1440 = vadd.f32 0.0, %v1439
  %v1441 = vpop.f32.mrb[0].mxu0
  %1442 = vmatprep.mubr.f32.mxu0 %v1329
  %1443 = vmatmul.mubr.f32.gmra.mrb[0].mxu0 %v1328
  %v1444 = vpop.f32.mrb[0].mxu0
  %v1445 = vadd.f32 0.0, %v1444
  %v1446 = vpop.f32.mrb[0].mxu0
  %1447 = vmatprep.mubr.f32.mxu0 %v1332
  %1448 = vmatmul.mubr.f32.gmra.mrb[0].mxu0 %v1331
  %v1449 = vpop.f32.mrb[0].mxu0
  %v1450 = vadd.f32 0.0, %v1449
  %v1451 = vpop.f32.mrb[0].mxu0
  %1452 = vmatprep.mubr.f32.mxu0 %v1335
  %1453 = vmatmul.mubr.f32.gmra.mrb[0].mxu0 %v1334
  %v1454 = vpop.f32.mrb[0].mxu0
  %v1455 = vadd.f32 0.0, %v1454
  %v1456 = vpop.f32.mrb[0].mxu0
  %1457 = vdwg.mxu0
  %1458 = vmatprep.subr.mxu0 0.0
  %1459 = vmatpush1.msra.mxu0 %v1031
  %1460 = vmatprep.subr.mxu0 0.0
  %1461 = vmatpush1.msra.mxu0 %v1032
  %1462 = vmatprep.subr.mxu0 0.0
  %1463 = vmatpush1.msra.mxu0 %v1033
  %1464 = vmatprep.subr.mxu0 0.0
  %1465 = vmatpush1.msra.mxu0 %v1034
  %1466 = vmatprep.subr.mxu0 0.0
  %1467 = vmatpush1.msra.mxu0 %v1035
  %1468 = vmatprep.subr.mxu0 0.0
  %1469 = vmatpush1.msra.mxu0 %v1036
  %1470 = vmatprep.subr.mxu0 0.0
  %1471 = vmatpush1.msra.mxu0 %v1037
  %1472 = vmatprep.subr.mxu0 0.0
  %1473 = vmatpush1.msra.mxu0 %v1038
  %1474 = vmatprep.subr.mxu0 0.0
  %1475 = vmatpush1.msra.mxu0 %v1039
  %1476 = vmatprep.subr.mxu0 0.0
  %1477 = vmatpush1.msra.mxu0 %v1040
  %1478 = vmatprep.subr.mxu0 0.0
  %1479 = vmatpush1.msra.mxu0 %v1041
  %1480 = vmatprep.subr.mxu0 0.0
  %1481 = vmatpush1.msra.mxu0 0.0
  %1482 = vmatprep.subr.mxu0 0.0
  %1483 = vmatpush1.msra.mxu0 0.0
  %1484 = vmatprep.subr.mxu0 0.0
  %1485 = vmatpush1.msra.mxu0 0.0
  %1486 = vmatprep.subr.mxu0 0.0
  %1487 = vmatpush1.msra.mxu0 0.0
  %1488 = vmatprep.subr.mxu0 0.0
  %1489 = vmatpush1.msra.mxu0 0.0
  %1490 = vmatprep.subr.mxu0 0.0
  %1491 = vmatpush1.msra.mxu0 0.0
  %1492 = vmatprep.subr.mxu0 0.0
  %1493 = vmatpush1.msra.mxu0 0.0
  %1494 = vmatprep.subr.mxu0 0.0
  %1495 = vmatpush1.msra.mxu0 0.0
  %1496 = vmatprep.subr.mxu0 0.0
  %1497 = vmatpush1.msra.mxu0 0.0
  %1498 = vmatprep.subr.mxu0 0.0
  %1499 = vmatpush1.msra.mxu0 0.0
  %1500 = vmatprep.subr.mxu0 0.0
  %1501 = vmatpush1.msra.mxu0 0.0
  %1502 = vmatprep.subr.mxu0 0.0
  %1503 = vmatpush1.msra.mxu0 0.0
  %1504 = vmatprep.subr.mxu0 0.0
  %1505 = vmatpush1.msra.mxu0 0.0
  %1506 = vmatprep.subr.mxu0 0.0
  %1507 = vmatpush1.msra.mxu0 0.0
  %1508 = vmatprep.subr.mxu0 0.0
  %1509 = vmatpush1.msra.mxu0 0.0
  %1510 = vmatprep.subr.mxu0 0.0
  %1511 = vmatpush1.msra.mxu0 0.0
  %1512 = vmatprep.subr.mxu0 0.0
  %1513 = vmatpush1.msra.mxu0 0.0
  %1514 = vmatprep.subr.mxu0 0.0
  %1515 = vmatpush1.msra.mxu0 0.0
  %1516 = vmatprep.subr.mxu0 0.0
  %1517 = vmatpush1.msra.mxu0 0.0
  %1518 = vmatprep.subr.mxu0 0.0
  %1519 = vmatpush1.msra.mxu0 0.0
  %1520 = vmatprep.subr.mxu0 0.0
  %1521 = vmatpush1.msra.mxu0 0.0
  %1522 = vmatprep.mubr.f32.mxu0 0.0
  %1523 = vmatmul.mubr.f32.gmra.mrb[0].mxu0 %v1338
  %v1524 = vpop.f32.mrb[0].mxu0
  %v1525 = vadd.f32 %v1425, %v1524
  %v1526 = vpop.f32.mrb[0].mxu0
  %1527 = vmatprep.mubr.f32.mxu0 0.0
  %1528 = vmatmul.mubr.f32.gmra.mrb[0].mxu0 %v1341
  %v1529 = vpop.f32.mrb[0].mxu0
  %v1530 = vadd.f32 %v1430, %v1529
  %v1531 = vpop.f32.mrb[0].mxu0
  %1532 = vmatprep.mubr.f32.mxu0 0.0
  %1533 = vmatmul.mubr.f32.gmra.mrb[0].mxu0 %v1344
  %v1534 = vpop.f32.mrb[0].mxu0
  %v1535 = vadd.f32 %v1435, %v1534
  %v1536 = vpop.f32.mrb[0].mxu0
  %1537 = vmatprep.mubr.f32.mxu0 0.0
  %1538 = vmatmul.mubr.f32.gmra.mrb[0].mxu0 %v1347
  %v1539 = vpop.f32.mrb[0].mxu0
  %v1540 = vadd.f32 %v1440, %v1539
  %v1541 = vpop.f32.mrb[0].mxu0
  %1542 = vmatprep.mubr.f32.mxu0 0.0
  %1543 = vmatmul.mubr.f32.gmra.mrb[0].mxu0 %v1350
  %v1544 = vpop.f32.mrb[0].mxu0
  %v1545 = vadd.f32 %v1445, %v1544
  %v1546 = vpop.f32.mrb[0].mxu0
  %1547 = vmatprep.mubr.f32.mxu0 0.0
  %1548 = vmatmul.mubr.f32.gmra.mrb[0].mxu0 %v1353
  %v1549 = vpop.f32.mrb[0].mxu0
  %v1550 = vadd.f32 %v1450, %v1549
  %v1551 = vpop.f32.mrb[0].mxu0
  %1552 = vmatprep.mubr.f32.mxu0 0.0
  %1553 = vmatmul.mubr.f32.gmra.mrb[0].mxu0 %v1356
  %v1554 = vpop.f32.mrb[0].mxu0
  %v1555 = vadd.f32 %v1455, %v1554
  %v1556 = vpop.f32.mrb[0].mxu0
  %1557 = vdwg.mxu0
  %s1558 = scalar_lea.vmem %s5, 16
  %v1559 = vld [vmem:[%s1558] sm:$0xff]
  %v1560 = vld [vmem:[%s1558 + $0x8] sm:$0xff]
  %v1562 = vsel %vm85, %v1525, 0
  %v1565 = vsel %vm85, %v1530, 0
  %v1568 = vsel %vm85, %v1535, 0
  %v1571 = vsel %vm85, %v1540, 0
  %v1574 = vsel %vm85, %v1545, 0
  %v1577 = vsel %vm85, %v1550, 0
  %v1580 = vsel %vm85, %v1555, 0
  %1582 = vmatprep.subr.mxu0 0.0
  %1583 = vmatpush1.msra.mxu0 %v1559
  %1584 = vmatprep.subr.mxu0 0.0
  %1585 = vmatpush1.msra.mxu0 %v1560
  %1586 = vmatprep.subr.mxu0 0.0
  %1587 = vmatpush1.msra.mxu0 0.0
  %1588 = vmatprep.subr.mxu0 0.0
  %1589 = vmatpush1.msra.mxu0 0.0
  %1590 = vmatprep.subr.mxu0 0.0
  %1591 = vmatpush1.msra.mxu0 0.0
  %1592 = vmatprep.subr.mxu0 0.0
  %1593 = vmatpush1.msra.mxu0 0.0
  %1594 = vmatprep.subr.mxu0 0.0
  %1595 = vmatpush1.msra.mxu0 0.0
  %1596 = vmatprep.subr.mxu0 0.0
  %1597 = vmatpush1.msra.mxu0 0.0
  %1598 = vmatprep.subr.mxu0 0.0
  %1599 = vmatpush1.msra.mxu0 0.0
  %1600 = vmatprep.subr.mxu0 0.0
  %1601 = vmatpush1.msra.mxu0 0.0
  %1602 = vmatprep.subr.mxu0 0.0
  %1603 = vmatpush1.msra.mxu0 0.0
  %1604 = vmatprep.subr.mxu0 0.0
  %1605 = vmatpush1.msra.mxu0 0.0
  %1606 = vmatprep.subr.mxu0 0.0
  %1607 = vmatpush1.msra.mxu0 0.0
  %1608 = vmatprep.subr.mxu0 0.0
  %1609 = vmatpush1.msra.mxu0 0.0
  %1610 = vmatprep.subr.mxu0 0.0
  %1611 = vmatpush1.msra.mxu0 0.0
  %1612 = vmatprep.subr.mxu0 0.0
  %1613 = vmatpush1.msra.mxu0 0.0
  %1614 = vmatprep.subr.mxu0 0.0
  %1615 = vmatpush1.msra.mxu0 0.0
  %1616 = vmatprep.subr.mxu0 0.0
  %1617 = vmatpush1.msra.mxu0 0.0
  %1618 = vmatprep.subr.mxu0 0.0
  %1619 = vmatpush1.msra.mxu0 0.0
  %1620 = vmatprep.subr.mxu0 0.0
  %1621 = vmatpush1.msra.mxu0 0.0
  %1622 = vmatprep.subr.mxu0 0.0
  %1623 = vmatpush1.msra.mxu0 0.0
  %1624 = vmatprep.subr.mxu0 0.0
  %1625 = vmatpush1.msra.mxu0 0.0
  %1626 = vmatprep.subr.mxu0 0.0
  %1627 = vmatpush1.msra.mxu0 0.0
  %1628 = vmatprep.subr.mxu0 0.0
  %1629 = vmatpush1.msra.mxu0 0.0
  %1630 = vmatprep.subr.mxu0 0.0
  %1631 = vmatpush1.msra.mxu0 0.0
  %1632 = vmatprep.subr.mxu0 0.0
  %1633 = vmatpush1.msra.mxu0 0.0
  %1634 = vmatprep.subr.mxu0 0.0
  %1635 = vmatpush1.msra.mxu0 0.0
  %1636 = vmatprep.subr.mxu0 0.0
  %1637 = vmatpush1.msra.mxu0 0.0
  %1638 = vmatprep.subr.mxu0 0.0
  %1639 = vmatpush1.msra.mxu0 0.0
  %1640 = vmatprep.subr.mxu0 0.0
  %1641 = vmatpush1.msra.mxu0 0.0
  %1642 = vmatprep.subr.mxu0 0.0
  %1643 = vmatpush1.msra.mxu0 0.0
  %1644 = vmatprep.subr.mxu0 0.0
  %1645 = vmatpush1.msra.mxu0 0.0
  %1646 = vmatprep.mubr.f32.mxu0 0.0
  %1647 = vmatmul.mubr.f32.gmra.mrb[0].mxu0 %v1562
  %v1648 = vpop.f32.mrb[0].mxu0
  %v1649 = vadd.f32 0.0, %v1648
  %v1650 = vpop.f32.mrb[0].mxu0
  %1651 = vmatprep.mubr.f32.mxu0 0.0
  %1652 = vmatmul.mubr.f32.gmra.mrb[0].mxu0 %v1565
  %v1653 = vpop.f32.mrb[0].mxu0
  %v1654 = vadd.f32 0.0, %v1653
  %v1655 = vpop.f32.mrb[0].mxu0
  %1656 = vmatprep.mubr.f32.mxu0 0.0
  %1657 = vmatmul.mubr.f32.gmra.mrb[0].mxu0 %v1568
  %v1658 = vpop.f32.mrb[0].mxu0
  %v1659 = vadd.f32 0.0, %v1658
  %v1660 = vpop.f32.mrb[0].mxu0
  %1661 = vmatprep.mubr.f32.mxu0 0.0
  %1662 = vmatmul.mubr.f32.gmra.mrb[0].mxu0 %v1571
  %v1663 = vpop.f32.mrb[0].mxu0
  %v1664 = vadd.f32 0.0, %v1663
  %v1665 = vpop.f32.mrb[0].mxu0
  %1666 = vmatprep.mubr.f32.mxu0 0.0
  %1667 = vmatmul.mubr.f32.gmra.mrb[0].mxu0 %v1574
  %v1668 = vpop.f32.mrb[0].mxu0
  %v1669 = vadd.f32 0.0, %v1668
  %v1670 = vpop.f32.mrb[0].mxu0
  %1671 = vmatprep.mubr.f32.mxu0 0.0
  %1672 = vmatmul.mubr.f32.gmra.mrb[0].mxu0 %v1577
  %v1673 = vpop.f32.mrb[0].mxu0
  %v1674 = vadd.f32 0.0, %v1673
  %v1675 = vpop.f32.mrb[0].mxu0
  %1676 = vmatprep.mubr.f32.mxu0 0.0
  %1677 = vmatmul.mubr.f32.gmra.mrb[0].mxu0 %v1580
  %v1678 = vpop.f32.mrb[0].mxu0
  %v1679 = vadd.f32 0.0, %v1678
  %v1680 = vpop.f32.mrb[0].mxu0
  %1681 = vdwg.mxu0
  %v1683 = vsel %vm85, %v1266, 0
  %v1686 = vsel %vm85, %v1271, 0
  %v1689 = vsel %vm85, %v1276, 0
  %v1692 = vsel %vm85, %v1281, 0
  %v1695 = vsel %vm85, %v1286, 0
  %v1698 = vsel %vm85, %v1291, 0
  %v1701 = vsel %vm85, %v1296, 0
  %1703 = vmatprep.subr.mxu0 0.0
  %1704 = vmatpush1.msra.mxu0 %v1299
  %1705 = vmatprep.subr.mxu0 0.0
  %1706 = vmatpush1.msra.mxu0 %v1300
  %1707 = vmatprep.subr.mxu0 0.0
  %1708 = vmatpush1.msra.mxu0 0.0
  %1709 = vmatprep.subr.mxu0 0.0
  %1710 = vmatpush1.msra.mxu0 0.0
  %1711 = vmatprep.subr.mxu0 0.0
  %1712 = vmatpush1.msra.mxu0 0.0
  %1713 = vmatprep.subr.mxu0 0.0
  %1714 = vmatpush1.msra.mxu0 0.0
  %1715 = vmatprep.subr.mxu0 0.0
  %1716 = vmatpush1.msra.mxu0 0.0
  %1717 = vmatprep.subr.mxu0 0.0
  %1718 = vmatpush1.msra.mxu0 0.0
  %1719 = vmatprep.subr.mxu0 0.0
  %1720 = vmatpush1.msra.mxu0 0.0
  %1721 = vmatprep.subr.mxu0 0.0
  %1722 = vmatpush1.msra.mxu0 0.0
  %1723 = vmatprep.subr.mxu0 0.0
  %1724 = vmatpush1.msra.mxu0 0.0
  %1725 = vmatprep.subr.mxu0 0.0
  %1726 = vmatpush1.msra.mxu0 0.0
  %1727 = vmatprep.subr.mxu0 0.0
  %1728 = vmatpush1.msra.mxu0 0.0
  %1729 = vmatprep.subr.mxu0 0.0
  %1730 = vmatpush1.msra.mxu0 0.0
  %1731 = vmatprep.subr.mxu0 0.0
  %1732 = vmatpush1.msra.mxu0 0.0
  %1733 = vmatprep.subr.mxu0 0.0
  %1734 = vmatpush1.msra.mxu0 0.0
  %1735 = vmatprep.subr.mxu0 0.0
  %1736 = vmatpush1.msra.mxu0 0.0
  %1737 = vmatprep.subr.mxu0 0.0
  %1738 = vmatpush1.msra.mxu0 0.0
  %1739 = vmatprep.subr.mxu0 0.0
  %1740 = vmatpush1.msra.mxu0 0.0
  %1741 = vmatprep.subr.mxu0 0.0
  %1742 = vmatpush1.msra.mxu0 0.0
  %1743 = vmatprep.subr.mxu0 0.0
  %1744 = vmatpush1.msra.mxu0 0.0
  %1745 = vmatprep.subr.mxu0 0.0
  %1746 = vmatpush1.msra.mxu0 0.0
  %1747 = vmatprep.subr.mxu0 0.0
  %1748 = vmatpush1.msra.mxu0 0.0
  %1749 = vmatprep.subr.mxu0 0.0
  %1750 = vmatpush1.msra.mxu0 0.0
  %1751 = vmatprep.subr.mxu0 0.0
  %1752 = vmatpush1.msra.mxu0 0.0
  %1753 = vmatprep.subr.mxu0 0.0
  %1754 = vmatpush1.msra.mxu0 0.0
  %1755 = vmatprep.subr.mxu0 0.0
  %1756 = vmatpush1.msra.mxu0 0.0
  %1757 = vmatprep.subr.mxu0 0.0
  %1758 = vmatpush1.msra.mxu0 0.0
  %1759 = vmatprep.subr.mxu0 0.0
  %1760 = vmatpush1.msra.mxu0 0.0
  %1761 = vmatprep.subr.mxu0 0.0
  %1762 = vmatpush1.msra.mxu0 0.0
  %1763 = vmatprep.subr.mxu0 0.0
  %1764 = vmatpush1.msra.mxu0 0.0
  %1765 = vmatprep.subr.mxu0 0.0
  %1766 = vmatpush1.msra.mxu0 0.0
  %1767 = vmatprep.mubr.f32.mxu0 0.0
  %1768 = vmatmul.mubr.f32.gmra.mrb[0].mxu0 %v1683
  %v1769 = vpop.f32.mrb[0].mxu0
  %v1770 = vadd.f32 %v1649, %v1769
  %v1771 = vpop.f32.mrb[0].mxu0
  %1772 = vmatprep.mubr.f32.mxu0 0.0
  %1773 = vmatmul.mubr.f32.gmra.mrb[0].mxu0 %v1686
  %v1774 = vpop.f32.mrb[0].mxu0
  %v1775 = vadd.f32 %v1654, %v1774
  %v1776 = vpop.f32.mrb[0].mxu0
  %1777 = vmatprep.mubr.f32.mxu0 0.0
  %1778 = vmatmul.mubr.f32.gmra.mrb[0].mxu0 %v1689
  %v1779 = vpop.f32.mrb[0].mxu0
  %v1780 = vadd.f32 %v1659, %v1779
  %v1781 = vpop.f32.mrb[0].mxu0
  %1782 = vmatprep.mubr.f32.mxu0 0.0
  %1783 = vmatmul.mubr.f32.gmra.mrb[0].mxu0 %v1692
  %v1784 = vpop.f32.mrb[0].mxu0
  %v1785 = vadd.f32 %v1664, %v1784
  %v1786 = vpop.f32.mrb[0].mxu0
  %1787 = vmatprep.mubr.f32.mxu0 0.0
  %1788 = vmatmul.mubr.f32.gmra.mrb[0].mxu0 %v1695
  %v1789 = vpop.f32.mrb[0].mxu0
  %v1790 = vadd.f32 %v1669, %v1789
  %v1791 = vpop.f32.mrb[0].mxu0
  %1792 = vmatprep.mubr.f32.mxu0 0.0
  %1793 = vmatmul.mubr.f32.gmra.mrb[0].mxu0 %v1698
  %v1794 = vpop.f32.mrb[0].mxu0
  %v1795 = vadd.f32 %v1674, %v1794
  %v1796 = vpop.f32.mrb[0].mxu0
  %1797 = vmatprep.mubr.f32.mxu0 0.0
  %1798 = vmatmul.mubr.f32.gmra.mrb[0].mxu0 %v1701
  %v1799 = vpop.f32.mrb[0].mxu0
  %v1800 = vadd.f32 %v1679, %v1799
  %v1801 = vpop.f32.mrb[0].mxu0
  %1802 = vdwg.mxu0
  %s1803 = scalar_lea.vmem %s4, 168
  %v1804 = vld [vmem:[%s1803] sm:$0xff]
  %v1805 = vld [vmem:[%s1803 + $0x8] sm:$0xf]
  %v1806 = vld [vmem:[%s1803 + $0xc] sm:$0xff]
  %v1807 = vld [vmem:[%s1803 + $0x14] sm:$0xf]
  %v1808 = vld [vmem:[%s1803 + $0x18] sm:$0xff]
  %v1809 = vld [vmem:[%s1803 + $0x20] sm:$0xf]
  %v1810 = vld [vmem:[%s1803 + $0x24] sm:$0xff]
  %v1811 = vld [vmem:[%s1803 + $0x2c] sm:$0xf]
  %v1812 = vld [vmem:[%s1803 + $0x30] sm:$0xff]
  %v1813 = vld [vmem:[%s1803 + $0x38] sm:$0xf]
  %v1814 = vld [vmem:[%s1803 + $0x3c] sm:$0xff]
  %v1815 = vld [vmem:[%s1803 + $0x44] sm:$0xf]
  %v1816 = vld [vmem:[%s1803 + $0x48] sm:$0xff]
  %v1817 = vld [vmem:[%s1803 + $0x50] sm:$0xf]
  %v1818 = vunpack.c.l.bf16 %v1804
  %v1819 = vunpack.c.h.bf16 %v1804
  %v1820 = vunpack.c.l.bf16 %v1805
  %v1821 = vunpack.c.l.bf16 %v1806
  %v1822 = vunpack.c.h.bf16 %v1806
  %v1823 = vunpack.c.l.bf16 %v1807
  %v1824 = vunpack.c.l.bf16 %v1808
  %v1825 = vunpack.c.h.bf16 %v1808
  %v1826 = vunpack.c.l.bf16 %v1809
  %v1827 = vunpack.c.l.bf16 %v1810
  %v1828 = vunpack.c.h.bf16 %v1810
  %v1829 = vunpack.c.l.bf16 %v1811
  %v1830 = vunpack.c.l.bf16 %v1812
  %v1831 = vunpack.c.h.bf16 %v1812
  %v1832 = vunpack.c.l.bf16 %v1813
  %v1833 = vunpack.c.l.bf16 %v1814
  %v1834 = vunpack.c.h.bf16 %v1814
  %v1835 = vunpack.c.l.bf16 %v1815
  %v1836 = vunpack.c.l.bf16 %v1816
  %v1837 = vunpack.c.h.bf16 %v1816
  %v1838 = vunpack.c.l.bf16 %v1817
  %v1840 = vsel %vm1077, %v1820, 0
  %v1843 = vsel %vm1077, %v1823, 0
  %v1846 = vsel %vm1077, %v1826, 0
  %v1849 = vsel %vm1077, %v1829, 0
  %v1852 = vsel %vm1077, %v1832, 0
  %v1855 = vsel %vm1077, %v1835, 0
  %v1858 = vsel %vm1077, %v1838, 0
  %1860 = vmatprep.subr.mxu0 0.0
  %1861 = vmatpush1.msra.mxu0 %v999
  %1862 = vmatprep.subr.mxu0 0.0
  %1863 = vmatpush1.msra.mxu0 %v1000
  %1864 = vmatprep.subr.mxu0 0.0
  %1865 = vmatpush1.msra.mxu0 %v1001
  %1866 = vmatprep.subr.mxu0 0.0
  %1867 = vmatpush1.msra.mxu0 %v1002
  %1868 = vmatprep.subr.mxu0 0.0
  %1869 = vmatpush1.msra.mxu0 %v1003
  %1870 = vmatprep.subr.mxu0 0.0
  %1871 = vmatpush1.msra.mxu0 %v1004
  %1872 = vmatprep.subr.mxu0 0.0
  %1873 = vmatpush1.msra.mxu0 %v1005
  %1874 = vmatprep.subr.mxu0 0.0
  %1875 = vmatpush1.msra.mxu0 %v1006
  %1876 = vmatprep.subr.mxu0 0.0
  %1877 = vmatpush1.msra.mxu0 %v1007
  %1878 = vmatprep.subr.mxu0 0.0
  %1879 = vmatpush1.msra.mxu0 %v1008
  %1880 = vmatprep.subr.mxu0 0.0
  %1881 = vmatpush1.msra.mxu0 %v1009
  %1882 = vmatprep.subr.mxu0 0.0
  %1883 = vmatpush1.msra.mxu0 %v1010
  %1884 = vmatprep.subr.mxu0 0.0
  %1885 = vmatpush1.msra.mxu0 %v1011
  %1886 = vmatprep.subr.mxu0 0.0
  %1887 = vmatpush1.msra.mxu0 %v1012
  %1888 = vmatprep.subr.mxu0 0.0
  %1889 = vmatpush1.msra.mxu0 %v1013
  %1890 = vmatprep.subr.mxu0 0.0
  %1891 = vmatpush1.msra.mxu0 %v1014
  %1892 = vmatprep.subr.mxu0 0.0
  %1893 = vmatpush1.msra.mxu0 %v1015
  %1894 = vmatprep.subr.mxu0 0.0
  %1895 = vmatpush1.msra.mxu0 %v1016
  %1896 = vmatprep.subr.mxu0 0.0
  %1897 = vmatpush1.msra.mxu0 %v1017
  %1898 = vmatprep.subr.mxu0 0.0
  %1899 = vmatpush1.msra.mxu0 %v1018
  %1900 = vmatprep.subr.mxu0 0.0
  %1901 = vmatpush1.msra.mxu0 %v1019
  %1902 = vmatprep.subr.mxu0 0.0
  %1903 = vmatpush1.msra.mxu0 %v1020
  %1904 = vmatprep.subr.mxu0 0.0
  %1905 = vmatpush1.msra.mxu0 %v1021
  %1906 = vmatprep.subr.mxu0 0.0
  %1907 = vmatpush1.msra.mxu0 %v1022
  %1908 = vmatprep.subr.mxu0 0.0
  %1909 = vmatpush1.msra.mxu0 %v1023
  %1910 = vmatprep.subr.mxu0 0.0
  %1911 = vmatpush1.msra.mxu0 %v1024
  %1912 = vmatprep.subr.mxu0 0.0
  %1913 = vmatpush1.msra.mxu0 %v1025
  %1914 = vmatprep.subr.mxu0 0.0
  %1915 = vmatpush1.msra.mxu0 %v1026
  %1916 = vmatprep.subr.mxu0 0.0
  %1917 = vmatpush1.msra.mxu0 %v1027
  %1918 = vmatprep.subr.mxu0 0.0
  %1919 = vmatpush1.msra.mxu0 %v1028
  %1920 = vmatprep.subr.mxu0 0.0
  %1921 = vmatpush1.msra.mxu0 %v1029
  %1922 = vmatprep.subr.mxu0 0.0
  %1923 = vmatpush1.msra.mxu0 %v1030
  %1924 = vmatprep.mubr.f32.mxu0 %v1819
  %1925 = vmatmul.mubr.f32.gmra.mrb[0].mxu0 %v1818
  %v1926 = vpop.f32.mrb[0].mxu0
  %v1927 = vadd.f32 0.0, %v1926
  %v1928 = vpop.f32.mrb[0].mxu0
  %1929 = vmatprep.mubr.f32.mxu0 %v1822
  %1930 = vmatmul.mubr.f32.gmra.mrb[0].mxu0 %v1821
  %v1931 = vpop.f32.mrb[0].mxu0
  %v1932 = vadd.f32 0.0, %v1931
  %v1933 = vpop.f32.mrb[0].mxu0
  %1934 = vmatprep.mubr.f32.mxu0 %v1825
  %1935 = vmatmul.mubr.f32.gmra.mrb[0].mxu0 %v1824
  %v1936 = vpop.f32.mrb[0].mxu0
  %v1937 = vadd.f32 0.0, %v1936
  %v1938 = vpop.f32.mrb[0].mxu0
  %1939 = vmatprep.mubr.f32.mxu0 %v1828
  %1940 = vmatmul.mubr.f32.gmra.mrb[0].mxu0 %v1827
  %v1941 = vpop.f32.mrb[0].mxu0
  %v1942 = vadd.f32 0.0, %v1941
  %v1943 = vpop.f32.mrb[0].mxu0
  %1944 = vmatprep.mubr.f32.mxu0 %v1831
  %1945 = vmatmul.mubr.f32.gmra.mrb[0].mxu0 %v1830
  %v1946 = vpop.f32.mrb[0].mxu0
  %v1947 = vadd.f32 0.0, %v1946
  %v1948 = vpop.f32.mrb[0].mxu0
  %1949 = vmatprep.mubr.f32.mxu0 %v1834
  %1950 = vmatmul.mubr.f32.gmra.mrb[0].mxu0 %v1833
  %v1951 = vpop.f32.mrb[0].mxu0
  %v1952 = vadd.f32 0.0, %v1951
  %v1953 = vpop.f32.mrb[0].mxu0
  %1954 = vmatprep.mubr.f32.mxu0 %v1837
  %1955 = vmatmul.mubr.f32.gmra.mrb[0].mxu0 %v1836
  %v1956 = vpop.f32.mrb[0].mxu0
  %v1957 = vadd.f32 0.0, %v1956
  %v1958 = vpop.f32.mrb[0].mxu0
  %1959 = vdwg.mxu0
  %1960 = vmatprep.subr.mxu0 0.0
  %1961 = vmatpush1.msra.mxu0 %v1031
  %1962 = vmatprep.subr.mxu0 0.0
  %1963 = vmatpush1.msra.mxu0 %v1032
  %1964 = vmatprep.subr.mxu0 0.0
  %1965 = vmatpush1.msra.mxu0 %v1033
  %1966 = vmatprep.subr.mxu0 0.0
  %1967 = vmatpush1.msra.mxu0 %v1034
  %1968 = vmatprep.subr.mxu0 0.0
  %1969 = vmatpush1.msra.mxu0 %v1035
  %1970 = vmatprep.subr.mxu0 0.0
  %1971 = vmatpush1.msra.mxu0 %v1036
  %1972 = vmatprep.subr.mxu0 0.0
  %1973 = vmatpush1.msra.mxu0 %v1037
  %1974 = vmatprep.subr.mxu0 0.0
  %1975 = vmatpush1.msra.mxu0 %v1038
  %1976 = vmatprep.subr.mxu0 0.0
  %1977 = vmatpush1.msra.mxu0 %v1039
  %1978 = vmatprep.subr.mxu0 0.0
  %1979 = vmatpush1.msra.mxu0 %v1040
  %1980 = vmatprep.subr.mxu0 0.0
  %1981 = vmatpush1.msra.mxu0 %v1041
  %1982 = vmatprep.subr.mxu0 0.0
  %1983 = vmatpush1.msra.mxu0 0.0
  %1984 = vmatprep.subr.mxu0 0.0
  %1985 = vmatpush1.msra.mxu0 0.0
  %1986 = vmatprep.subr.mxu0 0.0
  %1987 = vmatpush1.msra.mxu0 0.0
  %1988 = vmatprep.subr.mxu0 0.0
  %1989 = vmatpush1.msra.mxu0 0.0
  %1990 = vmatprep.subr.mxu0 0.0
  %1991 = vmatpush1.msra.mxu0 0.0
  %1992 = vmatprep.subr.mxu0 0.0
  %1993 = vmatpush1.msra.mxu0 0.0
  %1994 = vmatprep.subr.mxu0 0.0
  %1995 = vmatpush1.msra.mxu0 0.0
  %1996 = vmatprep.subr.mxu0 0.0
  %1997 = vmatpush1.msra.mxu0 0.0
  %1998 = vmatprep.subr.mxu0 0.0
  %1999 = vmatpush1.msra.mxu0 0.0
  %2000 = vmatprep.subr.mxu0 0.0
  %2001 = vmatpush1.msra.mxu0 0.0
  %2002 = vmatprep.subr.mxu0 0.0
  %2003 = vmatpush1.msra.mxu0 0.0
  %2004 = vmatprep.subr.mxu0 0.0
  %2005 = vmatpush1.msra.mxu0 0.0
  %2006 = vmatprep.subr.mxu0 0.0
  %2007 = vmatpush1.msra.mxu0 0.0
  %2008 = vmatprep.subr.mxu0 0.0
  %2009 = vmatpush1.msra.mxu0 0.0
  %2010 = vmatprep.subr.mxu0 0.0
  %2011 = vmatpush1.msra.mxu0 0.0
  %2012 = vmatprep.subr.mxu0 0.0
  %2013 = vmatpush1.msra.mxu0 0.0
  %2014 = vmatprep.subr.mxu0 0.0
  %2015 = vmatpush1.msra.mxu0 0.0
  %2016 = vmatprep.subr.mxu0 0.0
  %2017 = vmatpush1.msra.mxu0 0.0
  %2018 = vmatprep.subr.mxu0 0.0
  %2019 = vmatpush1.msra.mxu0 0.0
  %2020 = vmatprep.subr.mxu0 0.0
  %2021 = vmatpush1.msra.mxu0 0.0
  %2022 = vmatprep.subr.mxu0 0.0
  %2023 = vmatpush1.msra.mxu0 0.0
  %2024 = vmatprep.mubr.f32.mxu0 0.0
  %2025 = vmatmul.mubr.f32.gmra.mrb[0].mxu0 %v1840
  %v2026 = vpop.f32.mrb[0].mxu0
  %v2027 = vadd.f32 %v1927, %v2026
  %v2028 = vpop.f32.mrb[0].mxu0
  %2029 = vmatprep.mubr.f32.mxu0 0.0
  %2030 = vmatmul.mubr.f32.gmra.mrb[0].mxu0 %v1843
  %v2031 = vpop.f32.mrb[0].mxu0
  %v2032 = vadd.f32 %v1932, %v2031
  %v2033 = vpop.f32.mrb[0].mxu0
  %2034 = vmatprep.mubr.f32.mxu0 0.0
  %2035 = vmatmul.mubr.f32.gmra.mrb[0].mxu0 %v1846
  %v2036 = vpop.f32.mrb[0].mxu0
  %v2037 = vadd.f32 %v1937, %v2036
  %v2038 = vpop.f32.mrb[0].mxu0
  %2039 = vmatprep.mubr.f32.mxu0 0.0
  %2040 = vmatmul.mubr.f32.gmra.mrb[0].mxu0 %v1849
  %v2041 = vpop.f32.mrb[0].mxu0
  %v2042 = vadd.f32 %v1942, %v2041
  %v2043 = vpop.f32.mrb[0].mxu0
  %2044 = vmatprep.mubr.f32.mxu0 0.0
  %2045 = vmatmul.mubr.f32.gmra.mrb[0].mxu0 %v1852
  %v2046 = vpop.f32.mrb[0].mxu0
  %v2047 = vadd.f32 %v1947, %v2046
  %v2048 = vpop.f32.mrb[0].mxu0
  %2049 = vmatprep.mubr.f32.mxu0 0.0
  %2050 = vmatmul.mubr.f32.gmra.mrb[0].mxu0 %v1855
  %v2051 = vpop.f32.mrb[0].mxu0
  %v2052 = vadd.f32 %v1952, %v2051
  %v2053 = vpop.f32.mrb[0].mxu0
  %2054 = vmatprep.mubr.f32.mxu0 0.0
  %2055 = vmatmul.mubr.f32.gmra.mrb[0].mxu0 %v1858
  %v2056 = vpop.f32.mrb[0].mxu0
  %v2057 = vadd.f32 %v1957, %v2056
  %v2058 = vpop.f32.mrb[0].mxu0
  %2059 = vdwg.mxu0
  %s2060 = scalar_lea.vmem %s5, 32
  %v2061 = vld [vmem:[%s2060] sm:$0xff]
  %v2062 = vld [vmem:[%s2060 + $0x8] sm:$0xff]
  %v2064 = vsel %vm85, %v2027, 0
  %v2067 = vsel %vm85, %v2032, 0
  %v2070 = vsel %vm85, %v2037, 0
  %v2073 = vsel %vm85, %v2042, 0
  %v2076 = vsel %vm85, %v2047, 0
  %v2079 = vsel %vm85, %v2052, 0
  %v2082 = vsel %vm85, %v2057, 0
  %2084 = vmatprep.subr.mxu0 0.0
  %2085 = vmatpush1.msra.mxu0 %v2061
  %2086 = vmatprep.subr.mxu0 0.0
  %2087 = vmatpush1.msra.mxu0 %v2062
  %2088 = vmatprep.subr.mxu0 0.0
  %2089 = vmatpush1.msra.mxu0 0.0
  %2090 = vmatprep.subr.mxu0 0.0
  %2091 = vmatpush1.msra.mxu0 0.0
  %2092 = vmatprep.subr.mxu0 0.0
  %2093 = vmatpush1.msra.mxu0 0.0
  %2094 = vmatprep.subr.mxu0 0.0
  %2095 = vmatpush1.msra.mxu0 0.0
  %2096 = vmatprep.subr.mxu0 0.0
  %2097 = vmatpush1.msra.mxu0 0.0
  %2098 = vmatprep.subr.mxu0 0.0
  %2099 = vmatpush1.msra.mxu0 0.0
  %2100 = vmatprep.subr.mxu0 0.0
  %2101 = vmatpush1.msra.mxu0 0.0
  %2102 = vmatprep.subr.mxu0 0.0
  %2103 = vmatpush1.msra.mxu0 0.0
  %2104 = vmatprep.subr.mxu0 0.0
  %2105 = vmatpush1.msra.mxu0 0.0
  %2106 = vmatprep.subr.mxu0 0.0
  %2107 = vmatpush1.msra.mxu0 0.0
  %2108 = vmatprep.subr.mxu0 0.0
  %2109 = vmatpush1.msra.mxu0 0.0
  %2110 = vmatprep.subr.mxu0 0.0
  %2111 = vmatpush1.msra.mxu0 0.0
  %2112 = vmatprep.subr.mxu0 0.0
  %2113 = vmatpush1.msra.mxu0 0.0
  %2114 = vmatprep.subr.mxu0 0.0
  %2115 = vmatpush1.msra.mxu0 0.0
  %2116 = vmatprep.subr.mxu0 0.0
  %2117 = vmatpush1.msra.mxu0 0.0
  %2118 = vmatprep.subr.mxu0 0.0
  %2119 = vmatpush1.msra.mxu0 0.0
  %2120 = vmatprep.subr.mxu0 0.0
  %2121 = vmatpush1.msra.mxu0 0.0
  %2122 = vmatprep.subr.mxu0 0.0
  %2123 = vmatpush1.msra.mxu0 0.0
  %2124 = vmatprep.subr.mxu0 0.0
  %2125 = vmatpush1.msra.mxu0 0.0
  %2126 = vmatprep.subr.mxu0 0.0
  %2127 = vmatpush1.msra.mxu0 0.0
  %2128 = vmatprep.subr.mxu0 0.0
  %2129 = vmatpush1.msra.mxu0 0.0
  %2130 = vmatprep.subr.mxu0 0.0
  %2131 = vmatpush1.msra.mxu0 0.0
  %2132 = vmatprep.subr.mxu0 0.0
  %2133 = vmatpush1.msra.mxu0 0.0
  %2134 = vmatprep.subr.mxu0 0.0
  %2135 = vmatpush1.msra.mxu0 0.0
  %2136 = vmatprep.subr.mxu0 0.0
  %2137 = vmatpush1.msra.mxu0 0.0
  %2138 = vmatprep.subr.mxu0 0.0
  %2139 = vmatpush1.msra.mxu0 0.0
  %2140 = vmatprep.subr.mxu0 0.0
  %2141 = vmatpush1.msra.mxu0 0.0
  %2142 = vmatprep.subr.mxu0 0.0
  %2143 = vmatpush1.msra.mxu0 0.0
  %2144 = vmatprep.subr.mxu0 0.0
  %2145 = vmatpush1.msra.mxu0 0.0
  %2146 = vmatprep.subr.mxu0 0.0
  %2147 = vmatpush1.msra.mxu0 0.0
  %2148 = vmatprep.mubr.f32.mxu0 0.0
  %2149 = vmatmul.mubr.f32.gmra.mrb[0].mxu0 %v2064
  %v2150 = vpop.f32.mrb[0].mxu0
  %v2151 = vadd.f32 0.0, %v2150
  %v2152 = vpop.f32.mrb[0].mxu0
  %2153 = vmatprep.mubr.f32.mxu0 0.0
  %2154 = vmatmul.mubr.f32.gmra.mrb[0].mxu0 %v2067
  %v2155 = vpop.f32.mrb[0].mxu0
  %v2156 = vadd.f32 0.0, %v2155
  %v2157 = vpop.f32.mrb[0].mxu0
  %2158 = vmatprep.mubr.f32.mxu0 0.0
  %2159 = vmatmul.mubr.f32.gmra.mrb[0].mxu0 %v2070
  %v2160 = vpop.f32.mrb[0].mxu0
  %v2161 = vadd.f32 0.0, %v2160
  %v2162 = vpop.f32.mrb[0].mxu0
  %2163 = vmatprep.mubr.f32.mxu0 0.0
  %2164 = vmatmul.mubr.f32.gmra.mrb[0].mxu0 %v2073
  %v2165 = vpop.f32.mrb[0].mxu0
  %v2166 = vadd.f32 0.0, %v2165
  %v2167 = vpop.f32.mrb[0].mxu0
  %2168 = vmatprep.mubr.f32.mxu0 0.0
  %2169 = vmatmul.mubr.f32.gmra.mrb[0].mxu0 %v2076
  %v2170 = vpop.f32.mrb[0].mxu0
  %v2171 = vadd.f32 0.0, %v2170
  %v2172 = vpop.f32.mrb[0].mxu0
  %2173 = vmatprep.mubr.f32.mxu0 0.0
  %2174 = vmatmul.mubr.f32.gmra.mrb[0].mxu0 %v2079
  %v2175 = vpop.f32.mrb[0].mxu0
  %v2176 = vadd.f32 0.0, %v2175
  %v2177 = vpop.f32.mrb[0].mxu0
  %2178 = vmatprep.mubr.f32.mxu0 0.0
  %2179 = vmatmul.mubr.f32.gmra.mrb[0].mxu0 %v2082
  %v2180 = vpop.f32.mrb[0].mxu0
  %v2181 = vadd.f32 0.0, %v2180
  %v2182 = vpop.f32.mrb[0].mxu0
  %2183 = vdwg.mxu0
  %v2184 = vadd.f32 %v1770, %v2151
  %v2185 = vadd.f32 %v1775, %v2156
  %v2186 = vadd.f32 %v1780, %v2161
  %v2187 = vadd.f32 %v1785, %v2166
  %v2188 = vadd.f32 %v1790, %v2171
  %v2189 = vadd.f32 %v1795, %v2176
  %v2190 = vadd.f32 %v1800, %v2181
  %s2191 = scalar_lea.vmem %s4, 252
  %v2192 = vld [vmem:[%s2191] sm:$0xff]
  %v2193 = vld [vmem:[%s2191 + $0x8] sm:$0xf]
  %v2194 = vld [vmem:[%s2191 + $0xc] sm:$0xff]
  %v2195 = vld [vmem:[%s2191 + $0x14] sm:$0xf]
  %v2196 = vld [vmem:[%s2191 + $0x18] sm:$0xff]
  %v2197 = vld [vmem:[%s2191 + $0x20] sm:$0xf]
  %v2198 = vld [vmem:[%s2191 + $0x24] sm:$0xff]
  %v2199 = vld [vmem:[%s2191 + $0x2c] sm:$0xf]
  %v2200 = vld [vmem:[%s2191 + $0x30] sm:$0xff]
  %v2201 = vld [vmem:[%s2191 + $0x38] sm:$0xf]
  %v2202 = vld [vmem:[%s2191 + $0x3c] sm:$0xff]
  %v2203 = vld [vmem:[%s2191 + $0x44] sm:$0xf]
  %v2204 = vld [vmem:[%s2191 + $0x48] sm:$0xff]
  %v2205 = vld [vmem:[%s2191 + $0x50] sm:$0xf]
  %v2206 = vunpack.c.l.bf16 %v2192
  %v2207 = vunpack.c.h.bf16 %v2192
  %v2208 = vunpack.c.l.bf16 %v2193
  %v2209 = vunpack.c.l.bf16 %v2194
  %v2210 = vunpack.c.h.bf16 %v2194
  %v2211 = vunpack.c.l.bf16 %v2195
  %v2212 = vunpack.c.l.bf16 %v2196
  %v2213 = vunpack.c.h.bf16 %v2196
  %v2214 = vunpack.c.l.bf16 %v2197
  %v2215 = vunpack.c.l.bf16 %v2198
  %v2216 = vunpack.c.h.bf16 %v2198
  %v2217 = vunpack.c.l.bf16 %v2199
  %v2218 = vunpack.c.l.bf16 %v2200
  %v2219 = vunpack.c.h.bf16 %v2200
  %v2220 = vunpack.c.l.bf16 %v2201
  %v2221 = vunpack.c.l.bf16 %v2202
  %v2222 = vunpack.c.h.bf16 %v2202
  %v2223 = vunpack.c.l.bf16 %v2203
  %v2224 = vunpack.c.l.bf16 %v2204
  %v2225 = vunpack.c.h.bf16 %v2204
  %v2226 = vunpack.c.l.bf16 %v2205
  %v2228 = vsel %vm1077, %v2208, 0
  %v2231 = vsel %vm1077, %v2211, 0
  %v2234 = vsel %vm1077, %v2214, 0
  %v2237 = vsel %vm1077, %v2217, 0
  %v2240 = vsel %vm1077, %v2220, 0
  %v2243 = vsel %vm1077, %v2223, 0
  %v2246 = vsel %vm1077, %v2226, 0
  %2248 = vmatprep.subr.mxu0 0.0
  %2249 = vmatpush1.msra.mxu0 %v999
  %2250 = vmatprep.subr.mxu0 0.0
  %2251 = vmatpush1.msra.mxu0 %v1000
  %2252 = vmatprep.subr.mxu0 0.0
  %2253 = vmatpush1.msra.mxu0 %v1001
  %2254 = vmatprep.subr.mxu0 0.0
  %2255 = vmatpush1.msra.mxu0 %v1002
  %2256 = vmatprep.subr.mxu0 0.0
  %2257 = vmatpush1.msra.mxu0 %v1003
  %2258 = vmatprep.subr.mxu0 0.0
  %2259 = vmatpush1.msra.mxu0 %v1004
  %2260 = vmatprep.subr.mxu0 0.0
  %2261 = vmatpush1.msra.mxu0 %v1005
  %2262 = vmatprep.subr.mxu0 0.0
  %2263 = vmatpush1.msra.mxu0 %v1006
  %2264 = vmatprep.subr.mxu0 0.0
  %2265 = vmatpush1.msra.mxu0 %v1007
  %2266 = vmatprep.subr.mxu0 0.0
  %2267 = vmatpush1.msra.mxu0 %v1008
  %2268 = vmatprep.subr.mxu0 0.0
  %2269 = vmatpush1.msra.mxu0 %v1009
  %2270 = vmatprep.subr.mxu0 0.0
  %2271 = vmatpush1.msra.mxu0 %v1010
  %2272 = vmatprep.subr.mxu0 0.0
  %2273 = vmatpush1.msra.mxu0 %v1011
  %2274 = vmatprep.subr.mxu0 0.0
  %2275 = vmatpush1.msra.mxu0 %v1012
  %2276 = vmatprep.subr.mxu0 0.0
  %2277 = vmatpush1.msra.mxu0 %v1013
  %2278 = vmatprep.subr.mxu0 0.0
  %2279 = vmatpush1.msra.mxu0 %v1014
  %2280 = vmatprep.subr.mxu0 0.0
  %2281 = vmatpush1.msra.mxu0 %v1015
  %2282 = vmatprep.subr.mxu0 0.0
  %2283 = vmatpush1.msra.mxu0 %v1016
  %2284 = vmatprep.subr.mxu0 0.0
  %2285 = vmatpush1.msra.mxu0 %v1017
  %2286 = vmatprep.subr.mxu0 0.0
  %2287 = vmatpush1.msra.mxu0 %v1018
  %2288 = vmatprep.subr.mxu0 0.0
  %2289 = vmatpush1.msra.mxu0 %v1019
  %2290 = vmatprep.subr.mxu0 0.0
  %2291 = vmatpush1.msra.mxu0 %v1020
  %2292 = vmatprep.subr.mxu0 0.0
  %2293 = vmatpush1.msra.mxu0 %v1021
  %2294 = vmatprep.subr.mxu0 0.0
  %2295 = vmatpush1.msra.mxu0 %v1022
  %2296 = vmatprep.subr.mxu0 0.0
  %2297 = vmatpush1.msra.mxu0 %v1023
  %2298 = vmatprep.subr.mxu0 0.0
  %2299 = vmatpush1.msra.mxu0 %v1024
  %2300 = vmatprep.subr.mxu0 0.0
  %2301 = vmatpush1.msra.mxu0 %v1025
  %2302 = vmatprep.subr.mxu0 0.0
  %2303 = vmatpush1.msra.mxu0 %v1026
  %2304 = vmatprep.subr.mxu0 0.0
  %2305 = vmatpush1.msra.mxu0 %v1027
  %2306 = vmatprep.subr.mxu0 0.0
  %2307 = vmatpush1.msra.mxu0 %v1028
  %2308 = vmatprep.subr.mxu0 0.0
  %2309 = vmatpush1.msra.mxu0 %v1029
  %2310 = vmatprep.subr.mxu0 0.0
  %2311 = vmatpush1.msra.mxu0 %v1030
  %2312 = vmatprep.mubr.f32.mxu0 %v2207
  %2313 = vmatmul.mubr.f32.gmra.mrb[0].mxu0 %v2206
  %v2314 = vpop.f32.mrb[0].mxu0
  %v2315 = vadd.f32 0.0, %v2314
  %v2316 = vpop.f32.mrb[0].mxu0
  %2317 = vmatprep.mubr.f32.mxu0 %v2210
  %2318 = vmatmul.mubr.f32.gmra.mrb[0].mxu0 %v2209
  %v2319 = vpop.f32.mrb[0].mxu0
  %v2320 = vadd.f32 0.0, %v2319
  %v2321 = vpop.f32.mrb[0].mxu0
  %2322 = vmatprep.mubr.f32.mxu0 %v2213
  %2323 = vmatmul.mubr.f32.gmra.mrb[0].mxu0 %v2212
  %v2324 = vpop.f32.mrb[0].mxu0
  %v2325 = vadd.f32 0.0, %v2324
  %v2326 = vpop.f32.mrb[0].mxu0
  %2327 = vmatprep.mubr.f32.mxu0 %v2216
  %2328 = vmatmul.mubr.f32.gmra.mrb[0].mxu0 %v2215
  %v2329 = vpop.f32.mrb[0].mxu0
  %v2330 = vadd.f32 0.0, %v2329
  %v2331 = vpop.f32.mrb[0].mxu0
  %2332 = vmatprep.mubr.f32.mxu0 %v2219
  %2333 = vmatmul.mubr.f32.gmra.mrb[0].mxu0 %v2218
  %v2334 = vpop.f32.mrb[0].mxu0
  %v2335 = vadd.f32 0.0, %v2334
  %v2336 = vpop.f32.mrb[0].mxu0
  %2337 = vmatprep.mubr.f32.mxu0 %v2222
  %2338 = vmatmul.mubr.f32.gmra.mrb[0].mxu0 %v2221
  %v2339 = vpop.f32.mrb[0].mxu0
  %v2340 = vadd.f32 0.0, %v2339
  %v2341 = vpop.f32.mrb[0].mxu0
  %2342 = vmatprep.mubr.f32.mxu0 %v2225
  %2343 = vmatmul.mubr.f32.gmra.mrb[0].mxu0 %v2224
  %v2344 = vpop.f32.mrb[0].mxu0
  %v2345 = vadd.f32 0.0, %v2344
  %v2346 = vpop.f32.mrb[0].mxu0
  %2347 = vdwg.mxu0
  %2348 = vmatprep.subr.mxu0 0.0
  %2349 = vmatpush1.msra.mxu0 %v1031
  %2350 = vmatprep.subr.mxu0 0.0
  %2351 = vmatpush1.msra.mxu0 %v1032
  %2352 = vmatprep.subr.mxu0 0.0
  %2353 = vmatpush1.msra.mxu0 %v1033
  %2354 = vmatprep.subr.mxu0 0.0
  %2355 = vmatpush1.msra.mxu0 %v1034
  %2356 = vmatprep.subr.mxu0 0.0
  %2357 = vmatpush1.msra.mxu0 %v1035
  %2358 = vmatprep.subr.mxu0 0.0
  %2359 = vmatpush1.msra.mxu0 %v1036
  %2360 = vmatprep.subr.mxu0 0.0
  %2361 = vmatpush1.msra.mxu0 %v1037
  %2362 = vmatprep.subr.mxu0 0.0
  %2363 = vmatpush1.msra.mxu0 %v1038
  %2364 = vmatprep.subr.mxu0 0.0
  %2365 = vmatpush1.msra.mxu0 %v1039
  %2366 = vmatprep.subr.mxu0 0.0
  %2367 = vmatpush1.msra.mxu0 %v1040
  %2368 = vmatprep.subr.mxu0 0.0
  %2369 = vmatpush1.msra.mxu0 %v1041
  %2370 = vmatprep.subr.mxu0 0.0
  %2371 = vmatpush1.msra.mxu0 0.0
  %2372 = vmatprep.subr.mxu0 0.0
  %2373 = vmatpush1.msra.mxu0 0.0
  %2374 = vmatprep.subr.mxu0 0.0
  %2375 = vmatpush1.msra.mxu0 0.0
  %2376 = vmatprep.subr.mxu0 0.0
  %2377 = vmatpush1.msra.mxu0 0.0
  %2378 = vmatprep.subr.mxu0 0.0
  %2379 = vmatpush1.msra.mxu0 0.0
  %2380 = vmatprep.subr.mxu0 0.0
  %2381 = vmatpush1.msra.mxu0 0.0
  %2382 = vmatprep.subr.mxu0 0.0
  %2383 = vmatpush1.msra.mxu0 0.0
  %2384 = vmatprep.subr.mxu0 0.0
  %2385 = vmatpush1.msra.mxu0 0.0
  %2386 = vmatprep.subr.mxu0 0.0
  %2387 = vmatpush1.msra.mxu0 0.0
  %2388 = vmatprep.subr.mxu0 0.0
  %2389 = vmatpush1.msra.mxu0 0.0
  %2390 = vmatprep.subr.mxu0 0.0
  %2391 = vmatpush1.msra.mxu0 0.0
  %2392 = vmatprep.subr.mxu0 0.0
  %2393 = vmatpush1.msra.mxu0 0.0
  %2394 = vmatprep.subr.mxu0 0.0
  %2395 = vmatpush1.msra.mxu0 0.0
  %2396 = vmatprep.subr.mxu0 0.0
  %2397 = vmatpush1.msra.mxu0 0.0
  %2398 = vmatprep.subr.mxu0 0.0
  %2399 = vmatpush1.msra.mxu0 0.0
  %2400 = vmatprep.subr.mxu0 0.0
  %2401 = vmatpush1.msra.mxu0 0.0
  %2402 = vmatprep.subr.mxu0 0.0
  %2403 = vmatpush1.msra.mxu0 0.0
  %2404 = vmatprep.subr.mxu0 0.0
  %2405 = vmatpush1.msra.mxu0 0.0
  %2406 = vmatprep.subr.mxu0 0.0
  %2407 = vmatpush1.msra.mxu0 0.0
  %2408 = vmatprep.subr.mxu0 0.0
  %2409 = vmatpush1.msra.mxu0 0.0
  %2410 = vmatprep.subr.mxu0 0.0
  %2411 = vmatpush1.msra.mxu0 0.0
  %2412 = vmatprep.mubr.f32.mxu0 0.0
  %2413 = vmatmul.mubr.f32.gmra.mrb[0].mxu0 %v2228
  %v2414 = vpop.f32.mrb[0].mxu0
  %v2415 = vadd.f32 %v2315, %v2414
  %v2416 = vpop.f32.mrb[0].mxu0
  %2417 = vmatprep.mubr.f32.mxu0 0.0
  %2418 = vmatmul.mubr.f32.gmra.mrb[0].mxu0 %v2231
  %v2419 = vpop.f32.mrb[0].mxu0
  %v2420 = vadd.f32 %v2320, %v2419
  %v2421 = vpop.f32.mrb[0].mxu0
  %2422 = vmatprep.mubr.f32.mxu0 0.0
  %2423 = vmatmul.mubr.f32.gmra.mrb[0].mxu0 %v2234
  %v2424 = vpop.f32.mrb[0].mxu0
  %v2425 = vadd.f32 %v2325, %v2424
  %v2426 = vpop.f32.mrb[0].mxu0
  %2427 = vmatprep.mubr.f32.mxu0 0.0
  %2428 = vmatmul.mubr.f32.gmra.mrb[0].mxu0 %v2237
  %v2429 = vpop.f32.mrb[0].mxu0
  %v2430 = vadd.f32 %v2330, %v2429
  %v2431 = vpop.f32.mrb[0].mxu0
  %2432 = vmatprep.mubr.f32.mxu0 0.0
  %2433 = vmatmul.mubr.f32.gmra.mrb[0].mxu0 %v2240
  %v2434 = vpop.f32.mrb[0].mxu0
  %v2435 = vadd.f32 %v2335, %v2434
  %v2436 = vpop.f32.mrb[0].mxu0
  %2437 = vmatprep.mubr.f32.mxu0 0.0
  %2438 = vmatmul.mubr.f32.gmra.mrb[0].mxu0 %v2243
  %v2439 = vpop.f32.mrb[0].mxu0
  %v2440 = vadd.f32 %v2340, %v2439
  %v2441 = vpop.f32.mrb[0].mxu0
  %2442 = vmatprep.mubr.f32.mxu0 0.0
  %2443 = vmatmul.mubr.f32.gmra.mrb[0].mxu0 %v2246
  %v2444 = vpop.f32.mrb[0].mxu0
  %v2445 = vadd.f32 %v2345, %v2444
  %v2446 = vpop.f32.mrb[0].mxu0
  %2447 = vdwg.mxu0
  %s2448 = scalar_lea.vmem %s5, 48
  %v2449 = vld [vmem:[%s2448] sm:$0xff]
  %v2450 = vld [vmem:[%s2448 + $0x8] sm:$0xff]
  %v2452 = vsel %vm85, %v2415, 0
  %v2455 = vsel %vm85, %v2420, 0
  %v2458 = vsel %vm85, %v2425, 0
  %v2461 = vsel %vm85, %v2430, 0
  %v2464 = vsel %vm85, %v2435, 0
  %v2467 = vsel %vm85, %v2440, 0
  %v2470 = vsel %vm85, %v2445, 0
  %2472 = vmatprep.subr.mxu0 0.0
  %2473 = vmatpush1.msra.mxu0 %v2449
  %2474 = vmatprep.subr.mxu0 0.0
  %2475 = vmatpush1.msra.mxu0 %v2450
  %2476 = vmatprep.subr.mxu0 0.0
  %2477 = vmatpush1.msra.mxu0 0.0
  %2478 = vmatprep.subr.mxu0 0.0
  %2479 = vmatpush1.msra.mxu0 0.0
  %2480 = vmatprep.subr.mxu0 0.0
  %2481 = vmatpush1.msra.mxu0 0.0
  %2482 = vmatprep.subr.mxu0 0.0
  %2483 = vmatpush1.msra.mxu0 0.0
  %2484 = vmatprep.subr.mxu0 0.0
  %2485 = vmatpush1.msra.mxu0 0.0
  %2486 = vmatprep.subr.mxu0 0.0
  %2487 = vmatpush1.msra.mxu0 0.0
  %2488 = vmatprep.subr.mxu0 0.0
  %2489 = vmatpush1.msra.mxu0 0.0
  %2490 = vmatprep.subr.mxu0 0.0
  %2491 = vmatpush1.msra.mxu0 0.0
  %2492 = vmatprep.subr.mxu0 0.0
  %2493 = vmatpush1.msra.mxu0 0.0
  %2494 = vmatprep.subr.mxu0 0.0
  %2495 = vmatpush1.msra.mxu0 0.0
  %2496 = vmatprep.subr.mxu0 0.0
  %2497 = vmatpush1.msra.mxu0 0.0
  %2498 = vmatprep.subr.mxu0 0.0
  %2499 = vmatpush1.msra.mxu0 0.0
  %2500 = vmatprep.subr.mxu0 0.0
  %2501 = vmatpush1.msra.mxu0 0.0
  %2502 = vmatprep.subr.mxu0 0.0
  %2503 = vmatpush1.msra.mxu0 0.0
  %2504 = vmatprep.subr.mxu0 0.0
  %2505 = vmatpush1.msra.mxu0 0.0
  %2506 = vmatprep.subr.mxu0 0.0
  %2507 = vmatpush1.msra.mxu0 0.0
  %2508 = vmatprep.subr.mxu0 0.0
  %2509 = vmatpush1.msra.mxu0 0.0
  %2510 = vmatprep.subr.mxu0 0.0
  %2511 = vmatpush1.msra.mxu0 0.0
  %2512 = vmatprep.subr.mxu0 0.0
  %2513 = vmatpush1.msra.mxu0 0.0
  %2514 = vmatprep.subr.mxu0 0.0
  %2515 = vmatpush1.msra.mxu0 0.0
  %2516 = vmatprep.subr.mxu0 0.0
  %2517 = vmatpush1.msra.mxu0 0.0
  %2518 = vmatprep.subr.mxu0 0.0
  %2519 = vmatpush1.msra.mxu0 0.0
  %2520 = vmatprep.subr.mxu0 0.0
  %2521 = vmatpush1.msra.mxu0 0.0
  %2522 = vmatprep.subr.mxu0 0.0
  %2523 = vmatpush1.msra.mxu0 0.0
  %2524 = vmatprep.subr.mxu0 0.0
  %2525 = vmatpush1.msra.mxu0 0.0
  %2526 = vmatprep.subr.mxu0 0.0
  %2527 = vmatpush1.msra.mxu0 0.0
  %2528 = vmatprep.subr.mxu0 0.0
  %2529 = vmatpush1.msra.mxu0 0.0
  %2530 = vmatprep.subr.mxu0 0.0
  %2531 = vmatpush1.msra.mxu0 0.0
  %2532 = vmatprep.subr.mxu0 0.0
  %2533 = vmatpush1.msra.mxu0 0.0
  %2534 = vmatprep.subr.mxu0 0.0
  %2535 = vmatpush1.msra.mxu0 0.0
  %2536 = vmatprep.mubr.f32.mxu0 0.0
  %2537 = vmatmul.mubr.f32.gmra.mrb[0].mxu0 %v2452
  %v2538 = vpop.f32.mrb[0].mxu0
  %v2539 = vadd.f32 0.0, %v2538
  %v2540 = vpop.f32.mrb[0].mxu0
  %2541 = vmatprep.mubr.f32.mxu0 0.0
  %2542 = vmatmul.mubr.f32.gmra.mrb[0].mxu0 %v2455
  %v2543 = vpop.f32.mrb[0].mxu0
  %v2544 = vadd.f32 0.0, %v2543
  %v2545 = vpop.f32.mrb[0].mxu0
  %2546 = vmatprep.mubr.f32.mxu0 0.0
  %2547 = vmatmul.mubr.f32.gmra.mrb[0].mxu0 %v2458
  %v2548 = vpop.f32.mrb[0].mxu0
  %v2549 = vadd.f32 0.0, %v2548
  %v2550 = vpop.f32.mrb[0].mxu0
  %2551 = vmatprep.mubr.f32.mxu0 0.0
  %2552 = vmatmul.mubr.f32.gmra.mrb[0].mxu0 %v2461
  %v2553 = vpop.f32.mrb[0].mxu0
  %v2554 = vadd.f32 0.0, %v2553
  %v2555 = vpop.f32.mrb[0].mxu0
  %2556 = vmatprep.mubr.f32.mxu0 0.0
  %2557 = vmatmul.mubr.f32.gmra.mrb[0].mxu0 %v2464
  %v2558 = vpop.f32.mrb[0].mxu0
  %v2559 = vadd.f32 0.0, %v2558
  %v2560 = vpop.f32.mrb[0].mxu0
  %2561 = vmatprep.mubr.f32.mxu0 0.0
  %2562 = vmatmul.mubr.f32.gmra.mrb[0].mxu0 %v2467
  %v2563 = vpop.f32.mrb[0].mxu0
  %v2564 = vadd.f32 0.0, %v2563
  %v2565 = vpop.f32.mrb[0].mxu0
  %2566 = vmatprep.mubr.f32.mxu0 0.0
  %2567 = vmatmul.mubr.f32.gmra.mrb[0].mxu0 %v2470
  %v2568 = vpop.f32.mrb[0].mxu0
  %v2569 = vadd.f32 0.0, %v2568
  %v2570 = vpop.f32.mrb[0].mxu0
  %2571 = vdwg.mxu0
  %v2572 = vadd.f32 %v2184, %v2539
  %v2573 = vadd.f32 %v2185, %v2544
  %v2574 = vadd.f32 %v2186, %v2549
  %v2575 = vadd.f32 %v2187, %v2554
  %v2576 = vadd.f32 %v2188, %v2559
  %v2577 = vadd.f32 %v2189, %v2564
  %v2578 = vadd.f32 %v2190, %v2569
  %s2579 = scalar_lea.vmem %s4, 336
  %v2580 = vld [vmem:[%s2579] sm:$0xff]
  %v2581 = vld [vmem:[%s2579 + $0x8] sm:$0xf]
  %v2582 = vld [vmem:[%s2579 + $0xc] sm:$0xff]
  %v2583 = vld [vmem:[%s2579 + $0x14] sm:$0xf]
  %v2584 = vld [vmem:[%s2579 + $0x18] sm:$0xff]
  %v2585 = vld [vmem:[%s2579 + $0x20] sm:$0xf]
  %v2586 = vld [vmem:[%s2579 + $0x24] sm:$0xff]
  %v2587 = vld [vmem:[%s2579 + $0x2c] sm:$0xf]
  %v2588 = vld [vmem:[%s2579 + $0x30] sm:$0xff]
  %v2589 = vld [vmem:[%s2579 + $0x38] sm:$0xf]
  %v2590 = vld [vmem:[%s2579 + $0x3c] sm:$0xff]
  %v2591 = vld [vmem:[%s2579 + $0x44] sm:$0xf]
  %v2592 = vld [vmem:[%s2579 + $0x48] sm:$0xff]
  %v2593 = vld [vmem:[%s2579 + $0x50] sm:$0xf]
  %v2594 = vunpack.c.l.bf16 %v2580
  %v2595 = vunpack.c.h.bf16 %v2580
  %v2596 = vunpack.c.l.bf16 %v2581
  %v2597 = vunpack.c.l.bf16 %v2582
  %v2598 = vunpack.c.h.bf16 %v2582
  %v2599 = vunpack.c.l.bf16 %v2583
  %v2600 = vunpack.c.l.bf16 %v2584
  %v2601 = vunpack.c.h.bf16 %v2584
  %v2602 = vunpack.c.l.bf16 %v2585
  %v2603 = vunpack.c.l.bf16 %v2586
  %v2604 = vunpack.c.h.bf16 %v2586
  %v2605 = vunpack.c.l.bf16 %v2587
  %v2606 = vunpack.c.l.bf16 %v2588
  %v2607 = vunpack.c.h.bf16 %v2588
  %v2608 = vunpack.c.l.bf16 %v2589
  %v2609 = vunpack.c.l.bf16 %v2590
  %v2610 = vunpack.c.h.bf16 %v2590
  %v2611 = vunpack.c.l.bf16 %v2591
  %v2612 = vunpack.c.l.bf16 %v2592
  %v2613 = vunpack.c.h.bf16 %v2592
  %v2614 = vunpack.c.l.bf16 %v2593
  %v2616 = vsel %vm1077, %v2596, 0
  %v2619 = vsel %vm1077, %v2599, 0
  %v2622 = vsel %vm1077, %v2602, 0
  %v2625 = vsel %vm1077, %v2605, 0
  %v2628 = vsel %vm1077, %v2608, 0
  %v2631 = vsel %vm1077, %v2611, 0
  %v2634 = vsel %vm1077, %v2614, 0
  %2636 = vmatprep.subr.mxu0 0.0
  %2637 = vmatpush1.msra.mxu0 %v999
  %2638 = vmatprep.subr.mxu0 0.0
  %2639 = vmatpush1.msra.mxu0 %v1000
  %2640 = vmatprep.subr.mxu0 0.0
  %2641 = vmatpush1.msra.mxu0 %v1001
  %2642 = vmatprep.subr.mxu0 0.0
  %2643 = vmatpush1.msra.mxu0 %v1002
  %2644 = vmatprep.subr.mxu0 0.0
  %2645 = vmatpush1.msra.mxu0 %v1003
  %2646 = vmatprep.subr.mxu0 0.0
  %2647 = vmatpush1.msra.mxu0 %v1004
  %2648 = vmatprep.subr.mxu0 0.0
  %2649 = vmatpush1.msra.mxu0 %v1005
  %2650 = vmatprep.subr.mxu0 0.0
  %2651 = vmatpush1.msra.mxu0 %v1006
  %2652 = vmatprep.subr.mxu0 0.0
  %2653 = vmatpush1.msra.mxu0 %v1007
  %2654 = vmatprep.subr.mxu0 0.0
  %2655 = vmatpush1.msra.mxu0 %v1008
  %2656 = vmatprep.subr.mxu0 0.0
  %2657 = vmatpush1.msra.mxu0 %v1009
  %2658 = vmatprep.subr.mxu0 0.0
  %2659 = vmatpush1.msra.mxu0 %v1010
  %2660 = vmatprep.subr.mxu0 0.0
  %2661 = vmatpush1.msra.mxu0 %v1011
  %2662 = vmatprep.subr.mxu0 0.0
  %2663 = vmatpush1.msra.mxu0 %v1012
  %2664 = vmatprep.subr.mxu0 0.0
  %2665 = vmatpush1.msra.mxu0 %v1013
  %2666 = vmatprep.subr.mxu0 0.0
  %2667 = vmatpush1.msra.mxu0 %v1014
  %2668 = vmatprep.subr.mxu0 0.0
  %2669 = vmatpush1.msra.mxu0 %v1015
  %2670 = vmatprep.subr.mxu0 0.0
  %2671 = vmatpush1.msra.mxu0 %v1016
  %2672 = vmatprep.subr.mxu0 0.0
  %2673 = vmatpush1.msra.mxu0 %v1017
  %2674 = vmatprep.subr.mxu0 0.0
  %2675 = vmatpush1.msra.mxu0 %v1018
  %2676 = vmatprep.subr.mxu0 0.0
  %2677 = vmatpush1.msra.mxu0 %v1019
  %2678 = vmatprep.subr.mxu0 0.0
  %2679 = vmatpush1.msra.mxu0 %v1020
  %2680 = vmatprep.subr.mxu0 0.0
  %2681 = vmatpush1.msra.mxu0 %v1021
  %2682 = vmatprep.subr.mxu0 0.0
  %2683 = vmatpush1.msra.mxu0 %v1022
  %2684 = vmatprep.subr.mxu0 0.0
  %2685 = vmatpush1.msra.mxu0 %v1023
  %2686 = vmatprep.subr.mxu0 0.0
  %2687 = vmatpush1.msra.mxu0 %v1024
  %2688 = vmatprep.subr.mxu0 0.0
  %2689 = vmatpush1.msra.mxu0 %v1025
  %2690 = vmatprep.subr.mxu0 0.0
  %2691 = vmatpush1.msra.mxu0 %v1026
  %2692 = vmatprep.subr.mxu0 0.0
  %2693 = vmatpush1.msra.mxu0 %v1027
  %2694 = vmatprep.subr.mxu0 0.0
  %2695 = vmatpush1.msra.mxu0 %v1028
  %2696 = vmatprep.subr.mxu0 0.0
  %2697 = vmatpush1.msra.mxu0 %v1029
  %2698 = vmatprep.subr.mxu0 0.0
  %2699 = vmatpush1.msra.mxu0 %v1030
  %2700 = vmatprep.mubr.f32.mxu0 %v2595
  %2701 = vmatmul.mubr.f32.gmra.mrb[0].mxu0 %v2594
  %v2702 = vpop.f32.mrb[0].mxu0
  %v2703 = vadd.f32 0.0, %v2702
  %v2704 = vpop.f32.mrb[0].mxu0
  %2705 = vmatprep.mubr.f32.mxu0 %v2598
  %2706 = vmatmul.mubr.f32.gmra.mrb[0].mxu0 %v2597
  %v2707 = vpop.f32.mrb[0].mxu0
  %v2708 = vadd.f32 0.0, %v2707
  %v2709 = vpop.f32.mrb[0].mxu0
  %2710 = vmatprep.mubr.f32.mxu0 %v2601
  %2711 = vmatmul.mubr.f32.gmra.mrb[0].mxu0 %v2600
  %v2712 = vpop.f32.mrb[0].mxu0
  %v2713 = vadd.f32 0.0, %v2712
  %v2714 = vpop.f32.mrb[0].mxu0
  %2715 = vmatprep.mubr.f32.mxu0 %v2604
  %2716 = vmatmul.mubr.f32.gmra.mrb[0].mxu0 %v2603
  %v2717 = vpop.f32.mrb[0].mxu0
  %v2718 = vadd.f32 0.0, %v2717
  %v2719 = vpop.f32.mrb[0].mxu0
  %2720 = vmatprep.mubr.f32.mxu0 %v2607
  %2721 = vmatmul.mubr.f32.gmra.mrb[0].mxu0 %v2606
  %v2722 = vpop.f32.mrb[0].mxu0
  %v2723 = vadd.f32 0.0, %v2722
  %v2724 = vpop.f32.mrb[0].mxu0
  %2725 = vmatprep.mubr.f32.mxu0 %v2610
  %2726 = vmatmul.mubr.f32.gmra.mrb[0].mxu0 %v2609
  %v2727 = vpop.f32.mrb[0].mxu0
  %v2728 = vadd.f32 0.0, %v2727
  %v2729 = vpop.f32.mrb[0].mxu0
  %2730 = vmatprep.mubr.f32.mxu0 %v2613
  %2731 = vmatmul.mubr.f32.gmra.mrb[0].mxu0 %v2612
  %v2732 = vpop.f32.mrb[0].mxu0
  %v2733 = vadd.f32 0.0, %v2732
  %v2734 = vpop.f32.mrb[0].mxu0
  %2735 = vdwg.mxu0
  %2736 = vmatprep.subr.mxu0 0.0
  %2737 = vmatpush1.msra.mxu0 %v1031
  %2738 = vmatprep.subr.mxu0 0.0
  %2739 = vmatpush1.msra.mxu0 %v1032
  %2740 = vmatprep.subr.mxu0 0.0
  %2741 = vmatpush1.msra.mxu0 %v1033
  %2742 = vmatprep.subr.mxu0 0.0
  %2743 = vmatpush1.msra.mxu0 %v1034
  %2744 = vmatprep.subr.mxu0 0.0
  %2745 = vmatpush1.msra.mxu0 %v1035
  %2746 = vmatprep.subr.mxu0 0.0
  %2747 = vmatpush1.msra.mxu0 %v1036
  %2748 = vmatprep.subr.mxu0 0.0
  %2749 = vmatpush1.msra.mxu0 %v1037
  %2750 = vmatprep.subr.mxu0 0.0
  %2751 = vmatpush1.msra.mxu0 %v1038
  %2752 = vmatprep.subr.mxu0 0.0
  %2753 = vmatpush1.msra.mxu0 %v1039
  %2754 = vmatprep.subr.mxu0 0.0
  %2755 = vmatpush1.msra.mxu0 %v1040
  %2756 = vmatprep.subr.mxu0 0.0
  %2757 = vmatpush1.msra.mxu0 %v1041
  %2758 = vmatprep.subr.mxu0 0.0
  %2759 = vmatpush1.msra.mxu0 0.0
  %2760 = vmatprep.subr.mxu0 0.0
  %2761 = vmatpush1.msra.mxu0 0.0
  %2762 = vmatprep.subr.mxu0 0.0
  %2763 = vmatpush1.msra.mxu0 0.0
  %2764 = vmatprep.subr.mxu0 0.0
  %2765 = vmatpush1.msra.mxu0 0.0
  %2766 = vmatprep.subr.mxu0 0.0
  %2767 = vmatpush1.msra.mxu0 0.0
  %2768 = vmatprep.subr.mxu0 0.0
  %2769 = vmatpush1.msra.mxu0 0.0
  %2770 = vmatprep.subr.mxu0 0.0
  %2771 = vmatpush1.msra.mxu0 0.0
  %2772 = vmatprep.subr.mxu0 0.0
  %2773 = vmatpush1.msra.mxu0 0.0
  %2774 = vmatprep.subr.mxu0 0.0
  %2775 = vmatpush1.msra.mxu0 0.0
  %2776 = vmatprep.subr.mxu0 0.0
  %2777 = vmatpush1.msra.mxu0 0.0
  %2778 = vmatprep.subr.mxu0 0.0
  %2779 = vmatpush1.msra.mxu0 0.0
  %2780 = vmatprep.subr.mxu0 0.0
  %2781 = vmatpush1.msra.mxu0 0.0
  %2782 = vmatprep.subr.mxu0 0.0
  %2783 = vmatpush1.msra.mxu0 0.0
  %2784 = vmatprep.subr.mxu0 0.0
  %2785 = vmatpush1.msra.mxu0 0.0
  %2786 = vmatprep.subr.mxu0 0.0
  %2787 = vmatpush1.msra.mxu0 0.0
  %2788 = vmatprep.subr.mxu0 0.0
  %2789 = vmatpush1.msra.mxu0 0.0
  %2790 = vmatprep.subr.mxu0 0.0
  %2791 = vmatpush1.msra.mxu0 0.0
  %2792 = vmatprep.subr.mxu0 0.0
  %2793 = vmatpush1.msra.mxu0 0.0
  %2794 = vmatprep.subr.mxu0 0.0
  %2795 = vmatpush1.msra.mxu0 0.0
  %2796 = vmatprep.subr.mxu0 0.0
  %2797 = vmatpush1.msra.mxu0 0.0
  %2798 = vmatprep.subr.mxu0 0.0
  %2799 = vmatpush1.msra.mxu0 0.0
  %2800 = vmatprep.mubr.f32.mxu0 0.0
  %2801 = vmatmul.mubr.f32.gmra.mrb[0].mxu0 %v2616
  %v2802 = vpop.f32.mrb[0].mxu0
  %v2803 = vadd.f32 %v2703, %v2802
  %v2804 = vpop.f32.mrb[0].mxu0
  %2805 = vmatprep.mubr.f32.mxu0 0.0
  %2806 = vmatmul.mubr.f32.gmra.mrb[0].mxu0 %v2619
  %v2807 = vpop.f32.mrb[0].mxu0
  %v2808 = vadd.f32 %v2708, %v2807
  %v2809 = vpop.f32.mrb[0].mxu0
  %2810 = vmatprep.mubr.f32.mxu0 0.0
  %2811 = vmatmul.mubr.f32.gmra.mrb[0].mxu0 %v2622
  %v2812 = vpop.f32.mrb[0].mxu0
  %v2813 = vadd.f32 %v2713, %v2812
  %v2814 = vpop.f32.mrb[0].mxu0
  %2815 = vmatprep.mubr.f32.mxu0 0.0
  %2816 = vmatmul.mubr.f32.gmra.mrb[0].mxu0 %v2625
  %v2817 = vpop.f32.mrb[0].mxu0
  %v2818 = vadd.f32 %v2718, %v2817
  %v2819 = vpop.f32.mrb[0].mxu0
  %2820 = vmatprep.mubr.f32.mxu0 0.0
  %2821 = vmatmul.mubr.f32.gmra.mrb[0].mxu0 %v2628
  %v2822 = vpop.f32.mrb[0].mxu0
  %v2823 = vadd.f32 %v2723, %v2822
  %v2824 = vpop.f32.mrb[0].mxu0
  %2825 = vmatprep.mubr.f32.mxu0 0.0
  %2826 = vmatmul.mubr.f32.gmra.mrb[0].mxu0 %v2631
  %v2827 = vpop.f32.mrb[0].mxu0
  %v2828 = vadd.f32 %v2728, %v2827
  %v2829 = vpop.f32.mrb[0].mxu0
  %2830 = vmatprep.mubr.f32.mxu0 0.0
  %2831 = vmatmul.mubr.f32.gmra.mrb[0].mxu0 %v2634
  %v2832 = vpop.f32.mrb[0].mxu0
  %v2833 = vadd.f32 %v2733, %v2832
  %v2834 = vpop.f32.mrb[0].mxu0
  %2835 = vdwg.mxu0
  %s2836 = scalar_lea.vmem %s5, 64
  %v2837 = vld [vmem:[%s2836] sm:$0xff]
  %v2838 = vld [vmem:[%s2836 + $0x8] sm:$0xff]
  %v2840 = vsel %vm85, %v2803, 0
  %v2843 = vsel %vm85, %v2808, 0
  %v2846 = vsel %vm85, %v2813, 0
  %v2849 = vsel %vm85, %v2818, 0
  %v2852 = vsel %vm85, %v2823, 0
  %v2855 = vsel %vm85, %v2828, 0
  %v2858 = vsel %vm85, %v2833, 0
  %2860 = vmatprep.subr.mxu0 0.0
  %2861 = vmatpush1.msra.mxu0 %v2837
  %2862 = vmatprep.subr.mxu0 0.0
  %2863 = vmatpush1.msra.mxu0 %v2838
  %2864 = vmatprep.subr.mxu0 0.0
  %2865 = vmatpush1.msra.mxu0 0.0
  %2866 = vmatprep.subr.mxu0 0.0
  %2867 = vmatpush1.msra.mxu0 0.0
  %2868 = vmatprep.subr.mxu0 0.0
  %2869 = vmatpush1.msra.mxu0 0.0
  %2870 = vmatprep.subr.mxu0 0.0
  %2871 = vmatpush1.msra.mxu0 0.0
  %2872 = vmatprep.subr.mxu0 0.0
  %2873 = vmatpush1.msra.mxu0 0.0
  %2874 = vmatprep.subr.mxu0 0.0
  %2875 = vmatpush1.msra.mxu0 0.0
  %2876 = vmatprep.subr.mxu0 0.0
  %2877 = vmatpush1.msra.mxu0 0.0
  %2878 = vmatprep.subr.mxu0 0.0
  %2879 = vmatpush1.msra.mxu0 0.0
  %2880 = vmatprep.subr.mxu0 0.0
  %2881 = vmatpush1.msra.mxu0 0.0
  %2882 = vmatprep.subr.mxu0 0.0
  %2883 = vmatpush1.msra.mxu0 0.0
  %2884 = vmatprep.subr.mxu0 0.0
  %2885 = vmatpush1.msra.mxu0 0.0
  %2886 = vmatprep.subr.mxu0 0.0
  %2887 = vmatpush1.msra.mxu0 0.0
  %2888 = vmatprep.subr.mxu0 0.0
  %2889 = vmatpush1.msra.mxu0 0.0
  %2890 = vmatprep.subr.mxu0 0.0
  %2891 = vmatpush1.msra.mxu0 0.0
  %2892 = vmatprep.subr.mxu0 0.0
  %2893 = vmatpush1.msra.mxu0 0.0
  %2894 = vmatprep.subr.mxu0 0.0
  %2895 = vmatpush1.msra.mxu0 0.0
  %2896 = vmatprep.subr.mxu0 0.0
  %2897 = vmatpush1.msra.mxu0 0.0
  %2898 = vmatprep.subr.mxu0 0.0
  %2899 = vmatpush1.msra.mxu0 0.0
  %2900 = vmatprep.subr.mxu0 0.0
  %2901 = vmatpush1.msra.mxu0 0.0
  %2902 = vmatprep.subr.mxu0 0.0
  %2903 = vmatpush1.msra.mxu0 0.0
  %2904 = vmatprep.subr.mxu0 0.0
  %2905 = vmatpush1.msra.mxu0 0.0
  %2906 = vmatprep.subr.mxu0 0.0
  %2907 = vmatpush1.msra.mxu0 0.0
  %2908 = vmatprep.subr.mxu0 0.0
  %2909 = vmatpush1.msra.mxu0 0.0
  %2910 = vmatprep.subr.mxu0 0.0
  %2911 = vmatpush1.msra.mxu0 0.0
  %2912 = vmatprep.subr.mxu0 0.0
  %2913 = vmatpush1.msra.mxu0 0.0
  %2914 = vmatprep.subr.mxu0 0.0
  %2915 = vmatpush1.msra.mxu0 0.0
  %2916 = vmatprep.subr.mxu0 0.0
  %2917 = vmatpush1.msra.mxu0 0.0
  %2918 = vmatprep.subr.mxu0 0.0
  %2919 = vmatpush1.msra.mxu0 0.0
  %2920 = vmatprep.subr.mxu0 0.0
  %2921 = vmatpush1.msra.mxu0 0.0
  %2922 = vmatprep.subr.mxu0 0.0
  %2923 = vmatpush1.msra.mxu0 0.0
  %2924 = vmatprep.mubr.f32.mxu0 0.0
  %2925 = vmatmul.mubr.f32.gmra.mrb[0].mxu0 %v2840
  %v2926 = vpop.f32.mrb[0].mxu0
  %v2927 = vadd.f32 0.0, %v2926
  %v2928 = vpop.f32.mrb[0].mxu0
  %2929 = vmatprep.mubr.f32.mxu0 0.0
  %2930 = vmatmul.mubr.f32.gmra.mrb[0].mxu0 %v2843
  %v2931 = vpop.f32.mrb[0].mxu0
  %v2932 = vadd.f32 0.0, %v2931
  %v2933 = vpop.f32.mrb[0].mxu0
  %2934 = vmatprep.mubr.f32.mxu0 0.0
  %2935 = vmatmul.mubr.f32.gmra.mrb[0].mxu0 %v2846
  %v2936 = vpop.f32.mrb[0].mxu0
  %v2937 = vadd.f32 0.0, %v2936
  %v2938 = vpop.f32.mrb[0].mxu0
  %2939 = vmatprep.mubr.f32.mxu0 0.0
  %2940 = vmatmul.mubr.f32.gmra.mrb[0].mxu0 %v2849
  %v2941 = vpop.f32.mrb[0].mxu0
  %v2942 = vadd.f32 0.0, %v2941
  %v2943 = vpop.f32.mrb[0].mxu0
  %2944 = vmatprep.mubr.f32.mxu0 0.0
  %2945 = vmatmul.mubr.f32.gmra.mrb[0].mxu0 %v2852
  %v2946 = vpop.f32.mrb[0].mxu0
  %v2947 = vadd.f32 0.0, %v2946
  %v2948 = vpop.f32.mrb[0].mxu0
  %2949 = vmatprep.mubr.f32.mxu0 0.0
  %2950 = vmatmul.mubr.f32.gmra.mrb[0].mxu0 %v2855
  %v2951 = vpop.f32.mrb[0].mxu0
  %v2952 = vadd.f32 0.0, %v2951
  %v2953 = vpop.f32.mrb[0].mxu0
  %2954 = vmatprep.mubr.f32.mxu0 0.0
  %2955 = vmatmul.mubr.f32.gmra.mrb[0].mxu0 %v2858
  %v2956 = vpop.f32.mrb[0].mxu0
  %v2957 = vadd.f32 0.0, %v2956
  %v2958 = vpop.f32.mrb[0].mxu0
  %2959 = vdwg.mxu0
  %v2960 = vadd.f32 %v2572, %v2927
  %v2961 = vadd.f32 %v2573, %v2932
  %v2962 = vadd.f32 %v2574, %v2937
  %v2963 = vadd.f32 %v2575, %v2942
  %v2964 = vadd.f32 %v2576, %v2947
  %v2965 = vadd.f32 %v2577, %v2952
  %v2966 = vadd.f32 %v2578, %v2957
  %s2967 = scalar_lea.vmem %s4, 420
  %v2968 = vld [vmem:[%s2967] sm:$0xff]
  %v2969 = vld [vmem:[%s2967 + $0x8] sm:$0xf]
  %v2970 = vld [vmem:[%s2967 + $0xc] sm:$0xff]
  %v2971 = vld [vmem:[%s2967 + $0x14] sm:$0xf]
  %v2972 = vld [vmem:[%s2967 + $0x18] sm:$0xff]
  %v2973 = vld [vmem:[%s2967 + $0x20] sm:$0xf]
  %v2974 = vld [vmem:[%s2967 + $0x24] sm:$0xff]
  %v2975 = vld [vmem:[%s2967 + $0x2c] sm:$0xf]
  %v2976 = vld [vmem:[%s2967 + $0x30] sm:$0xff]
  %v2977 = vld [vmem:[%s2967 + $0x38] sm:$0xf]
  %v2978 = vld [vmem:[%s2967 + $0x3c] sm:$0xff]
  %v2979 = vld [vmem:[%s2967 + $0x44] sm:$0xf]
  %v2980 = vld [vmem:[%s2967 + $0x48] sm:$0xff]
  %v2981 = vld [vmem:[%s2967 + $0x50] sm:$0xf]
  %v2982 = vunpack.c.l.bf16 %v2968
  %v2983 = vunpack.c.h.bf16 %v2968
  %v2984 = vunpack.c.l.bf16 %v2969
  %v2985 = vunpack.c.l.bf16 %v2970
  %v2986 = vunpack.c.h.bf16 %v2970
  %v2987 = vunpack.c.l.bf16 %v2971
  %v2988 = vunpack.c.l.bf16 %v2972
  %v2989 = vunpack.c.h.bf16 %v2972
  %v2990 = vunpack.c.l.bf16 %v2973
  %v2991 = vunpack.c.l.bf16 %v2974
  %v2992 = vunpack.c.h.bf16 %v2974
  %v2993 = vunpack.c.l.bf16 %v2975
  %v2994 = vunpack.c.l.bf16 %v2976
  %v2995 = vunpack.c.h.bf16 %v2976
  %v2996 = vunpack.c.l.bf16 %v2977
  %v2997 = vunpack.c.l.bf16 %v2978
  %v2998 = vunpack.c.h.bf16 %v2978
  %v2999 = vunpack.c.l.bf16 %v2979
  %v3000 = vunpack.c.l.bf16 %v2980
  %v3001 = vunpack.c.h.bf16 %v2980
  %v3002 = vunpack.c.l.bf16 %v2981
  %v3004 = vsel %vm1077, %v2984, 0
  %v3007 = vsel %vm1077, %v2987, 0
  %v3010 = vsel %vm1077, %v2990, 0
  %v3013 = vsel %vm1077, %v2993, 0
  %v3016 = vsel %vm1077, %v2996, 0
  %v3019 = vsel %vm1077, %v2999, 0
  %v3022 = vsel %vm1077, %v3002, 0
  %3024 = vmatprep.subr.mxu0 0.0
  %3025 = vmatpush1.msra.mxu0 %v999
  %3026 = vmatprep.subr.mxu0 0.0
  %3027 = vmatpush1.msra.mxu0 %v1000
  %3028 = vmatprep.subr.mxu0 0.0
  %3029 = vmatpush1.msra.mxu0 %v1001
  %3030 = vmatprep.subr.mxu0 0.0
  %3031 = vmatpush1.msra.mxu0 %v1002
  %3032 = vmatprep.subr.mxu0 0.0
  %3033 = vmatpush1.msra.mxu0 %v1003
  %3034 = vmatprep.subr.mxu0 0.0
  %3035 = vmatpush1.msra.mxu0 %v1004
  %3036 = vmatprep.subr.mxu0 0.0
  %3037 = vmatpush1.msra.mxu0 %v1005
  %3038 = vmatprep.subr.mxu0 0.0
  %3039 = vmatpush1.msra.mxu0 %v1006
  %3040 = vmatprep.subr.mxu0 0.0
  %3041 = vmatpush1.msra.mxu0 %v1007
  %3042 = vmatprep.subr.mxu0 0.0
  %3043 = vmatpush1.msra.mxu0 %v1008
  %3044 = vmatprep.subr.mxu0 0.0
  %3045 = vmatpush1.msra.mxu0 %v1009
  %3046 = vmatprep.subr.mxu0 0.0
  %3047 = vmatpush1.msra.mxu0 %v1010
  %3048 = vmatprep.subr.mxu0 0.0
  %3049 = vmatpush1.msra.mxu0 %v1011
  %3050 = vmatprep.subr.mxu0 0.0
  %3051 = vmatpush1.msra.mxu0 %v1012
  %3052 = vmatprep.subr.mxu0 0.0
  %3053 = vmatpush1.msra.mxu0 %v1013
  %3054 = vmatprep.subr.mxu0 0.0
  %3055 = vmatpush1.msra.mxu0 %v1014
  %3056 = vmatprep.subr.mxu0 0.0
  %3057 = vmatpush1.msra.mxu0 %v1015
  %3058 = vmatprep.subr.mxu0 0.0
  %3059 = vmatpush1.msra.mxu0 %v1016
  %3060 = vmatprep.subr.mxu0 0.0
  %3061 = vmatpush1.msra.mxu0 %v1017
  %3062 = vmatprep.subr.mxu0 0.0
  %3063 = vmatpush1.msra.mxu0 %v1018
  %3064 = vmatprep.subr.mxu0 0.0
  %3065 = vmatpush1.msra.mxu0 %v1019
  %3066 = vmatprep.subr.mxu0 0.0
  %3067 = vmatpush1.msra.mxu0 %v1020
  %3068 = vmatprep.subr.mxu0 0.0
  %3069 = vmatpush1.msra.mxu0 %v1021
  %3070 = vmatprep.subr.mxu0 0.0
  %3071 = vmatpush1.msra.mxu0 %v1022
  %3072 = vmatprep.subr.mxu0 0.0
  %3073 = vmatpush1.msra.mxu0 %v1023
  %3074 = vmatprep.subr.mxu0 0.0
  %3075 = vmatpush1.msra.mxu0 %v1024
  %3076 = vmatprep.subr.mxu0 0.0
  %3077 = vmatpush1.msra.mxu0 %v1025
  %3078 = vmatprep.subr.mxu0 0.0
  %3079 = vmatpush1.msra.mxu0 %v1026
  %3080 = vmatprep.subr.mxu0 0.0
  %3081 = vmatpush1.msra.mxu0 %v1027
  %3082 = vmatprep.subr.mxu0 0.0
  %3083 = vmatpush1.msra.mxu0 %v1028
  %3084 = vmatprep.subr.mxu0 0.0
  %3085 = vmatpush1.msra.mxu0 %v1029
  %3086 = vmatprep.subr.mxu0 0.0
  %3087 = vmatpush1.msra.mxu0 %v1030
  %3088 = vmatprep.mubr.f32.mxu0 %v2983
  %3089 = vmatmul.mubr.f32.gmra.mrb[0].mxu0 %v2982
  %v3090 = vpop.f32.mrb[0].mxu0
  %v3091 = vadd.f32 0.0, %v3090
  %v3092 = vpop.f32.mrb[0].mxu0
  %3093 = vmatprep.mubr.f32.mxu0 %v2986
  %3094 = vmatmul.mubr.f32.gmra.mrb[0].mxu0 %v2985
  %v3095 = vpop.f32.mrb[0].mxu0
  %v3096 = vadd.f32 0.0, %v3095
  %v3097 = vpop.f32.mrb[0].mxu0
  %3098 = vmatprep.mubr.f32.mxu0 %v2989
  %3099 = vmatmul.mubr.f32.gmra.mrb[0].mxu0 %v2988
  %v3100 = vpop.f32.mrb[0].mxu0
  %v3101 = vadd.f32 0.0, %v3100
  %v3102 = vpop.f32.mrb[0].mxu0
  %3103 = vmatprep.mubr.f32.mxu0 %v2992
  %3104 = vmatmul.mubr.f32.gmra.mrb[0].mxu0 %v2991
  %v3105 = vpop.f32.mrb[0].mxu0
  %v3106 = vadd.f32 0.0, %v3105
  %v3107 = vpop.f32.mrb[0].mxu0
  %3108 = vmatprep.mubr.f32.mxu0 %v2995
  %3109 = vmatmul.mubr.f32.gmra.mrb[0].mxu0 %v2994
  %v3110 = vpop.f32.mrb[0].mxu0
  %v3111 = vadd.f32 0.0, %v3110
  %v3112 = vpop.f32.mrb[0].mxu0
  %3113 = vmatprep.mubr.f32.mxu0 %v2998
  %3114 = vmatmul.mubr.f32.gmra.mrb[0].mxu0 %v2997
  %v3115 = vpop.f32.mrb[0].mxu0
  %v3116 = vadd.f32 0.0, %v3115
  %v3117 = vpop.f32.mrb[0].mxu0
  %3118 = vmatprep.mubr.f32.mxu0 %v3001
  %3119 = vmatmul.mubr.f32.gmra.mrb[0].mxu0 %v3000
  %v3120 = vpop.f32.mrb[0].mxu0
  %v3121 = vadd.f32 0.0, %v3120
  %v3122 = vpop.f32.mrb[0].mxu0
  %3123 = vdwg.mxu0
  %3124 = vmatprep.subr.mxu0 0.0
  %3125 = vmatpush1.msra.mxu0 %v1031
  %3126 = vmatprep.subr.mxu0 0.0
  %3127 = vmatpush1.msra.mxu0 %v1032
  %3128 = vmatprep.subr.mxu0 0.0
  %3129 = vmatpush1.msra.mxu0 %v1033
  %3130 = vmatprep.subr.mxu0 0.0
  %3131 = vmatpush1.msra.mxu0 %v1034
  %3132 = vmatprep.subr.mxu0 0.0
  %3133 = vmatpush1.msra.mxu0 %v1035
  %3134 = vmatprep.subr.mxu0 0.0
  %3135 = vmatpush1.msra.mxu0 %v1036
  %3136 = vmatprep.subr.mxu0 0.0
  %3137 = vmatpush1.msra.mxu0 %v1037
  %3138 = vmatprep.subr.mxu0 0.0
  %3139 = vmatpush1.msra.mxu0 %v1038
  %3140 = vmatprep.subr.mxu0 0.0
  %3141 = vmatpush1.msra.mxu0 %v1039
  %3142 = vmatprep.subr.mxu0 0.0
  %3143 = vmatpush1.msra.mxu0 %v1040
  %3144 = vmatprep.subr.mxu0 0.0
  %3145 = vmatpush1.msra.mxu0 %v1041
  %3146 = vmatprep.subr.mxu0 0.0
  %3147 = vmatpush1.msra.mxu0 0.0
  %3148 = vmatprep.subr.mxu0 0.0
  %3149 = vmatpush1.msra.mxu0 0.0
  %3150 = vmatprep.subr.mxu0 0.0
  %3151 = vmatpush1.msra.mxu0 0.0
  %3152 = vmatprep.subr.mxu0 0.0
  %3153 = vmatpush1.msra.mxu0 0.0
  %3154 = vmatprep.subr.mxu0 0.0
  %3155 = vmatpush1.msra.mxu0 0.0
  %3156 = vmatprep.subr.mxu0 0.0
  %3157 = vmatpush1.msra.mxu0 0.0
  %3158 = vmatprep.subr.mxu0 0.0
  %3159 = vmatpush1.msra.mxu0 0.0
  %3160 = vmatprep.subr.mxu0 0.0
  %3161 = vmatpush1.msra.mxu0 0.0
  %3162 = vmatprep.subr.mxu0 0.0
  %3163 = vmatpush1.msra.mxu0 0.0
  %3164 = vmatprep.subr.mxu0 0.0
  %3165 = vmatpush1.msra.mxu0 0.0
  %3166 = vmatprep.subr.mxu0 0.0
  %3167 = vmatpush1.msra.mxu0 0.0
  %3168 = vmatprep.subr.mxu0 0.0
  %3169 = vmatpush1.msra.mxu0 0.0
  %3170 = vmatprep.subr.mxu0 0.0
  %3171 = vmatpush1.msra.mxu0 0.0
  %3172 = vmatprep.subr.mxu0 0.0
  %3173 = vmatpush1.msra.mxu0 0.0
  %3174 = vmatprep.subr.mxu0 0.0
  %3175 = vmatpush1.msra.mxu0 0.0
  %3176 = vmatprep.subr.mxu0 0.0
  %3177 = vmatpush1.msra.mxu0 0.0
  %3178 = vmatprep.subr.mxu0 0.0
  %3179 = vmatpush1.msra.mxu0 0.0
  %3180 = vmatprep.subr.mxu0 0.0
  %3181 = vmatpush1.msra.mxu0 0.0
  %3182 = vmatprep.subr.mxu0 0.0
  %3183 = vmatpush1.msra.mxu0 0.0
  %3184 = vmatprep.subr.mxu0 0.0
  %3185 = vmatpush1.msra.mxu0 0.0
  %3186 = vmatprep.subr.mxu0 0.0
  %3187 = vmatpush1.msra.mxu0 0.0
  %3188 = vmatprep.mubr.f32.mxu0 0.0
  %3189 = vmatmul.mubr.f32.gmra.mrb[0].mxu0 %v3004
  %v3190 = vpop.f32.mrb[0].mxu0
  %v3191 = vadd.f32 %v3091, %v3190
  %v3192 = vpop.f32.mrb[0].mxu0
  %3193 = vmatprep.mubr.f32.mxu0 0.0
  %3194 = vmatmul.mubr.f32.gmra.mrb[0].mxu0 %v3007
  %v3195 = vpop.f32.mrb[0].mxu0
  %v3196 = vadd.f32 %v3096, %v3195
  %v3197 = vpop.f32.mrb[0].mxu0
  %3198 = vmatprep.mubr.f32.mxu0 0.0
  %3199 = vmatmul.mubr.f32.gmra.mrb[0].mxu0 %v3010
  %v3200 = vpop.f32.mrb[0].mxu0
  %v3201 = vadd.f32 %v3101, %v3200
  %v3202 = vpop.f32.mrb[0].mxu0
  %3203 = vmatprep.mubr.f32.mxu0 0.0
  %3204 = vmatmul.mubr.f32.gmra.mrb[0].mxu0 %v3013
  %v3205 = vpop.f32.mrb[0].mxu0
  %v3206 = vadd.f32 %v3106, %v3205
  %v3207 = vpop.f32.mrb[0].mxu0
  %3208 = vmatprep.mubr.f32.mxu0 0.0
  %3209 = vmatmul.mubr.f32.gmra.mrb[0].mxu0 %v3016
  %v3210 = vpop.f32.mrb[0].mxu0
  %v3211 = vadd.f32 %v3111, %v3210
  %v3212 = vpop.f32.mrb[0].mxu0
  %3213 = vmatprep.mubr.f32.mxu0 0.0
  %3214 = vmatmul.mubr.f32.gmra.mrb[0].mxu0 %v3019
  %v3215 = vpop.f32.mrb[0].mxu0
  %v3216 = vadd.f32 %v3116, %v3215
  %v3217 = vpop.f32.mrb[0].mxu0
  %3218 = vmatprep.mubr.f32.mxu0 0.0
  %3219 = vmatmul.mubr.f32.gmra.mrb[0].mxu0 %v3022
  %v3220 = vpop.f32.mrb[0].mxu0
  %v3221 = vadd.f32 %v3121, %v3220
  %v3222 = vpop.f32.mrb[0].mxu0
  %3223 = vdwg.mxu0
  %s3224 = scalar_lea.vmem %s5, 80
  %v3225 = vld [vmem:[%s3224] sm:$0xff]
  %v3226 = vld [vmem:[%s3224 + $0x8] sm:$0xff]
  %v3228 = vsel %vm85, %v3191, 0
  %v3231 = vsel %vm85, %v3196, 0
  %v3234 = vsel %vm85, %v3201, 0
  %v3237 = vsel %vm85, %v3206, 0
  %v3240 = vsel %vm85, %v3211, 0
  %v3243 = vsel %vm85, %v3216, 0
  %v3246 = vsel %vm85, %v3221, 0
  %3248 = vmatprep.subr.mxu0 0.0
  %3249 = vmatpush1.msra.mxu0 %v3225
  %3250 = vmatprep.subr.mxu0 0.0
  %3251 = vmatpush1.msra.mxu0 %v3226
  %3252 = vmatprep.subr.mxu0 0.0
  %3253 = vmatpush1.msra.mxu0 0.0
  %3254 = vmatprep.subr.mxu0 0.0
  %3255 = vmatpush1.msra.mxu0 0.0
  %3256 = vmatprep.subr.mxu0 0.0
  %3257 = vmatpush1.msra.mxu0 0.0
  %3258 = vmatprep.subr.mxu0 0.0
  %3259 = vmatpush1.msra.mxu0 0.0
  %3260 = vmatprep.subr.mxu0 0.0
  %3261 = vmatpush1.msra.mxu0 0.0
  %3262 = vmatprep.subr.mxu0 0.0
  %3263 = vmatpush1.msra.mxu0 0.0
  %3264 = vmatprep.subr.mxu0 0.0
  %3265 = vmatpush1.msra.mxu0 0.0
  %3266 = vmatprep.subr.mxu0 0.0
  %3267 = vmatpush1.msra.mxu0 0.0
  %3268 = vmatprep.subr.mxu0 0.0
  %3269 = vmatpush1.msra.mxu0 0.0
  %3270 = vmatprep.subr.mxu0 0.0
  %3271 = vmatpush1.msra.mxu0 0.0
  %3272 = vmatprep.subr.mxu0 0.0
  %3273 = vmatpush1.msra.mxu0 0.0
  %3274 = vmatprep.subr.mxu0 0.0
  %3275 = vmatpush1.msra.mxu0 0.0
  %3276 = vmatprep.subr.mxu0 0.0
  %3277 = vmatpush1.msra.mxu0 0.0
  %3278 = vmatprep.subr.mxu0 0.0
  %3279 = vmatpush1.msra.mxu0 0.0
  %3280 = vmatprep.subr.mxu0 0.0
  %3281 = vmatpush1.msra.mxu0 0.0
  %3282 = vmatprep.subr.mxu0 0.0
  %3283 = vmatpush1.msra.mxu0 0.0
  %3284 = vmatprep.subr.mxu0 0.0
  %3285 = vmatpush1.msra.mxu0 0.0
  %3286 = vmatprep.subr.mxu0 0.0
  %3287 = vmatpush1.msra.mxu0 0.0
  %3288 = vmatprep.subr.mxu0 0.0
  %3289 = vmatpush1.msra.mxu0 0.0
  %3290 = vmatprep.subr.mxu0 0.0
  %3291 = vmatpush1.msra.mxu0 0.0
  %3292 = vmatprep.subr.mxu0 0.0
  %3293 = vmatpush1.msra.mxu0 0.0
  %3294 = vmatprep.subr.mxu0 0.0
  %3295 = vmatpush1.msra.mxu0 0.0
  %3296 = vmatprep.subr.mxu0 0.0
  %3297 = vmatpush1.msra.mxu0 0.0
  %3298 = vmatprep.subr.mxu0 0.0
  %3299 = vmatpush1.msra.mxu0 0.0
  %3300 = vmatprep.subr.mxu0 0.0
  %3301 = vmatpush1.msra.mxu0 0.0
  %3302 = vmatprep.subr.mxu0 0.0
  %3303 = vmatpush1.msra.mxu0 0.0
  %3304 = vmatprep.subr.mxu0 0.0
  %3305 = vmatpush1.msra.mxu0 0.0
  %3306 = vmatprep.subr.mxu0 0.0
  %3307 = vmatpush1.msra.mxu0 0.0
  %3308 = vmatprep.subr.mxu0 0.0
  %3309 = vmatpush1.msra.mxu0 0.0
  %3310 = vmatprep.subr.mxu0 0.0
  %3311 = vmatpush1.msra.mxu0 0.0
  %3312 = vmatprep.mubr.f32.mxu0 0.0
  %3313 = vmatmul.mubr.f32.gmra.mrb[0].mxu0 %v3228
  %v3314 = vpop.f32.mrb[0].mxu0
  %v3315 = vadd.f32 0.0, %v3314
  %v3316 = vpop.f32.mrb[0].mxu0
  %3317 = vmatprep.mubr.f32.mxu0 0.0
  %3318 = vmatmul.mubr.f32.gmra.mrb[0].mxu0 %v3231
  %v3319 = vpop.f32.mrb[0].mxu0
  %v3320 = vadd.f32 0.0, %v3319
  %v3321 = vpop.f32.mrb[0].mxu0
  %3322 = vmatprep.mubr.f32.mxu0 0.0
  %3323 = vmatmul.mubr.f32.gmra.mrb[0].mxu0 %v3234
  %v3324 = vpop.f32.mrb[0].mxu0
  %v3325 = vadd.f32 0.0, %v3324
  %v3326 = vpop.f32.mrb[0].mxu0
  %3327 = vmatprep.mubr.f32.mxu0 0.0
  %3328 = vmatmul.mubr.f32.gmra.mrb[0].mxu0 %v3237
  %v3329 = vpop.f32.mrb[0].mxu0
  %v3330 = vadd.f32 0.0, %v3329
  %v3331 = vpop.f32.mrb[0].mxu0
  %3332 = vmatprep.mubr.f32.mxu0 0.0
  %3333 = vmatmul.mubr.f32.gmra.mrb[0].mxu0 %v3240
  %v3334 = vpop.f32.mrb[0].mxu0
  %v3335 = vadd.f32 0.0, %v3334
  %v3336 = vpop.f32.mrb[0].mxu0
  %3337 = vmatprep.mubr.f32.mxu0 0.0
  %3338 = vmatmul.mubr.f32.gmra.mrb[0].mxu0 %v3243
  %v3339 = vpop.f32.mrb[0].mxu0
  %v3340 = vadd.f32 0.0, %v3339
  %v3341 = vpop.f32.mrb[0].mxu0
  %3342 = vmatprep.mubr.f32.mxu0 0.0
  %3343 = vmatmul.mubr.f32.gmra.mrb[0].mxu0 %v3246
  %v3344 = vpop.f32.mrb[0].mxu0
  %v3345 = vadd.f32 0.0, %v3344
  %v3346 = vpop.f32.mrb[0].mxu0
  %3347 = vdwg.mxu0
  %v3348 = vadd.f32 %v2960, %v3315
  %v3349 = vadd.f32 %v2961, %v3320
  %v3350 = vadd.f32 %v2962, %v3325
  %v3351 = vadd.f32 %v2963, %v3330
  %v3352 = vadd.f32 %v2964, %v3335
  %v3353 = vadd.f32 %v2965, %v3340
  %v3354 = vadd.f32 %v2966, %v3345
  %s3355 = scalar_lea.vmem %s4, 504
  %v3356 = vld [vmem:[%s3355] sm:$0xff]
  %v3357 = vld [vmem:[%s3355 + $0x8] sm:$0xf]
  %v3358 = vld [vmem:[%s3355 + $0xc] sm:$0xff]
  %v3359 = vld [vmem:[%s3355 + $0x14] sm:$0xf]
  %v3360 = vld [vmem:[%s3355 + $0x18] sm:$0xff]
  %v3361 = vld [vmem:[%s3355 + $0x20] sm:$0xf]
  %v3362 = vld [vmem:[%s3355 + $0x24] sm:$0xff]
  %v3363 = vld [vmem:[%s3355 + $0x2c] sm:$0xf]
  %v3364 = vld [vmem:[%s3355 + $0x30] sm:$0xff]
  %v3365 = vld [vmem:[%s3355 + $0x38] sm:$0xf]
  %v3366 = vld [vmem:[%s3355 + $0x3c] sm:$0xff]
  %v3367 = vld [vmem:[%s3355 + $0x44] sm:$0xf]
  %v3368 = vld [vmem:[%s3355 + $0x48] sm:$0xff]
  %v3369 = vld [vmem:[%s3355 + $0x50] sm:$0xf]
  %v3370 = vunpack.c.l.bf16 %v3356
  %v3371 = vunpack.c.h.bf16 %v3356
  %v3372 = vunpack.c.l.bf16 %v3357
  %v3373 = vunpack.c.l.bf16 %v3358
  %v3374 = vunpack.c.h.bf16 %v3358
  %v3375 = vunpack.c.l.bf16 %v3359
  %v3376 = vunpack.c.l.bf16 %v3360
  %v3377 = vunpack.c.h.bf16 %v3360
  %v3378 = vunpack.c.l.bf16 %v3361
  %v3379 = vunpack.c.l.bf16 %v3362
  %v3380 = vunpack.c.h.bf16 %v3362
  %v3381 = vunpack.c.l.bf16 %v3363
  %v3382 = vunpack.c.l.bf16 %v3364
  %v3383 = vunpack.c.h.bf16 %v3364
  %v3384 = vunpack.c.l.bf16 %v3365
  %v3385 = vunpack.c.l.bf16 %v3366
  %v3386 = vunpack.c.h.bf16 %v3366
  %v3387 = vunpack.c.l.bf16 %v3367
  %v3388 = vunpack.c.l.bf16 %v3368
  %v3389 = vunpack.c.h.bf16 %v3368
  %v3390 = vunpack.c.l.bf16 %v3369
  %v3392 = vsel %vm1077, %v3372, 0
  %v3395 = vsel %vm1077, %v3375, 0
  %v3398 = vsel %vm1077, %v3378, 0
  %v3401 = vsel %vm1077, %v3381, 0
  %v3404 = vsel %vm1077, %v3384, 0
  %v3407 = vsel %vm1077, %v3387, 0
  %v3410 = vsel %vm1077, %v3390, 0
  %3412 = vmatprep.subr.mxu0 0.0
  %3413 = vmatpush1.msra.mxu0 %v999
  %3414 = vmatprep.subr.mxu0 0.0
  %3415 = vmatpush1.msra.mxu0 %v1000
  %3416 = vmatprep.subr.mxu0 0.0
  %3417 = vmatpush1.msra.mxu0 %v1001
  %3418 = vmatprep.subr.mxu0 0.0
  %3419 = vmatpush1.msra.mxu0 %v1002
  %3420 = vmatprep.subr.mxu0 0.0
  %3421 = vmatpush1.msra.mxu0 %v1003
  %3422 = vmatprep.subr.mxu0 0.0
  %3423 = vmatpush1.msra.mxu0 %v1004
  %3424 = vmatprep.subr.mxu0 0.0
  %3425 = vmatpush1.msra.mxu0 %v1005
  %3426 = vmatprep.subr.mxu0 0.0
  %3427 = vmatpush1.msra.mxu0 %v1006
  %3428 = vmatprep.subr.mxu0 0.0
  %3429 = vmatpush1.msra.mxu0 %v1007
  %3430 = vmatprep.subr.mxu0 0.0
  %3431 = vmatpush1.msra.mxu0 %v1008
  %3432 = vmatprep.subr.mxu0 0.0
  %3433 = vmatpush1.msra.mxu0 %v1009
  %3434 = vmatprep.subr.mxu0 0.0
  %3435 = vmatpush1.msra.mxu0 %v1010
  %3436 = vmatprep.subr.mxu0 0.0
  %3437 = vmatpush1.msra.mxu0 %v1011
  %3438 = vmatprep.subr.mxu0 0.0
  %3439 = vmatpush1.msra.mxu0 %v1012
  %3440 = vmatprep.subr.mxu0 0.0
  %3441 = vmatpush1.msra.mxu0 %v1013
  %3442 = vmatprep.subr.mxu0 0.0
  %3443 = vmatpush1.msra.mxu0 %v1014
  %3444 = vmatprep.subr.mxu0 0.0
  %3445 = vmatpush1.msra.mxu0 %v1015
  %3446 = vmatprep.subr.mxu0 0.0
  %3447 = vmatpush1.msra.mxu0 %v1016
  %3448 = vmatprep.subr.mxu0 0.0
  %3449 = vmatpush1.msra.mxu0 %v1017
  %3450 = vmatprep.subr.mxu0 0.0
  %3451 = vmatpush1.msra.mxu0 %v1018
  %3452 = vmatprep.subr.mxu0 0.0
  %3453 = vmatpush1.msra.mxu0 %v1019
  %3454 = vmatprep.subr.mxu0 0.0
  %3455 = vmatpush1.msra.mxu0 %v1020
  %3456 = vmatprep.subr.mxu0 0.0
  %3457 = vmatpush1.msra.mxu0 %v1021
  %3458 = vmatprep.subr.mxu0 0.0
  %3459 = vmatpush1.msra.mxu0 %v1022
  %3460 = vmatprep.subr.mxu0 0.0
  %3461 = vmatpush1.msra.mxu0 %v1023
  %3462 = vmatprep.subr.mxu0 0.0
  %3463 = vmatpush1.msra.mxu0 %v1024
  %3464 = vmatprep.subr.mxu0 0.0
  %3465 = vmatpush1.msra.mxu0 %v1025
  %3466 = vmatprep.subr.mxu0 0.0
  %3467 = vmatpush1.msra.mxu0 %v1026
  %3468 = vmatprep.subr.mxu0 0.0
  %3469 = vmatpush1.msra.mxu0 %v1027
  %3470 = vmatprep.subr.mxu0 0.0
  %3471 = vmatpush1.msra.mxu0 %v1028
  %3472 = vmatprep.subr.mxu0 0.0
  %3473 = vmatpush1.msra.mxu0 %v1029
  %3474 = vmatprep.subr.mxu0 0.0
  %3475 = vmatpush1.msra.mxu0 %v1030
  %3476 = vmatprep.mubr.f32.mxu0 %v3371
  %3477 = vmatmul.mubr.f32.gmra.mrb[0].mxu0 %v3370
  %v3478 = vpop.f32.mrb[0].mxu0
  %v3479 = vadd.f32 0.0, %v3478
  %v3480 = vpop.f32.mrb[0].mxu0
  %3481 = vmatprep.mubr.f32.mxu0 %v3374
  %3482 = vmatmul.mubr.f32.gmra.mrb[0].mxu0 %v3373
  %v3483 = vpop.f32.mrb[0].mxu0
  %v3484 = vadd.f32 0.0, %v3483
  %v3485 = vpop.f32.mrb[0].mxu0
  %3486 = vmatprep.mubr.f32.mxu0 %v3377
  %3487 = vmatmul.mubr.f32.gmra.mrb[0].mxu0 %v3376
  %v3488 = vpop.f32.mrb[0].mxu0
  %v3489 = vadd.f32 0.0, %v3488
  %v3490 = vpop.f32.mrb[0].mxu0
  %3491 = vmatprep.mubr.f32.mxu0 %v3380
  %3492 = vmatmul.mubr.f32.gmra.mrb[0].mxu0 %v3379
  %v3493 = vpop.f32.mrb[0].mxu0
  %v3494 = vadd.f32 0.0, %v3493
  %v3495 = vpop.f32.mrb[0].mxu0
  %3496 = vmatprep.mubr.f32.mxu0 %v3383
  %3497 = vmatmul.mubr.f32.gmra.mrb[0].mxu0 %v3382
  %v3498 = vpop.f32.mrb[0].mxu0
  %v3499 = vadd.f32 0.0, %v3498
  %v3500 = vpop.f32.mrb[0].mxu0
  %3501 = vmatprep.mubr.f32.mxu0 %v3386
  %3502 = vmatmul.mubr.f32.gmra.mrb[0].mxu0 %v3385
  %v3503 = vpop.f32.mrb[0].mxu0
  %v3504 = vadd.f32 0.0, %v3503
  %v3505 = vpop.f32.mrb[0].mxu0
  %3506 = vmatprep.mubr.f32.mxu0 %v3389
  %3507 = vmatmul.mubr.f32.gmra.mrb[0].mxu0 %v3388
  %v3508 = vpop.f32.mrb[0].mxu0
  %v3509 = vadd.f32 0.0, %v3508
  %v3510 = vpop.f32.mrb[0].mxu0
  %3511 = vdwg.mxu0
  %3512 = vmatprep.subr.mxu0 0.0
  %3513 = vmatpush1.msra.mxu0 %v1031
  %3514 = vmatprep.subr.mxu0 0.0
  %3515 = vmatpush1.msra.mxu0 %v1032
  %3516 = vmatprep.subr.mxu0 0.0
  %3517 = vmatpush1.msra.mxu0 %v1033
  %3518 = vmatprep.subr.mxu0 0.0
  %3519 = vmatpush1.msra.mxu0 %v1034
  %3520 = vmatprep.subr.mxu0 0.0
  %3521 = vmatpush1.msra.mxu0 %v1035
  %3522 = vmatprep.subr.mxu0 0.0
  %3523 = vmatpush1.msra.mxu0 %v1036
  %3524 = vmatprep.subr.mxu0 0.0
  %3525 = vmatpush1.msra.mxu0 %v1037
  %3526 = vmatprep.subr.mxu0 0.0
  %3527 = vmatpush1.msra.mxu0 %v1038
  %3528 = vmatprep.subr.mxu0 0.0
  %3529 = vmatpush1.msra.mxu0 %v1039
  %3530 = vmatprep.subr.mxu0 0.0
  %3531 = vmatpush1.msra.mxu0 %v1040
  %3532 = vmatprep.subr.mxu0 0.0
  %3533 = vmatpush1.msra.mxu0 %v1041
  %3534 = vmatprep.subr.mxu0 0.0
  %3535 = vmatpush1.msra.mxu0 0.0
  %3536 = vmatprep.subr.mxu0 0.0
  %3537 = vmatpush1.msra.mxu0 0.0
  %3538 = vmatprep.subr.mxu0 0.0
  %3539 = vmatpush1.msra.mxu0 0.0
  %3540 = vmatprep.subr.mxu0 0.0
  %3541 = vmatpush1.msra.mxu0 0.0
  %3542 = vmatprep.subr.mxu0 0.0
  %3543 = vmatpush1.msra.mxu0 0.0
  %3544 = vmatprep.subr.mxu0 0.0
  %3545 = vmatpush1.msra.mxu0 0.0
  %3546 = vmatprep.subr.mxu0 0.0
  %3547 = vmatpush1.msra.mxu0 0.0
  %3548 = vmatprep.subr.mxu0 0.0
  %3549 = vmatpush1.msra.mxu0 0.0
  %3550 = vmatprep.subr.mxu0 0.0
  %3551 = vmatpush1.msra.mxu0 0.0
  %3552 = vmatprep.subr.mxu0 0.0
  %3553 = vmatpush1.msra.mxu0 0.0
  %3554 = vmatprep.subr.mxu0 0.0
  %3555 = vmatpush1.msra.mxu0 0.0
  %3556 = vmatprep.subr.mxu0 0.0
  %3557 = vmatpush1.msra.mxu0 0.0
  %3558 = vmatprep.subr.mxu0 0.0
  %3559 = vmatpush1.msra.mxu0 0.0
  %3560 = vmatprep.subr.mxu0 0.0
  %3561 = vmatpush1.msra.mxu0 0.0
  %3562 = vmatprep.subr.mxu0 0.0
  %3563 = vmatpush1.msra.mxu0 0.0
  %3564 = vmatprep.subr.mxu0 0.0
  %3565 = vmatpush1.msra.mxu0 0.0
  %3566 = vmatprep.subr.mxu0 0.0
  %3567 = vmatpush1.msra.mxu0 0.0
  %3568 = vmatprep.subr.mxu0 0.0
  %3569 = vmatpush1.msra.mxu0 0.0
  %3570 = vmatprep.subr.mxu0 0.0
  %3571 = vmatpush1.msra.mxu0 0.0
  %3572 = vmatprep.subr.mxu0 0.0
  %3573 = vmatpush1.msra.mxu0 0.0
  %3574 = vmatprep.subr.mxu0 0.0
  %3575 = vmatpush1.msra.mxu0 0.0
  %3576 = vmatprep.mubr.f32.mxu0 0.0
  %3577 = vmatmul.mubr.f32.gmra.mrb[0].mxu0 %v3392
  %v3578 = vpop.f32.mrb[0].mxu0
  %v3579 = vadd.f32 %v3479, %v3578
  %v3580 = vpop.f32.mrb[0].mxu0
  %3581 = vmatprep.mubr.f32.mxu0 0.0
  %3582 = vmatmul.mubr.f32.gmra.mrb[0].mxu0 %v3395
  %v3583 = vpop.f32.mrb[0].mxu0
  %v3584 = vadd.f32 %v3484, %v3583
  %v3585 = vpop.f32.mrb[0].mxu0
  %3586 = vmatprep.mubr.f32.mxu0 0.0
  %3587 = vmatmul.mubr.f32.gmra.mrb[0].mxu0 %v3398
  %v3588 = vpop.f32.mrb[0].mxu0
  %v3589 = vadd.f32 %v3489, %v3588
  %v3590 = vpop.f32.mrb[0].mxu0
  %3591 = vmatprep.mubr.f32.mxu0 0.0
  %3592 = vmatmul.mubr.f32.gmra.mrb[0].mxu0 %v3401
  %v3593 = vpop.f32.mrb[0].mxu0
  %v3594 = vadd.f32 %v3494, %v3593
  %v3595 = vpop.f32.mrb[0].mxu0
  %3596 = vmatprep.mubr.f32.mxu0 0.0
  %3597 = vmatmul.mubr.f32.gmra.mrb[0].mxu0 %v3404
  %v3598 = vpop.f32.mrb[0].mxu0
  %v3599 = vadd.f32 %v3499, %v3598
  %v3600 = vpop.f32.mrb[0].mxu0
  %3601 = vmatprep.mubr.f32.mxu0 0.0
  %3602 = vmatmul.mubr.f32.gmra.mrb[0].mxu0 %v3407
  %v3603 = vpop.f32.mrb[0].mxu0
  %v3604 = vadd.f32 %v3504, %v3603
  %v3605 = vpop.f32.mrb[0].mxu0
  %3606 = vmatprep.mubr.f32.mxu0 0.0
  %3607 = vmatmul.mubr.f32.gmra.mrb[0].mxu0 %v3410
  %v3608 = vpop.f32.mrb[0].mxu0
  %v3609 = vadd.f32 %v3509, %v3608
  %v3610 = vpop.f32.mrb[0].mxu0
  %3611 = vdwg.mxu0
  %s3612 = scalar_lea.vmem %s5, 96
  %v3613 = vld [vmem:[%s3612] sm:$0xff]
  %v3614 = vld [vmem:[%s3612 + $0x8] sm:$0xff]
  %v3616 = vsel %vm85, %v3579, 0
  %v3619 = vsel %vm85, %v3584, 0
  %v3622 = vsel %vm85, %v3589, 0
  %v3625 = vsel %vm85, %v3594, 0
  %v3628 = vsel %vm85, %v3599, 0
  %v3631 = vsel %vm85, %v3604, 0
  %v3634 = vsel %vm85, %v3609, 0
  %3636 = vmatprep.subr.mxu0 0.0
  %3637 = vmatpush1.msra.mxu0 %v3613
  %3638 = vmatprep.subr.mxu0 0.0
  %3639 = vmatpush1.msra.mxu0 %v3614
  %3640 = vmatprep.subr.mxu0 0.0
  %3641 = vmatpush1.msra.mxu0 0.0
  %3642 = vmatprep.subr.mxu0 0.0
  %3643 = vmatpush1.msra.mxu0 0.0
  %3644 = vmatprep.subr.mxu0 0.0
  %3645 = vmatpush1.msra.mxu0 0.0
  %3646 = vmatprep.subr.mxu0 0.0
  %3647 = vmatpush1.msra.mxu0 0.0
  %3648 = vmatprep.subr.mxu0 0.0
  %3649 = vmatpush1.msra.mxu0 0.0
  %3650 = vmatprep.subr.mxu0 0.0
  %3651 = vmatpush1.msra.mxu0 0.0
  %3652 = vmatprep.subr.mxu0 0.0
  %3653 = vmatpush1.msra.mxu0 0.0
  %3654 = vmatprep.subr.mxu0 0.0
  %3655 = vmatpush1.msra.mxu0 0.0
  %3656 = vmatprep.subr.mxu0 0.0
  %3657 = vmatpush1.msra.mxu0 0.0
  %3658 = vmatprep.subr.mxu0 0.0
  %3659 = vmatpush1.msra.mxu0 0.0
  %3660 = vmatprep.subr.mxu0 0.0
  %3661 = vmatpush1.msra.mxu0 0.0
  %3662 = vmatprep.subr.mxu0 0.0
  %3663 = vmatpush1.msra.mxu0 0.0
  %3664 = vmatprep.subr.mxu0 0.0
  %3665 = vmatpush1.msra.mxu0 0.0
  %3666 = vmatprep.subr.mxu0 0.0
  %3667 = vmatpush1.msra.mxu0 0.0
  %3668 = vmatprep.subr.mxu0 0.0
  %3669 = vmatpush1.msra.mxu0 0.0
  %3670 = vmatprep.subr.mxu0 0.0
  %3671 = vmatpush1.msra.mxu0 0.0
  %3672 = vmatprep.subr.mxu0 0.0
  %3673 = vmatpush1.msra.mxu0 0.0
  %3674 = vmatprep.subr.mxu0 0.0
  %3675 = vmatpush1.msra.mxu0 0.0
  %3676 = vmatprep.subr.mxu0 0.0
  %3677 = vmatpush1.msra.mxu0 0.0
  %3678 = vmatprep.subr.mxu0 0.0
  %3679 = vmatpush1.msra.mxu0 0.0
  %3680 = vmatprep.subr.mxu0 0.0
  %3681 = vmatpush1.msra.mxu0 0.0
  %3682 = vmatprep.subr.mxu0 0.0
  %3683 = vmatpush1.msra.mxu0 0.0
  %3684 = vmatprep.subr.mxu0 0.0
  %3685 = vmatpush1.msra.mxu0 0.0
  %3686 = vmatprep.subr.mxu0 0.0
  %3687 = vmatpush1.msra.mxu0 0.0
  %3688 = vmatprep.subr.mxu0 0.0
  %3689 = vmatpush1.msra.mxu0 0.0
  %3690 = vmatprep.subr.mxu0 0.0
  %3691 = vmatpush1.msra.mxu0 0.0
  %3692 = vmatprep.subr.mxu0 0.0
  %3693 = vmatpush1.msra.mxu0 0.0
  %3694 = vmatprep.subr.mxu0 0.0
  %3695 = vmatpush1.msra.mxu0 0.0
  %3696 = vmatprep.subr.mxu0 0.0
  %3697 = vmatpush1.msra.mxu0 0.0
  %3698 = vmatprep.subr.mxu0 0.0
  %3699 = vmatpush1.msra.mxu0 0.0
  %3700 = vmatprep.mubr.f32.mxu0 0.0
  %3701 = vmatmul.mubr.f32.gmra.mrb[0].mxu0 %v3616
  %v3702 = vpop.f32.mrb[0].mxu0
  %v3703 = vadd.f32 0.0, %v3702
  %v3704 = vpop.f32.mrb[0].mxu0
  %3705 = vmatprep.mubr.f32.mxu0 0.0
  %3706 = vmatmul.mubr.f32.gmra.mrb[0].mxu0 %v3619
  %v3707 = vpop.f32.mrb[0].mxu0
  %v3708 = vadd.f32 0.0, %v3707
  %v3709 = vpop.f32.mrb[0].mxu0
  %3710 = vmatprep.mubr.f32.mxu0 0.0
  %3711 = vmatmul.mubr.f32.gmra.mrb[0].mxu0 %v3622
  %v3712 = vpop.f32.mrb[0].mxu0
  %v3713 = vadd.f32 0.0, %v3712
  %v3714 = vpop.f32.mrb[0].mxu0
  %3715 = vmatprep.mubr.f32.mxu0 0.0
  %3716 = vmatmul.mubr.f32.gmra.mrb[0].mxu0 %v3625
  %v3717 = vpop.f32.mrb[0].mxu0
  %v3718 = vadd.f32 0.0, %v3717
  %v3719 = vpop.f32.mrb[0].mxu0
  %3720 = vmatprep.mubr.f32.mxu0 0.0
  %3721 = vmatmul.mubr.f32.gmra.mrb[0].mxu0 %v3628
  %v3722 = vpop.f32.mrb[0].mxu0
  %v3723 = vadd.f32 0.0, %v3722
  %v3724 = vpop.f32.mrb[0].mxu0
  %3725 = vmatprep.mubr.f32.mxu0 0.0
  %3726 = vmatmul.mubr.f32.gmra.mrb[0].mxu0 %v3631
  %v3727 = vpop.f32.mrb[0].mxu0
  %v3728 = vadd.f32 0.0, %v3727
  %v3729 = vpop.f32.mrb[0].mxu0
  %3730 = vmatprep.mubr.f32.mxu0 0.0
  %3731 = vmatmul.mubr.f32.gmra.mrb[0].mxu0 %v3634
  %v3732 = vpop.f32.mrb[0].mxu0
  %v3733 = vadd.f32 0.0, %v3732
  %v3734 = vpop.f32.mrb[0].mxu0
  %3735 = vdwg.mxu0
  %v3736 = vadd.f32 %v3348, %v3703
  %v3737 = vadd.f32 %v3349, %v3708
  %v3738 = vadd.f32 %v3350, %v3713
  %v3739 = vadd.f32 %v3351, %v3718
  %v3740 = vadd.f32 %v3352, %v3723
  %v3741 = vadd.f32 %v3353, %v3728
  %v3742 = vadd.f32 %v3354, %v3733
  %s3743 = scalar_lea.vmem %s4, 588
  %v3744 = vld [vmem:[%s3743] sm:$0xff]
  %v3745 = vld [vmem:[%s3743 + $0x8] sm:$0xf]
  %v3746 = vld [vmem:[%s3743 + $0xc] sm:$0xff]
  %v3747 = vld [vmem:[%s3743 + $0x14] sm:$0xf]
  %v3748 = vld [vmem:[%s3743 + $0x18] sm:$0xff]
  %v3749 = vld [vmem:[%s3743 + $0x20] sm:$0xf]
  %v3750 = vld [vmem:[%s3743 + $0x24] sm:$0xff]
  %v3751 = vld [vmem:[%s3743 + $0x2c] sm:$0xf]
  %v3752 = vld [vmem:[%s3743 + $0x30] sm:$0xff]
  %v3753 = vld [vmem:[%s3743 + $0x38] sm:$0xf]
  %v3754 = vld [vmem:[%s3743 + $0x3c] sm:$0xff]
  %v3755 = vld [vmem:[%s3743 + $0x44] sm:$0xf]
  %v3756 = vld [vmem:[%s3743 + $0x48] sm:$0xff]
  %v3757 = vld [vmem:[%s3743 + $0x50] sm:$0xf]
  %v3758 = vunpack.c.l.bf16 %v3744
  %v3759 = vunpack.c.h.bf16 %v3744
  %v3760 = vunpack.c.l.bf16 %v3745
  %v3761 = vunpack.c.l.bf16 %v3746
  %v3762 = vunpack.c.h.bf16 %v3746
  %v3763 = vunpack.c.l.bf16 %v3747
  %v3764 = vunpack.c.l.bf16 %v3748
  %v3765 = vunpack.c.h.bf16 %v3748
  %v3766 = vunpack.c.l.bf16 %v3749
  %v3767 = vunpack.c.l.bf16 %v3750
  %v3768 = vunpack.c.h.bf16 %v3750
  %v3769 = vunpack.c.l.bf16 %v3751
  %v3770 = vunpack.c.l.bf16 %v3752
  %v3771 = vunpack.c.h.bf16 %v3752
  %v3772 = vunpack.c.l.bf16 %v3753
  %v3773 = vunpack.c.l.bf16 %v3754
  %v3774 = vunpack.c.h.bf16 %v3754
  %v3775 = vunpack.c.l.bf16 %v3755
  %v3776 = vunpack.c.l.bf16 %v3756
  %v3777 = vunpack.c.h.bf16 %v3756
  %v3778 = vunpack.c.l.bf16 %v3757
  %v3780 = vsel %vm1077, %v3760, 0
  %v3783 = vsel %vm1077, %v3763, 0
  %v3786 = vsel %vm1077, %v3766, 0
  %v3789 = vsel %vm1077, %v3769, 0
  %v3792 = vsel %vm1077, %v3772, 0
  %v3795 = vsel %vm1077, %v3775, 0
  %v3798 = vsel %vm1077, %v3778, 0
  %3800 = vmatprep.subr.mxu0 0.0
  %3801 = vmatpush1.msra.mxu0 %v999
  %3802 = vmatprep.subr.mxu0 0.0
  %3803 = vmatpush1.msra.mxu0 %v1000
  %3804 = vmatprep.subr.mxu0 0.0
  %3805 = vmatpush1.msra.mxu0 %v1001
  %3806 = vmatprep.subr.mxu0 0.0
  %3807 = vmatpush1.msra.mxu0 %v1002
  %3808 = vmatprep.subr.mxu0 0.0
  %3809 = vmatpush1.msra.mxu0 %v1003
  %3810 = vmatprep.subr.mxu0 0.0
  %3811 = vmatpush1.msra.mxu0 %v1004
  %3812 = vmatprep.subr.mxu0 0.0
  %3813 = vmatpush1.msra.mxu0 %v1005
  %3814 = vmatprep.subr.mxu0 0.0
  %3815 = vmatpush1.msra.mxu0 %v1006
  %3816 = vmatprep.subr.mxu0 0.0
  %3817 = vmatpush1.msra.mxu0 %v1007
  %3818 = vmatprep.subr.mxu0 0.0
  %3819 = vmatpush1.msra.mxu0 %v1008
  %3820 = vmatprep.subr.mxu0 0.0
  %3821 = vmatpush1.msra.mxu0 %v1009
  %3822 = vmatprep.subr.mxu0 0.0
  %3823 = vmatpush1.msra.mxu0 %v1010
  %3824 = vmatprep.subr.mxu0 0.0
  %3825 = vmatpush1.msra.mxu0 %v1011
  %3826 = vmatprep.subr.mxu0 0.0
  %3827 = vmatpush1.msra.mxu0 %v1012
  %3828 = vmatprep.subr.mxu0 0.0
  %3829 = vmatpush1.msra.mxu0 %v1013
  %3830 = vmatprep.subr.mxu0 0.0
  %3831 = vmatpush1.msra.mxu0 %v1014
  %3832 = vmatprep.subr.mxu0 0.0
  %3833 = vmatpush1.msra.mxu0 %v1015
  %3834 = vmatprep.subr.mxu0 0.0
  %3835 = vmatpush1.msra.mxu0 %v1016
  %3836 = vmatprep.subr.mxu0 0.0
  %3837 = vmatpush1.msra.mxu0 %v1017
  %3838 = vmatprep.subr.mxu0 0.0
  %3839 = vmatpush1.msra.mxu0 %v1018
  %3840 = vmatprep.subr.mxu0 0.0
  %3841 = vmatpush1.msra.mxu0 %v1019
  %3842 = vmatprep.subr.mxu0 0.0
  %3843 = vmatpush1.msra.mxu0 %v1020
  %3844 = vmatprep.subr.mxu0 0.0
  %3845 = vmatpush1.msra.mxu0 %v1021
  %3846 = vmatprep.subr.mxu0 0.0
  %3847 = vmatpush1.msra.mxu0 %v1022
  %3848 = vmatprep.subr.mxu0 0.0
  %3849 = vmatpush1.msra.mxu0 %v1023
  %3850 = vmatprep.subr.mxu0 0.0
  %3851 = vmatpush1.msra.mxu0 %v1024
  %3852 = vmatprep.subr.mxu0 0.0
  %3853 = vmatpush1.msra.mxu0 %v1025
  %3854 = vmatprep.subr.mxu0 0.0
  %3855 = vmatpush1.msra.mxu0 %v1026
  %3856 = vmatprep.subr.mxu0 0.0
  %3857 = vmatpush1.msra.mxu0 %v1027
  %3858 = vmatprep.subr.mxu0 0.0
  %3859 = vmatpush1.msra.mxu0 %v1028
  %3860 = vmatprep.subr.mxu0 0.0
  %3861 = vmatpush1.msra.mxu0 %v1029
  %3862 = vmatprep.subr.mxu0 0.0
  %3863 = vmatpush1.msra.mxu0 %v1030
  %3864 = vmatprep.mubr.f32.mxu0 %v3759
  %3865 = vmatmul.mubr.f32.gmra.mrb[0].mxu0 %v3758
  %v3866 = vpop.f32.mrb[0].mxu0
  %v3867 = vadd.f32 0.0, %v3866
  %v3868 = vpop.f32.mrb[0].mxu0
  %3869 = vmatprep.mubr.f32.mxu0 %v3762
  %3870 = vmatmul.mubr.f32.gmra.mrb[0].mxu0 %v3761
  %v3871 = vpop.f32.mrb[0].mxu0
  %v3872 = vadd.f32 0.0, %v3871
  %v3873 = vpop.f32.mrb[0].mxu0
  %3874 = vmatprep.mubr.f32.mxu0 %v3765
  %3875 = vmatmul.mubr.f32.gmra.mrb[0].mxu0 %v3764
  %v3876 = vpop.f32.mrb[0].mxu0
  %v3877 = vadd.f32 0.0, %v3876
  %v3878 = vpop.f32.mrb[0].mxu0
  %3879 = vmatprep.mubr.f32.mxu0 %v3768
  %3880 = vmatmul.mubr.f32.gmra.mrb[0].mxu0 %v3767
  %v3881 = vpop.f32.mrb[0].mxu0
  %v3882 = vadd.f32 0.0, %v3881
  %v3883 = vpop.f32.mrb[0].mxu0
  %3884 = vmatprep.mubr.f32.mxu0 %v3771
  %3885 = vmatmul.mubr.f32.gmra.mrb[0].mxu0 %v3770
  %v3886 = vpop.f32.mrb[0].mxu0
  %v3887 = vadd.f32 0.0, %v3886
  %v3888 = vpop.f32.mrb[0].mxu0
  %3889 = vmatprep.mubr.f32.mxu0 %v3774
  %3890 = vmatmul.mubr.f32.gmra.mrb[0].mxu0 %v3773
  %v3891 = vpop.f32.mrb[0].mxu0
  %v3892 = vadd.f32 0.0, %v3891
  %v3893 = vpop.f32.mrb[0].mxu0
  %3894 = vmatprep.mubr.f32.mxu0 %v3777
  %3895 = vmatmul.mubr.f32.gmra.mrb[0].mxu0 %v3776
  %v3896 = vpop.f32.mrb[0].mxu0
  %v3897 = vadd.f32 0.0, %v3896
  %v3898 = vpop.f32.mrb[0].mxu0
  %3899 = vdwg.mxu0
  %3900 = vmatprep.subr.mxu0 0.0
  %3901 = vmatpush1.msra.mxu0 %v1031
  %3902 = vmatprep.subr.mxu0 0.0
  %3903 = vmatpush1.msra.mxu0 %v1032
  %3904 = vmatprep.subr.mxu0 0.0
  %3905 = vmatpush1.msra.mxu0 %v1033
  %3906 = vmatprep.subr.mxu0 0.0
  %3907 = vmatpush1.msra.mxu0 %v1034
  %3908 = vmatprep.subr.mxu0 0.0
  %3909 = vmatpush1.msra.mxu0 %v1035
  %3910 = vmatprep.subr.mxu0 0.0
  %3911 = vmatpush1.msra.mxu0 %v1036
  %3912 = vmatprep.subr.mxu0 0.0
  %3913 = vmatpush1.msra.mxu0 %v1037
  %3914 = vmatprep.subr.mxu0 0.0
  %3915 = vmatpush1.msra.mxu0 %v1038
  %3916 = vmatprep.subr.mxu0 0.0
  %3917 = vmatpush1.msra.mxu0 %v1039
  %3918 = vmatprep.subr.mxu0 0.0
  %3919 = vmatpush1.msra.mxu0 %v1040
  %3920 = vmatprep.subr.mxu0 0.0
  %3921 = vmatpush1.msra.mxu0 %v1041
  %3922 = vmatprep.subr.mxu0 0.0
  %3923 = vmatpush1.msra.mxu0 0.0
  %3924 = vmatprep.subr.mxu0 0.0
  %3925 = vmatpush1.msra.mxu0 0.0
  %3926 = vmatprep.subr.mxu0 0.0
  %3927 = vmatpush1.msra.mxu0 0.0
  %3928 = vmatprep.subr.mxu0 0.0
  %3929 = vmatpush1.msra.mxu0 0.0
  %3930 = vmatprep.subr.mxu0 0.0
  %3931 = vmatpush1.msra.mxu0 0.0
  %3932 = vmatprep.subr.mxu0 0.0
  %3933 = vmatpush1.msra.mxu0 0.0
  %3934 = vmatprep.subr.mxu0 0.0
  %3935 = vmatpush1.msra.mxu0 0.0
  %3936 = vmatprep.subr.mxu0 0.0
  %3937 = vmatpush1.msra.mxu0 0.0
  %3938 = vmatprep.subr.mxu0 0.0
  %3939 = vmatpush1.msra.mxu0 0.0
  %3940 = vmatprep.subr.mxu0 0.0
  %3941 = vmatpush1.msra.mxu0 0.0
  %3942 = vmatprep.subr.mxu0 0.0
  %3943 = vmatpush1.msra.mxu0 0.0
  %3944 = vmatprep.subr.mxu0 0.0
  %3945 = vmatpush1.msra.mxu0 0.0
  %3946 = vmatprep.subr.mxu0 0.0
  %3947 = vmatpush1.msra.mxu0 0.0
  %3948 = vmatprep.subr.mxu0 0.0
  %3949 = vmatpush1.msra.mxu0 0.0
  %3950 = vmatprep.subr.mxu0 0.0
  %3951 = vmatpush1.msra.mxu0 0.0
  %3952 = vmatprep.subr.mxu0 0.0
  %3953 = vmatpush1.msra.mxu0 0.0
  %3954 = vmatprep.subr.mxu0 0.0
  %3955 = vmatpush1.msra.mxu0 0.0
  %3956 = vmatprep.subr.mxu0 0.0
  %3957 = vmatpush1.msra.mxu0 0.0
  %3958 = vmatprep.subr.mxu0 0.0
  %3959 = vmatpush1.msra.mxu0 0.0
  %3960 = vmatprep.subr.mxu0 0.0
  %3961 = vmatpush1.msra.mxu0 0.0
  %3962 = vmatprep.subr.mxu0 0.0
  %3963 = vmatpush1.msra.mxu0 0.0
  %3964 = vmatprep.mubr.f32.mxu0 0.0
  %3965 = vmatmul.mubr.f32.gmra.mrb[0].mxu0 %v3780
  %v3966 = vpop.f32.mrb[0].mxu0
  %v3967 = vadd.f32 %v3867, %v3966
  %v3968 = vpop.f32.mrb[0].mxu0
  %3969 = vmatprep.mubr.f32.mxu0 0.0
  %3970 = vmatmul.mubr.f32.gmra.mrb[0].mxu0 %v3783
  %v3971 = vpop.f32.mrb[0].mxu0
  %v3972 = vadd.f32 %v3872, %v3971
  %v3973 = vpop.f32.mrb[0].mxu0
  %3974 = vmatprep.mubr.f32.mxu0 0.0
  %3975 = vmatmul.mubr.f32.gmra.mrb[0].mxu0 %v3786
  %v3976 = vpop.f32.mrb[0].mxu0
  %v3977 = vadd.f32 %v3877, %v3976
  %v3978 = vpop.f32.mrb[0].mxu0
  %3979 = vmatprep.mubr.f32.mxu0 0.0
  %3980 = vmatmul.mubr.f32.gmra.mrb[0].mxu0 %v3789
  %v3981 = vpop.f32.mrb[0].mxu0
  %v3982 = vadd.f32 %v3882, %v3981
  %v3983 = vpop.f32.mrb[0].mxu0
  %3984 = vmatprep.mubr.f32.mxu0 0.0
  %3985 = vmatmul.mubr.f32.gmra.mrb[0].mxu0 %v3792
  %v3986 = vpop.f32.mrb[0].mxu0
  %v3987 = vadd.f32 %v3887, %v3986
  %v3988 = vpop.f32.mrb[0].mxu0
  %3989 = vmatprep.mubr.f32.mxu0 0.0
  %3990 = vmatmul.mubr.f32.gmra.mrb[0].mxu0 %v3795
  %v3991 = vpop.f32.mrb[0].mxu0
  %v3992 = vadd.f32 %v3892, %v3991
  %v3993 = vpop.f32.mrb[0].mxu0
  %3994 = vmatprep.mubr.f32.mxu0 0.0
  %3995 = vmatmul.mubr.f32.gmra.mrb[0].mxu0 %v3798
  %v3996 = vpop.f32.mrb[0].mxu0
  %v3997 = vadd.f32 %v3897, %v3996
  %v3998 = vpop.f32.mrb[0].mxu0
  %3999 = vdwg.mxu0
  %s4000 = scalar_lea.vmem %s5, 112
  %v4001 = vld [vmem:[%s4000] sm:$0xff]
  %v4002 = vld [vmem:[%s4000 + $0x8] sm:$0xff]
  %v4004 = vsel %vm85, %v3967, 0
  %v4007 = vsel %vm85, %v3972, 0
  %v4010 = vsel %vm85, %v3977, 0
  %v4013 = vsel %vm85, %v3982, 0
  %v4016 = vsel %vm85, %v3987, 0
  %v4019 = vsel %vm85, %v3992, 0
  %v4022 = vsel %vm85, %v3997, 0
  %4024 = vmatprep.subr.mxu0 0.0
  %4025 = vmatpush1.msra.mxu0 %v4001
  %4026 = vmatprep.subr.mxu0 0.0
  %4027 = vmatpush1.msra.mxu0 %v4002
  %4028 = vmatprep.subr.mxu0 0.0
  %4029 = vmatpush1.msra.mxu0 0.0
  %4030 = vmatprep.subr.mxu0 0.0
  %4031 = vmatpush1.msra.mxu0 0.0
  %4032 = vmatprep.subr.mxu0 0.0
  %4033 = vmatpush1.msra.mxu0 0.0
  %4034 = vmatprep.subr.mxu0 0.0
  %4035 = vmatpush1.msra.mxu0 0.0
  %4036 = vmatprep.subr.mxu0 0.0
  %4037 = vmatpush1.msra.mxu0 0.0
  %4038 = vmatprep.subr.mxu0 0.0
  %4039 = vmatpush1.msra.mxu0 0.0
  %4040 = vmatprep.subr.mxu0 0.0
  %4041 = vmatpush1.msra.mxu0 0.0
  %4042 = vmatprep.subr.mxu0 0.0
  %4043 = vmatpush1.msra.mxu0 0.0
  %4044 = vmatprep.subr.mxu0 0.0
  %4045 = vmatpush1.msra.mxu0 0.0
  %4046 = vmatprep.subr.mxu0 0.0
  %4047 = vmatpush1.msra.mxu0 0.0
  %4048 = vmatprep.subr.mxu0 0.0
  %4049 = vmatpush1.msra.mxu0 0.0
  %4050 = vmatprep.subr.mxu0 0.0
  %4051 = vmatpush1.msra.mxu0 0.0
  %4052 = vmatprep.subr.mxu0 0.0
  %4053 = vmatpush1.msra.mxu0 0.0
  %4054 = vmatprep.subr.mxu0 0.0
  %4055 = vmatpush1.msra.mxu0 0.0
  %4056 = vmatprep.subr.mxu0 0.0
  %4057 = vmatpush1.msra.mxu0 0.0
  %4058 = vmatprep.subr.mxu0 0.0
  %4059 = vmatpush1.msra.mxu0 0.0
  %4060 = vmatprep.subr.mxu0 0.0
  %4061 = vmatpush1.msra.mxu0 0.0
  %4062 = vmatprep.subr.mxu0 0.0
  %4063 = vmatpush1.msra.mxu0 0.0
  %4064 = vmatprep.subr.mxu0 0.0
  %4065 = vmatpush1.msra.mxu0 0.0
  %4066 = vmatprep.subr.mxu0 0.0
  %4067 = vmatpush1.msra.mxu0 0.0
  %4068 = vmatprep.subr.mxu0 0.0
  %4069 = vmatpush1.msra.mxu0 0.0
  %4070 = vmatprep.subr.mxu0 0.0
  %4071 = vmatpush1.msra.mxu0 0.0
  %4072 = vmatprep.subr.mxu0 0.0
  %4073 = vmatpush1.msra.mxu0 0.0
  %4074 = vmatprep.subr.mxu0 0.0
  %4075 = vmatpush1.msra.mxu0 0.0
  %4076 = vmatprep.subr.mxu0 0.0
  %4077 = vmatpush1.msra.mxu0 0.0
  %4078 = vmatprep.subr.mxu0 0.0
  %4079 = vmatpush1.msra.mxu0 0.0
  %4080 = vmatprep.subr.mxu0 0.0
  %4081 = vmatpush1.msra.mxu0 0.0
  %4082 = vmatprep.subr.mxu0 0.0
  %4083 = vmatpush1.msra.mxu0 0.0
  %4084 = vmatprep.subr.mxu0 0.0
  %4085 = vmatpush1.msra.mxu0 0.0
  %4086 = vmatprep.subr.mxu0 0.0
  %4087 = vmatpush1.msra.mxu0 0.0
  %4088 = vmatprep.mubr.f32.mxu0 0.0
  %4089 = vmatmul.mubr.f32.gmra.mrb[0].mxu0 %v4004
  %v4090 = vpop.f32.mrb[0].mxu0
  %v4091 = vadd.f32 0.0, %v4090
  %v4092 = vpop.f32.mrb[0].mxu0
  %4093 = vmatprep.mubr.f32.mxu0 0.0
  %4094 = vmatmul.mubr.f32.gmra.mrb[0].mxu0 %v4007
  %v4095 = vpop.f32.mrb[0].mxu0
  %v4096 = vadd.f32 0.0, %v4095
  %v4097 = vpop.f32.mrb[0].mxu0
  %4098 = vmatprep.mubr.f32.mxu0 0.0
  %4099 = vmatmul.mubr.f32.gmra.mrb[0].mxu0 %v4010
  %v4100 = vpop.f32.mrb[0].mxu0
  %v4101 = vadd.f32 0.0, %v4100
  %v4102 = vpop.f32.mrb[0].mxu0
  %4103 = vmatprep.mubr.f32.mxu0 0.0
  %4104 = vmatmul.mubr.f32.gmra.mrb[0].mxu0 %v4013
  %v4105 = vpop.f32.mrb[0].mxu0
  %v4106 = vadd.f32 0.0, %v4105
  %v4107 = vpop.f32.mrb[0].mxu0
  %4108 = vmatprep.mubr.f32.mxu0 0.0
  %4109 = vmatmul.mubr.f32.gmra.mrb[0].mxu0 %v4016
  %v4110 = vpop.f32.mrb[0].mxu0
  %v4111 = vadd.f32 0.0, %v4110
  %v4112 = vpop.f32.mrb[0].mxu0
  %4113 = vmatprep.mubr.f32.mxu0 0.0
  %4114 = vmatmul.mubr.f32.gmra.mrb[0].mxu0 %v4019
  %v4115 = vpop.f32.mrb[0].mxu0
  %v4116 = vadd.f32 0.0, %v4115
  %v4117 = vpop.f32.mrb[0].mxu0
  %4118 = vmatprep.mubr.f32.mxu0 0.0
  %4119 = vmatmul.mubr.f32.gmra.mrb[0].mxu0 %v4022
  %v4120 = vpop.f32.mrb[0].mxu0
  %v4121 = vadd.f32 0.0, %v4120
  %v4122 = vpop.f32.mrb[0].mxu0
  %4123 = vdwg.mxu0
  %v4124 = vadd.f32 %v3736, %v4091
  %v4125 = vadd.f32 %v3737, %v4096
  %v4126 = vadd.f32 %v3738, %v4101
  %v4127 = vadd.f32 %v3739, %v4106
  %v4128 = vadd.f32 %v3740, %v4111
  %v4129 = vadd.f32 %v3741, %v4116
  %v4130 = vadd.f32 %v3742, %v4121
  %s4131 = scalar_lea.vmem %s4, 672
  %v4132 = vld [vmem:[%s4131] sm:$0xff]
  %v4133 = vld [vmem:[%s4131 + $0x8] sm:$0xf]
  %v4134 = vld [vmem:[%s4131 + $0xc] sm:$0xff]
  %v4135 = vld [vmem:[%s4131 + $0x14] sm:$0xf]
  %v4136 = vld [vmem:[%s4131 + $0x18] sm:$0xff]
  %v4137 = vld [vmem:[%s4131 + $0x20] sm:$0xf]
  %v4138 = vld [vmem:[%s4131 + $0x24] sm:$0xff]
  %v4139 = vld [vmem:[%s4131 + $0x2c] sm:$0xf]
  %v4140 = vld [vmem:[%s4131 + $0x30] sm:$0xff]
  %v4141 = vld [vmem:[%s4131 + $0x38] sm:$0xf]
  %v4142 = vld [vmem:[%s4131 + $0x3c] sm:$0xff]
  %v4143 = vld [vmem:[%s4131 + $0x44] sm:$0xf]
  %v4144 = vld [vmem:[%s4131 + $0x48] sm:$0xff]
  %v4145 = vld [vmem:[%s4131 + $0x50] sm:$0xf]
  %v4146 = vunpack.c.l.bf16 %v4132
  %v4147 = vunpack.c.h.bf16 %v4132
  %v4148 = vunpack.c.l.bf16 %v4133
  %v4149 = vunpack.c.l.bf16 %v4134
  %v4150 = vunpack.c.h.bf16 %v4134
  %v4151 = vunpack.c.l.bf16 %v4135
  %v4152 = vunpack.c.l.bf16 %v4136
  %v4153 = vunpack.c.h.bf16 %v4136
  %v4154 = vunpack.c.l.bf16 %v4137
  %v4155 = vunpack.c.l.bf16 %v4138
  %v4156 = vunpack.c.h.bf16 %v4138
  %v4157 = vunpack.c.l.bf16 %v4139
  %v4158 = vunpack.c.l.bf16 %v4140
  %v4159 = vunpack.c.h.bf16 %v4140
  %v4160 = vunpack.c.l.bf16 %v4141
  %v4161 = vunpack.c.l.bf16 %v4142
  %v4162 = vunpack.c.h.bf16 %v4142
  %v4163 = vunpack.c.l.bf16 %v4143
  %v4164 = vunpack.c.l.bf16 %v4144
  %v4165 = vunpack.c.h.bf16 %v4144
  %v4166 = vunpack.c.l.bf16 %v4145
  %v4168 = vsel %vm1077, %v4148, 0
  %v4171 = vsel %vm1077, %v4151, 0
  %v4174 = vsel %vm1077, %v4154, 0
  %v4177 = vsel %vm1077, %v4157, 0
  %v4180 = vsel %vm1077, %v4160, 0
  %v4183 = vsel %vm1077, %v4163, 0
  %v4186 = vsel %vm1077, %v4166, 0
  %4188 = vmatprep.subr.mxu0 0.0
  %4189 = vmatpush1.msra.mxu0 %v999
  %4190 = vmatprep.subr.mxu0 0.0
  %4191 = vmatpush1.msra.mxu0 %v1000
  %4192 = vmatprep.subr.mxu0 0.0
  %4193 = vmatpush1.msra.mxu0 %v1001
  %4194 = vmatprep.subr.mxu0 0.0
  %4195 = vmatpush1.msra.mxu0 %v1002
  %4196 = vmatprep.subr.mxu0 0.0
  %4197 = vmatpush1.msra.mxu0 %v1003
  %4198 = vmatprep.subr.mxu0 0.0
  %4199 = vmatpush1.msra.mxu0 %v1004
  %4200 = vmatprep.subr.mxu0 0.0
  %4201 = vmatpush1.msra.mxu0 %v1005
  %4202 = vmatprep.subr.mxu0 0.0
  %4203 = vmatpush1.msra.mxu0 %v1006
  %4204 = vmatprep.subr.mxu0 0.0
  %4205 = vmatpush1.msra.mxu0 %v1007
  %4206 = vmatprep.subr.mxu0 0.0
  %4207 = vmatpush1.msra.mxu0 %v1008
  %4208 = vmatprep.subr.mxu0 0.0
  %4209 = vmatpush1.msra.mxu0 %v1009
  %4210 = vmatprep.subr.mxu0 0.0
  %4211 = vmatpush1.msra.mxu0 %v1010
  %4212 = vmatprep.subr.mxu0 0.0
  %4213 = vmatpush1.msra.mxu0 %v1011
  %4214 = vmatprep.subr.mxu0 0.0
  %4215 = vmatpush1.msra.mxu0 %v1012
  %4216 = vmatprep.subr.mxu0 0.0
  %4217 = vmatpush1.msra.mxu0 %v1013
  %4218 = vmatprep.subr.mxu0 0.0
  %4219 = vmatpush1.msra.mxu0 %v1014
  %4220 = vmatprep.subr.mxu0 0.0
  %4221 = vmatpush1.msra.mxu0 %v1015
  %4222 = vmatprep.subr.mxu0 0.0
  %4223 = vmatpush1.msra.mxu0 %v1016
  %4224 = vmatprep.subr.mxu0 0.0
  %4225 = vmatpush1.msra.mxu0 %v1017
  %4226 = vmatprep.subr.mxu0 0.0
  %4227 = vmatpush1.msra.mxu0 %v1018
  %4228 = vmatprep.subr.mxu0 0.0
  %4229 = vmatpush1.msra.mxu0 %v1019
  %4230 = vmatprep.subr.mxu0 0.0
  %4231 = vmatpush1.msra.mxu0 %v1020
  %4232 = vmatprep.subr.mxu0 0.0
  %4233 = vmatpush1.msra.mxu0 %v1021
  %4234 = vmatprep.subr.mxu0 0.0
  %4235 = vmatpush1.msra.mxu0 %v1022
  %4236 = vmatprep.subr.mxu0 0.0
  %4237 = vmatpush1.msra.mxu0 %v1023
  %4238 = vmatprep.subr.mxu0 0.0
  %4239 = vmatpush1.msra.mxu0 %v1024
  %4240 = vmatprep.subr.mxu0 0.0
  %4241 = vmatpush1.msra.mxu0 %v1025
  %4242 = vmatprep.subr.mxu0 0.0
  %4243 = vmatpush1.msra.mxu0 %v1026
  %4244 = vmatprep.subr.mxu0 0.0
  %4245 = vmatpush1.msra.mxu0 %v1027
  %4246 = vmatprep.subr.mxu0 0.0
  %4247 = vmatpush1.msra.mxu0 %v1028
  %4248 = vmatprep.subr.mxu0 0.0
  %4249 = vmatpush1.msra.mxu0 %v1029
  %4250 = vmatprep.subr.mxu0 0.0
  %4251 = vmatpush1.msra.mxu0 %v1030
  %4252 = vmatprep.mubr.f32.mxu0 %v4147
  %4253 = vmatmul.mubr.f32.gmra.mrb[0].mxu0 %v4146
  %v4254 = vpop.f32.mrb[0].mxu0
  %v4255 = vadd.f32 0.0, %v4254
  %v4256 = vpop.f32.mrb[0].mxu0
  %4257 = vmatprep.mubr.f32.mxu0 %v4150
  %4258 = vmatmul.mubr.f32.gmra.mrb[0].mxu0 %v4149
  %v4259 = vpop.f32.mrb[0].mxu0
  %v4260 = vadd.f32 0.0, %v4259
  %v4261 = vpop.f32.mrb[0].mxu0
  %4262 = vmatprep.mubr.f32.mxu0 %v4153
  %4263 = vmatmul.mubr.f32.gmra.mrb[0].mxu0 %v4152
  %v4264 = vpop.f32.mrb[0].mxu0
  %v4265 = vadd.f32 0.0, %v4264
  %v4266 = vpop.f32.mrb[0].mxu0
  %4267 = vmatprep.mubr.f32.mxu0 %v4156
  %4268 = vmatmul.mubr.f32.gmra.mrb[0].mxu0 %v4155
  %v4269 = vpop.f32.mrb[0].mxu0
  %v4270 = vadd.f32 0.0, %v4269
  %v4271 = vpop.f32.mrb[0].mxu0
  %4272 = vmatprep.mubr.f32.mxu0 %v4159
  %4273 = vmatmul.mubr.f32.gmra.mrb[0].mxu0 %v4158
  %v4274 = vpop.f32.mrb[0].mxu0
  %v4275 = vadd.f32 0.0, %v4274
  %v4276 = vpop.f32.mrb[0].mxu0
  %4277 = vmatprep.mubr.f32.mxu0 %v4162
  %4278 = vmatmul.mubr.f32.gmra.mrb[0].mxu0 %v4161
  %v4279 = vpop.f32.mrb[0].mxu0
  %v4280 = vadd.f32 0.0, %v4279
  %v4281 = vpop.f32.mrb[0].mxu0
  %4282 = vmatprep.mubr.f32.mxu0 %v4165
  %4283 = vmatmul.mubr.f32.gmra.mrb[0].mxu0 %v4164
  %v4284 = vpop.f32.mrb[0].mxu0
  %v4285 = vadd.f32 0.0, %v4284
  %v4286 = vpop.f32.mrb[0].mxu0
  %4287 = vdwg.mxu0
  %4288 = vmatprep.subr.mxu0 0.0
  %4289 = vmatpush1.msra.mxu0 %v1031
  %4290 = vmatprep.subr.mxu0 0.0
  %4291 = vmatpush1.msra.mxu0 %v1032
  %4292 = vmatprep.subr.mxu0 0.0
  %4293 = vmatpush1.msra.mxu0 %v1033
  %4294 = vmatprep.subr.mxu0 0.0
  %4295 = vmatpush1.msra.mxu0 %v1034
  %4296 = vmatprep.subr.mxu0 0.0
  %4297 = vmatpush1.msra.mxu0 %v1035
  %4298 = vmatprep.subr.mxu0 0.0
  %4299 = vmatpush1.msra.mxu0 %v1036
  %4300 = vmatprep.subr.mxu0 0.0
  %4301 = vmatpush1.msra.mxu0 %v1037
  %4302 = vmatprep.subr.mxu0 0.0
  %4303 = vmatpush1.msra.mxu0 %v1038
  %4304 = vmatprep.subr.mxu0 0.0
  %4305 = vmatpush1.msra.mxu0 %v1039
  %4306 = vmatprep.subr.mxu0 0.0
  %4307 = vmatpush1.msra.mxu0 %v1040
  %4308 = vmatprep.subr.mxu0 0.0
  %4309 = vmatpush1.msra.mxu0 %v1041
  %4310 = vmatprep.subr.mxu0 0.0
  %4311 = vmatpush1.msra.mxu0 0.0
  %4312 = vmatprep.subr.mxu0 0.0
  %4313 = vmatpush1.msra.mxu0 0.0
  %4314 = vmatprep.subr.mxu0 0.0
  %4315 = vmatpush1.msra.mxu0 0.0
  %4316 = vmatprep.subr.mxu0 0.0
  %4317 = vmatpush1.msra.mxu0 0.0
  %4318 = vmatprep.subr.mxu0 0.0
  %4319 = vmatpush1.msra.mxu0 0.0
  %4320 = vmatprep.subr.mxu0 0.0
  %4321 = vmatpush1.msra.mxu0 0.0
  %4322 = vmatprep.subr.mxu0 0.0
  %4323 = vmatpush1.msra.mxu0 0.0
  %4324 = vmatprep.subr.mxu0 0.0
  %4325 = vmatpush1.msra.mxu0 0.0
  %4326 = vmatprep.subr.mxu0 0.0
  %4327 = vmatpush1.msra.mxu0 0.0
  %4328 = vmatprep.subr.mxu0 0.0
  %4329 = vmatpush1.msra.mxu0 0.0
  %4330 = vmatprep.subr.mxu0 0.0
  %4331 = vmatpush1.msra.mxu0 0.0
  %4332 = vmatprep.subr.mxu0 0.0
  %4333 = vmatpush1.msra.mxu0 0.0
  %4334 = vmatprep.subr.mxu0 0.0
  %4335 = vmatpush1.msra.mxu0 0.0
  %4336 = vmatprep.subr.mxu0 0.0
  %4337 = vmatpush1.msra.mxu0 0.0
  %4338 = vmatprep.subr.mxu0 0.0
  %4339 = vmatpush1.msra.mxu0 0.0
  %4340 = vmatprep.subr.mxu0 0.0
  %4341 = vmatpush1.msra.mxu0 0.0
  %4342 = vmatprep.subr.mxu0 0.0
  %4343 = vmatpush1.msra.mxu0 0.0
  %4344 = vmatprep.subr.mxu0 0.0
  %4345 = vmatpush1.msra.mxu0 0.0
  %4346 = vmatprep.subr.mxu0 0.0
  %4347 = vmatpush1.msra.mxu0 0.0
  %4348 = vmatprep.subr.mxu0 0.0
  %4349 = vmatpush1.msra.mxu0 0.0
  %4350 = vmatprep.subr.mxu0 0.0
  %4351 = vmatpush1.msra.mxu0 0.0
  %4352 = vmatprep.mubr.f32.mxu0 0.0
  %4353 = vmatmul.mubr.f32.gmra.mrb[0].mxu0 %v4168
  %v4354 = vpop.f32.mrb[0].mxu0
  %v4355 = vadd.f32 %v4255, %v4354
  %v4356 = vpop.f32.mrb[0].mxu0
  %4357 = vmatprep.mubr.f32.mxu0 0.0
  %4358 = vmatmul.mubr.f32.gmra.mrb[0].mxu0 %v4171
  %v4359 = vpop.f32.mrb[0].mxu0
  %v4360 = vadd.f32 %v4260, %v4359
  %v4361 = vpop.f32.mrb[0].mxu0
  %4362 = vmatprep.mubr.f32.mxu0 0.0
  %4363 = vmatmul.mubr.f32.gmra.mrb[0].mxu0 %v4174
  %v4364 = vpop.f32.mrb[0].mxu0
  %v4365 = vadd.f32 %v4265, %v4364
  %v4366 = vpop.f32.mrb[0].mxu0
  %4367 = vmatprep.mubr.f32.mxu0 0.0
  %4368 = vmatmul.mubr.f32.gmra.mrb[0].mxu0 %v4177
  %v4369 = vpop.f32.mrb[0].mxu0
  %v4370 = vadd.f32 %v4270, %v4369
  %v4371 = vpop.f32.mrb[0].mxu0
  %4372 = vmatprep.mubr.f32.mxu0 0.0
  %4373 = vmatmul.mubr.f32.gmra.mrb[0].mxu0 %v4180
  %v4374 = vpop.f32.mrb[0].mxu0
  %v4375 = vadd.f32 %v4275, %v4374
  %v4376 = vpop.f32.mrb[0].mxu0
  %4377 = vmatprep.mubr.f32.mxu0 0.0
  %4378 = vmatmul.mubr.f32.gmra.mrb[0].mxu0 %v4183
  %v4379 = vpop.f32.mrb[0].mxu0
  %v4380 = vadd.f32 %v4280, %v4379
  %v4381 = vpop.f32.mrb[0].mxu0
  %4382 = vmatprep.mubr.f32.mxu0 0.0
  %4383 = vmatmul.mubr.f32.gmra.mrb[0].mxu0 %v4186
  %v4384 = vpop.f32.mrb[0].mxu0
  %v4385 = vadd.f32 %v4285, %v4384
  %v4386 = vpop.f32.mrb[0].mxu0
  %4387 = vdwg.mxu0
  %s4388 = scalar_lea.vmem %s5, 128
  %v4389 = vld [vmem:[%s4388] sm:$0xff]
  %v4390 = vld [vmem:[%s4388 + $0x8] sm:$0xff]
  %v4392 = vsel %vm85, %v4355, 0
  %v4395 = vsel %vm85, %v4360, 0
  %v4398 = vsel %vm85, %v4365, 0
  %v4401 = vsel %vm85, %v4370, 0
  %v4404 = vsel %vm85, %v4375, 0
  %v4407 = vsel %vm85, %v4380, 0
  %v4410 = vsel %vm85, %v4385, 0
  %4412 = vmatprep.subr.mxu0 0.0
  %4413 = vmatpush1.msra.mxu0 %v4389
  %4414 = vmatprep.subr.mxu0 0.0
  %4415 = vmatpush1.msra.mxu0 %v4390
  %4416 = vmatprep.subr.mxu0 0.0
  %4417 = vmatpush1.msra.mxu0 0.0
  %4418 = vmatprep.subr.mxu0 0.0
  %4419 = vmatpush1.msra.mxu0 0.0
  %4420 = vmatprep.subr.mxu0 0.0
  %4421 = vmatpush1.msra.mxu0 0.0
  %4422 = vmatprep.subr.mxu0 0.0
  %4423 = vmatpush1.msra.mxu0 0.0
  %4424 = vmatprep.subr.mxu0 0.0
  %4425 = vmatpush1.msra.mxu0 0.0
  %4426 = vmatprep.subr.mxu0 0.0
  %4427 = vmatpush1.msra.mxu0 0.0
  %4428 = vmatprep.subr.mxu0 0.0
  %4429 = vmatpush1.msra.mxu0 0.0
  %4430 = vmatprep.subr.mxu0 0.0
  %4431 = vmatpush1.msra.mxu0 0.0
  %4432 = vmatprep.subr.mxu0 0.0
  %4433 = vmatpush1.msra.mxu0 0.0
  %4434 = vmatprep.subr.mxu0 0.0
  %4435 = vmatpush1.msra.mxu0 0.0
  %4436 = vmatprep.subr.mxu0 0.0
  %4437 = vmatpush1.msra.mxu0 0.0
  %4438 = vmatprep.subr.mxu0 0.0
  %4439 = vmatpush1.msra.mxu0 0.0
  %4440 = vmatprep.subr.mxu0 0.0
  %4441 = vmatpush1.msra.mxu0 0.0
  %4442 = vmatprep.subr.mxu0 0.0
  %4443 = vmatpush1.msra.mxu0 0.0
  %4444 = vmatprep.subr.mxu0 0.0
  %4445 = vmatpush1.msra.mxu0 0.0
  %4446 = vmatprep.subr.mxu0 0.0
  %4447 = vmatpush1.msra.mxu0 0.0
  %4448 = vmatprep.subr.mxu0 0.0
  %4449 = vmatpush1.msra.mxu0 0.0
  %4450 = vmatprep.subr.mxu0 0.0
  %4451 = vmatpush1.msra.mxu0 0.0
  %4452 = vmatprep.subr.mxu0 0.0
  %4453 = vmatpush1.msra.mxu0 0.0
  %4454 = vmatprep.subr.mxu0 0.0
  %4455 = vmatpush1.msra.mxu0 0.0
  %4456 = vmatprep.subr.mxu0 0.0
  %4457 = vmatpush1.msra.mxu0 0.0
  %4458 = vmatprep.subr.mxu0 0.0
  %4459 = vmatpush1.msra.mxu0 0.0
  %4460 = vmatprep.subr.mxu0 0.0
  %4461 = vmatpush1.msra.mxu0 0.0
  %4462 = vmatprep.subr.mxu0 0.0
  %4463 = vmatpush1.msra.mxu0 0.0
  %4464 = vmatprep.subr.mxu0 0.0
  %4465 = vmatpush1.msra.mxu0 0.0
  %4466 = vmatprep.subr.mxu0 0.0
  %4467 = vmatpush1.msra.mxu0 0.0
  %4468 = vmatprep.subr.mxu0 0.0
  %4469 = vmatpush1.msra.mxu0 0.0
  %4470 = vmatprep.subr.mxu0 0.0
  %4471 = vmatpush1.msra.mxu0 0.0
  %4472 = vmatprep.subr.mxu0 0.0
  %4473 = vmatpush1.msra.mxu0 0.0
  %4474 = vmatprep.subr.mxu0 0.0
  %4475 = vmatpush1.msra.mxu0 0.0
  %4476 = vmatprep.mubr.f32.mxu0 0.0
  %4477 = vmatmul.mubr.f32.gmra.mrb[0].mxu0 %v4392
  %v4478 = vpop.f32.mrb[0].mxu0
  %v4479 = vadd.f32 0.0, %v4478
  %v4480 = vpop.f32.mrb[0].mxu0
  %4481 = vmatprep.mubr.f32.mxu0 0.0
  %4482 = vmatmul.mubr.f32.gmra.mrb[0].mxu0 %v4395
  %v4483 = vpop.f32.mrb[0].mxu0
  %v4484 = vadd.f32 0.0, %v4483
  %v4485 = vpop.f32.mrb[0].mxu0
  %4486 = vmatprep.mubr.f32.mxu0 0.0
  %4487 = vmatmul.mubr.f32.gmra.mrb[0].mxu0 %v4398
  %v4488 = vpop.f32.mrb[0].mxu0
  %v4489 = vadd.f32 0.0, %v4488
  %v4490 = vpop.f32.mrb[0].mxu0
  %4491 = vmatprep.mubr.f32.mxu0 0.0
  %4492 = vmatmul.mubr.f32.gmra.mrb[0].mxu0 %v4401
  %v4493 = vpop.f32.mrb[0].mxu0
  %v4494 = vadd.f32 0.0, %v4493
  %v4495 = vpop.f32.mrb[0].mxu0
  %4496 = vmatprep.mubr.f32.mxu0 0.0
  %4497 = vmatmul.mubr.f32.gmra.mrb[0].mxu0 %v4404
  %v4498 = vpop.f32.mrb[0].mxu0
  %v4499 = vadd.f32 0.0, %v4498
  %v4500 = vpop.f32.mrb[0].mxu0
  %4501 = vmatprep.mubr.f32.mxu0 0.0
  %4502 = vmatmul.mubr.f32.gmra.mrb[0].mxu0 %v4407
  %v4503 = vpop.f32.mrb[0].mxu0
  %v4504 = vadd.f32 0.0, %v4503
  %v4505 = vpop.f32.mrb[0].mxu0
  %4506 = vmatprep.mubr.f32.mxu0 0.0
  %4507 = vmatmul.mubr.f32.gmra.mrb[0].mxu0 %v4410
  %v4508 = vpop.f32.mrb[0].mxu0
  %v4509 = vadd.f32 0.0, %v4508
  %v4510 = vpop.f32.mrb[0].mxu0
  %4511 = vdwg.mxu0
  %v4512 = vadd.f32 %v4124, %v4479
  %v4513 = vadd.f32 %v4125, %v4484
  %v4514 = vadd.f32 %v4126, %v4489
  %v4515 = vadd.f32 %v4127, %v4494
  %v4516 = vadd.f32 %v4128, %v4499
  %v4517 = vadd.f32 %v4129, %v4504
  %v4518 = vadd.f32 %v4130, %v4509
  %s4519 = scalar_lea.vmem %s4, 756
  %v4520 = vld [vmem:[%s4519] sm:$0xff]
  %v4521 = vld [vmem:[%s4519 + $0x8] sm:$0xf]
  %v4522 = vld [vmem:[%s4519 + $0xc] sm:$0xff]
  %v4523 = vld [vmem:[%s4519 + $0x14] sm:$0xf]
  %v4524 = vld [vmem:[%s4519 + $0x18] sm:$0xff]
  %v4525 = vld [vmem:[%s4519 + $0x20] sm:$0xf]
  %v4526 = vld [vmem:[%s4519 + $0x24] sm:$0xff]
  %v4527 = vld [vmem:[%s4519 + $0x2c] sm:$0xf]
  %v4528 = vld [vmem:[%s4519 + $0x30] sm:$0xff]
  %v4529 = vld [vmem:[%s4519 + $0x38] sm:$0xf]
  %v4530 = vld [vmem:[%s4519 + $0x3c] sm:$0xff]
  %v4531 = vld [vmem:[%s4519 + $0x44] sm:$0xf]
  %v4532 = vld [vmem:[%s4519 + $0x48] sm:$0xff]
  %v4533 = vld [vmem:[%s4519 + $0x50] sm:$0xf]
  %v4534 = vunpack.c.l.bf16 %v4520
  %v4535 = vunpack.c.h.bf16 %v4520
  %v4536 = vunpack.c.l.bf16 %v4521
  %v4537 = vunpack.c.l.bf16 %v4522
  %v4538 = vunpack.c.h.bf16 %v4522
  %v4539 = vunpack.c.l.bf16 %v4523
  %v4540 = vunpack.c.l.bf16 %v4524
  %v4541 = vunpack.c.h.bf16 %v4524
  %v4542 = vunpack.c.l.bf16 %v4525
  %v4543 = vunpack.c.l.bf16 %v4526
  %v4544 = vunpack.c.h.bf16 %v4526
  %v4545 = vunpack.c.l.bf16 %v4527
  %v4546 = vunpack.c.l.bf16 %v4528
  %v4547 = vunpack.c.h.bf16 %v4528
  %v4548 = vunpack.c.l.bf16 %v4529
  %v4549 = vunpack.c.l.bf16 %v4530
  %v4550 = vunpack.c.h.bf16 %v4530
  %v4551 = vunpack.c.l.bf16 %v4531
  %v4552 = vunpack.c.l.bf16 %v4532
  %v4553 = vunpack.c.h.bf16 %v4532
  %v4554 = vunpack.c.l.bf16 %v4533
  %v4556 = vsel %vm1077, %v4536, 0
  %v4559 = vsel %vm1077, %v4539, 0
  %v4562 = vsel %vm1077, %v4542, 0
  %v4565 = vsel %vm1077, %v4545, 0
  %v4568 = vsel %vm1077, %v4548, 0
  %v4571 = vsel %vm1077, %v4551, 0
  %v4574 = vsel %vm1077, %v4554, 0
  %4576 = vmatprep.subr.mxu0 0.0
  %4577 = vmatpush1.msra.mxu0 %v999
  %4578 = vmatprep.subr.mxu0 0.0
  %4579 = vmatpush1.msra.mxu0 %v1000
  %4580 = vmatprep.subr.mxu0 0.0
  %4581 = vmatpush1.msra.mxu0 %v1001
  %4582 = vmatprep.subr.mxu0 0.0
  %4583 = vmatpush1.msra.mxu0 %v1002
  %4584 = vmatprep.subr.mxu0 0.0
  %4585 = vmatpush1.msra.mxu0 %v1003
  %4586 = vmatprep.subr.mxu0 0.0
  %4587 = vmatpush1.msra.mxu0 %v1004
  %4588 = vmatprep.subr.mxu0 0.0
  %4589 = vmatpush1.msra.mxu0 %v1005
  %4590 = vmatprep.subr.mxu0 0.0
  %4591 = vmatpush1.msra.mxu0 %v1006
  %4592 = vmatprep.subr.mxu0 0.0
  %4593 = vmatpush1.msra.mxu0 %v1007
  %4594 = vmatprep.subr.mxu0 0.0
  %4595 = vmatpush1.msra.mxu0 %v1008
  %4596 = vmatprep.subr.mxu0 0.0
  %4597 = vmatpush1.msra.mxu0 %v1009
  %4598 = vmatprep.subr.mxu0 0.0
  %4599 = vmatpush1.msra.mxu0 %v1010
  %4600 = vmatprep.subr.mxu0 0.0
  %4601 = vmatpush1.msra.mxu0 %v1011
  %4602 = vmatprep.subr.mxu0 0.0
  %4603 = vmatpush1.msra.mxu0 %v1012
  %4604 = vmatprep.subr.mxu0 0.0
  %4605 = vmatpush1.msra.mxu0 %v1013
  %4606 = vmatprep.subr.mxu0 0.0
  %4607 = vmatpush1.msra.mxu0 %v1014
  %4608 = vmatprep.subr.mxu0 0.0
  %4609 = vmatpush1.msra.mxu0 %v1015
  %4610 = vmatprep.subr.mxu0 0.0
  %4611 = vmatpush1.msra.mxu0 %v1016
  %4612 = vmatprep.subr.mxu0 0.0
  %4613 = vmatpush1.msra.mxu0 %v1017
  %4614 = vmatprep.subr.mxu0 0.0
  %4615 = vmatpush1.msra.mxu0 %v1018
  %4616 = vmatprep.subr.mxu0 0.0
  %4617 = vmatpush1.msra.mxu0 %v1019
  %4618 = vmatprep.subr.mxu0 0.0
  %4619 = vmatpush1.msra.mxu0 %v1020
  %4620 = vmatprep.subr.mxu0 0.0
  %4621 = vmatpush1.msra.mxu0 %v1021
  %4622 = vmatprep.subr.mxu0 0.0
  %4623 = vmatpush1.msra.mxu0 %v1022
  %4624 = vmatprep.subr.mxu0 0.0
  %4625 = vmatpush1.msra.mxu0 %v1023
  %4626 = vmatprep.subr.mxu0 0.0
  %4627 = vmatpush1.msra.mxu0 %v1024
  %4628 = vmatprep.subr.mxu0 0.0
  %4629 = vmatpush1.msra.mxu0 %v1025
  %4630 = vmatprep.subr.mxu0 0.0
  %4631 = vmatpush1.msra.mxu0 %v1026
  %4632 = vmatprep.subr.mxu0 0.0
  %4633 = vmatpush1.msra.mxu0 %v1027
  %4634 = vmatprep.subr.mxu0 0.0
  %4635 = vmatpush1.msra.mxu0 %v1028
  %4636 = vmatprep.subr.mxu0 0.0
  %4637 = vmatpush1.msra.mxu0 %v1029
  %4638 = vmatprep.subr.mxu0 0.0
  %4639 = vmatpush1.msra.mxu0 %v1030
  %4640 = vmatprep.mubr.f32.mxu0 %v4535
  %4641 = vmatmul.mubr.f32.gmra.mrb[0].mxu0 %v4534
  %v4642 = vpop.f32.mrb[0].mxu0
  %v4643 = vadd.f32 0.0, %v4642
  %v4644 = vpop.f32.mrb[0].mxu0
  %4645 = vmatprep.mubr.f32.mxu0 %v4538
  %4646 = vmatmul.mubr.f32.gmra.mrb[0].mxu0 %v4537
  %v4647 = vpop.f32.mrb[0].mxu0
  %v4648 = vadd.f32 0.0, %v4647
  %v4649 = vpop.f32.mrb[0].mxu0
  %4650 = vmatprep.mubr.f32.mxu0 %v4541
  %4651 = vmatmul.mubr.f32.gmra.mrb[0].mxu0 %v4540
  %v4652 = vpop.f32.mrb[0].mxu0
  %v4653 = vadd.f32 0.0, %v4652
  %v4654 = vpop.f32.mrb[0].mxu0
  %4655 = vmatprep.mubr.f32.mxu0 %v4544
  %4656 = vmatmul.mubr.f32.gmra.mrb[0].mxu0 %v4543
  %v4657 = vpop.f32.mrb[0].mxu0
  %v4658 = vadd.f32 0.0, %v4657
  %v4659 = vpop.f32.mrb[0].mxu0
  %4660 = vmatprep.mubr.f32.mxu0 %v4547
  %4661 = vmatmul.mubr.f32.gmra.mrb[0].mxu0 %v4546
  %v4662 = vpop.f32.mrb[0].mxu0
  %v4663 = vadd.f32 0.0, %v4662
  %v4664 = vpop.f32.mrb[0].mxu0
  %4665 = vmatprep.mubr.f32.mxu0 %v4550
  %4666 = vmatmul.mubr.f32.gmra.mrb[0].mxu0 %v4549
  %v4667 = vpop.f32.mrb[0].mxu0
  %v4668 = vadd.f32 0.0, %v4667
  %v4669 = vpop.f32.mrb[0].mxu0
  %4670 = vmatprep.mubr.f32.mxu0 %v4553
  %4671 = vmatmul.mubr.f32.gmra.mrb[0].mxu0 %v4552
  %v4672 = vpop.f32.mrb[0].mxu0
  %v4673 = vadd.f32 0.0, %v4672
  %v4674 = vpop.f32.mrb[0].mxu0
  %4675 = vdwg.mxu0
  %4676 = vmatprep.subr.mxu0 0.0
  %4677 = vmatpush1.msra.mxu0 %v1031
  %4678 = vmatprep.subr.mxu0 0.0
  %4679 = vmatpush1.msra.mxu0 %v1032
  %4680 = vmatprep.subr.mxu0 0.0
  %4681 = vmatpush1.msra.mxu0 %v1033
  %4682 = vmatprep.subr.mxu0 0.0
  %4683 = vmatpush1.msra.mxu0 %v1034
  %4684 = vmatprep.subr.mxu0 0.0
  %4685 = vmatpush1.msra.mxu0 %v1035
  %4686 = vmatprep.subr.mxu0 0.0
  %4687 = vmatpush1.msra.mxu0 %v1036
  %4688 = vmatprep.subr.mxu0 0.0
  %4689 = vmatpush1.msra.mxu0 %v1037
  %4690 = vmatprep.subr.mxu0 0.0
  %4691 = vmatpush1.msra.mxu0 %v1038
  %4692 = vmatprep.subr.mxu0 0.0
  %4693 = vmatpush1.msra.mxu0 %v1039
  %4694 = vmatprep.subr.mxu0 0.0
  %4695 = vmatpush1.msra.mxu0 %v1040
  %4696 = vmatprep.subr.mxu0 0.0
  %4697 = vmatpush1.msra.mxu0 %v1041
  %4698 = vmatprep.subr.mxu0 0.0
  %4699 = vmatpush1.msra.mxu0 0.0
  %4700 = vmatprep.subr.mxu0 0.0
  %4701 = vmatpush1.msra.mxu0 0.0
  %4702 = vmatprep.subr.mxu0 0.0
  %4703 = vmatpush1.msra.mxu0 0.0
  %4704 = vmatprep.subr.mxu0 0.0
  %4705 = vmatpush1.msra.mxu0 0.0
  %4706 = vmatprep.subr.mxu0 0.0
  %4707 = vmatpush1.msra.mxu0 0.0
  %4708 = vmatprep.subr.mxu0 0.0
  %4709 = vmatpush1.msra.mxu0 0.0
  %4710 = vmatprep.subr.mxu0 0.0
  %4711 = vmatpush1.msra.mxu0 0.0
  %4712 = vmatprep.subr.mxu0 0.0
  %4713 = vmatpush1.msra.mxu0 0.0
  %4714 = vmatprep.subr.mxu0 0.0
  %4715 = vmatpush1.msra.mxu0 0.0
  %4716 = vmatprep.subr.mxu0 0.0
  %4717 = vmatpush1.msra.mxu0 0.0
  %4718 = vmatprep.subr.mxu0 0.0
  %4719 = vmatpush1.msra.mxu0 0.0
  %4720 = vmatprep.subr.mxu0 0.0
  %4721 = vmatpush1.msra.mxu0 0.0
  %4722 = vmatprep.subr.mxu0 0.0
  %4723 = vmatpush1.msra.mxu0 0.0
  %4724 = vmatprep.subr.mxu0 0.0
  %4725 = vmatpush1.msra.mxu0 0.0
  %4726 = vmatprep.subr.mxu0 0.0
  %4727 = vmatpush1.msra.mxu0 0.0
  %4728 = vmatprep.subr.mxu0 0.0
  %4729 = vmatpush1.msra.mxu0 0.0
  %4730 = vmatprep.subr.mxu0 0.0
  %4731 = vmatpush1.msra.mxu0 0.0
  %4732 = vmatprep.subr.mxu0 0.0
  %4733 = vmatpush1.msra.mxu0 0.0
  %4734 = vmatprep.subr.mxu0 0.0
  %4735 = vmatpush1.msra.mxu0 0.0
  %4736 = vmatprep.subr.mxu0 0.0
  %4737 = vmatpush1.msra.mxu0 0.0
  %4738 = vmatprep.subr.mxu0 0.0
  %4739 = vmatpush1.msra.mxu0 0.0
  %4740 = vmatprep.mubr.f32.mxu0 0.0
  %4741 = vmatmul.mubr.f32.gmra.mrb[0].mxu0 %v4556
  %v4742 = vpop.f32.mrb[0].mxu0
  %v4743 = vadd.f32 %v4643, %v4742
  %v4744 = vpop.f32.mrb[0].mxu0
  %4745 = vmatprep.mubr.f32.mxu0 0.0
  %4746 = vmatmul.mubr.f32.gmra.mrb[0].mxu0 %v4559
  %v4747 = vpop.f32.mrb[0].mxu0
  %v4748 = vadd.f32 %v4648, %v4747
  %v4749 = vpop.f32.mrb[0].mxu0
  %4750 = vmatprep.mubr.f32.mxu0 0.0
  %4751 = vmatmul.mubr.f32.gmra.mrb[0].mxu0 %v4562
  %v4752 = vpop.f32.mrb[0].mxu0
  %v4753 = vadd.f32 %v4653, %v4752
  %v4754 = vpop.f32.mrb[0].mxu0
  %4755 = vmatprep.mubr.f32.mxu0 0.0
  %4756 = vmatmul.mubr.f32.gmra.mrb[0].mxu0 %v4565
  %v4757 = vpop.f32.mrb[0].mxu0
  %v4758 = vadd.f32 %v4658, %v4757
  %v4759 = vpop.f32.mrb[0].mxu0
  %4760 = vmatprep.mubr.f32.mxu0 0.0
  %4761 = vmatmul.mubr.f32.gmra.mrb[0].mxu0 %v4568
  %v4762 = vpop.f32.mrb[0].mxu0
  %v4763 = vadd.f32 %v4663, %v4762
  %v4764 = vpop.f32.mrb[0].mxu0
  %4765 = vmatprep.mubr.f32.mxu0 0.0
  %4766 = vmatmul.mubr.f32.gmra.mrb[0].mxu0 %v4571
  %v4767 = vpop.f32.mrb[0].mxu0
  %v4768 = vadd.f32 %v4668, %v4767
  %v4769 = vpop.f32.mrb[0].mxu0
  %4770 = vmatprep.mubr.f32.mxu0 0.0
  %4771 = vmatmul.mubr.f32.gmra.mrb[0].mxu0 %v4574
  %v4772 = vpop.f32.mrb[0].mxu0
  %v4773 = vadd.f32 %v4673, %v4772
  %v4774 = vpop.f32.mrb[0].mxu0
  %4775 = vdwg.mxu0
  %s4776 = scalar_lea.vmem %s5, 144
  %v4777 = vld [vmem:[%s4776] sm:$0xff]
  %v4778 = vld [vmem:[%s4776 + $0x8] sm:$0xff]
  %v4780 = vsel %vm85, %v4743, 0
  %v4783 = vsel %vm85, %v4748, 0
  %v4786 = vsel %vm85, %v4753, 0
  %v4789 = vsel %vm85, %v4758, 0
  %v4792 = vsel %vm85, %v4763, 0
  %v4795 = vsel %vm85, %v4768, 0
  %v4798 = vsel %vm85, %v4773, 0
  %4800 = vmatprep.subr.mxu0 0.0
  %4801 = vmatpush1.msra.mxu0 %v4777
  %4802 = vmatprep.subr.mxu0 0.0
  %4803 = vmatpush1.msra.mxu0 %v4778
  %4804 = vmatprep.subr.mxu0 0.0
  %4805 = vmatpush1.msra.mxu0 0.0
  %4806 = vmatprep.subr.mxu0 0.0
  %4807 = vmatpush1.msra.mxu0 0.0
  %4808 = vmatprep.subr.mxu0 0.0
  %4809 = vmatpush1.msra.mxu0 0.0
  %4810 = vmatprep.subr.mxu0 0.0
  %4811 = vmatpush1.msra.mxu0 0.0
  %4812 = vmatprep.subr.mxu0 0.0
  %4813 = vmatpush1.msra.mxu0 0.0
  %4814 = vmatprep.subr.mxu0 0.0
  %4815 = vmatpush1.msra.mxu0 0.0
  %4816 = vmatprep.subr.mxu0 0.0
  %4817 = vmatpush1.msra.mxu0 0.0
  %4818 = vmatprep.subr.mxu0 0.0
  %4819 = vmatpush1.msra.mxu0 0.0
  %4820 = vmatprep.subr.mxu0 0.0
  %4821 = vmatpush1.msra.mxu0 0.0
  %4822 = vmatprep.subr.mxu0 0.0
  %4823 = vmatpush1.msra.mxu0 0.0
  %4824 = vmatprep.subr.mxu0 0.0
  %4825 = vmatpush1.msra.mxu0 0.0
  %4826 = vmatprep.subr.mxu0 0.0
  %4827 = vmatpush1.msra.mxu0 0.0
  %4828 = vmatprep.subr.mxu0 0.0
  %4829 = vmatpush1.msra.mxu0 0.0
  %4830 = vmatprep.subr.mxu0 0.0
  %4831 = vmatpush1.msra.mxu0 0.0
  %4832 = vmatprep.subr.mxu0 0.0
  %4833 = vmatpush1.msra.mxu0 0.0
  %4834 = vmatprep.subr.mxu0 0.0
  %4835 = vmatpush1.msra.mxu0 0.0
  %4836 = vmatprep.subr.mxu0 0.0
  %4837 = vmatpush1.msra.mxu0 0.0
  %4838 = vmatprep.subr.mxu0 0.0
  %4839 = vmatpush1.msra.mxu0 0.0
  %4840 = vmatprep.subr.mxu0 0.0
  %4841 = vmatpush1.msra.mxu0 0.0
  %4842 = vmatprep.subr.mxu0 0.0
  %4843 = vmatpush1.msra.mxu0 0.0
  %4844 = vmatprep.subr.mxu0 0.0
  %4845 = vmatpush1.msra.mxu0 0.0
  %4846 = vmatprep.subr.mxu0 0.0
  %4847 = vmatpush1.msra.mxu0 0.0
  %4848 = vmatprep.subr.mxu0 0.0
  %4849 = vmatpush1.msra.mxu0 0.0
  %4850 = vmatprep.subr.mxu0 0.0
  %4851 = vmatpush1.msra.mxu0 0.0
  %4852 = vmatprep.subr.mxu0 0.0
  %4853 = vmatpush1.msra.mxu0 0.0
  %4854 = vmatprep.subr.mxu0 0.0
  %4855 = vmatpush1.msra.mxu0 0.0
  %4856 = vmatprep.subr.mxu0 0.0
  %4857 = vmatpush1.msra.mxu0 0.0
  %4858 = vmatprep.subr.mxu0 0.0
  %4859 = vmatpush1.msra.mxu0 0.0
  %4860 = vmatprep.subr.mxu0 0.0
  %4861 = vmatpush1.msra.mxu0 0.0
  %4862 = vmatprep.subr.mxu0 0.0
  %4863 = vmatpush1.msra.mxu0 0.0
  %4864 = vmatprep.mubr.f32.mxu0 0.0
  %4865 = vmatmul.mubr.f32.gmra.mrb[0].mxu0 %v4780
  %v4866 = vpop.f32.mrb[0].mxu0
  %v4867 = vadd.f32 0.0, %v4866
  %v4868 = vpop.f32.mrb[0].mxu0
  %4869 = vmatprep.mubr.f32.mxu0 0.0
  %4870 = vmatmul.mubr.f32.gmra.mrb[0].mxu0 %v4783
  %v4871 = vpop.f32.mrb[0].mxu0
  %v4872 = vadd.f32 0.0, %v4871
  %v4873 = vpop.f32.mrb[0].mxu0
  %4874 = vmatprep.mubr.f32.mxu0 0.0
  %4875 = vmatmul.mubr.f32.gmra.mrb[0].mxu0 %v4786
  %v4876 = vpop.f32.mrb[0].mxu0
  %v4877 = vadd.f32 0.0, %v4876
  %v4878 = vpop.f32.mrb[0].mxu0
  %4879 = vmatprep.mubr.f32.mxu0 0.0
  %4880 = vmatmul.mubr.f32.gmra.mrb[0].mxu0 %v4789
  %v4881 = vpop.f32.mrb[0].mxu0
  %v4882 = vadd.f32 0.0, %v4881
  %v4883 = vpop.f32.mrb[0].mxu0
  %4884 = vmatprep.mubr.f32.mxu0 0.0
  %4885 = vmatmul.mubr.f32.gmra.mrb[0].mxu0 %v4792
  %v4886 = vpop.f32.mrb[0].mxu0
  %v4887 = vadd.f32 0.0, %v4886
  %v4888 = vpop.f32.mrb[0].mxu0
  %4889 = vmatprep.mubr.f32.mxu0 0.0
  %4890 = vmatmul.mubr.f32.gmra.mrb[0].mxu0 %v4795
  %v4891 = vpop.f32.mrb[0].mxu0
  %v4892 = vadd.f32 0.0, %v4891
  %v4893 = vpop.f32.mrb[0].mxu0
  %4894 = vmatprep.mubr.f32.mxu0 0.0
  %4895 = vmatmul.mubr.f32.gmra.mrb[0].mxu0 %v4798
  %v4896 = vpop.f32.mrb[0].mxu0
  %v4897 = vadd.f32 0.0, %v4896
  %v4898 = vpop.f32.mrb[0].mxu0
  %4899 = vdwg.mxu0
  %v4900 = vadd.f32 %v4512, %v4867
  %v4901 = vadd.f32 %v4513, %v4872
  %v4902 = vadd.f32 %v4514, %v4877
  %v4903 = vadd.f32 %v4515, %v4882
  %v4904 = vadd.f32 %v4516, %v4887
  %v4905 = vadd.f32 %v4517, %v4892
  %v4906 = vadd.f32 %v4518, %v4897
  %s4907 = scalar_lea.vmem %s4, 840
  %v4908 = vld [vmem:[%s4907] sm:$0xff]
  %v4909 = vld [vmem:[%s4907 + $0x8] sm:$0xf]
  %v4910 = vld [vmem:[%s4907 + $0xc] sm:$0xff]
  %v4911 = vld [vmem:[%s4907 + $0x14] sm:$0xf]
  %v4912 = vld [vmem:[%s4907 + $0x18] sm:$0xff]
  %v4913 = vld [vmem:[%s4907 + $0x20] sm:$0xf]
  %v4914 = vld [vmem:[%s4907 + $0x24] sm:$0xff]
  %v4915 = vld [vmem:[%s4907 + $0x2c] sm:$0xf]
  %v4916 = vld [vmem:[%s4907 + $0x30] sm:$0xff]
  %v4917 = vld [vmem:[%s4907 + $0x38] sm:$0xf]
  %v4918 = vld [vmem:[%s4907 + $0x3c] sm:$0xff]
  %v4919 = vld [vmem:[%s4907 + $0x44] sm:$0xf]
  %v4920 = vld [vmem:[%s4907 + $0x48] sm:$0xff]
  %v4921 = vld [vmem:[%s4907 + $0x50] sm:$0xf]
  %v4922 = vunpack.c.l.bf16 %v4908
  %v4923 = vunpack.c.h.bf16 %v4908
  %v4924 = vunpack.c.l.bf16 %v4909
  %v4925 = vunpack.c.l.bf16 %v4910
  %v4926 = vunpack.c.h.bf16 %v4910
  %v4927 = vunpack.c.l.bf16 %v4911
  %v4928 = vunpack.c.l.bf16 %v4912
  %v4929 = vunpack.c.h.bf16 %v4912
  %v4930 = vunpack.c.l.bf16 %v4913
  %v4931 = vunpack.c.l.bf16 %v4914
  %v4932 = vunpack.c.h.bf16 %v4914
  %v4933 = vunpack.c.l.bf16 %v4915
  %v4934 = vunpack.c.l.bf16 %v4916
  %v4935 = vunpack.c.h.bf16 %v4916
  %v4936 = vunpack.c.l.bf16 %v4917
  %v4937 = vunpack.c.l.bf16 %v4918
  %v4938 = vunpack.c.h.bf16 %v4918
  %v4939 = vunpack.c.l.bf16 %v4919
  %v4940 = vunpack.c.l.bf16 %v4920
  %v4941 = vunpack.c.h.bf16 %v4920
  %v4942 = vunpack.c.l.bf16 %v4921
  %v4944 = vsel %vm1077, %v4924, 0
  %v4947 = vsel %vm1077, %v4927, 0
  %v4950 = vsel %vm1077, %v4930, 0
  %v4953 = vsel %vm1077, %v4933, 0
  %v4956 = vsel %vm1077, %v4936, 0
  %v4959 = vsel %vm1077, %v4939, 0
  %v4962 = vsel %vm1077, %v4942, 0
  %4964 = vmatprep.subr.mxu0 0.0
  %4965 = vmatpush1.msra.mxu0 %v999
  %4966 = vmatprep.subr.mxu0 0.0
  %4967 = vmatpush1.msra.mxu0 %v1000
  %4968 = vmatprep.subr.mxu0 0.0
  %4969 = vmatpush1.msra.mxu0 %v1001
  %4970 = vmatprep.subr.mxu0 0.0
  %4971 = vmatpush1.msra.mxu0 %v1002
  %4972 = vmatprep.subr.mxu0 0.0
  %4973 = vmatpush1.msra.mxu0 %v1003
  %4974 = vmatprep.subr.mxu0 0.0
  %4975 = vmatpush1.msra.mxu0 %v1004
  %4976 = vmatprep.subr.mxu0 0.0
  %4977 = vmatpush1.msra.mxu0 %v1005
  %4978 = vmatprep.subr.mxu0 0.0
  %4979 = vmatpush1.msra.mxu0 %v1006
  %4980 = vmatprep.subr.mxu0 0.0
  %4981 = vmatpush1.msra.mxu0 %v1007
  %4982 = vmatprep.subr.mxu0 0.0
  %4983 = vmatpush1.msra.mxu0 %v1008
  %4984 = vmatprep.subr.mxu0 0.0
  %4985 = vmatpush1.msra.mxu0 %v1009
  %4986 = vmatprep.subr.mxu0 0.0
  %4987 = vmatpush1.msra.mxu0 %v1010
  %4988 = vmatprep.subr.mxu0 0.0
  %4989 = vmatpush1.msra.mxu0 %v1011
  %4990 = vmatprep.subr.mxu0 0.0
  %4991 = vmatpush1.msra.mxu0 %v1012
  %4992 = vmatprep.subr.mxu0 0.0
  %4993 = vmatpush1.msra.mxu0 %v1013
  %4994 = vmatprep.subr.mxu0 0.0
  %4995 = vmatpush1.msra.mxu0 %v1014
  %4996 = vmatprep.subr.mxu0 0.0
  %4997 = vmatpush1.msra.mxu0 %v1015
  %4998 = vmatprep.subr.mxu0 0.0
  %4999 = vmatpush1.msra.mxu0 %v1016
  %5000 = vmatprep.subr.mxu0 0.0
  %5001 = vmatpush1.msra.mxu0 %v1017
  %5002 = vmatprep.subr.mxu0 0.0
  %5003 = vmatpush1.msra.mxu0 %v1018
  %5004 = vmatprep.subr.mxu0 0.0
  %5005 = vmatpush1.msra.mxu0 %v1019
  %5006 = vmatprep.subr.mxu0 0.0
  %5007 = vmatpush1.msra.mxu0 %v1020
  %5008 = vmatprep.subr.mxu0 0.0
  %5009 = vmatpush1.msra.mxu0 %v1021
  %5010 = vmatprep.subr.mxu0 0.0
  %5011 = vmatpush1.msra.mxu0 %v1022
  %5012 = vmatprep.subr.mxu0 0.0
  %5013 = vmatpush1.msra.mxu0 %v1023
  %5014 = vmatprep.subr.mxu0 0.0
  %5015 = vmatpush1.msra.mxu0 %v1024
  %5016 = vmatprep.subr.mxu0 0.0
  %5017 = vmatpush1.msra.mxu0 %v1025
  %5018 = vmatprep.subr.mxu0 0.0
  %5019 = vmatpush1.msra.mxu0 %v1026
  %5020 = vmatprep.subr.mxu0 0.0
  %5021 = vmatpush1.msra.mxu0 %v1027
  %5022 = vmatprep.subr.mxu0 0.0
  %5023 = vmatpush1.msra.mxu0 %v1028
  %5024 = vmatprep.subr.mxu0 0.0
  %5025 = vmatpush1.msra.mxu0 %v1029
  %5026 = vmatprep.subr.mxu0 0.0
  %5027 = vmatpush1.msra.mxu0 %v1030
  %5028 = vmatprep.mubr.f32.mxu0 %v4923
  %5029 = vmatmul.mubr.f32.gmra.mrb[0].mxu0 %v4922
  %v5030 = vpop.f32.mrb[0].mxu0
  %v5031 = vadd.f32 0.0, %v5030
  %v5032 = vpop.f32.mrb[0].mxu0
  %5033 = vmatprep.mubr.f32.mxu0 %v4926
  %5034 = vmatmul.mubr.f32.gmra.mrb[0].mxu0 %v4925
  %v5035 = vpop.f32.mrb[0].mxu0
  %v5036 = vadd.f32 0.0, %v5035
  %v5037 = vpop.f32.mrb[0].mxu0
  %5038 = vmatprep.mubr.f32.mxu0 %v4929
  %5039 = vmatmul.mubr.f32.gmra.mrb[0].mxu0 %v4928
  %v5040 = vpop.f32.mrb[0].mxu0
  %v5041 = vadd.f32 0.0, %v5040
  %v5042 = vpop.f32.mrb[0].mxu0
  %5043 = vmatprep.mubr.f32.mxu0 %v4932
  %5044 = vmatmul.mubr.f32.gmra.mrb[0].mxu0 %v4931
  %v5045 = vpop.f32.mrb[0].mxu0
  %v5046 = vadd.f32 0.0, %v5045
  %v5047 = vpop.f32.mrb[0].mxu0
  %5048 = vmatprep.mubr.f32.mxu0 %v4935
  %5049 = vmatmul.mubr.f32.gmra.mrb[0].mxu0 %v4934
  %v5050 = vpop.f32.mrb[0].mxu0
  %v5051 = vadd.f32 0.0, %v5050
  %v5052 = vpop.f32.mrb[0].mxu0
  %5053 = vmatprep.mubr.f32.mxu0 %v4938
  %5054 = vmatmul.mubr.f32.gmra.mrb[0].mxu0 %v4937
  %v5055 = vpop.f32.mrb[0].mxu0
  %v5056 = vadd.f32 0.0, %v5055
  %v5057 = vpop.f32.mrb[0].mxu0
  %5058 = vmatprep.mubr.f32.mxu0 %v4941
  %5059 = vmatmul.mubr.f32.gmra.mrb[0].mxu0 %v4940
  %v5060 = vpop.f32.mrb[0].mxu0
  %v5061 = vadd.f32 0.0, %v5060
  %v5062 = vpop.f32.mrb[0].mxu0
  %5063 = vdwg.mxu0
  %5064 = vmatprep.subr.mxu0 0.0
  %5065 = vmatpush1.msra.mxu0 %v1031
  %5066 = vmatprep.subr.mxu0 0.0
  %5067 = vmatpush1.msra.mxu0 %v1032
  %5068 = vmatprep.subr.mxu0 0.0
  %5069 = vmatpush1.msra.mxu0 %v1033
  %5070 = vmatprep.subr.mxu0 0.0
  %5071 = vmatpush1.msra.mxu0 %v1034
  %5072 = vmatprep.subr.mxu0 0.0
  %5073 = vmatpush1.msra.mxu0 %v1035
  %5074 = vmatprep.subr.mxu0 0.0
  %5075 = vmatpush1.msra.mxu0 %v1036
  %5076 = vmatprep.subr.mxu0 0.0
  %5077 = vmatpush1.msra.mxu0 %v1037
  %5078 = vmatprep.subr.mxu0 0.0
  %5079 = vmatpush1.msra.mxu0 %v1038
  %5080 = vmatprep.subr.mxu0 0.0
  %5081 = vmatpush1.msra.mxu0 %v1039
  %5082 = vmatprep.subr.mxu0 0.0
  %5083 = vmatpush1.msra.mxu0 %v1040
  %5084 = vmatprep.subr.mxu0 0.0
  %5085 = vmatpush1.msra.mxu0 %v1041
  %5086 = vmatprep.subr.mxu0 0.0
  %5087 = vmatpush1.msra.mxu0 0.0
  %5088 = vmatprep.subr.mxu0 0.0
  %5089 = vmatpush1.msra.mxu0 0.0
  %5090 = vmatprep.subr.mxu0 0.0
  %5091 = vmatpush1.msra.mxu0 0.0
  %5092 = vmatprep.subr.mxu0 0.0
  %5093 = vmatpush1.msra.mxu0 0.0
  %5094 = vmatprep.subr.mxu0 0.0
  %5095 = vmatpush1.msra.mxu0 0.0
  %5096 = vmatprep.subr.mxu0 0.0
  %5097 = vmatpush1.msra.mxu0 0.0
  %5098 = vmatprep.subr.mxu0 0.0
  %5099 = vmatpush1.msra.mxu0 0.0
  %5100 = vmatprep.subr.mxu0 0.0
  %5101 = vmatpush1.msra.mxu0 0.0
  %5102 = vmatprep.subr.mxu0 0.0
  %5103 = vmatpush1.msra.mxu0 0.0
  %5104 = vmatprep.subr.mxu0 0.0
  %5105 = vmatpush1.msra.mxu0 0.0
  %5106 = vmatprep.subr.mxu0 0.0
  %5107 = vmatpush1.msra.mxu0 0.0
  %5108 = vmatprep.subr.mxu0 0.0
  %5109 = vmatpush1.msra.mxu0 0.0
  %5110 = vmatprep.subr.mxu0 0.0
  %5111 = vmatpush1.msra.mxu0 0.0
  %5112 = vmatprep.subr.mxu0 0.0
  %5113 = vmatpush1.msra.mxu0 0.0
  %5114 = vmatprep.subr.mxu0 0.0
  %5115 = vmatpush1.msra.mxu0 0.0
  %5116 = vmatprep.subr.mxu0 0.0
  %5117 = vmatpush1.msra.mxu0 0.0
  %5118 = vmatprep.subr.mxu0 0.0
  %5119 = vmatpush1.msra.mxu0 0.0
  %5120 = vmatprep.subr.mxu0 0.0
  %5121 = vmatpush1.msra.mxu0 0.0
  %5122 = vmatprep.subr.mxu0 0.0
  %5123 = vmatpush1.msra.mxu0 0.0
  %5124 = vmatprep.subr.mxu0 0.0
  %5125 = vmatpush1.msra.mxu0 0.0
  %5126 = vmatprep.subr.mxu0 0.0
  %5127 = vmatpush1.msra.mxu0 0.0
  %5128 = vmatprep.mubr.f32.mxu0 0.0
  %5129 = vmatmul.mubr.f32.gmra.mrb[0].mxu0 %v4944
  %v5130 = vpop.f32.mrb[0].mxu0
  %v5131 = vadd.f32 %v5031, %v5130
  %v5132 = vpop.f32.mrb[0].mxu0
  %5133 = vmatprep.mubr.f32.mxu0 0.0
  %5134 = vmatmul.mubr.f32.gmra.mrb[0].mxu0 %v4947
  %v5135 = vpop.f32.mrb[0].mxu0
  %v5136 = vadd.f32 %v5036, %v5135
  %v5137 = vpop.f32.mrb[0].mxu0
  %5138 = vmatprep.mubr.f32.mxu0 0.0
  %5139 = vmatmul.mubr.f32.gmra.mrb[0].mxu0 %v4950
  %v5140 = vpop.f32.mrb[0].mxu0
  %v5141 = vadd.f32 %v5041, %v5140
  %v5142 = vpop.f32.mrb[0].mxu0
  %5143 = vmatprep.mubr.f32.mxu0 0.0
  %5144 = vmatmul.mubr.f32.gmra.mrb[0].mxu0 %v4953
  %v5145 = vpop.f32.mrb[0].mxu0
  %v5146 = vadd.f32 %v5046, %v5145
  %v5147 = vpop.f32.mrb[0].mxu0
  %5148 = vmatprep.mubr.f32.mxu0 0.0
  %5149 = vmatmul.mubr.f32.gmra.mrb[0].mxu0 %v4956
  %v5150 = vpop.f32.mrb[0].mxu0
  %v5151 = vadd.f32 %v5051, %v5150
  %v5152 = vpop.f32.mrb[0].mxu0
  %5153 = vmatprep.mubr.f32.mxu0 0.0
  %5154 = vmatmul.mubr.f32.gmra.mrb[0].mxu0 %v4959
  %v5155 = vpop.f32.mrb[0].mxu0
  %v5156 = vadd.f32 %v5056, %v5155
  %v5157 = vpop.f32.mrb[0].mxu0
  %5158 = vmatprep.mubr.f32.mxu0 0.0
  %5159 = vmatmul.mubr.f32.gmra.mrb[0].mxu0 %v4962
  %v5160 = vpop.f32.mrb[0].mxu0
  %v5161 = vadd.f32 %v5061, %v5160
  %v5162 = vpop.f32.mrb[0].mxu0
  %5163 = vdwg.mxu0
  %s5164 = scalar_lea.vmem %s5, 160
  %v5165 = vld [vmem:[%s5164] sm:$0xff]
  %v5166 = vld [vmem:[%s5164 + $0x8] sm:$0xff]
  %v5168 = vsel %vm85, %v5131, 0
  %v5171 = vsel %vm85, %v5136, 0
  %v5174 = vsel %vm85, %v5141, 0
  %v5177 = vsel %vm85, %v5146, 0
  %v5180 = vsel %vm85, %v5151, 0
  %v5183 = vsel %vm85, %v5156, 0
  %v5186 = vsel %vm85, %v5161, 0
  %5188 = vmatprep.subr.mxu0 0.0
  %5189 = vmatpush1.msra.mxu0 %v5165
  %5190 = vmatprep.subr.mxu0 0.0
  %5191 = vmatpush1.msra.mxu0 %v5166
  %5192 = vmatprep.subr.mxu0 0.0
  %5193 = vmatpush1.msra.mxu0 0.0
  %5194 = vmatprep.subr.mxu0 0.0
  %5195 = vmatpush1.msra.mxu0 0.0
  %5196 = vmatprep.subr.mxu0 0.0
  %5197 = vmatpush1.msra.mxu0 0.0
  %5198 = vmatprep.subr.mxu0 0.0
  %5199 = vmatpush1.msra.mxu0 0.0
  %5200 = vmatprep.subr.mxu0 0.0
  %5201 = vmatpush1.msra.mxu0 0.0
  %5202 = vmatprep.subr.mxu0 0.0
  %5203 = vmatpush1.msra.mxu0 0.0
  %5204 = vmatprep.subr.mxu0 0.0
  %5205 = vmatpush1.msra.mxu0 0.0
  %5206 = vmatprep.subr.mxu0 0.0
  %5207 = vmatpush1.msra.mxu0 0.0
  %5208 = vmatprep.subr.mxu0 0.0
  %5209 = vmatpush1.msra.mxu0 0.0
  %5210 = vmatprep.subr.mxu0 0.0
  %5211 = vmatpush1.msra.mxu0 0.0
  %5212 = vmatprep.subr.mxu0 0.0
  %5213 = vmatpush1.msra.mxu0 0.0
  %5214 = vmatprep.subr.mxu0 0.0
  %5215 = vmatpush1.msra.mxu0 0.0
  %5216 = vmatprep.subr.mxu0 0.0
  %5217 = vmatpush1.msra.mxu0 0.0
  %5218 = vmatprep.subr.mxu0 0.0
  %5219 = vmatpush1.msra.mxu0 0.0
  %5220 = vmatprep.subr.mxu0 0.0
  %5221 = vmatpush1.msra.mxu0 0.0
  %5222 = vmatprep.subr.mxu0 0.0
  %5223 = vmatpush1.msra.mxu0 0.0
  %5224 = vmatprep.subr.mxu0 0.0
  %5225 = vmatpush1.msra.mxu0 0.0
  %5226 = vmatprep.subr.mxu0 0.0
  %5227 = vmatpush1.msra.mxu0 0.0
  %5228 = vmatprep.subr.mxu0 0.0
  %5229 = vmatpush1.msra.mxu0 0.0
  %5230 = vmatprep.subr.mxu0 0.0
  %5231 = vmatpush1.msra.mxu0 0.0
  %5232 = vmatprep.subr.mxu0 0.0
  %5233 = vmatpush1.msra.mxu0 0.0
  %5234 = vmatprep.subr.mxu0 0.0
  %5235 = vmatpush1.msra.mxu0 0.0
  %5236 = vmatprep.subr.mxu0 0.0
  %5237 = vmatpush1.msra.mxu0 0.0
  %5238 = vmatprep.subr.mxu0 0.0
  %5239 = vmatpush1.msra.mxu0 0.0
  %5240 = vmatprep.subr.mxu0 0.0
  %5241 = vmatpush1.msra.mxu0 0.0
  %5242 = vmatprep.subr.mxu0 0.0
  %5243 = vmatpush1.msra.mxu0 0.0
  %5244 = vmatprep.subr.mxu0 0.0
  %5245 = vmatpush1.msra.mxu0 0.0
  %5246 = vmatprep.subr.mxu0 0.0
  %5247 = vmatpush1.msra.mxu0 0.0
  %5248 = vmatprep.subr.mxu0 0.0
  %5249 = vmatpush1.msra.mxu0 0.0
  %5250 = vmatprep.subr.mxu0 0.0
  %5251 = vmatpush1.msra.mxu0 0.0
  %5252 = vmatprep.mubr.f32.mxu0 0.0
  %5253 = vmatmul.mubr.f32.gmra.mrb[0].mxu0 %v5168
  %v5254 = vpop.f32.mrb[0].mxu0
  %v5255 = vadd.f32 0.0, %v5254
  %v5256 = vpop.f32.mrb[0].mxu0
  %5257 = vmatprep.mubr.f32.mxu0 0.0
  %5258 = vmatmul.mubr.f32.gmra.mrb[0].mxu0 %v5171
  %v5259 = vpop.f32.mrb[0].mxu0
  %v5260 = vadd.f32 0.0, %v5259
  %v5261 = vpop.f32.mrb[0].mxu0
  %5262 = vmatprep.mubr.f32.mxu0 0.0
  %5263 = vmatmul.mubr.f32.gmra.mrb[0].mxu0 %v5174
  %v5264 = vpop.f32.mrb[0].mxu0
  %v5265 = vadd.f32 0.0, %v5264
  %v5266 = vpop.f32.mrb[0].mxu0
  %5267 = vmatprep.mubr.f32.mxu0 0.0
  %5268 = vmatmul.mubr.f32.gmra.mrb[0].mxu0 %v5177
  %v5269 = vpop.f32.mrb[0].mxu0
  %v5270 = vadd.f32 0.0, %v5269
  %v5271 = vpop.f32.mrb[0].mxu0
  %5272 = vmatprep.mubr.f32.mxu0 0.0
  %5273 = vmatmul.mubr.f32.gmra.mrb[0].mxu0 %v5180
  %v5274 = vpop.f32.mrb[0].mxu0
  %v5275 = vadd.f32 0.0, %v5274
  %v5276 = vpop.f32.mrb[0].mxu0
  %5277 = vmatprep.mubr.f32.mxu0 0.0
  %5278 = vmatmul.mubr.f32.gmra.mrb[0].mxu0 %v5183
  %v5279 = vpop.f32.mrb[0].mxu0
  %v5280 = vadd.f32 0.0, %v5279
  %v5281 = vpop.f32.mrb[0].mxu0
  %5282 = vmatprep.mubr.f32.mxu0 0.0
  %5283 = vmatmul.mubr.f32.gmra.mrb[0].mxu0 %v5186
  %v5284 = vpop.f32.mrb[0].mxu0
  %v5285 = vadd.f32 0.0, %v5284
  %v5286 = vpop.f32.mrb[0].mxu0
  %5287 = vdwg.mxu0
  %v5288 = vadd.f32 %v4900, %v5255
  %v5289 = vadd.f32 %v4901, %v5260
  %v5290 = vadd.f32 %v4902, %v5265
  %v5291 = vadd.f32 %v4903, %v5270
  %v5292 = vadd.f32 %v4904, %v5275
  %v5293 = vadd.f32 %v4905, %v5280
  %v5294 = vadd.f32 %v4906, %v5285
  %s5295 = scalar_lea.vmem %s4, 924
  %v5296 = vld [vmem:[%s5295] sm:$0xff]
  %v5297 = vld [vmem:[%s5295 + $0x8] sm:$0xf]
  %v5298 = vld [vmem:[%s5295 + $0xc] sm:$0xff]
  %v5299 = vld [vmem:[%s5295 + $0x14] sm:$0xf]
  %v5300 = vld [vmem:[%s5295 + $0x18] sm:$0xff]
  %v5301 = vld [vmem:[%s5295 + $0x20] sm:$0xf]
  %v5302 = vld [vmem:[%s5295 + $0x24] sm:$0xff]
  %v5303 = vld [vmem:[%s5295 + $0x2c] sm:$0xf]
  %v5304 = vld [vmem:[%s5295 + $0x30] sm:$0xff]
  %v5305 = vld [vmem:[%s5295 + $0x38] sm:$0xf]
  %v5306 = vld [vmem:[%s5295 + $0x3c] sm:$0xff]
  %v5307 = vld [vmem:[%s5295 + $0x44] sm:$0xf]
  %v5308 = vld [vmem:[%s5295 + $0x48] sm:$0xff]
  %v5309 = vld [vmem:[%s5295 + $0x50] sm:$0xf]
  %v5310 = vunpack.c.l.bf16 %v5296
  %v5311 = vunpack.c.h.bf16 %v5296
  %v5312 = vunpack.c.l.bf16 %v5297
  %v5313 = vunpack.c.l.bf16 %v5298
  %v5314 = vunpack.c.h.bf16 %v5298
  %v5315 = vunpack.c.l.bf16 %v5299
  %v5316 = vunpack.c.l.bf16 %v5300
  %v5317 = vunpack.c.h.bf16 %v5300
  %v5318 = vunpack.c.l.bf16 %v5301
  %v5319 = vunpack.c.l.bf16 %v5302
  %v5320 = vunpack.c.h.bf16 %v5302
  %v5321 = vunpack.c.l.bf16 %v5303
  %v5322 = vunpack.c.l.bf16 %v5304
  %v5323 = vunpack.c.h.bf16 %v5304
  %v5324 = vunpack.c.l.bf16 %v5305
  %v5325 = vunpack.c.l.bf16 %v5306
  %v5326 = vunpack.c.h.bf16 %v5306
  %v5327 = vunpack.c.l.bf16 %v5307
  %v5328 = vunpack.c.l.bf16 %v5308
  %v5329 = vunpack.c.h.bf16 %v5308
  %v5330 = vunpack.c.l.bf16 %v5309
  %v5332 = vsel %vm1077, %v5312, 0
  %v5335 = vsel %vm1077, %v5315, 0
  %v5338 = vsel %vm1077, %v5318, 0
  %v5341 = vsel %vm1077, %v5321, 0
  %v5344 = vsel %vm1077, %v5324, 0
  %v5347 = vsel %vm1077, %v5327, 0
  %v5350 = vsel %vm1077, %v5330, 0
  %5352 = vmatprep.subr.mxu0 0.0
  %5353 = vmatpush1.msra.mxu0 %v999
  %5354 = vmatprep.subr.mxu0 0.0
  %5355 = vmatpush1.msra.mxu0 %v1000
  %5356 = vmatprep.subr.mxu0 0.0
  %5357 = vmatpush1.msra.mxu0 %v1001
  %5358 = vmatprep.subr.mxu0 0.0
  %5359 = vmatpush1.msra.mxu0 %v1002
  %5360 = vmatprep.subr.mxu0 0.0
  %5361 = vmatpush1.msra.mxu0 %v1003
  %5362 = vmatprep.subr.mxu0 0.0
  %5363 = vmatpush1.msra.mxu0 %v1004
  %5364 = vmatprep.subr.mxu0 0.0
  %5365 = vmatpush1.msra.mxu0 %v1005
  %5366 = vmatprep.subr.mxu0 0.0
  %5367 = vmatpush1.msra.mxu0 %v1006
  %5368 = vmatprep.subr.mxu0 0.0
  %5369 = vmatpush1.msra.mxu0 %v1007
  %5370 = vmatprep.subr.mxu0 0.0
  %5371 = vmatpush1.msra.mxu0 %v1008
  %5372 = vmatprep.subr.mxu0 0.0
  %5373 = vmatpush1.msra.mxu0 %v1009
  %5374 = vmatprep.subr.mxu0 0.0
  %5375 = vmatpush1.msra.mxu0 %v1010
  %5376 = vmatprep.subr.mxu0 0.0
  %5377 = vmatpush1.msra.mxu0 %v1011
  %5378 = vmatprep.subr.mxu0 0.0
  %5379 = vmatpush1.msra.mxu0 %v1012
  %5380 = vmatprep.subr.mxu0 0.0
  %5381 = vmatpush1.msra.mxu0 %v1013
  %5382 = vmatprep.subr.mxu0 0.0
  %5383 = vmatpush1.msra.mxu0 %v1014
  %5384 = vmatprep.subr.mxu0 0.0
  %5385 = vmatpush1.msra.mxu0 %v1015
  %5386 = vmatprep.subr.mxu0 0.0
  %5387 = vmatpush1.msra.mxu0 %v1016
  %5388 = vmatprep.subr.mxu0 0.0
  %5389 = vmatpush1.msra.mxu0 %v1017
  %5390 = vmatprep.subr.mxu0 0.0
  %5391 = vmatpush1.msra.mxu0 %v1018
  %5392 = vmatprep.subr.mxu0 0.0
  %5393 = vmatpush1.msra.mxu0 %v1019
  %5394 = vmatprep.subr.mxu0 0.0
  %5395 = vmatpush1.msra.mxu0 %v1020
  %5396 = vmatprep.subr.mxu0 0.0
  %5397 = vmatpush1.msra.mxu0 %v1021
  %5398 = vmatprep.subr.mxu0 0.0
  %5399 = vmatpush1.msra.mxu0 %v1022
  %5400 = vmatprep.subr.mxu0 0.0
  %5401 = vmatpush1.msra.mxu0 %v1023
  %5402 = vmatprep.subr.mxu0 0.0
  %5403 = vmatpush1.msra.mxu0 %v1024
  %5404 = vmatprep.subr.mxu0 0.0
  %5405 = vmatpush1.msra.mxu0 %v1025
  %5406 = vmatprep.subr.mxu0 0.0
  %5407 = vmatpush1.msra.mxu0 %v1026
  %5408 = vmatprep.subr.mxu0 0.0
  %5409 = vmatpush1.msra.mxu0 %v1027
  %5410 = vmatprep.subr.mxu0 0.0
  %5411 = vmatpush1.msra.mxu0 %v1028
  %5412 = vmatprep.subr.mxu0 0.0
  %5413 = vmatpush1.msra.mxu0 %v1029
  %5414 = vmatprep.subr.mxu0 0.0
  %5415 = vmatpush1.msra.mxu0 %v1030
  %5416 = vmatprep.mubr.f32.mxu0 %v5311
  %5417 = vmatmul.mubr.f32.gmra.mrb[0].mxu0 %v5310
  %v5418 = vpop.f32.mrb[0].mxu0
  %v5419 = vadd.f32 0.0, %v5418
  %v5420 = vpop.f32.mrb[0].mxu0
  %5421 = vmatprep.mubr.f32.mxu0 %v5314
  %5422 = vmatmul.mubr.f32.gmra.mrb[0].mxu0 %v5313
  %v5423 = vpop.f32.mrb[0].mxu0
  %v5424 = vadd.f32 0.0, %v5423
  %v5425 = vpop.f32.mrb[0].mxu0
  %5426 = vmatprep.mubr.f32.mxu0 %v5317
  %5427 = vmatmul.mubr.f32.gmra.mrb[0].mxu0 %v5316
  %v5428 = vpop.f32.mrb[0].mxu0
  %v5429 = vadd.f32 0.0, %v5428
  %v5430 = vpop.f32.mrb[0].mxu0
  %5431 = vmatprep.mubr.f32.mxu0 %v5320
  %5432 = vmatmul.mubr.f32.gmra.mrb[0].mxu0 %v5319
  %v5433 = vpop.f32.mrb[0].mxu0
  %v5434 = vadd.f32 0.0, %v5433
  %v5435 = vpop.f32.mrb[0].mxu0
  %5436 = vmatprep.mubr.f32.mxu0 %v5323
  %5437 = vmatmul.mubr.f32.gmra.mrb[0].mxu0 %v5322
  %v5438 = vpop.f32.mrb[0].mxu0
  %v5439 = vadd.f32 0.0, %v5438
  %v5440 = vpop.f32.mrb[0].mxu0
  %5441 = vmatprep.mubr.f32.mxu0 %v5326
  %5442 = vmatmul.mubr.f32.gmra.mrb[0].mxu0 %v5325
  %v5443 = vpop.f32.mrb[0].mxu0
  %v5444 = vadd.f32 0.0, %v5443
  %v5445 = vpop.f32.mrb[0].mxu0
  %5446 = vmatprep.mubr.f32.mxu0 %v5329
  %5447 = vmatmul.mubr.f32.gmra.mrb[0].mxu0 %v5328
  %v5448 = vpop.f32.mrb[0].mxu0
  %v5449 = vadd.f32 0.0, %v5448
  %v5450 = vpop.f32.mrb[0].mxu0
  %5451 = vdwg.mxu0
  %5452 = vmatprep.subr.mxu0 0.0
  %5453 = vmatpush1.msra.mxu0 %v1031
  %5454 = vmatprep.subr.mxu0 0.0
  %5455 = vmatpush1.msra.mxu0 %v1032
  %5456 = vmatprep.subr.mxu0 0.0
  %5457 = vmatpush1.msra.mxu0 %v1033
  %5458 = vmatprep.subr.mxu0 0.0
  %5459 = vmatpush1.msra.mxu0 %v1034
  %5460 = vmatprep.subr.mxu0 0.0
  %5461 = vmatpush1.msra.mxu0 %v1035
  %5462 = vmatprep.subr.mxu0 0.0
  %5463 = vmatpush1.msra.mxu0 %v1036
  %5464 = vmatprep.subr.mxu0 0.0
  %5465 = vmatpush1.msra.mxu0 %v1037
  %5466 = vmatprep.subr.mxu0 0.0
  %5467 = vmatpush1.msra.mxu0 %v1038
  %5468 = vmatprep.subr.mxu0 0.0
  %5469 = vmatpush1.msra.mxu0 %v1039
  %5470 = vmatprep.subr.mxu0 0.0
  %5471 = vmatpush1.msra.mxu0 %v1040
  %5472 = vmatprep.subr.mxu0 0.0
  %5473 = vmatpush1.msra.mxu0 %v1041
  %5474 = vmatprep.subr.mxu0 0.0
  %5475 = vmatpush1.msra.mxu0 0.0
  %5476 = vmatprep.subr.mxu0 0.0
  %5477 = vmatpush1.msra.mxu0 0.0
  %5478 = vmatprep.subr.mxu0 0.0
  %5479 = vmatpush1.msra.mxu0 0.0
  %5480 = vmatprep.subr.mxu0 0.0
  %5481 = vmatpush1.msra.mxu0 0.0
  %5482 = vmatprep.subr.mxu0 0.0
  %5483 = vmatpush1.msra.mxu0 0.0
  %5484 = vmatprep.subr.mxu0 0.0
  %5485 = vmatpush1.msra.mxu0 0.0
  %5486 = vmatprep.subr.mxu0 0.0
  %5487 = vmatpush1.msra.mxu0 0.0
  %5488 = vmatprep.subr.mxu0 0.0
  %5489 = vmatpush1.msra.mxu0 0.0
  %5490 = vmatprep.subr.mxu0 0.0
  %5491 = vmatpush1.msra.mxu0 0.0
  %5492 = vmatprep.subr.mxu0 0.0
  %5493 = vmatpush1.msra.mxu0 0.0
  %5494 = vmatprep.subr.mxu0 0.0
  %5495 = vmatpush1.msra.mxu0 0.0
  %5496 = vmatprep.subr.mxu0 0.0
  %5497 = vmatpush1.msra.mxu0 0.0
  %5498 = vmatprep.subr.mxu0 0.0
  %5499 = vmatpush1.msra.mxu0 0.0
  %5500 = vmatprep.subr.mxu0 0.0
  %5501 = vmatpush1.msra.mxu0 0.0
  %5502 = vmatprep.subr.mxu0 0.0
  %5503 = vmatpush1.msra.mxu0 0.0
  %5504 = vmatprep.subr.mxu0 0.0
  %5505 = vmatpush1.msra.mxu0 0.0
  %5506 = vmatprep.subr.mxu0 0.0
  %5507 = vmatpush1.msra.mxu0 0.0
  %5508 = vmatprep.subr.mxu0 0.0
  %5509 = vmatpush1.msra.mxu0 0.0
  %5510 = vmatprep.subr.mxu0 0.0
  %5511 = vmatpush1.msra.mxu0 0.0
  %5512 = vmatprep.subr.mxu0 0.0
  %5513 = vmatpush1.msra.mxu0 0.0
  %5514 = vmatprep.subr.mxu0 0.0
  %5515 = vmatpush1.msra.mxu0 0.0
  %5516 = vmatprep.mubr.f32.mxu0 0.0
  %5517 = vmatmul.mubr.f32.gmra.mrb[0].mxu0 %v5332
  %v5518 = vpop.f32.mrb[0].mxu0
  %v5519 = vadd.f32 %v5419, %v5518
  %v5520 = vpop.f32.mrb[0].mxu0
  %5521 = vmatprep.mubr.f32.mxu0 0.0
  %5522 = vmatmul.mubr.f32.gmra.mrb[0].mxu0 %v5335
  %v5523 = vpop.f32.mrb[0].mxu0
  %v5524 = vadd.f32 %v5424, %v5523
  %v5525 = vpop.f32.mrb[0].mxu0
  %5526 = vmatprep.mubr.f32.mxu0 0.0
  %5527 = vmatmul.mubr.f32.gmra.mrb[0].mxu0 %v5338
  %v5528 = vpop.f32.mrb[0].mxu0
  %v5529 = vadd.f32 %v5429, %v5528
  %v5530 = vpop.f32.mrb[0].mxu0
  %5531 = vmatprep.mubr.f32.mxu0 0.0
  %5532 = vmatmul.mubr.f32.gmra.mrb[0].mxu0 %v5341
  %v5533 = vpop.f32.mrb[0].mxu0
  %v5534 = vadd.f32 %v5434, %v5533
  %v5535 = vpop.f32.mrb[0].mxu0
  %5536 = vmatprep.mubr.f32.mxu0 0.0
  %5537 = vmatmul.mubr.f32.gmra.mrb[0].mxu0 %v5344
  %v5538 = vpop.f32.mrb[0].mxu0
  %v5539 = vadd.f32 %v5439, %v5538
  %v5540 = vpop.f32.mrb[0].mxu0
  %5541 = vmatprep.mubr.f32.mxu0 0.0
  %5542 = vmatmul.mubr.f32.gmra.mrb[0].mxu0 %v5347
  %v5543 = vpop.f32.mrb[0].mxu0
  %v5544 = vadd.f32 %v5444, %v5543
  %v5545 = vpop.f32.mrb[0].mxu0
  %5546 = vmatprep.mubr.f32.mxu0 0.0
  %5547 = vmatmul.mubr.f32.gmra.mrb[0].mxu0 %v5350
  %v5548 = vpop.f32.mrb[0].mxu0
  %v5549 = vadd.f32 %v5449, %v5548
  %v5550 = vpop.f32.mrb[0].mxu0
  %5551 = vdwg.mxu0
  %s5552 = scalar_lea.vmem %s5, 176
  %v5553 = vld [vmem:[%s5552] sm:$0xff]
  %v5554 = vld [vmem:[%s5552 + $0x8] sm:$0xff]
  %v5556 = vsel %vm85, %v5519, 0
  %v5559 = vsel %vm85, %v5524, 0
  %v5562 = vsel %vm85, %v5529, 0
  %v5565 = vsel %vm85, %v5534, 0
  %v5568 = vsel %vm85, %v5539, 0
  %v5571 = vsel %vm85, %v5544, 0
  %v5574 = vsel %vm85, %v5549, 0
  %5576 = vmatprep.subr.mxu0 0.0
  %5577 = vmatpush1.msra.mxu0 %v5553
  %5578 = vmatprep.subr.mxu0 0.0
  %5579 = vmatpush1.msra.mxu0 %v5554
  %5580 = vmatprep.subr.mxu0 0.0
  %5581 = vmatpush1.msra.mxu0 0.0
  %5582 = vmatprep.subr.mxu0 0.0
  %5583 = vmatpush1.msra.mxu0 0.0
  %5584 = vmatprep.subr.mxu0 0.0
  %5585 = vmatpush1.msra.mxu0 0.0
  %5586 = vmatprep.subr.mxu0 0.0
  %5587 = vmatpush1.msra.mxu0 0.0
  %5588 = vmatprep.subr.mxu0 0.0
  %5589 = vmatpush1.msra.mxu0 0.0
  %5590 = vmatprep.subr.mxu0 0.0
  %5591 = vmatpush1.msra.mxu0 0.0
  %5592 = vmatprep.subr.mxu0 0.0
  %5593 = vmatpush1.msra.mxu0 0.0
  %5594 = vmatprep.subr.mxu0 0.0
  %5595 = vmatpush1.msra.mxu0 0.0
  %5596 = vmatprep.subr.mxu0 0.0
  %5597 = vmatpush1.msra.mxu0 0.0
  %5598 = vmatprep.subr.mxu0 0.0
  %5599 = vmatpush1.msra.mxu0 0.0
  %5600 = vmatprep.subr.mxu0 0.0
  %5601 = vmatpush1.msra.mxu0 0.0
  %5602 = vmatprep.subr.mxu0 0.0
  %5603 = vmatpush1.msra.mxu0 0.0
  %5604 = vmatprep.subr.mxu0 0.0
  %5605 = vmatpush1.msra.mxu0 0.0
  %5606 = vmatprep.subr.mxu0 0.0
  %5607 = vmatpush1.msra.mxu0 0.0
  %5608 = vmatprep.subr.mxu0 0.0
  %5609 = vmatpush1.msra.mxu0 0.0
  %5610 = vmatprep.subr.mxu0 0.0
  %5611 = vmatpush1.msra.mxu0 0.0
  %5612 = vmatprep.subr.mxu0 0.0
  %5613 = vmatpush1.msra.mxu0 0.0
  %5614 = vmatprep.subr.mxu0 0.0
  %5615 = vmatpush1.msra.mxu0 0.0
  %5616 = vmatprep.subr.mxu0 0.0
  %5617 = vmatpush1.msra.mxu0 0.0
  %5618 = vmatprep.subr.mxu0 0.0
  %5619 = vmatpush1.msra.mxu0 0.0
  %5620 = vmatprep.subr.mxu0 0.0
  %5621 = vmatpush1.msra.mxu0 0.0
  %5622 = vmatprep.subr.mxu0 0.0
  %5623 = vmatpush1.msra.mxu0 0.0
  %5624 = vmatprep.subr.mxu0 0.0
  %5625 = vmatpush1.msra.mxu0 0.0
  %5626 = vmatprep.subr.mxu0 0.0
  %5627 = vmatpush1.msra.mxu0 0.0
  %5628 = vmatprep.subr.mxu0 0.0
  %5629 = vmatpush1.msra.mxu0 0.0
  %5630 = vmatprep.subr.mxu0 0.0
  %5631 = vmatpush1.msra.mxu0 0.0
  %5632 = vmatprep.subr.mxu0 0.0
  %5633 = vmatpush1.msra.mxu0 0.0
  %5634 = vmatprep.subr.mxu0 0.0
  %5635 = vmatpush1.msra.mxu0 0.0
  %5636 = vmatprep.subr.mxu0 0.0
  %5637 = vmatpush1.msra.mxu0 0.0
  %5638 = vmatprep.subr.mxu0 0.0
  %5639 = vmatpush1.msra.mxu0 0.0
  %5640 = vmatprep.mubr.f32.mxu0 0.0
  %5641 = vmatmul.mubr.f32.gmra.mrb[0].mxu0 %v5556
  %v5642 = vpop.f32.mrb[0].mxu0
  %v5643 = vadd.f32 0.0, %v5642
  %v5644 = vpop.f32.mrb[0].mxu0
  %5645 = vmatprep.mubr.f32.mxu0 0.0
  %5646 = vmatmul.mubr.f32.gmra.mrb[0].mxu0 %v5559
  %v5647 = vpop.f32.mrb[0].mxu0
  %v5648 = vadd.f32 0.0, %v5647
  %v5649 = vpop.f32.mrb[0].mxu0
  %5650 = vmatprep.mubr.f32.mxu0 0.0
  %5651 = vmatmul.mubr.f32.gmra.mrb[0].mxu0 %v5562
  %v5652 = vpop.f32.mrb[0].mxu0
  %v5653 = vadd.f32 0.0, %v5652
  %v5654 = vpop.f32.mrb[0].mxu0
  %5655 = vmatprep.mubr.f32.mxu0 0.0
  %5656 = vmatmul.mubr.f32.gmra.mrb[0].mxu0 %v5565
  %v5657 = vpop.f32.mrb[0].mxu0
  %v5658 = vadd.f32 0.0, %v5657
  %v5659 = vpop.f32.mrb[0].mxu0
  %5660 = vmatprep.mubr.f32.mxu0 0.0
  %5661 = vmatmul.mubr.f32.gmra.mrb[0].mxu0 %v5568
  %v5662 = vpop.f32.mrb[0].mxu0
  %v5663 = vadd.f32 0.0, %v5662
  %v5664 = vpop.f32.mrb[0].mxu0
  %5665 = vmatprep.mubr.f32.mxu0 0.0
  %5666 = vmatmul.mubr.f32.gmra.mrb[0].mxu0 %v5571
  %v5667 = vpop.f32.mrb[0].mxu0
  %v5668 = vadd.f32 0.0, %v5667
  %v5669 = vpop.f32.mrb[0].mxu0
  %5670 = vmatprep.mubr.f32.mxu0 0.0
  %5671 = vmatmul.mubr.f32.gmra.mrb[0].mxu0 %v5574
  %v5672 = vpop.f32.mrb[0].mxu0
  %v5673 = vadd.f32 0.0, %v5672
  %v5674 = vpop.f32.mrb[0].mxu0
  %5675 = vdwg.mxu0
  %v5676 = vadd.f32 %v5288, %v5643
  %v5677 = vadd.f32 %v5289, %v5648
  %v5678 = vadd.f32 %v5290, %v5653
  %v5679 = vadd.f32 %v5291, %v5658
  %v5680 = vadd.f32 %v5292, %v5663
  %v5681 = vadd.f32 %v5293, %v5668
  %v5682 = vadd.f32 %v5294, %v5673
  %s5683 = scalar_lea.vmem %s4, 1008
  %v5684 = vld [vmem:[%s5683] sm:$0xff]
  %v5685 = vld [vmem:[%s5683 + $0x8] sm:$0xf]
  %v5686 = vld [vmem:[%s5683 + $0xc] sm:$0xff]
  %v5687 = vld [vmem:[%s5683 + $0x14] sm:$0xf]
  %v5688 = vld [vmem:[%s5683 + $0x18] sm:$0xff]
  %v5689 = vld [vmem:[%s5683 + $0x20] sm:$0xf]
  %v5690 = vld [vmem:[%s5683 + $0x24] sm:$0xff]
  %v5691 = vld [vmem:[%s5683 + $0x2c] sm:$0xf]
  %v5692 = vld [vmem:[%s5683 + $0x30] sm:$0xff]
  %v5693 = vld [vmem:[%s5683 + $0x38] sm:$0xf]
  %v5694 = vld [vmem:[%s5683 + $0x3c] sm:$0xff]
  %v5695 = vld [vmem:[%s5683 + $0x44] sm:$0xf]
  %v5696 = vld [vmem:[%s5683 + $0x48] sm:$0xff]
  %v5697 = vld [vmem:[%s5683 + $0x50] sm:$0xf]
  %v5698 = vunpack.c.l.bf16 %v5684
  %v5699 = vunpack.c.h.bf16 %v5684
  %v5700 = vunpack.c.l.bf16 %v5685
  %v5701 = vunpack.c.l.bf16 %v5686
  %v5702 = vunpack.c.h.bf16 %v5686
  %v5703 = vunpack.c.l.bf16 %v5687
  %v5704 = vunpack.c.l.bf16 %v5688
  %v5705 = vunpack.c.h.bf16 %v5688
  %v5706 = vunpack.c.l.bf16 %v5689
  %v5707 = vunpack.c.l.bf16 %v5690
  %v5708 = vunpack.c.h.bf16 %v5690
  %v5709 = vunpack.c.l.bf16 %v5691
  %v5710 = vunpack.c.l.bf16 %v5692
  %v5711 = vunpack.c.h.bf16 %v5692
  %v5712 = vunpack.c.l.bf16 %v5693
  %v5713 = vunpack.c.l.bf16 %v5694
  %v5714 = vunpack.c.h.bf16 %v5694
  %v5715 = vunpack.c.l.bf16 %v5695
  %v5716 = vunpack.c.l.bf16 %v5696
  %v5717 = vunpack.c.h.bf16 %v5696
  %v5718 = vunpack.c.l.bf16 %v5697
  %v5720 = vsel %vm1077, %v5700, 0
  %v5723 = vsel %vm1077, %v5703, 0
  %v5726 = vsel %vm1077, %v5706, 0
  %v5729 = vsel %vm1077, %v5709, 0
  %v5732 = vsel %vm1077, %v5712, 0
  %v5735 = vsel %vm1077, %v5715, 0
  %v5738 = vsel %vm1077, %v5718, 0
  %5740 = vmatprep.subr.mxu0 0.0
  %5741 = vmatpush1.msra.mxu0 %v999
  %5742 = vmatprep.subr.mxu0 0.0
  %5743 = vmatpush1.msra.mxu0 %v1000
  %5744 = vmatprep.subr.mxu0 0.0
  %5745 = vmatpush1.msra.mxu0 %v1001
  %5746 = vmatprep.subr.mxu0 0.0
  %5747 = vmatpush1.msra.mxu0 %v1002
  %5748 = vmatprep.subr.mxu0 0.0
  %5749 = vmatpush1.msra.mxu0 %v1003
  %5750 = vmatprep.subr.mxu0 0.0
  %5751 = vmatpush1.msra.mxu0 %v1004
  %5752 = vmatprep.subr.mxu0 0.0
  %5753 = vmatpush1.msra.mxu0 %v1005
  %5754 = vmatprep.subr.mxu0 0.0
  %5755 = vmatpush1.msra.mxu0 %v1006
  %5756 = vmatprep.subr.mxu0 0.0
  %5757 = vmatpush1.msra.mxu0 %v1007
  %5758 = vmatprep.subr.mxu0 0.0
  %5759 = vmatpush1.msra.mxu0 %v1008
  %5760 = vmatprep.subr.mxu0 0.0
  %5761 = vmatpush1.msra.mxu0 %v1009
  %5762 = vmatprep.subr.mxu0 0.0
  %5763 = vmatpush1.msra.mxu0 %v1010
  %5764 = vmatprep.subr.mxu0 0.0
  %5765 = vmatpush1.msra.mxu0 %v1011
  %5766 = vmatprep.subr.mxu0 0.0
  %5767 = vmatpush1.msra.mxu0 %v1012
  %5768 = vmatprep.subr.mxu0 0.0
  %5769 = vmatpush1.msra.mxu0 %v1013
  %5770 = vmatprep.subr.mxu0 0.0
  %5771 = vmatpush1.msra.mxu0 %v1014
  %5772 = vmatprep.subr.mxu0 0.0
  %5773 = vmatpush1.msra.mxu0 %v1015
  %5774 = vmatprep.subr.mxu0 0.0
  %5775 = vmatpush1.msra.mxu0 %v1016
  %5776 = vmatprep.subr.mxu0 0.0
  %5777 = vmatpush1.msra.mxu0 %v1017
  %5778 = vmatprep.subr.mxu0 0.0
  %5779 = vmatpush1.msra.mxu0 %v1018
  %5780 = vmatprep.subr.mxu0 0.0
  %5781 = vmatpush1.msra.mxu0 %v1019
  %5782 = vmatprep.subr.mxu0 0.0
  %5783 = vmatpush1.msra.mxu0 %v1020
  %5784 = vmatprep.subr.mxu0 0.0
  %5785 = vmatpush1.msra.mxu0 %v1021
  %5786 = vmatprep.subr.mxu0 0.0
  %5787 = vmatpush1.msra.mxu0 %v1022
  %5788 = vmatprep.subr.mxu0 0.0
  %5789 = vmatpush1.msra.mxu0 %v1023
  %5790 = vmatprep.subr.mxu0 0.0
  %5791 = vmatpush1.msra.mxu0 %v1024
  %5792 = vmatprep.subr.mxu0 0.0
  %5793 = vmatpush1.msra.mxu0 %v1025
  %5794 = vmatprep.subr.mxu0 0.0
  %5795 = vmatpush1.msra.mxu0 %v1026
  %5796 = vmatprep.subr.mxu0 0.0
  %5797 = vmatpush1.msra.mxu0 %v1027
  %5798 = vmatprep.subr.mxu0 0.0
  %5799 = vmatpush1.msra.mxu0 %v1028
  %5800 = vmatprep.subr.mxu0 0.0
  %5801 = vmatpush1.msra.mxu0 %v1029
  %5802 = vmatprep.subr.mxu0 0.0
  %5803 = vmatpush1.msra.mxu0 %v1030
  %5804 = vmatprep.mubr.f32.mxu0 %v5699
  %5805 = vmatmul.mubr.f32.gmra.mrb[0].mxu0 %v5698
  %v5806 = vpop.f32.mrb[0].mxu0
  %v5807 = vadd.f32 0.0, %v5806
  %v5808 = vpop.f32.mrb[0].mxu0
  %5809 = vmatprep.mubr.f32.mxu0 %v5702
  %5810 = vmatmul.mubr.f32.gmra.mrb[0].mxu0 %v5701
  %v5811 = vpop.f32.mrb[0].mxu0
  %v5812 = vadd.f32 0.0, %v5811
  %v5813 = vpop.f32.mrb[0].mxu0
  %5814 = vmatprep.mubr.f32.mxu0 %v5705
  %5815 = vmatmul.mubr.f32.gmra.mrb[0].mxu0 %v5704
  %v5816 = vpop.f32.mrb[0].mxu0
  %v5817 = vadd.f32 0.0, %v5816
  %v5818 = vpop.f32.mrb[0].mxu0
  %5819 = vmatprep.mubr.f32.mxu0 %v5708
  %5820 = vmatmul.mubr.f32.gmra.mrb[0].mxu0 %v5707
  %v5821 = vpop.f32.mrb[0].mxu0
  %v5822 = vadd.f32 0.0, %v5821
  %v5823 = vpop.f32.mrb[0].mxu0
  %5824 = vmatprep.mubr.f32.mxu0 %v5711
  %5825 = vmatmul.mubr.f32.gmra.mrb[0].mxu0 %v5710
  %v5826 = vpop.f32.mrb[0].mxu0
  %v5827 = vadd.f32 0.0, %v5826
  %v5828 = vpop.f32.mrb[0].mxu0
  %5829 = vmatprep.mubr.f32.mxu0 %v5714
  %5830 = vmatmul.mubr.f32.gmra.mrb[0].mxu0 %v5713
  %v5831 = vpop.f32.mrb[0].mxu0
  %v5832 = vadd.f32 0.0, %v5831
  %v5833 = vpop.f32.mrb[0].mxu0
  %5834 = vmatprep.mubr.f32.mxu0 %v5717
  %5835 = vmatmul.mubr.f32.gmra.mrb[0].mxu0 %v5716
  %v5836 = vpop.f32.mrb[0].mxu0
  %v5837 = vadd.f32 0.0, %v5836
  %v5838 = vpop.f32.mrb[0].mxu0
  %5839 = vdwg.mxu0
  %5840 = vmatprep.subr.mxu0 0.0
  %5841 = vmatpush1.msra.mxu0 %v1031
  %5842 = vmatprep.subr.mxu0 0.0
  %5843 = vmatpush1.msra.mxu0 %v1032
  %5844 = vmatprep.subr.mxu0 0.0
  %5845 = vmatpush1.msra.mxu0 %v1033
  %5846 = vmatprep.subr.mxu0 0.0
  %5847 = vmatpush1.msra.mxu0 %v1034
  %5848 = vmatprep.subr.mxu0 0.0
  %5849 = vmatpush1.msra.mxu0 %v1035
  %5850 = vmatprep.subr.mxu0 0.0
  %5851 = vmatpush1.msra.mxu0 %v1036
  %5852 = vmatprep.subr.mxu0 0.0
  %5853 = vmatpush1.msra.mxu0 %v1037
  %5854 = vmatprep.subr.mxu0 0.0
  %5855 = vmatpush1.msra.mxu0 %v1038
  %5856 = vmatprep.subr.mxu0 0.0
  %5857 = vmatpush1.msra.mxu0 %v1039
  %5858 = vmatprep.subr.mxu0 0.0
  %5859 = vmatpush1.msra.mxu0 %v1040
  %5860 = vmatprep.subr.mxu0 0.0
  %5861 = vmatpush1.msra.mxu0 %v1041
  %5862 = vmatprep.subr.mxu0 0.0
  %5863 = vmatpush1.msra.mxu0 0.0
  %5864 = vmatprep.subr.mxu0 0.0
  %5865 = vmatpush1.msra.mxu0 0.0
  %5866 = vmatprep.subr.mxu0 0.0
  %5867 = vmatpush1.msra.mxu0 0.0
  %5868 = vmatprep.subr.mxu0 0.0
  %5869 = vmatpush1.msra.mxu0 0.0
  %5870 = vmatprep.subr.mxu0 0.0
  %5871 = vmatpush1.msra.mxu0 0.0
  %5872 = vmatprep.subr.mxu0 0.0
  %5873 = vmatpush1.msra.mxu0 0.0
  %5874 = vmatprep.subr.mxu0 0.0
  %5875 = vmatpush1.msra.mxu0 0.0
  %5876 = vmatprep.subr.mxu0 0.0
  %5877 = vmatpush1.msra.mxu0 0.0
  %5878 = vmatprep.subr.mxu0 0.0
  %5879 = vmatpush1.msra.mxu0 0.0
  %5880 = vmatprep.subr.mxu0 0.0
  %5881 = vmatpush1.msra.mxu0 0.0
  %5882 = vmatprep.subr.mxu0 0.0
  %5883 = vmatpush1.msra.mxu0 0.0
  %5884 = vmatprep.subr.mxu0 0.0
  %5885 = vmatpush1.msra.mxu0 0.0
  %5886 = vmatprep.subr.mxu0 0.0
  %5887 = vmatpush1.msra.mxu0 0.0
  %5888 = vmatprep.subr.mxu0 0.0
  %5889 = vmatpush1.msra.mxu0 0.0
  %5890 = vmatprep.subr.mxu0 0.0
  %5891 = vmatpush1.msra.mxu0 0.0
  %5892 = vmatprep.subr.mxu0 0.0
  %5893 = vmatpush1.msra.mxu0 0.0
  %5894 = vmatprep.subr.mxu0 0.0
  %5895 = vmatpush1.msra.mxu0 0.0
  %5896 = vmatprep.subr.mxu0 0.0
  %5897 = vmatpush1.msra.mxu0 0.0
  %5898 = vmatprep.subr.mxu0 0.0
  %5899 = vmatpush1.msra.mxu0 0.0
  %5900 = vmatprep.subr.mxu0 0.0
  %5901 = vmatpush1.msra.mxu0 0.0
  %5902 = vmatprep.subr.mxu0 0.0
  %5903 = vmatpush1.msra.mxu0 0.0
  %5904 = vmatprep.mubr.f32.mxu0 0.0
  %5905 = vmatmul.mubr.f32.gmra.mrb[0].mxu0 %v5720
  %v5906 = vpop.f32.mrb[0].mxu0
  %v5907 = vadd.f32 %v5807, %v5906
  %v5908 = vpop.f32.mrb[0].mxu0
  %5909 = vmatprep.mubr.f32.mxu0 0.0
  %5910 = vmatmul.mubr.f32.gmra.mrb[0].mxu0 %v5723
  %v5911 = vpop.f32.mrb[0].mxu0
  %v5912 = vadd.f32 %v5812, %v5911
  %v5913 = vpop.f32.mrb[0].mxu0
  %5914 = vmatprep.mubr.f32.mxu0 0.0
  %5915 = vmatmul.mubr.f32.gmra.mrb[0].mxu0 %v5726
  %v5916 = vpop.f32.mrb[0].mxu0
  %v5917 = vadd.f32 %v5817, %v5916
  %v5918 = vpop.f32.mrb[0].mxu0
  %5919 = vmatprep.mubr.f32.mxu0 0.0
  %5920 = vmatmul.mubr.f32.gmra.mrb[0].mxu0 %v5729
  %v5921 = vpop.f32.mrb[0].mxu0
  %v5922 = vadd.f32 %v5822, %v5921
  %v5923 = vpop.f32.mrb[0].mxu0
  %5924 = vmatprep.mubr.f32.mxu0 0.0
  %5925 = vmatmul.mubr.f32.gmra.mrb[0].mxu0 %v5732
  %v5926 = vpop.f32.mrb[0].mxu0
  %v5927 = vadd.f32 %v5827, %v5926
  %v5928 = vpop.f32.mrb[0].mxu0
  %5929 = vmatprep.mubr.f32.mxu0 0.0
  %5930 = vmatmul.mubr.f32.gmra.mrb[0].mxu0 %v5735
  %v5931 = vpop.f32.mrb[0].mxu0
  %v5932 = vadd.f32 %v5832, %v5931
  %v5933 = vpop.f32.mrb[0].mxu0
  %5934 = vmatprep.mubr.f32.mxu0 0.0
  %5935 = vmatmul.mubr.f32.gmra.mrb[0].mxu0 %v5738
  %v5936 = vpop.f32.mrb[0].mxu0
  %v5937 = vadd.f32 %v5837, %v5936
  %v5938 = vpop.f32.mrb[0].mxu0
  %5939 = vdwg.mxu0
  %s5940 = scalar_lea.vmem %s5, 192
  %v5941 = vld [vmem:[%s5940] sm:$0xff]
  %v5942 = vld [vmem:[%s5940 + $0x8] sm:$0xff]
  %v5944 = vsel %vm85, %v5907, 0
  %v5947 = vsel %vm85, %v5912, 0
  %v5950 = vsel %vm85, %v5917, 0
  %v5953 = vsel %vm85, %v5922, 0
  %v5956 = vsel %vm85, %v5927, 0
  %v5959 = vsel %vm85, %v5932, 0
  %v5962 = vsel %vm85, %v5937, 0
  %5964 = vmatprep.subr.mxu0 0.0
  %5965 = vmatpush1.msra.mxu0 %v5941
  %5966 = vmatprep.subr.mxu0 0.0
  %5967 = vmatpush1.msra.mxu0 %v5942
  %5968 = vmatprep.subr.mxu0 0.0
  %5969 = vmatpush1.msra.mxu0 0.0
  %5970 = vmatprep.subr.mxu0 0.0
  %5971 = vmatpush1.msra.mxu0 0.0
  %5972 = vmatprep.subr.mxu0 0.0
  %5973 = vmatpush1.msra.mxu0 0.0
  %5974 = vmatprep.subr.mxu0 0.0
  %5975 = vmatpush1.msra.mxu0 0.0
  %5976 = vmatprep.subr.mxu0 0.0
  %5977 = vmatpush1.msra.mxu0 0.0
  %5978 = vmatprep.subr.mxu0 0.0
  %5979 = vmatpush1.msra.mxu0 0.0
  %5980 = vmatprep.subr.mxu0 0.0
  %5981 = vmatpush1.msra.mxu0 0.0
  %5982 = vmatprep.subr.mxu0 0.0
  %5983 = vmatpush1.msra.mxu0 0.0
  %5984 = vmatprep.subr.mxu0 0.0
  %5985 = vmatpush1.msra.mxu0 0.0
  %5986 = vmatprep.subr.mxu0 0.0
  %5987 = vmatpush1.msra.mxu0 0.0
  %5988 = vmatprep.subr.mxu0 0.0
  %5989 = vmatpush1.msra.mxu0 0.0
  %5990 = vmatprep.subr.mxu0 0.0
  %5991 = vmatpush1.msra.mxu0 0.0
  %5992 = vmatprep.subr.mxu0 0.0
  %5993 = vmatpush1.msra.mxu0 0.0
  %5994 = vmatprep.subr.mxu0 0.0
  %5995 = vmatpush1.msra.mxu0 0.0
  %5996 = vmatprep.subr.mxu0 0.0
  %5997 = vmatpush1.msra.mxu0 0.0
  %5998 = vmatprep.subr.mxu0 0.0
  %5999 = vmatpush1.msra.mxu0 0.0
  %6000 = vmatprep.subr.mxu0 0.0
  %6001 = vmatpush1.msra.mxu0 0.0
  %6002 = vmatprep.subr.mxu0 0.0
  %6003 = vmatpush1.msra.mxu0 0.0
  %6004 = vmatprep.subr.mxu0 0.0
  %6005 = vmatpush1.msra.mxu0 0.0
  %6006 = vmatprep.subr.mxu0 0.0
  %6007 = vmatpush1.msra.mxu0 0.0
  %6008 = vmatprep.subr.mxu0 0.0
  %6009 = vmatpush1.msra.mxu0 0.0
  %6010 = vmatprep.subr.mxu0 0.0
  %6011 = vmatpush1.msra.mxu0 0.0
  %6012 = vmatprep.subr.mxu0 0.0
  %6013 = vmatpush1.msra.mxu0 0.0
  %6014 = vmatprep.subr.mxu0 0.0
  %6015 = vmatpush1.msra.mxu0 0.0
  %6016 = vmatprep.subr.mxu0 0.0
  %6017 = vmatpush1.msra.mxu0 0.0
  %6018 = vmatprep.subr.mxu0 0.0
  %6019 = vmatpush1.msra.mxu0 0.0
  %6020 = vmatprep.subr.mxu0 0.0
  %6021 = vmatpush1.msra.mxu0 0.0
  %6022 = vmatprep.subr.mxu0 0.0
  %6023 = vmatpush1.msra.mxu0 0.0
  %6024 = vmatprep.subr.mxu0 0.0
  %6025 = vmatpush1.msra.mxu0 0.0
  %6026 = vmatprep.subr.mxu0 0.0
  %6027 = vmatpush1.msra.mxu0 0.0
  %6028 = vmatprep.mubr.f32.mxu0 0.0
  %6029 = vmatmul.mubr.f32.gmra.mrb[0].mxu0 %v5944
  %v6030 = vpop.f32.mrb[0].mxu0
  %v6031 = vadd.f32 0.0, %v6030
  %v6032 = vpop.f32.mrb[0].mxu0
  %6033 = vmatprep.mubr.f32.mxu0 0.0
  %6034 = vmatmul.mubr.f32.gmra.mrb[0].mxu0 %v5947
  %v6035 = vpop.f32.mrb[0].mxu0
  %v6036 = vadd.f32 0.0, %v6035
  %v6037 = vpop.f32.mrb[0].mxu0
  %6038 = vmatprep.mubr.f32.mxu0 0.0
  %6039 = vmatmul.mubr.f32.gmra.mrb[0].mxu0 %v5950
  %v6040 = vpop.f32.mrb[0].mxu0
  %v6041 = vadd.f32 0.0, %v6040
  %v6042 = vpop.f32.mrb[0].mxu0
  %6043 = vmatprep.mubr.f32.mxu0 0.0
  %6044 = vmatmul.mubr.f32.gmra.mrb[0].mxu0 %v5953
  %v6045 = vpop.f32.mrb[0].mxu0
  %v6046 = vadd.f32 0.0, %v6045
  %v6047 = vpop.f32.mrb[0].mxu0
  %6048 = vmatprep.mubr.f32.mxu0 0.0
  %6049 = vmatmul.mubr.f32.gmra.mrb[0].mxu0 %v5956
  %v6050 = vpop.f32.mrb[0].mxu0
  %v6051 = vadd.f32 0.0, %v6050
  %v6052 = vpop.f32.mrb[0].mxu0
  %6053 = vmatprep.mubr.f32.mxu0 0.0
  %6054 = vmatmul.mubr.f32.gmra.mrb[0].mxu0 %v5959
  %v6055 = vpop.f32.mrb[0].mxu0
  %v6056 = vadd.f32 0.0, %v6055
  %v6057 = vpop.f32.mrb[0].mxu0
  %6058 = vmatprep.mubr.f32.mxu0 0.0
  %6059 = vmatmul.mubr.f32.gmra.mrb[0].mxu0 %v5962
  %v6060 = vpop.f32.mrb[0].mxu0
  %v6061 = vadd.f32 0.0, %v6060
  %v6062 = vpop.f32.mrb[0].mxu0
  %6063 = vdwg.mxu0
  %v6064 = vadd.f32 %v5676, %v6031
  %v6065 = vadd.f32 %v5677, %v6036
  %v6066 = vadd.f32 %v5678, %v6041
  %v6067 = vadd.f32 %v5679, %v6046
  %v6068 = vadd.f32 %v5680, %v6051
  %v6069 = vadd.f32 %v5681, %v6056
  %v6070 = vadd.f32 %v5682, %v6061
  %s6071 = scalar_lea.vmem %s4, 1092
  %v6072 = vld [vmem:[%s6071] sm:$0xff]
  %v6073 = vld [vmem:[%s6071 + $0x8] sm:$0xf]
  %v6074 = vld [vmem:[%s6071 + $0xc] sm:$0xff]
  %v6075 = vld [vmem:[%s6071 + $0x14] sm:$0xf]
  %v6076 = vld [vmem:[%s6071 + $0x18] sm:$0xff]
  %v6077 = vld [vmem:[%s6071 + $0x20] sm:$0xf]
  %v6078 = vld [vmem:[%s6071 + $0x24] sm:$0xff]
  %v6079 = vld [vmem:[%s6071 + $0x2c] sm:$0xf]
  %v6080 = vld [vmem:[%s6071 + $0x30] sm:$0xff]
  %v6081 = vld [vmem:[%s6071 + $0x38] sm:$0xf]
  %v6082 = vld [vmem:[%s6071 + $0x3c] sm:$0xff]
  %v6083 = vld [vmem:[%s6071 + $0x44] sm:$0xf]
  %v6084 = vld [vmem:[%s6071 + $0x48] sm:$0xff]
  %v6085 = vld [vmem:[%s6071 + $0x50] sm:$0xf]
  %v6086 = vunpack.c.l.bf16 %v6072
  %v6087 = vunpack.c.h.bf16 %v6072
  %v6088 = vunpack.c.l.bf16 %v6073
  %v6089 = vunpack.c.l.bf16 %v6074
  %v6090 = vunpack.c.h.bf16 %v6074
  %v6091 = vunpack.c.l.bf16 %v6075
  %v6092 = vunpack.c.l.bf16 %v6076
  %v6093 = vunpack.c.h.bf16 %v6076
  %v6094 = vunpack.c.l.bf16 %v6077
  %v6095 = vunpack.c.l.bf16 %v6078
  %v6096 = vunpack.c.h.bf16 %v6078
  %v6097 = vunpack.c.l.bf16 %v6079
  %v6098 = vunpack.c.l.bf16 %v6080
  %v6099 = vunpack.c.h.bf16 %v6080
  %v6100 = vunpack.c.l.bf16 %v6081
  %v6101 = vunpack.c.l.bf16 %v6082
  %v6102 = vunpack.c.h.bf16 %v6082
  %v6103 = vunpack.c.l.bf16 %v6083
  %v6104 = vunpack.c.l.bf16 %v6084
  %v6105 = vunpack.c.h.bf16 %v6084
  %v6106 = vunpack.c.l.bf16 %v6085
  %v6108 = vsel %vm1077, %v6088, 0
  %v6111 = vsel %vm1077, %v6091, 0
  %v6114 = vsel %vm1077, %v6094, 0
  %v6117 = vsel %vm1077, %v6097, 0
  %v6120 = vsel %vm1077, %v6100, 0
  %v6123 = vsel %vm1077, %v6103, 0
  %v6126 = vsel %vm1077, %v6106, 0
  %6128 = vmatprep.subr.mxu0 0.0
  %6129 = vmatpush1.msra.mxu0 %v999
  %6130 = vmatprep.subr.mxu0 0.0
  %6131 = vmatpush1.msra.mxu0 %v1000
  %6132 = vmatprep.subr.mxu0 0.0
  %6133 = vmatpush1.msra.mxu0 %v1001
  %6134 = vmatprep.subr.mxu0 0.0
  %6135 = vmatpush1.msra.mxu0 %v1002
  %6136 = vmatprep.subr.mxu0 0.0
  %6137 = vmatpush1.msra.mxu0 %v1003
  %6138 = vmatprep.subr.mxu0 0.0
  %6139 = vmatpush1.msra.mxu0 %v1004
  %6140 = vmatprep.subr.mxu0 0.0
  %6141 = vmatpush1.msra.mxu0 %v1005
  %6142 = vmatprep.subr.mxu0 0.0
  %6143 = vmatpush1.msra.mxu0 %v1006
  %6144 = vmatprep.subr.mxu0 0.0
  %6145 = vmatpush1.msra.mxu0 %v1007
  %6146 = vmatprep.subr.mxu0 0.0
  %6147 = vmatpush1.msra.mxu0 %v1008
  %6148 = vmatprep.subr.mxu0 0.0
  %6149 = vmatpush1.msra.mxu0 %v1009
  %6150 = vmatprep.subr.mxu0 0.0
  %6151 = vmatpush1.msra.mxu0 %v1010
  %6152 = vmatprep.subr.mxu0 0.0
  %6153 = vmatpush1.msra.mxu0 %v1011
  %6154 = vmatprep.subr.mxu0 0.0
  %6155 = vmatpush1.msra.mxu0 %v1012
  %6156 = vmatprep.subr.mxu0 0.0
  %6157 = vmatpush1.msra.mxu0 %v1013
  %6158 = vmatprep.subr.mxu0 0.0
  %6159 = vmatpush1.msra.mxu0 %v1014
  %6160 = vmatprep.subr.mxu0 0.0
  %6161 = vmatpush1.msra.mxu0 %v1015
  %6162 = vmatprep.subr.mxu0 0.0
  %6163 = vmatpush1.msra.mxu0 %v1016
  %6164 = vmatprep.subr.mxu0 0.0
  %6165 = vmatpush1.msra.mxu0 %v1017
  %6166 = vmatprep.subr.mxu0 0.0
  %6167 = vmatpush1.msra.mxu0 %v1018
  %6168 = vmatprep.subr.mxu0 0.0
  %6169 = vmatpush1.msra.mxu0 %v1019
  %6170 = vmatprep.subr.mxu0 0.0
  %6171 = vmatpush1.msra.mxu0 %v1020
  %6172 = vmatprep.subr.mxu0 0.0
  %6173 = vmatpush1.msra.mxu0 %v1021
  %6174 = vmatprep.subr.mxu0 0.0
  %6175 = vmatpush1.msra.mxu0 %v1022
  %6176 = vmatprep.subr.mxu0 0.0
  %6177 = vmatpush1.msra.mxu0 %v1023
  %6178 = vmatprep.subr.mxu0 0.0
  %6179 = vmatpush1.msra.mxu0 %v1024
  %6180 = vmatprep.subr.mxu0 0.0
  %6181 = vmatpush1.msra.mxu0 %v1025
  %6182 = vmatprep.subr.mxu0 0.0
  %6183 = vmatpush1.msra.mxu0 %v1026
  %6184 = vmatprep.subr.mxu0 0.0
  %6185 = vmatpush1.msra.mxu0 %v1027
  %6186 = vmatprep.subr.mxu0 0.0
  %6187 = vmatpush1.msra.mxu0 %v1028
  %6188 = vmatprep.subr.mxu0 0.0
  %6189 = vmatpush1.msra.mxu0 %v1029
  %6190 = vmatprep.subr.mxu0 0.0
  %6191 = vmatpush1.msra.mxu0 %v1030
  %6192 = vmatprep.mubr.f32.mxu0 %v6087
  %6193 = vmatmul.mubr.f32.gmra.mrb[0].mxu0 %v6086
  %v6194 = vpop.f32.mrb[0].mxu0
  %v6195 = vadd.f32 0.0, %v6194
  %v6196 = vpop.f32.mrb[0].mxu0
  %6197 = vmatprep.mubr.f32.mxu0 %v6090
  %6198 = vmatmul.mubr.f32.gmra.mrb[0].mxu0 %v6089
  %v6199 = vpop.f32.mrb[0].mxu0
  %v6200 = vadd.f32 0.0, %v6199
  %v6201 = vpop.f32.mrb[0].mxu0
  %6202 = vmatprep.mubr.f32.mxu0 %v6093
  %6203 = vmatmul.mubr.f32.gmra.mrb[0].mxu0 %v6092
  %v6204 = vpop.f32.mrb[0].mxu0
  %v6205 = vadd.f32 0.0, %v6204
  %v6206 = vpop.f32.mrb[0].mxu0
  %6207 = vmatprep.mubr.f32.mxu0 %v6096
  %6208 = vmatmul.mubr.f32.gmra.mrb[0].mxu0 %v6095
  %v6209 = vpop.f32.mrb[0].mxu0
  %v6210 = vadd.f32 0.0, %v6209
  %v6211 = vpop.f32.mrb[0].mxu0
  %6212 = vmatprep.mubr.f32.mxu0 %v6099
  %6213 = vmatmul.mubr.f32.gmra.mrb[0].mxu0 %v6098
  %v6214 = vpop.f32.mrb[0].mxu0
  %v6215 = vadd.f32 0.0, %v6214
  %v6216 = vpop.f32.mrb[0].mxu0
  %6217 = vmatprep.mubr.f32.mxu0 %v6102
  %6218 = vmatmul.mubr.f32.gmra.mrb[0].mxu0 %v6101
  %v6219 = vpop.f32.mrb[0].mxu0
  %v6220 = vadd.f32 0.0, %v6219
  %v6221 = vpop.f32.mrb[0].mxu0
  %6222 = vmatprep.mubr.f32.mxu0 %v6105
  %6223 = vmatmul.mubr.f32.gmra.mrb[0].mxu0 %v6104
  %v6224 = vpop.f32.mrb[0].mxu0
  %v6225 = vadd.f32 0.0, %v6224
  %v6226 = vpop.f32.mrb[0].mxu0
  %6227 = vdwg.mxu0
  %6228 = vmatprep.subr.mxu0 0.0
  %6229 = vmatpush1.msra.mxu0 %v1031
  %6230 = vmatprep.subr.mxu0 0.0
  %6231 = vmatpush1.msra.mxu0 %v1032
  %6232 = vmatprep.subr.mxu0 0.0
  %6233 = vmatpush1.msra.mxu0 %v1033
  %6234 = vmatprep.subr.mxu0 0.0
  %6235 = vmatpush1.msra.mxu0 %v1034
  %6236 = vmatprep.subr.mxu0 0.0
  %6237 = vmatpush1.msra.mxu0 %v1035
  %6238 = vmatprep.subr.mxu0 0.0
  %6239 = vmatpush1.msra.mxu0 %v1036
  %6240 = vmatprep.subr.mxu0 0.0
  %6241 = vmatpush1.msra.mxu0 %v1037
  %6242 = vmatprep.subr.mxu0 0.0
  %6243 = vmatpush1.msra.mxu0 %v1038
  %6244 = vmatprep.subr.mxu0 0.0
  %6245 = vmatpush1.msra.mxu0 %v1039
  %6246 = vmatprep.subr.mxu0 0.0
  %6247 = vmatpush1.msra.mxu0 %v1040
  %6248 = vmatprep.subr.mxu0 0.0
  %6249 = vmatpush1.msra.mxu0 %v1041
  %6250 = vmatprep.subr.mxu0 0.0
  %6251 = vmatpush1.msra.mxu0 0.0
  %6252 = vmatprep.subr.mxu0 0.0
  %6253 = vmatpush1.msra.mxu0 0.0
  %6254 = vmatprep.subr.mxu0 0.0
  %6255 = vmatpush1.msra.mxu0 0.0
  %6256 = vmatprep.subr.mxu0 0.0
  %6257 = vmatpush1.msra.mxu0 0.0
  %6258 = vmatprep.subr.mxu0 0.0
  %6259 = vmatpush1.msra.mxu0 0.0
  %6260 = vmatprep.subr.mxu0 0.0
  %6261 = vmatpush1.msra.mxu0 0.0
  %6262 = vmatprep.subr.mxu0 0.0
  %6263 = vmatpush1.msra.mxu0 0.0
  %6264 = vmatprep.subr.mxu0 0.0
  %6265 = vmatpush1.msra.mxu0 0.0
  %6266 = vmatprep.subr.mxu0 0.0
  %6267 = vmatpush1.msra.mxu0 0.0
  %6268 = vmatprep.subr.mxu0 0.0
  %6269 = vmatpush1.msra.mxu0 0.0
  %6270 = vmatprep.subr.mxu0 0.0
  %6271 = vmatpush1.msra.mxu0 0.0
  %6272 = vmatprep.subr.mxu0 0.0
  %6273 = vmatpush1.msra.mxu0 0.0
  %6274 = vmatprep.subr.mxu0 0.0
  %6275 = vmatpush1.msra.mxu0 0.0
  %6276 = vmatprep.subr.mxu0 0.0
  %6277 = vmatpush1.msra.mxu0 0.0
  %6278 = vmatprep.subr.mxu0 0.0
  %6279 = vmatpush1.msra.mxu0 0.0
  %6280 = vmatprep.subr.mxu0 0.0
  %6281 = vmatpush1.msra.mxu0 0.0
  %6282 = vmatprep.subr.mxu0 0.0
  %6283 = vmatpush1.msra.mxu0 0.0
  %6284 = vmatprep.subr.mxu0 0.0
  %6285 = vmatpush1.msra.mxu0 0.0
  %6286 = vmatprep.subr.mxu0 0.0
  %6287 = vmatpush1.msra.mxu0 0.0
  %6288 = vmatprep.subr.mxu0 0.0
  %6289 = vmatpush1.msra.mxu0 0.0
  %6290 = vmatprep.subr.mxu0 0.0
  %6291 = vmatpush1.msra.mxu0 0.0
  %6292 = vmatprep.mubr.f32.mxu0 0.0
  %6293 = vmatmul.mubr.f32.gmra.mrb[0].mxu0 %v6108
  %v6294 = vpop.f32.mrb[0].mxu0
  %v6295 = vadd.f32 %v6195, %v6294
  %v6296 = vpop.f32.mrb[0].mxu0
  %6297 = vmatprep.mubr.f32.mxu0 0.0
  %6298 = vmatmul.mubr.f32.gmra.mrb[0].mxu0 %v6111
  %v6299 = vpop.f32.mrb[0].mxu0
  %v6300 = vadd.f32 %v6200, %v6299
  %v6301 = vpop.f32.mrb[0].mxu0
  %6302 = vmatprep.mubr.f32.mxu0 0.0
  %6303 = vmatmul.mubr.f32.gmra.mrb[0].mxu0 %v6114
  %v6304 = vpop.f32.mrb[0].mxu0
  %v6305 = vadd.f32 %v6205, %v6304
  %v6306 = vpop.f32.mrb[0].mxu0
  %6307 = vmatprep.mubr.f32.mxu0 0.0
  %6308 = vmatmul.mubr.f32.gmra.mrb[0].mxu0 %v6117
  %v6309 = vpop.f32.mrb[0].mxu0
  %v6310 = vadd.f32 %v6210, %v6309
  %v6311 = vpop.f32.mrb[0].mxu0
  %6312 = vmatprep.mubr.f32.mxu0 0.0
  %6313 = vmatmul.mubr.f32.gmra.mrb[0].mxu0 %v6120
  %v6314 = vpop.f32.mrb[0].mxu0
  %v6315 = vadd.f32 %v6215, %v6314
  %v6316 = vpop.f32.mrb[0].mxu0
  %6317 = vmatprep.mubr.f32.mxu0 0.0
  %6318 = vmatmul.mubr.f32.gmra.mrb[0].mxu0 %v6123
  %v6319 = vpop.f32.mrb[0].mxu0
  %v6320 = vadd.f32 %v6220, %v6319
  %v6321 = vpop.f32.mrb[0].mxu0
  %6322 = vmatprep.mubr.f32.mxu0 0.0
  %6323 = vmatmul.mubr.f32.gmra.mrb[0].mxu0 %v6126
  %v6324 = vpop.f32.mrb[0].mxu0
  %v6325 = vadd.f32 %v6225, %v6324
  %v6326 = vpop.f32.mrb[0].mxu0
  %6327 = vdwg.mxu0
  %s6328 = scalar_lea.vmem %s5, 208
  %v6329 = vld [vmem:[%s6328] sm:$0xff]
  %v6330 = vld [vmem:[%s6328 + $0x8] sm:$0xff]
  %v6332 = vsel %vm85, %v6295, 0
  %v6335 = vsel %vm85, %v6300, 0
  %v6338 = vsel %vm85, %v6305, 0
  %v6341 = vsel %vm85, %v6310, 0
  %v6344 = vsel %vm85, %v6315, 0
  %v6347 = vsel %vm85, %v6320, 0
  %v6350 = vsel %vm85, %v6325, 0
  %6352 = vmatprep.subr.mxu0 0.0
  %6353 = vmatpush1.msra.mxu0 %v6329
  %6354 = vmatprep.subr.mxu0 0.0
  %6355 = vmatpush1.msra.mxu0 %v6330
  %6356 = vmatprep.subr.mxu0 0.0
  %6357 = vmatpush1.msra.mxu0 0.0
  %6358 = vmatprep.subr.mxu0 0.0
  %6359 = vmatpush1.msra.mxu0 0.0
  %6360 = vmatprep.subr.mxu0 0.0
  %6361 = vmatpush1.msra.mxu0 0.0
  %6362 = vmatprep.subr.mxu0 0.0
  %6363 = vmatpush1.msra.mxu0 0.0
  %6364 = vmatprep.subr.mxu0 0.0
  %6365 = vmatpush1.msra.mxu0 0.0
  %6366 = vmatprep.subr.mxu0 0.0
  %6367 = vmatpush1.msra.mxu0 0.0
  %6368 = vmatprep.subr.mxu0 0.0
  %6369 = vmatpush1.msra.mxu0 0.0
  %6370 = vmatprep.subr.mxu0 0.0
  %6371 = vmatpush1.msra.mxu0 0.0
  %6372 = vmatprep.subr.mxu0 0.0
  %6373 = vmatpush1.msra.mxu0 0.0
  %6374 = vmatprep.subr.mxu0 0.0
  %6375 = vmatpush1.msra.mxu0 0.0
  %6376 = vmatprep.subr.mxu0 0.0
  %6377 = vmatpush1.msra.mxu0 0.0
  %6378 = vmatprep.subr.mxu0 0.0
  %6379 = vmatpush1.msra.mxu0 0.0
  %6380 = vmatprep.subr.mxu0 0.0
  %6381 = vmatpush1.msra.mxu0 0.0
  %6382 = vmatprep.subr.mxu0 0.0
  %6383 = vmatpush1.msra.mxu0 0.0
  %6384 = vmatprep.subr.mxu0 0.0
  %6385 = vmatpush1.msra.mxu0 0.0
  %6386 = vmatprep.subr.mxu0 0.0
  %6387 = vmatpush1.msra.mxu0 0.0
  %6388 = vmatprep.subr.mxu0 0.0
  %6389 = vmatpush1.msra.mxu0 0.0
  %6390 = vmatprep.subr.mxu0 0.0
  %6391 = vmatpush1.msra.mxu0 0.0
  %6392 = vmatprep.subr.mxu0 0.0
  %6393 = vmatpush1.msra.mxu0 0.0
  %6394 = vmatprep.subr.mxu0 0.0
  %6395 = vmatpush1.msra.mxu0 0.0
  %6396 = vmatprep.subr.mxu0 0.0
  %6397 = vmatpush1.msra.mxu0 0.0
  %6398 = vmatprep.subr.mxu0 0.0
  %6399 = vmatpush1.msra.mxu0 0.0
  %6400 = vmatprep.subr.mxu0 0.0
  %6401 = vmatpush1.msra.mxu0 0.0
  %6402 = vmatprep.subr.mxu0 0.0
  %6403 = vmatpush1.msra.mxu0 0.0
  %6404 = vmatprep.subr.mxu0 0.0
  %6405 = vmatpush1.msra.mxu0 0.0
  %6406 = vmatprep.subr.mxu0 0.0
  %6407 = vmatpush1.msra.mxu0 0.0
  %6408 = vmatprep.subr.mxu0 0.0
  %6409 = vmatpush1.msra.mxu0 0.0
  %6410 = vmatprep.subr.mxu0 0.0
  %6411 = vmatpush1.msra.mxu0 0.0
  %6412 = vmatprep.subr.mxu0 0.0
  %6413 = vmatpush1.msra.mxu0 0.0
  %6414 = vmatprep.subr.mxu0 0.0
  %6415 = vmatpush1.msra.mxu0 0.0
  %6416 = vmatprep.mubr.f32.mxu0 0.0
  %6417 = vmatmul.mubr.f32.gmra.mrb[0].mxu0 %v6332
  %v6418 = vpop.f32.mrb[0].mxu0
  %v6419 = vadd.f32 0.0, %v6418
  %v6420 = vpop.f32.mrb[0].mxu0
  %6421 = vmatprep.mubr.f32.mxu0 0.0
  %6422 = vmatmul.mubr.f32.gmra.mrb[0].mxu0 %v6335
  %v6423 = vpop.f32.mrb[0].mxu0
  %v6424 = vadd.f32 0.0, %v6423
  %v6425 = vpop.f32.mrb[0].mxu0
  %6426 = vmatprep.mubr.f32.mxu0 0.0
  %6427 = vmatmul.mubr.f32.gmra.mrb[0].mxu0 %v6338
  %v6428 = vpop.f32.mrb[0].mxu0
  %v6429 = vadd.f32 0.0, %v6428
  %v6430 = vpop.f32.mrb[0].mxu0
  %6431 = vmatprep.mubr.f32.mxu0 0.0
  %6432 = vmatmul.mubr.f32.gmra.mrb[0].mxu0 %v6341
  %v6433 = vpop.f32.mrb[0].mxu0
  %v6434 = vadd.f32 0.0, %v6433
  %v6435 = vpop.f32.mrb[0].mxu0
  %6436 = vmatprep.mubr.f32.mxu0 0.0
  %6437 = vmatmul.mubr.f32.gmra.mrb[0].mxu0 %v6344
  %v6438 = vpop.f32.mrb[0].mxu0
  %v6439 = vadd.f32 0.0, %v6438
  %v6440 = vpop.f32.mrb[0].mxu0
  %6441 = vmatprep.mubr.f32.mxu0 0.0
  %6442 = vmatmul.mubr.f32.gmra.mrb[0].mxu0 %v6347
  %v6443 = vpop.f32.mrb[0].mxu0
  %v6444 = vadd.f32 0.0, %v6443
  %v6445 = vpop.f32.mrb[0].mxu0
  %6446 = vmatprep.mubr.f32.mxu0 0.0
  %6447 = vmatmul.mubr.f32.gmra.mrb[0].mxu0 %v6350
  %v6448 = vpop.f32.mrb[0].mxu0
  %v6449 = vadd.f32 0.0, %v6448
  %v6450 = vpop.f32.mrb[0].mxu0
  %6451 = vdwg.mxu0
  %v6452 = vadd.f32 %v6064, %v6419
  %v6453 = vadd.f32 %v6065, %v6424
  %v6454 = vadd.f32 %v6066, %v6429
  %v6455 = vadd.f32 %v6067, %v6434
  %v6456 = vadd.f32 %v6068, %v6439
  %v6457 = vadd.f32 %v6069, %v6444
  %v6458 = vadd.f32 %v6070, %v6449
  %s6459 = scalar_lea.vmem %s4, 1176
  %v6460 = vld [vmem:[%s6459] sm:$0xff]
  %v6461 = vld [vmem:[%s6459 + $0x8] sm:$0xf]
  %v6462 = vld [vmem:[%s6459 + $0xc] sm:$0xff]
  %v6463 = vld [vmem:[%s6459 + $0x14] sm:$0xf]
  %v6464 = vld [vmem:[%s6459 + $0x18] sm:$0xff]
  %v6465 = vld [vmem:[%s6459 + $0x20] sm:$0xf]
  %v6466 = vld [vmem:[%s6459 + $0x24] sm:$0xff]
  %v6467 = vld [vmem:[%s6459 + $0x2c] sm:$0xf]
  %v6468 = vld [vmem:[%s6459 + $0x30] sm:$0xff]
  %v6469 = vld [vmem:[%s6459 + $0x38] sm:$0xf]
  %v6470 = vld [vmem:[%s6459 + $0x3c] sm:$0xff]
  %v6471 = vld [vmem:[%s6459 + $0x44] sm:$0xf]
  %v6472 = vld [vmem:[%s6459 + $0x48] sm:$0xff]
  %v6473 = vld [vmem:[%s6459 + $0x50] sm:$0xf]
  %v6474 = vunpack.c.l.bf16 %v6460
  %v6475 = vunpack.c.h.bf16 %v6460
  %v6476 = vunpack.c.l.bf16 %v6461
  %v6477 = vunpack.c.l.bf16 %v6462
  %v6478 = vunpack.c.h.bf16 %v6462
  %v6479 = vunpack.c.l.bf16 %v6463
  %v6480 = vunpack.c.l.bf16 %v6464
  %v6481 = vunpack.c.h.bf16 %v6464
  %v6482 = vunpack.c.l.bf16 %v6465
  %v6483 = vunpack.c.l.bf16 %v6466
  %v6484 = vunpack.c.h.bf16 %v6466
  %v6485 = vunpack.c.l.bf16 %v6467
  %v6486 = vunpack.c.l.bf16 %v6468
  %v6487 = vunpack.c.h.bf16 %v6468
  %v6488 = vunpack.c.l.bf16 %v6469
  %v6489 = vunpack.c.l.bf16 %v6470
  %v6490 = vunpack.c.h.bf16 %v6470
  %v6491 = vunpack.c.l.bf16 %v6471
  %v6492 = vunpack.c.l.bf16 %v6472
  %v6493 = vunpack.c.h.bf16 %v6472
  %v6494 = vunpack.c.l.bf16 %v6473
  %v6496 = vsel %vm1077, %v6476, 0
  %v6499 = vsel %vm1077, %v6479, 0
  %v6502 = vsel %vm1077, %v6482, 0
  %v6505 = vsel %vm1077, %v6485, 0
  %v6508 = vsel %vm1077, %v6488, 0
  %v6511 = vsel %vm1077, %v6491, 0
  %v6514 = vsel %vm1077, %v6494, 0
  %6516 = vmatprep.subr.mxu0 0.0
  %6517 = vmatpush1.msra.mxu0 %v999
  %6518 = vmatprep.subr.mxu0 0.0
  %6519 = vmatpush1.msra.mxu0 %v1000
  %6520 = vmatprep.subr.mxu0 0.0
  %6521 = vmatpush1.msra.mxu0 %v1001
  %6522 = vmatprep.subr.mxu0 0.0
  %6523 = vmatpush1.msra.mxu0 %v1002
  %6524 = vmatprep.subr.mxu0 0.0
  %6525 = vmatpush1.msra.mxu0 %v1003
  %6526 = vmatprep.subr.mxu0 0.0
  %6527 = vmatpush1.msra.mxu0 %v1004
  %6528 = vmatprep.subr.mxu0 0.0
  %6529 = vmatpush1.msra.mxu0 %v1005
  %6530 = vmatprep.subr.mxu0 0.0
  %6531 = vmatpush1.msra.mxu0 %v1006
  %6532 = vmatprep.subr.mxu0 0.0
  %6533 = vmatpush1.msra.mxu0 %v1007
  %6534 = vmatprep.subr.mxu0 0.0
  %6535 = vmatpush1.msra.mxu0 %v1008
  %6536 = vmatprep.subr.mxu0 0.0
  %6537 = vmatpush1.msra.mxu0 %v1009
  %6538 = vmatprep.subr.mxu0 0.0
  %6539 = vmatpush1.msra.mxu0 %v1010
  %6540 = vmatprep.subr.mxu0 0.0
  %6541 = vmatpush1.msra.mxu0 %v1011
  %6542 = vmatprep.subr.mxu0 0.0
  %6543 = vmatpush1.msra.mxu0 %v1012
  %6544 = vmatprep.subr.mxu0 0.0
  %6545 = vmatpush1.msra.mxu0 %v1013
  %6546 = vmatprep.subr.mxu0 0.0
  %6547 = vmatpush1.msra.mxu0 %v1014
  %6548 = vmatprep.subr.mxu0 0.0
  %6549 = vmatpush1.msra.mxu0 %v1015
  %6550 = vmatprep.subr.mxu0 0.0
  %6551 = vmatpush1.msra.mxu0 %v1016
  %6552 = vmatprep.subr.mxu0 0.0
  %6553 = vmatpush1.msra.mxu0 %v1017
  %6554 = vmatprep.subr.mxu0 0.0
  %6555 = vmatpush1.msra.mxu0 %v1018
  %6556 = vmatprep.subr.mxu0 0.0
  %6557 = vmatpush1.msra.mxu0 %v1019
  %6558 = vmatprep.subr.mxu0 0.0
  %6559 = vmatpush1.msra.mxu0 %v1020
  %6560 = vmatprep.subr.mxu0 0.0
  %6561 = vmatpush1.msra.mxu0 %v1021
  %6562 = vmatprep.subr.mxu0 0.0
  %6563 = vmatpush1.msra.mxu0 %v1022
  %6564 = vmatprep.subr.mxu0 0.0
  %6565 = vmatpush1.msra.mxu0 %v1023
  %6566 = vmatprep.subr.mxu0 0.0
  %6567 = vmatpush1.msra.mxu0 %v1024
  %6568 = vmatprep.subr.mxu0 0.0
  %6569 = vmatpush1.msra.mxu0 %v1025
  %6570 = vmatprep.subr.mxu0 0.0
  %6571 = vmatpush1.msra.mxu0 %v1026
  %6572 = vmatprep.subr.mxu0 0.0
  %6573 = vmatpush1.msra.mxu0 %v1027
  %6574 = vmatprep.subr.mxu0 0.0
  %6575 = vmatpush1.msra.mxu0 %v1028
  %6576 = vmatprep.subr.mxu0 0.0
  %6577 = vmatpush1.msra.mxu0 %v1029
  %6578 = vmatprep.subr.mxu0 0.0
  %6579 = vmatpush1.msra.mxu0 %v1030
  %6580 = vmatprep.mubr.f32.mxu0 %v6475
  %6581 = vmatmul.mubr.f32.gmra.mrb[0].mxu0 %v6474
  %v6582 = vpop.f32.mrb[0].mxu0
  %v6583 = vadd.f32 0.0, %v6582
  %v6584 = vpop.f32.mrb[0].mxu0
  %6585 = vmatprep.mubr.f32.mxu0 %v6478
  %6586 = vmatmul.mubr.f32.gmra.mrb[0].mxu0 %v6477
  %v6587 = vpop.f32.mrb[0].mxu0
  %v6588 = vadd.f32 0.0, %v6587
  %v6589 = vpop.f32.mrb[0].mxu0
  %6590 = vmatprep.mubr.f32.mxu0 %v6481
  %6591 = vmatmul.mubr.f32.gmra.mrb[0].mxu0 %v6480
  %v6592 = vpop.f32.mrb[0].mxu0
  %v6593 = vadd.f32 0.0, %v6592
  %v6594 = vpop.f32.mrb[0].mxu0
  %6595 = vmatprep.mubr.f32.mxu0 %v6484
  %6596 = vmatmul.mubr.f32.gmra.mrb[0].mxu0 %v6483
  %v6597 = vpop.f32.mrb[0].mxu0
  %v6598 = vadd.f32 0.0, %v6597
  %v6599 = vpop.f32.mrb[0].mxu0
  %6600 = vmatprep.mubr.f32.mxu0 %v6487
  %6601 = vmatmul.mubr.f32.gmra.mrb[0].mxu0 %v6486
  %v6602 = vpop.f32.mrb[0].mxu0
  %v6603 = vadd.f32 0.0, %v6602
  %v6604 = vpop.f32.mrb[0].mxu0
  %6605 = vmatprep.mubr.f32.mxu0 %v6490
  %6606 = vmatmul.mubr.f32.gmra.mrb[0].mxu0 %v6489
  %v6607 = vpop.f32.mrb[0].mxu0
  %v6608 = vadd.f32 0.0, %v6607
  %v6609 = vpop.f32.mrb[0].mxu0
  %6610 = vmatprep.mubr.f32.mxu0 %v6493
  %6611 = vmatmul.mubr.f32.gmra.mrb[0].mxu0 %v6492
  %v6612 = vpop.f32.mrb[0].mxu0
  %v6613 = vadd.f32 0.0, %v6612
  %v6614 = vpop.f32.mrb[0].mxu0
  %6615 = vdwg.mxu0
  %6616 = vmatprep.subr.mxu0 0.0
  %6617 = vmatpush1.msra.mxu0 %v1031
  %6618 = vmatprep.subr.mxu0 0.0
  %6619 = vmatpush1.msra.mxu0 %v1032
  %6620 = vmatprep.subr.mxu0 0.0
  %6621 = vmatpush1.msra.mxu0 %v1033
  %6622 = vmatprep.subr.mxu0 0.0
  %6623 = vmatpush1.msra.mxu0 %v1034
  %6624 = vmatprep.subr.mxu0 0.0
  %6625 = vmatpush1.msra.mxu0 %v1035
  %6626 = vmatprep.subr.mxu0 0.0
  %6627 = vmatpush1.msra.mxu0 %v1036
  %6628 = vmatprep.subr.mxu0 0.0
  %6629 = vmatpush1.msra.mxu0 %v1037
  %6630 = vmatprep.subr.mxu0 0.0
  %6631 = vmatpush1.msra.mxu0 %v1038
  %6632 = vmatprep.subr.mxu0 0.0
  %6633 = vmatpush1.msra.mxu0 %v1039
  %6634 = vmatprep.subr.mxu0 0.0
  %6635 = vmatpush1.msra.mxu0 %v1040
  %6636 = vmatprep.subr.mxu0 0.0
  %6637 = vmatpush1.msra.mxu0 %v1041
  %6638 = vmatprep.subr.mxu0 0.0
  %6639 = vmatpush1.msra.mxu0 0.0
  %6640 = vmatprep.subr.mxu0 0.0
  %6641 = vmatpush1.msra.mxu0 0.0
  %6642 = vmatprep.subr.mxu0 0.0
  %6643 = vmatpush1.msra.mxu0 0.0
  %6644 = vmatprep.subr.mxu0 0.0
  %6645 = vmatpush1.msra.mxu0 0.0
  %6646 = vmatprep.subr.mxu0 0.0
  %6647 = vmatpush1.msra.mxu0 0.0
  %6648 = vmatprep.subr.mxu0 0.0
  %6649 = vmatpush1.msra.mxu0 0.0
  %6650 = vmatprep.subr.mxu0 0.0
  %6651 = vmatpush1.msra.mxu0 0.0
  %6652 = vmatprep.subr.mxu0 0.0
  %6653 = vmatpush1.msra.mxu0 0.0
  %6654 = vmatprep.subr.mxu0 0.0
  %6655 = vmatpush1.msra.mxu0 0.0
  %6656 = vmatprep.subr.mxu0 0.0
  %6657 = vmatpush1.msra.mxu0 0.0
  %6658 = vmatprep.subr.mxu0 0.0
  %6659 = vmatpush1.msra.mxu0 0.0
  %6660 = vmatprep.subr.mxu0 0.0
  %6661 = vmatpush1.msra.mxu0 0.0
  %6662 = vmatprep.subr.mxu0 0.0
  %6663 = vmatpush1.msra.mxu0 0.0
  %6664 = vmatprep.subr.mxu0 0.0
  %6665 = vmatpush1.msra.mxu0 0.0
  %6666 = vmatprep.subr.mxu0 0.0
  %6667 = vmatpush1.msra.mxu0 0.0
  %6668 = vmatprep.subr.mxu0 0.0
  %6669 = vmatpush1.msra.mxu0 0.0
  %6670 = vmatprep.subr.mxu0 0.0
  %6671 = vmatpush1.msra.mxu0 0.0
  %6672 = vmatprep.subr.mxu0 0.0
  %6673 = vmatpush1.msra.mxu0 0.0
  %6674 = vmatprep.subr.mxu0 0.0
  %6675 = vmatpush1.msra.mxu0 0.0
  %6676 = vmatprep.subr.mxu0 0.0
  %6677 = vmatpush1.msra.mxu0 0.0
  %6678 = vmatprep.subr.mxu0 0.0
  %6679 = vmatpush1.msra.mxu0 0.0
  %6680 = vmatprep.mubr.f32.mxu0 0.0
  %6681 = vmatmul.mubr.f32.gmra.mrb[0].mxu0 %v6496
  %v6682 = vpop.f32.mrb[0].mxu0
  %v6683 = vadd.f32 %v6583, %v6682
  %v6684 = vpop.f32.mrb[0].mxu0
  %6685 = vmatprep.mubr.f32.mxu0 0.0
  %6686 = vmatmul.mubr.f32.gmra.mrb[0].mxu0 %v6499
  %v6687 = vpop.f32.mrb[0].mxu0
  %v6688 = vadd.f32 %v6588, %v6687
  %v6689 = vpop.f32.mrb[0].mxu0
  %6690 = vmatprep.mubr.f32.mxu0 0.0
  %6691 = vmatmul.mubr.f32.gmra.mrb[0].mxu0 %v6502
  %v6692 = vpop.f32.mrb[0].mxu0
  %v6693 = vadd.f32 %v6593, %v6692
  %v6694 = vpop.f32.mrb[0].mxu0
  %6695 = vmatprep.mubr.f32.mxu0 0.0
  %6696 = vmatmul.mubr.f32.gmra.mrb[0].mxu0 %v6505
  %v6697 = vpop.f32.mrb[0].mxu0
  %v6698 = vadd.f32 %v6598, %v6697
  %v6699 = vpop.f32.mrb[0].mxu0
  %6700 = vmatprep.mubr.f32.mxu0 0.0
  %6701 = vmatmul.mubr.f32.gmra.mrb[0].mxu0 %v6508
  %v6702 = vpop.f32.mrb[0].mxu0
  %v6703 = vadd.f32 %v6603, %v6702
  %v6704 = vpop.f32.mrb[0].mxu0
  %6705 = vmatprep.mubr.f32.mxu0 0.0
  %6706 = vmatmul.mubr.f32.gmra.mrb[0].mxu0 %v6511
  %v6707 = vpop.f32.mrb[0].mxu0
  %v6708 = vadd.f32 %v6608, %v6707
  %v6709 = vpop.f32.mrb[0].mxu0
  %6710 = vmatprep.mubr.f32.mxu0 0.0
  %6711 = vmatmul.mubr.f32.gmra.mrb[0].mxu0 %v6514
  %v6712 = vpop.f32.mrb[0].mxu0
  %v6713 = vadd.f32 %v6613, %v6712
  %v6714 = vpop.f32.mrb[0].mxu0
  %6715 = vdwg.mxu0
  %s6716 = scalar_lea.vmem %s5, 224
  %v6717 = vld [vmem:[%s6716] sm:$0xff]
  %v6718 = vld [vmem:[%s6716 + $0x8] sm:$0xff]
  %v6720 = vsel %vm85, %v6683, 0
  %v6723 = vsel %vm85, %v6688, 0
  %v6726 = vsel %vm85, %v6693, 0
  %v6729 = vsel %vm85, %v6698, 0
  %v6732 = vsel %vm85, %v6703, 0
  %v6735 = vsel %vm85, %v6708, 0
  %v6738 = vsel %vm85, %v6713, 0
  %6740 = vmatprep.subr.mxu0 0.0
  %6741 = vmatpush1.msra.mxu0 %v6717
  %6742 = vmatprep.subr.mxu0 0.0
  %6743 = vmatpush1.msra.mxu0 %v6718
  %6744 = vmatprep.subr.mxu0 0.0
  %6745 = vmatpush1.msra.mxu0 0.0
  %6746 = vmatprep.subr.mxu0 0.0
  %6747 = vmatpush1.msra.mxu0 0.0
  %6748 = vmatprep.subr.mxu0 0.0
  %6749 = vmatpush1.msra.mxu0 0.0
  %6750 = vmatprep.subr.mxu0 0.0
  %6751 = vmatpush1.msra.mxu0 0.0
  %6752 = vmatprep.subr.mxu0 0.0
  %6753 = vmatpush1.msra.mxu0 0.0
  %6754 = vmatprep.subr.mxu0 0.0
  %6755 = vmatpush1.msra.mxu0 0.0
  %6756 = vmatprep.subr.mxu0 0.0
  %6757 = vmatpush1.msra.mxu0 0.0
  %6758 = vmatprep.subr.mxu0 0.0
  %6759 = vmatpush1.msra.mxu0 0.0
  %6760 = vmatprep.subr.mxu0 0.0
  %6761 = vmatpush1.msra.mxu0 0.0
  %6762 = vmatprep.subr.mxu0 0.0
  %6763 = vmatpush1.msra.mxu0 0.0
  %6764 = vmatprep.subr.mxu0 0.0
  %6765 = vmatpush1.msra.mxu0 0.0
  %6766 = vmatprep.subr.mxu0 0.0
  %6767 = vmatpush1.msra.mxu0 0.0
  %6768 = vmatprep.subr.mxu0 0.0
  %6769 = vmatpush1.msra.mxu0 0.0
  %6770 = vmatprep.subr.mxu0 0.0
  %6771 = vmatpush1.msra.mxu0 0.0
  %6772 = vmatprep.subr.mxu0 0.0
  %6773 = vmatpush1.msra.mxu0 0.0
  %6774 = vmatprep.subr.mxu0 0.0
  %6775 = vmatpush1.msra.mxu0 0.0
  %6776 = vmatprep.subr.mxu0 0.0
  %6777 = vmatpush1.msra.mxu0 0.0
  %6778 = vmatprep.subr.mxu0 0.0
  %6779 = vmatpush1.msra.mxu0 0.0
  %6780 = vmatprep.subr.mxu0 0.0
  %6781 = vmatpush1.msra.mxu0 0.0
  %6782 = vmatprep.subr.mxu0 0.0
  %6783 = vmatpush1.msra.mxu0 0.0
  %6784 = vmatprep.subr.mxu0 0.0
  %6785 = vmatpush1.msra.mxu0 0.0
  %6786 = vmatprep.subr.mxu0 0.0
  %6787 = vmatpush1.msra.mxu0 0.0
  %6788 = vmatprep.subr.mxu0 0.0
  %6789 = vmatpush1.msra.mxu0 0.0
  %6790 = vmatprep.subr.mxu0 0.0
  %6791 = vmatpush1.msra.mxu0 0.0
  %6792 = vmatprep.subr.mxu0 0.0
  %6793 = vmatpush1.msra.mxu0 0.0
  %6794 = vmatprep.subr.mxu0 0.0
  %6795 = vmatpush1.msra.mxu0 0.0
  %6796 = vmatprep.subr.mxu0 0.0
  %6797 = vmatpush1.msra.mxu0 0.0
  %6798 = vmatprep.subr.mxu0 0.0
  %6799 = vmatpush1.msra.mxu0 0.0
  %6800 = vmatprep.subr.mxu0 0.0
  %6801 = vmatpush1.msra.mxu0 0.0
  %6802 = vmatprep.subr.mxu0 0.0
  %6803 = vmatpush1.msra.mxu0 0.0
  %6804 = vmatprep.mubr.f32.mxu0 0.0
  %6805 = vmatmul.mubr.f32.gmra.mrb[0].mxu0 %v6720
  %v6806 = vpop.f32.mrb[0].mxu0
  %v6807 = vadd.f32 0.0, %v6806
  %v6808 = vpop.f32.mrb[0].mxu0
  %6809 = vmatprep.mubr.f32.mxu0 0.0
  %6810 = vmatmul.mubr.f32.gmra.mrb[0].mxu0 %v6723
  %v6811 = vpop.f32.mrb[0].mxu0
  %v6812 = vadd.f32 0.0, %v6811
  %v6813 = vpop.f32.mrb[0].mxu0
  %6814 = vmatprep.mubr.f32.mxu0 0.0
  %6815 = vmatmul.mubr.f32.gmra.mrb[0].mxu0 %v6726
  %v6816 = vpop.f32.mrb[0].mxu0
  %v6817 = vadd.f32 0.0, %v6816
  %v6818 = vpop.f32.mrb[0].mxu0
  %6819 = vmatprep.mubr.f32.mxu0 0.0
  %6820 = vmatmul.mubr.f32.gmra.mrb[0].mxu0 %v6729
  %v6821 = vpop.f32.mrb[0].mxu0
  %v6822 = vadd.f32 0.0, %v6821
  %v6823 = vpop.f32.mrb[0].mxu0
  %6824 = vmatprep.mubr.f32.mxu0 0.0
  %6825 = vmatmul.mubr.f32.gmra.mrb[0].mxu0 %v6732
  %v6826 = vpop.f32.mrb[0].mxu0
  %v6827 = vadd.f32 0.0, %v6826
  %v6828 = vpop.f32.mrb[0].mxu0
  %6829 = vmatprep.mubr.f32.mxu0 0.0
  %6830 = vmatmul.mubr.f32.gmra.mrb[0].mxu0 %v6735
  %v6831 = vpop.f32.mrb[0].mxu0
  %v6832 = vadd.f32 0.0, %v6831
  %v6833 = vpop.f32.mrb[0].mxu0
  %6834 = vmatprep.mubr.f32.mxu0 0.0
  %6835 = vmatmul.mubr.f32.gmra.mrb[0].mxu0 %v6738
  %v6836 = vpop.f32.mrb[0].mxu0
  %v6837 = vadd.f32 0.0, %v6836
  %v6838 = vpop.f32.mrb[0].mxu0
  %6839 = vdwg.mxu0
  %v6840 = vadd.f32 %v6452, %v6807
  %v6841 = vadd.f32 %v6453, %v6812
  %v6842 = vadd.f32 %v6454, %v6817
  %v6843 = vadd.f32 %v6455, %v6822
  %v6844 = vadd.f32 %v6456, %v6827
  %v6845 = vadd.f32 %v6457, %v6832
  %v6846 = vadd.f32 %v6458, %v6837
  %s6847 = scalar_lea.vmem %s4, 1260
  %v6848 = vld [vmem:[%s6847] sm:$0xff]
  %v6849 = vld [vmem:[%s6847 + $0x8] sm:$0xf]
  %v6850 = vld [vmem:[%s6847 + $0xc] sm:$0xff]
  %v6851 = vld [vmem:[%s6847 + $0x14] sm:$0xf]
  %v6852 = vld [vmem:[%s6847 + $0x18] sm:$0xff]
  %v6853 = vld [vmem:[%s6847 + $0x20] sm:$0xf]
  %v6854 = vld [vmem:[%s6847 + $0x24] sm:$0xff]
  %v6855 = vld [vmem:[%s6847 + $0x2c] sm:$0xf]
  %v6856 = vld [vmem:[%s6847 + $0x30] sm:$0xff]
  %v6857 = vld [vmem:[%s6847 + $0x38] sm:$0xf]
  %v6858 = vld [vmem:[%s6847 + $0x3c] sm:$0xff]
  %v6859 = vld [vmem:[%s6847 + $0x44] sm:$0xf]
  %v6860 = vld [vmem:[%s6847 + $0x48] sm:$0xff]
  %v6861 = vld [vmem:[%s6847 + $0x50] sm:$0xf]
  %v6862 = vunpack.c.l.bf16 %v6848
  %v6863 = vunpack.c.h.bf16 %v6848
  %v6864 = vunpack.c.l.bf16 %v6849
  %v6865 = vunpack.c.l.bf16 %v6850
  %v6866 = vunpack.c.h.bf16 %v6850
  %v6867 = vunpack.c.l.bf16 %v6851
  %v6868 = vunpack.c.l.bf16 %v6852
  %v6869 = vunpack.c.h.bf16 %v6852
  %v6870 = vunpack.c.l.bf16 %v6853
  %v6871 = vunpack.c.l.bf16 %v6854
  %v6872 = vunpack.c.h.bf16 %v6854
  %v6873 = vunpack.c.l.bf16 %v6855
  %v6874 = vunpack.c.l.bf16 %v6856
  %v6875 = vunpack.c.h.bf16 %v6856
  %v6876 = vunpack.c.l.bf16 %v6857
  %v6877 = vunpack.c.l.bf16 %v6858
  %v6878 = vunpack.c.h.bf16 %v6858
  %v6879 = vunpack.c.l.bf16 %v6859
  %v6880 = vunpack.c.l.bf16 %v6860
  %v6881 = vunpack.c.h.bf16 %v6860
  %v6882 = vunpack.c.l.bf16 %v6861
  %v6884 = vsel %vm1077, %v6864, 0
  %v6887 = vsel %vm1077, %v6867, 0
  %v6890 = vsel %vm1077, %v6870, 0
  %v6893 = vsel %vm1077, %v6873, 0
  %v6896 = vsel %vm1077, %v6876, 0
  %v6899 = vsel %vm1077, %v6879, 0
  %v6902 = vsel %vm1077, %v6882, 0
  %6904 = vmatprep.subr.mxu0 0.0
  %6905 = vmatpush1.msra.mxu0 %v999
  %6906 = vmatprep.subr.mxu0 0.0
  %6907 = vmatpush1.msra.mxu0 %v1000
  %6908 = vmatprep.subr.mxu0 0.0
  %6909 = vmatpush1.msra.mxu0 %v1001
  %6910 = vmatprep.subr.mxu0 0.0
  %6911 = vmatpush1.msra.mxu0 %v1002
  %6912 = vmatprep.subr.mxu0 0.0
  %6913 = vmatpush1.msra.mxu0 %v1003
  %6914 = vmatprep.subr.mxu0 0.0
  %6915 = vmatpush1.msra.mxu0 %v1004
  %6916 = vmatprep.subr.mxu0 0.0
  %6917 = vmatpush1.msra.mxu0 %v1005
  %6918 = vmatprep.subr.mxu0 0.0
  %6919 = vmatpush1.msra.mxu0 %v1006
  %6920 = vmatprep.subr.mxu0 0.0
  %6921 = vmatpush1.msra.mxu0 %v1007
  %6922 = vmatprep.subr.mxu0 0.0
  %6923 = vmatpush1.msra.mxu0 %v1008
  %6924 = vmatprep.subr.mxu0 0.0
  %6925 = vmatpush1.msra.mxu0 %v1009
  %6926 = vmatprep.subr.mxu0 0.0
  %6927 = vmatpush1.msra.mxu0 %v1010
  %6928 = vmatprep.subr.mxu0 0.0
  %6929 = vmatpush1.msra.mxu0 %v1011
  %6930 = vmatprep.subr.mxu0 0.0
  %6931 = vmatpush1.msra.mxu0 %v1012
  %6932 = vmatprep.subr.mxu0 0.0
  %6933 = vmatpush1.msra.mxu0 %v1013
  %6934 = vmatprep.subr.mxu0 0.0
  %6935 = vmatpush1.msra.mxu0 %v1014
  %6936 = vmatprep.subr.mxu0 0.0
  %6937 = vmatpush1.msra.mxu0 %v1015
  %6938 = vmatprep.subr.mxu0 0.0
  %6939 = vmatpush1.msra.mxu0 %v1016
  %6940 = vmatprep.subr.mxu0 0.0
  %6941 = vmatpush1.msra.mxu0 %v1017
  %6942 = vmatprep.subr.mxu0 0.0
  %6943 = vmatpush1.msra.mxu0 %v1018
  %6944 = vmatprep.subr.mxu0 0.0
  %6945 = vmatpush1.msra.mxu0 %v1019
  %6946 = vmatprep.subr.mxu0 0.0
  %6947 = vmatpush1.msra.mxu0 %v1020
  %6948 = vmatprep.subr.mxu0 0.0
  %6949 = vmatpush1.msra.mxu0 %v1021
  %6950 = vmatprep.subr.mxu0 0.0
  %6951 = vmatpush1.msra.mxu0 %v1022
  %6952 = vmatprep.subr.mxu0 0.0
  %6953 = vmatpush1.msra.mxu0 %v1023
  %6954 = vmatprep.subr.mxu0 0.0
  %6955 = vmatpush1.msra.mxu0 %v1024
  %6956 = vmatprep.subr.mxu0 0.0
  %6957 = vmatpush1.msra.mxu0 %v1025
  %6958 = vmatprep.subr.mxu0 0.0
  %6959 = vmatpush1.msra.mxu0 %v1026
  %6960 = vmatprep.subr.mxu0 0.0
  %6961 = vmatpush1.msra.mxu0 %v1027
  %6962 = vmatprep.subr.mxu0 0.0
  %6963 = vmatpush1.msra.mxu0 %v1028
  %6964 = vmatprep.subr.mxu0 0.0
  %6965 = vmatpush1.msra.mxu0 %v1029
  %6966 = vmatprep.subr.mxu0 0.0
  %6967 = vmatpush1.msra.mxu0 %v1030
  %6968 = vmatprep.mubr.f32.mxu0 %v6863
  %6969 = vmatmul.mubr.f32.gmra.mrb[0].mxu0 %v6862
  %v6970 = vpop.f32.mrb[0].mxu0
  %v6971 = vadd.f32 0.0, %v6970
  %v6972 = vpop.f32.mrb[0].mxu0
  %6973 = vmatprep.mubr.f32.mxu0 %v6866
  %6974 = vmatmul.mubr.f32.gmra.mrb[0].mxu0 %v6865
  %v6975 = vpop.f32.mrb[0].mxu0
  %v6976 = vadd.f32 0.0, %v6975
  %v6977 = vpop.f32.mrb[0].mxu0
  %6978 = vmatprep.mubr.f32.mxu0 %v6869
  %6979 = vmatmul.mubr.f32.gmra.mrb[0].mxu0 %v6868
  %v6980 = vpop.f32.mrb[0].mxu0
  %v6981 = vadd.f32 0.0, %v6980
  %v6982 = vpop.f32.mrb[0].mxu0
  %6983 = vmatprep.mubr.f32.mxu0 %v6872
  %6984 = vmatmul.mubr.f32.gmra.mrb[0].mxu0 %v6871
  %v6985 = vpop.f32.mrb[0].mxu0
  %v6986 = vadd.f32 0.0, %v6985
  %v6987 = vpop.f32.mrb[0].mxu0
  %6988 = vmatprep.mubr.f32.mxu0 %v6875
  %6989 = vmatmul.mubr.f32.gmra.mrb[0].mxu0 %v6874
  %v6990 = vpop.f32.mrb[0].mxu0
  %v6991 = vadd.f32 0.0, %v6990
  %v6992 = vpop.f32.mrb[0].mxu0
  %6993 = vmatprep.mubr.f32.mxu0 %v6878
  %6994 = vmatmul.mubr.f32.gmra.mrb[0].mxu0 %v6877
  %v6995 = vpop.f32.mrb[0].mxu0
  %v6996 = vadd.f32 0.0, %v6995
  %v6997 = vpop.f32.mrb[0].mxu0
  %6998 = vmatprep.mubr.f32.mxu0 %v6881
  %6999 = vmatmul.mubr.f32.gmra.mrb[0].mxu0 %v6880
  %v7000 = vpop.f32.mrb[0].mxu0
  %v7001 = vadd.f32 0.0, %v7000
  %v7002 = vpop.f32.mrb[0].mxu0
  %7003 = vdwg.mxu0
  %7004 = vmatprep.subr.mxu0 0.0
  %7005 = vmatpush1.msra.mxu0 %v1031
  %7006 = vmatprep.subr.mxu0 0.0
  %7007 = vmatpush1.msra.mxu0 %v1032
  %7008 = vmatprep.subr.mxu0 0.0
  %7009 = vmatpush1.msra.mxu0 %v1033
  %7010 = vmatprep.subr.mxu0 0.0
  %7011 = vmatpush1.msra.mxu0 %v1034
  %7012 = vmatprep.subr.mxu0 0.0
  %7013 = vmatpush1.msra.mxu0 %v1035
  %7014 = vmatprep.subr.mxu0 0.0
  %7015 = vmatpush1.msra.mxu0 %v1036
  %7016 = vmatprep.subr.mxu0 0.0
  %7017 = vmatpush1.msra.mxu0 %v1037
  %7018 = vmatprep.subr.mxu0 0.0
  %7019 = vmatpush1.msra.mxu0 %v1038
  %7020 = vmatprep.subr.mxu0 0.0
  %7021 = vmatpush1.msra.mxu0 %v1039
  %7022 = vmatprep.subr.mxu0 0.0
  %7023 = vmatpush1.msra.mxu0 %v1040
  %7024 = vmatprep.subr.mxu0 0.0
  %7025 = vmatpush1.msra.mxu0 %v1041
  %7026 = vmatprep.subr.mxu0 0.0
  %7027 = vmatpush1.msra.mxu0 0.0
  %7028 = vmatprep.subr.mxu0 0.0
  %7029 = vmatpush1.msra.mxu0 0.0
  %7030 = vmatprep.subr.mxu0 0.0
  %7031 = vmatpush1.msra.mxu0 0.0
  %7032 = vmatprep.subr.mxu0 0.0
  %7033 = vmatpush1.msra.mxu0 0.0
  %7034 = vmatprep.subr.mxu0 0.0
  %7035 = vmatpush1.msra.mxu0 0.0
  %7036 = vmatprep.subr.mxu0 0.0
  %7037 = vmatpush1.msra.mxu0 0.0
  %7038 = vmatprep.subr.mxu0 0.0
  %7039 = vmatpush1.msra.mxu0 0.0
  %7040 = vmatprep.subr.mxu0 0.0
  %7041 = vmatpush1.msra.mxu0 0.0
  %7042 = vmatprep.subr.mxu0 0.0
  %7043 = vmatpush1.msra.mxu0 0.0
  %7044 = vmatprep.subr.mxu0 0.0
  %7045 = vmatpush1.msra.mxu0 0.0
  %7046 = vmatprep.subr.mxu0 0.0
  %7047 = vmatpush1.msra.mxu0 0.0
  %7048 = vmatprep.subr.mxu0 0.0
  %7049 = vmatpush1.msra.mxu0 0.0
  %7050 = vmatprep.subr.mxu0 0.0
  %7051 = vmatpush1.msra.mxu0 0.0
  %7052 = vmatprep.subr.mxu0 0.0
  %7053 = vmatpush1.msra.mxu0 0.0
  %7054 = vmatprep.subr.mxu0 0.0
  %7055 = vmatpush1.msra.mxu0 0.0
  %7056 = vmatprep.subr.mxu0 0.0
  %7057 = vmatpush1.msra.mxu0 0.0
  %7058 = vmatprep.subr.mxu0 0.0
  %7059 = vmatpush1.msra.mxu0 0.0
  %7060 = vmatprep.subr.mxu0 0.0
  %7061 = vmatpush1.msra.mxu0 0.0
  %7062 = vmatprep.subr.mxu0 0.0
  %7063 = vmatpush1.msra.mxu0 0.0
  %7064 = vmatprep.subr.mxu0 0.0
  %7065 = vmatpush1.msra.mxu0 0.0
  %7066 = vmatprep.subr.mxu0 0.0
  %7067 = vmatpush1.msra.mxu0 0.0
  %7068 = vmatprep.mubr.f32.mxu0 0.0
  %7069 = vmatmul.mubr.f32.gmra.mrb[0].mxu0 %v6884
  %v7070 = vpop.f32.mrb[0].mxu0
  %v7071 = vadd.f32 %v6971, %v7070
  %v7072 = vpop.f32.mrb[0].mxu0
  %7073 = vmatprep.mubr.f32.mxu0 0.0
  %7074 = vmatmul.mubr.f32.gmra.mrb[0].mxu0 %v6887
  %v7075 = vpop.f32.mrb[0].mxu0
  %v7076 = vadd.f32 %v6976, %v7075
  %v7077 = vpop.f32.mrb[0].mxu0
  %7078 = vmatprep.mubr.f32.mxu0 0.0
  %7079 = vmatmul.mubr.f32.gmra.mrb[0].mxu0 %v6890
  %v7080 = vpop.f32.mrb[0].mxu0
  %v7081 = vadd.f32 %v6981, %v7080
  %v7082 = vpop.f32.mrb[0].mxu0
  %7083 = vmatprep.mubr.f32.mxu0 0.0
  %7084 = vmatmul.mubr.f32.gmra.mrb[0].mxu0 %v6893
  %v7085 = vpop.f32.mrb[0].mxu0
  %v7086 = vadd.f32 %v6986, %v7085
  %v7087 = vpop.f32.mrb[0].mxu0
  %7088 = vmatprep.mubr.f32.mxu0 0.0
  %7089 = vmatmul.mubr.f32.gmra.mrb[0].mxu0 %v6896
  %v7090 = vpop.f32.mrb[0].mxu0
  %v7091 = vadd.f32 %v6991, %v7090
  %v7092 = vpop.f32.mrb[0].mxu0
  %7093 = vmatprep.mubr.f32.mxu0 0.0
  %7094 = vmatmul.mubr.f32.gmra.mrb[0].mxu0 %v6899
  %v7095 = vpop.f32.mrb[0].mxu0
  %v7096 = vadd.f32 %v6996, %v7095
  %v7097 = vpop.f32.mrb[0].mxu0
  %7098 = vmatprep.mubr.f32.mxu0 0.0
  %7099 = vmatmul.mubr.f32.gmra.mrb[0].mxu0 %v6902
  %v7100 = vpop.f32.mrb[0].mxu0
  %v7101 = vadd.f32 %v7001, %v7100
  %v7102 = vpop.f32.mrb[0].mxu0
  %7103 = vdwg.mxu0
  %s7104 = scalar_lea.vmem %s5, 240
  %v7105 = vld [vmem:[%s7104] sm:$0xff]
  %v7106 = vld [vmem:[%s7104 + $0x8] sm:$0xff]
  %v7108 = vsel %vm85, %v7071, 0
  %v7111 = vsel %vm85, %v7076, 0
  %v7114 = vsel %vm85, %v7081, 0
  %v7117 = vsel %vm85, %v7086, 0
  %v7120 = vsel %vm85, %v7091, 0
  %v7123 = vsel %vm85, %v7096, 0
  %v7126 = vsel %vm85, %v7101, 0
  %7128 = vmatprep.subr.mxu0 0.0
  %7129 = vmatpush1.msra.mxu0 %v7105
  %7130 = vmatprep.subr.mxu0 0.0
  %7131 = vmatpush1.msra.mxu0 %v7106
  %7132 = vmatprep.subr.mxu0 0.0
  %7133 = vmatpush1.msra.mxu0 0.0
  %7134 = vmatprep.subr.mxu0 0.0
  %7135 = vmatpush1.msra.mxu0 0.0
  %7136 = vmatprep.subr.mxu0 0.0
  %7137 = vmatpush1.msra.mxu0 0.0
  %7138 = vmatprep.subr.mxu0 0.0
  %7139 = vmatpush1.msra.mxu0 0.0
  %7140 = vmatprep.subr.mxu0 0.0
  %7141 = vmatpush1.msra.mxu0 0.0
  %7142 = vmatprep.subr.mxu0 0.0
  %7143 = vmatpush1.msra.mxu0 0.0
  %7144 = vmatprep.subr.mxu0 0.0
  %7145 = vmatpush1.msra.mxu0 0.0
  %7146 = vmatprep.subr.mxu0 0.0
  %7147 = vmatpush1.msra.mxu0 0.0
  %7148 = vmatprep.subr.mxu0 0.0
  %7149 = vmatpush1.msra.mxu0 0.0
  %7150 = vmatprep.subr.mxu0 0.0
  %7151 = vmatpush1.msra.mxu0 0.0
  %7152 = vmatprep.subr.mxu0 0.0
  %7153 = vmatpush1.msra.mxu0 0.0
  %7154 = vmatprep.subr.mxu0 0.0
  %7155 = vmatpush1.msra.mxu0 0.0
  %7156 = vmatprep.subr.mxu0 0.0
  %7157 = vmatpush1.msra.mxu0 0.0
  %7158 = vmatprep.subr.mxu0 0.0
  %7159 = vmatpush1.msra.mxu0 0.0
  %7160 = vmatprep.subr.mxu0 0.0
  %7161 = vmatpush1.msra.mxu0 0.0
  %7162 = vmatprep.subr.mxu0 0.0
  %7163 = vmatpush1.msra.mxu0 0.0
  %7164 = vmatprep.subr.mxu0 0.0
  %7165 = vmatpush1.msra.mxu0 0.0
  %7166 = vmatprep.subr.mxu0 0.0
  %7167 = vmatpush1.msra.mxu0 0.0
  %7168 = vmatprep.subr.mxu0 0.0
  %7169 = vmatpush1.msra.mxu0 0.0
  %7170 = vmatprep.subr.mxu0 0.0
  %7171 = vmatpush1.msra.mxu0 0.0
  %7172 = vmatprep.subr.mxu0 0.0
  %7173 = vmatpush1.msra.mxu0 0.0
  %7174 = vmatprep.subr.mxu0 0.0
  %7175 = vmatpush1.msra.mxu0 0.0
  %7176 = vmatprep.subr.mxu0 0.0
  %7177 = vmatpush1.msra.mxu0 0.0
  %7178 = vmatprep.subr.mxu0 0.0
  %7179 = vmatpush1.msra.mxu0 0.0
  %7180 = vmatprep.subr.mxu0 0.0
  %7181 = vmatpush1.msra.mxu0 0.0
  %7182 = vmatprep.subr.mxu0 0.0
  %7183 = vmatpush1.msra.mxu0 0.0
  %7184 = vmatprep.subr.mxu0 0.0
  %7185 = vmatpush1.msra.mxu0 0.0
  %7186 = vmatprep.subr.mxu0 0.0
  %7187 = vmatpush1.msra.mxu0 0.0
  %7188 = vmatprep.subr.mxu0 0.0
  %7189 = vmatpush1.msra.mxu0 0.0
  %7190 = vmatprep.subr.mxu0 0.0
  %7191 = vmatpush1.msra.mxu0 0.0
  %7192 = vmatprep.mubr.f32.mxu0 0.0
  %7193 = vmatmul.mubr.f32.gmra.mrb[0].mxu0 %v7108
  %v7194 = vpop.f32.mrb[0].mxu0
  %v7195 = vadd.f32 0.0, %v7194
  %v7196 = vpop.f32.mrb[0].mxu0
  %7197 = vmatprep.mubr.f32.mxu0 0.0
  %7198 = vmatmul.mubr.f32.gmra.mrb[0].mxu0 %v7111
  %v7199 = vpop.f32.mrb[0].mxu0
  %v7200 = vadd.f32 0.0, %v7199
  %v7201 = vpop.f32.mrb[0].mxu0
  %7202 = vmatprep.mubr.f32.mxu0 0.0
  %7203 = vmatmul.mubr.f32.gmra.mrb[0].mxu0 %v7114
  %v7204 = vpop.f32.mrb[0].mxu0
  %v7205 = vadd.f32 0.0, %v7204
  %v7206 = vpop.f32.mrb[0].mxu0
  %7207 = vmatprep.mubr.f32.mxu0 0.0
  %7208 = vmatmul.mubr.f32.gmra.mrb[0].mxu0 %v7117
  %v7209 = vpop.f32.mrb[0].mxu0
  %v7210 = vadd.f32 0.0, %v7209
  %v7211 = vpop.f32.mrb[0].mxu0
  %7212 = vmatprep.mubr.f32.mxu0 0.0
  %7213 = vmatmul.mubr.f32.gmra.mrb[0].mxu0 %v7120
  %v7214 = vpop.f32.mrb[0].mxu0
  %v7215 = vadd.f32 0.0, %v7214
  %v7216 = vpop.f32.mrb[0].mxu0
  %7217 = vmatprep.mubr.f32.mxu0 0.0
  %7218 = vmatmul.mubr.f32.gmra.mrb[0].mxu0 %v7123
  %v7219 = vpop.f32.mrb[0].mxu0
  %v7220 = vadd.f32 0.0, %v7219
  %v7221 = vpop.f32.mrb[0].mxu0
  %7222 = vmatprep.mubr.f32.mxu0 0.0
  %7223 = vmatmul.mubr.f32.gmra.mrb[0].mxu0 %v7126
  %v7224 = vpop.f32.mrb[0].mxu0
  %v7225 = vadd.f32 0.0, %v7224
  %v7226 = vpop.f32.mrb[0].mxu0
  %7227 = vdwg.mxu0
  %v7228 = vadd.f32 %v6840, %v7195
  %v7229 = vadd.f32 %v6841, %v7200
  %v7230 = vadd.f32 %v6842, %v7205
  %v7231 = vadd.f32 %v6843, %v7210
  %v7232 = vadd.f32 %v6844, %v7215
  %v7233 = vadd.f32 %v6845, %v7220
  %v7234 = vadd.f32 %v6846, %v7225
  %vm7235 = vcmask 261120
  %v7236 = vsel %vm7235, %v7228, 0.0
  %v7237 = vsel %vm7235, %v7229, 0.0
  %v7238 = vadd.f32 %v7236, %v7237
  %v7239 = vsel %vm7235, %v7230, 0.0
  %v7240 = vadd.f32 %v7238, %v7239
  %v7241 = vsel %vm7235, %v7231, 0.0
  %v7242 = vadd.f32 %v7240, %v7241
  %v7243 = vsel %vm7235, %v7232, 0.0
  %v7244 = vadd.f32 %v7242, %v7243
  %v7245 = vsel %vm7235, %v7233, 0.0
  %v7246 = vadd.f32 %v7244, %v7245
  %v7247 = vsel %vm7235, %v7234, 0.0
  %v7248 = vadd.f32 %v7246, %v7247
  %v7249 = vrot.slane %v7248, 4
  %v7250 = vadd.f32 %v7248, %v7249
  %v7251 = vrot.slane %v7250, 2
  %v7252 = vadd.f32 %v7250, %v7251
  %v7253 = vrot.slane %v7252, 1
  %v7254 = vadd.f32 %v7252, %v7253
  %v7255 = vmul.f32 %v7228, %v7228
  %v7256 = vmul.f32 %v7229, %v7229
  %v7257 = vmul.f32 %v7230, %v7230
  %v7258 = vmul.f32 %v7231, %v7231
  %v7259 = vmul.f32 %v7232, %v7232
  %v7260 = vmul.f32 %v7233, %v7233
  %v7261 = vmul.f32 %v7234, %v7234
  %v7262 = vsel %vm7235, %v7255, 0.0
  %v7263 = vsel %vm7235, %v7256, 0.0
  %v7264 = vadd.f32 %v7262, %v7263
  %v7265 = vsel %vm7235, %v7257, 0.0
  %v7266 = vadd.f32 %v7264, %v7265
  %v7267 = vsel %vm7235, %v7258, 0.0
  %v7268 = vadd.f32 %v7266, %v7267
  %v7269 = vsel %vm7235, %v7259, 0.0
  %v7270 = vadd.f32 %v7268, %v7269
  %v7271 = vsel %vm7235, %v7260, 0.0
  %v7272 = vadd.f32 %v7270, %v7271
  %v7273 = vsel %vm7235, %v7261, 0.0
  %v7274 = vadd.f32 %v7272, %v7273
  %v7275 = vrot.slane %v7274, 4
  %v7276 = vadd.f32 %v7274, %v7275
  %v7277 = vrot.slane %v7276, 2
  %v7278 = vadd.f32 %v7276, %v7277
  %v7279 = vrot.slane %v7278, 1
  %v7280 = vadd.f32 %v7278, %v7279
  %v7281 = vmul.f32 %v7254, 0.02
  %v7282 = vmul.f32 %v7280, 0.02
  %v7283 = vmul.f32 %v7281, %v7281
  %v7284 = vsub.f32 %v7282, %v7283
  %v7285 = vmax.f32 %v7284, 0.0
  %v7286 = vsub.f32 %v7228, %v7281
  %v7287 = vsub.f32 %v7229, %v7281
  %v7288 = vsub.f32 %v7230, %v7281
  %v7289 = vsub.f32 %v7231, %v7281
  %v7290 = vsub.f32 %v7232, %v7281
  %v7291 = vsub.f32 %v7233, %v7281
  %v7292 = vsub.f32 %v7234, %v7281
  %v7293 = vadd.f32 %v7285, 1e-05
  %v7294 = vrsqrt.pop %v7293
  %v7295 = vmul.f32 %v7286, %v7294
  %v7296 = vmul.f32 %v7287, %v7294
  %v7297 = vmul.f32 %v7288, %v7294
  %v7298 = vmul.f32 %v7289, %v7294
  %v7299 = vmul.f32 %v7290, %v7294
  %v7300 = vmul.f32 %v7291, %v7294
  %v7301 = vmul.f32 %v7292, %v7294
  %v7302 = vld [vmem:[%s6] sm:$0x1]
  %v7304 = vlaneseq
  %v7305 = vshrl.u32 %v7304, 7
  %v7306 = vsub.s32 0, %v7305
  %v7307 = vrot.slane %v7302, %v7306
  %v7309 = vmul.f32 %v7295, %v7307
  %v7310 = vmul.f32 %v7296, %v7307
  %v7311 = vmul.f32 %v7297, %v7307
  %v7312 = vmul.f32 %v7298, %v7307
  %v7313 = vmul.f32 %v7299, %v7307
  %v7314 = vmul.f32 %v7300, %v7307
  %v7315 = vmul.f32 %v7301, %v7307
  %v7316 = vld [vmem:[%s7] sm:$0x1]
  %v7318 = vlaneseq
  %v7319 = vshrl.u32 %v7318, 7
  %v7320 = vsub.s32 0, %v7319
  %v7321 = vrot.slane %v7316, %v7320
  %v7323 = vadd.f32 %v7309, %v7321
  %v7324 = vadd.f32 %v7310, %v7321
  %v7325 = vadd.f32 %v7311, %v7321
  %v7326 = vadd.f32 %v7312, %v7321
  %v7327 = vadd.f32 %v7313, %v7321
  %v7328 = vadd.f32 %v7314, %v7321
  %v7329 = vadd.f32 %v7315, %v7321
  %vm7330 = vcmp.ge.f32.partialorder %v7323, 0.0
  %vm7331 = vcmp.ge.f32.partialorder %v7324, 0.0
  %vm7332 = vcmp.ge.f32.partialorder %v7325, 0.0
  %vm7333 = vcmp.ge.f32.partialorder %v7326, 0.0
  %vm7334 = vcmp.ge.f32.partialorder %v7327, 0.0
  %vm7335 = vcmp.ge.f32.partialorder %v7328, 0.0
  %vm7336 = vcmp.ge.f32.partialorder %v7329, 0.0
  %v7337 = vmul.f32 %v7323, 0.2
  %v7338 = vmul.f32 %v7324, 0.2
  %v7339 = vmul.f32 %v7325, 0.2
  %v7340 = vmul.f32 %v7326, 0.2
  %v7341 = vmul.f32 %v7327, 0.2
  %v7342 = vmul.f32 %v7328, 0.2
  %v7343 = vmul.f32 %v7329, 0.2
  %v7344 = vsel %vm7330, %v7323, %v7337
  %v7345 = vsel %vm7331, %v7324, %v7338
  %v7346 = vsel %vm7332, %v7325, %v7339
  %v7347 = vsel %vm7333, %v7326, %v7340
  %v7348 = vsel %vm7334, %v7327, %v7341
  %v7349 = vsel %vm7335, %v7328, %v7342
  %v7350 = vsel %vm7336, %v7329, %v7343
  %v7351 = vld [vmem:[%s8] sm:$0xff]
  %v7352 = vld [vmem:[%s8 + $0x8] sm:$0xff]
  %v7353 = vld [vmem:[%s8 + $0x10] sm:$0xff]
  %v7354 = vld [vmem:[%s8 + $0x18] sm:$0xff]
  %v7355 = vld [vmem:[%s8 + $0x20] sm:$0xff]
  %v7356 = vld [vmem:[%s8 + $0x28] sm:$0xff]
  %v7357 = vld [vmem:[%s8 + $0x30] sm:$0xff]
  %v7358 = vmul.f32 %v7344, %v7351
  %v7359 = vmul.f32 %v7345, %v7352
  %v7360 = vmul.f32 %v7346, %v7353
  %v7361 = vmul.f32 %v7347, %v7354
  %v7362 = vmul.f32 %v7348, %v7355
  %v7363 = vmul.f32 %v7349, %v7356
  %v7364 = vmul.f32 %v7350, %v7357
  %v7365 = vsel %vm7235, %v7358, 0.0
  %7366 = vadd.xlane.f32.xlu0 %v7365
  %v7367 = vpop.xlane.xlu0 %7366
  %v7368 = vsel %vm7235, %v7359, 0.0
  %7369 = vadd.xlane.f32.xlu0 %v7368
  %v7370 = vpop.xlane.xlu0 %7369
  %v7371 = vsel %vm7235, %v7360, 0.0
  %7372 = vadd.xlane.f32.xlu0 %v7371
  %v7373 = vpop.xlane.xlu0 %7372
  %v7374 = vsel %vm7235, %v7361, 0.0
  %7375 = vadd.xlane.f32.xlu0 %v7374
  %v7376 = vpop.xlane.xlu0 %7375
  %v7377 = vsel %vm7235, %v7362, 0.0
  %7378 = vadd.xlane.f32.xlu0 %v7377
  %v7379 = vpop.xlane.xlu0 %7378
  %v7380 = vsel %vm7235, %v7363, 0.0
  %7381 = vadd.xlane.f32.xlu0 %v7380
  %v7382 = vpop.xlane.xlu0 %7381
  %v7383 = vsel %vm7235, %v7364, 0.0
  %7384 = vadd.xlane.f32.xlu0 %v7383
  %v7385 = vpop.xlane.xlu0 %7384
  %v7386 = vld [vmem:[%s9] sm:$0xff]
  %v7387 = vld [vmem:[#allocation2] sm:$0x1]
  %v7389 = vlaneseq
  %v7390 = vshrl.u32 %v7389, 7
  %v7391 = vsub.s32 0, %v7390
  %v7392 = vrot.slane %v7387, %v7391
  %vm7394 = vcmask 457728
  %v7396 = vsel %vm7394, %v7386, 0
  %7398 = vmatprep.subr.mxu0 0.0
  %7399 = vmatpush1.msra.mxu0 %v7367
  %7400 = vmatprep.subr.mxu0 0.0
  %7401 = vmatpush1.msra.mxu0 %v7370
  %7402 = vmatprep.subr.mxu0 0.0
  %7403 = vmatpush1.msra.mxu0 %v7373
  %7404 = vmatprep.subr.mxu0 0.0
  %7405 = vmatpush1.msra.mxu0 %v7376
  %7406 = vmatprep.subr.mxu0 0.0
  %7407 = vmatpush1.msra.mxu0 %v7379
  %7408 = vmatprep.subr.mxu0 0.0
  %7409 = vmatpush1.msra.mxu0 %v7382
  %7410 = vmatprep.subr.mxu0 0.0
  %7411 = vmatpush1.msra.mxu0 %v7385
  %7412 = vmatprep.subr.mxu0 0.0
  %7413 = vmatpush1.msra.mxu0 0.0
  %7414 = vmatprep.subr.mxu0 0.0
  %7415 = vmatpush1.msra.mxu0 0.0
  %7416 = vmatprep.subr.mxu0 0.0
  %7417 = vmatpush1.msra.mxu0 0.0
  %7418 = vmatprep.subr.mxu0 0.0
  %7419 = vmatpush1.msra.mxu0 0.0
  %7420 = vmatprep.subr.mxu0 0.0
  %7421 = vmatpush1.msra.mxu0 0.0
  %7422 = vmatprep.subr.mxu0 0.0
  %7423 = vmatpush1.msra.mxu0 0.0
  %7424 = vmatprep.subr.mxu0 0.0
  %7425 = vmatpush1.msra.mxu0 0.0
  %7426 = vmatprep.subr.mxu0 0.0
  %7427 = vmatpush1.msra.mxu0 0.0
  %7428 = vmatprep.subr.mxu0 0.0
  %7429 = vmatpush1.msra.mxu0 0.0
  %7430 = vmatprep.subr.mxu0 0.0
  %7431 = vmatpush1.msra.mxu0 0.0
  %7432 = vmatprep.subr.mxu0 0.0
  %7433 = vmatpush1.msra.mxu0 0.0
  %7434 = vmatprep.subr.mxu0 0.0
  %7435 = vmatpush1.msra.mxu0 0.0
  %7436 = vmatprep.subr.mxu0 0.0
  %7437 = vmatpush1.msra.mxu0 0.0
  %7438 = vmatprep.subr.mxu0 0.0
  %7439 = vmatpush1.msra.mxu0 0.0
  %7440 = vmatprep.subr.mxu0 0.0
  %7441 = vmatpush1.msra.mxu0 0.0
  %7442 = vmatprep.subr.mxu0 0.0
  %7443 = vmatpush1.msra.mxu0 0.0
  %7444 = vmatprep.subr.mxu0 0.0
  %7445 = vmatpush1.msra.mxu0 0.0
  %7446 = vmatprep.subr.mxu0 0.0
  %7447 = vmatpush1.msra.mxu0 0.0
  %7448 = vmatprep.subr.mxu0 0.0
  %7449 = vmatpush1.msra.mxu0 0.0
  %7450 = vmatprep.subr.mxu0 0.0
  %7451 = vmatpush1.msra.mxu0 0.0
  %7452 = vmatprep.subr.mxu0 0.0
  %7453 = vmatpush1.msra.mxu0 0.0
  %7454 = vmatprep.subr.mxu0 0.0
  %7455 = vmatpush1.msra.mxu0 0.0
  %7456 = vmatprep.subr.mxu0 0.0
  %7457 = vmatpush1.msra.mxu0 0.0
  %7458 = vmatprep.subr.mxu0 0.0
  %7459 = vmatpush1.msra.mxu0 0.0
  %7460 = vmatprep.subr.mxu0 0.0
  %7461 = vmatpush1.msra.mxu0 0.0
  %7462 = vmatprep.mubr.f32.mxu0 0.0
  %7463 = vmatmul.mubr.f32.gmra.mrb[0].mxu0 %v7396
  %v7464 = vpop.f32.mrb[0].mxu0
  %v7465 = vadd.f32 %v7392, %v7464
  %v7466 = vpop.f32.mrb[0].mxu0
  %7467 = vdwg.mxu0
  %7469 = vset.pattern.permute.xlu0 0
  %7470 = vperm.xlu0 %7469, %v7465
  %v7471 = vpop.permute.xlu0 %7470
  %7473 = vst [vmem:[%s11] sm:$0xff] %v7471
  // Predicated region
  $region46: #{discriminator_forward.1} parent=0 // pred_check
    _
  $region47: #{discriminator_forward.1} parent=0 // pred_check_branch
    %7475 = sbr.rel (0) target = $region49
  $region48: #{discriminator_forward.1} parent=0 // pred_region
    _
  $region49: #{discriminator_forward.1} parent=0 // pred_fallthru
    _
  // Predicated region
  $region50: #{discriminator_forward.1} parent=0 // pred_check
    _
  $region51: #{discriminator_forward.1} parent=0 // pred_check_branch
    %7477 = sbr.rel (0) target = $region53
  $region52: #{discriminator_forward.1} parent=0 // pred_region
    _
  $region53: #{discriminator_forward.1} parent=0 // pred_fallthru
    _

</llo_original>
